<compile_context>
chip_gen: v7x
topology: tpu7x:2x2x1
jax: 0.10.0
libtpu: 0.0.40
codegen_flags: <defaults>
</compile_context>

<pallas_src>
from functools import partial

import jax
import jax.numpy as jnp
from jax import lax
from jax.experimental import pallas as pl
from jax.experimental.pallas import tpu as pltpu


# --------------------------------------------------------------------------
# Pass 1: conv2d(context) once per batch, pre-activation, 3x3x3 conv (dt-slab
#         im2col matmuls), per-channel sum / sum-of-squares accumulation.
# --------------------------------------------------------------------------
def _conv_stats_kernel(x_ref, xl_ref, xr_ref, ctx_ref, w2_ref, b2_ref, temp_ref,
                       w3_ref, b3_ref, conv_ref, stats_ref,
                       pad_ref, patch3_ref, patch2_ref, ctx_sc,
                       *, T, H, W, C, Cc, tT, NT):
    f32 = jnp.float32
    bf16 = jnp.bfloat16
    t = pl.program_id(1)           # serial T-tile index within this batch
    t0 = t * tT
    M = tT * H * W

    # -- once per batch (first serial tile): zero the 4 constant H/W halo faces
    #    (the T faces hold real halo data and are rewritten every step) and run
    #    the T-invariant 3x3 context conv into a persistent scratch. --
    @pl.when(t == 0)
    def _():
        pad_ref[:, 0:1, :, :] = jnp.zeros((tT + 2, 1, W + 2, C), f32)
        pad_ref[:, H + 1:H + 2, :, :] = jnp.zeros((tT + 2, 1, W + 2, C), f32)
        pad_ref[:, 1:H + 1, 0:1, :] = jnp.zeros((tT + 2, H, 1, C), f32)
        pad_ref[:, 1:H + 1, W + 1:W + 2, :] = jnp.zeros((tT + 2, H, 1, C), f32)
        # Conv2d(context_dim -> dim, 3x3, pad 1) as ONE im2col matmul (K=9*Cc).
        k = 0
        for dh in range(3):
            for dw in range(3):
                win = ctx_ref[0, dh:dh + H, dw:dw + W, :]              # (H, W, Cc)
                patch2_ref[:, k * Cc:(k + 1) * Cc] = (
                    win.reshape(H * W, Cc).astype(bf16))
                k += 1
        ctx_sc[...] = jnp.dot(patch2_ref[...], w2_ref[...],
                              preferred_element_type=f32) + b2_ref[...]

    ctx_hw = ctx_sc[...].reshape(H, W, C)                              # (H, W, C)

    # -- pre-activation for this T tile plus one halo frame on each side.
    #    Out-of-volume halo frames are zero (= the conv's zero padding). --
    tw = temp_ref[pl.ds(t0, tT)]                                       # (tT,1,1,C)
    pad_ref[1:tT + 1, 1:H + 1, 1:W + 1, :] = x_ref[0].astype(f32) + ctx_hw + tw

    lt = jnp.maximum(t0 - 1, 0)
    left = (xl_ref[0, 0].astype(f32) + ctx_hw
            + temp_ref[pl.ds(lt, 1)].reshape(1, 1, C))
    pad_ref[0, 1:H + 1, 1:W + 1, :] = jnp.where(t > 0, left, 0.0)

    rt = jnp.minimum(t0 + tT, T - 1)
    right = (xr_ref[0, 0].astype(f32) + ctx_hw
             + temp_ref[pl.ds(rt, 1)].reshape(1, 1, C))
    pad_ref[tT + 1, 1:H + 1, 1:W + 1, :] = jnp.where(t < NT - 1, right, 0.0)

    # -- Conv3d(dim -> dim, 3x3x3, pad 1) as 3 dt-slab matmuls of K=9*C,
    #    sharing one (M, 9*C) bf16 im2col buffer, f32 accumulation. --
    acc = None
    for dt in range(3):
        k = 0
        for dh in range(3):
            for dw in range(3):
                win = pad_ref[dt:dt + tT, dh:dh + H, dw:dw + W, :]     # (tT,H,W,C)
                patch3_ref[:, k * C:(k + 1) * C] = (
                    win.reshape(M, C).astype(bf16))
                k += 1
        part = jnp.dot(patch3_ref[...], w3_ref[dt], preferred_element_type=f32)
        acc = part if acc is None else acc + part
    acc = acc + b3_ref[...]                                            # (M, C) f32

    conv_ref[0] = acc.reshape(tT, H, W, C)

    # -- per-channel sum / sum-of-squares accumulated across the serial tiles.
    #    TODO(synk): switch to a Welford/Chan combine for very large volumes. --
    @pl.when(t == 0)
    def _():
        stats_ref[...] = jnp.zeros_like(stats_ref)
    stats_ref[0, 0:1, :] = stats_ref[0, 0:1, :] + jnp.sum(acc, axis=0, keepdims=True)
    stats_ref[0, 1:2, :] = stats_ref[0, 1:2, :] + jnp.sum(acc * acc, axis=0,
                                                          keepdims=True)


# --------------------------------------------------------------------------
# Pass 2: GroupNorm (from the per-batch stats) + swish + skip connection.
# --------------------------------------------------------------------------
def _norm_swish_skip_kernel(conv_ref, x_ref, stats_ref, gamma_ref, beta_ref,
                            o_ref, *, T, H, W, C, G, tT):
    f32 = jnp.float32
    gs = C // G
    n = float(T * H * W * gs)
    s = stats_ref[0, 0:1, :]                         # (1, C) per-channel sum
    q = stats_ref[0, 1:2, :]                         # (1, C) per-channel sum sq
    if gs > 1:
        s = jnp.broadcast_to(jnp.sum(s.reshape(G, gs), axis=1, keepdims=True),
                             (G, gs)).reshape(1, C)
        q = jnp.broadcast_to(jnp.sum(q.reshape(G, gs), axis=1, keepdims=True),
                             (G, gs)).reshape(1, C)
    mean = s * (1.0 / n)
    var = jnp.maximum(q * (1.0 / n) - mean * mean, 0.0)
    inv = lax.rsqrt(var + 1e-6)
    scale = (gamma_ref[...] * inv).reshape(1, 1, 1, C)
    shift = (beta_ref[...] - gamma_ref[...] * inv * mean).reshape(1, 1, 1, C)

    normed = conv_ref[0] * scale + shift             # (tT, H, W, C)
    act = normed * jax.nn.sigmoid(normed)            # swish; dropout(p=0) = id
    o_ref[0] = (x_ref[0].astype(f32) + act).astype(o_ref.dtype)


# --------------------------------------------------------------------------
# Wrapper
# --------------------------------------------------------------------------
def _vmem_limit_bytes():
    """Generation-aware scoped-VMEM cap: ~48 MiB on v7x (64 MiB physical),
    ~112 MiB on v5e/v6e (128 MiB physical), conservative fallback otherwise."""
    try:
        cap = int(pltpu.get_tpu_info().vmem_capacity_bytes)
    except Exception:
        cap = 64 * 1024 * 1024
    return int(max(32 * 1024 * 1024, min(cap - 16 * 1024 * 1024,
                                         112 * 1024 * 1024)))


def _forward_impl(x, context, params, *, num_groups, t_tile, single_buffer_consts):
    B, T, H, W, C = x.shape
    Cc = context.shape[-1]
    assert C % num_groups == 0

    tT = max(1, min(t_tile if t_tile is not None else T, T))
    while T % tT:            # TODO(synk): derive tT from the VMEM budget at prod shapes
        tT -= 1
    NT = T // tT

    # glue (free XLA ops): spatial zero-pad of context, im2col weight reshape,
    # bf16 cast of the matmul weights (f32 kept for biases / affine / temp).
    ctx_pad = jnp.pad(context, ((0, 0), (1, 1), (1, 1), (0, 0)))
    w2 = params["w2"].reshape(9 * Cc, C).astype(jnp.bfloat16)
    w3 = params["w3"].reshape(3, 9 * C, C).astype(jnp.bfloat16)

    const_kw = {"pipeline_mode": pl.Buffered(1)} if single_buffer_consts else {}
    vmem_limit = _vmem_limit_bytes()

    flops1 = B * (2 * T * H * W * (27 * C) * C) + B * (2 * H * W * (9 * Cc) * C)
    bytes1 = (B * T * H * W * C * 4 + 2 * B * NT * H * W * C * 4
              + B * (H + 2) * (W + 2) * Cc * 4
              + B * T * H * W * C * 4
              + (27 * C * C + 9 * Cc * C) * 2 + (T + 4) * C * 4 + B * 2 * C * 4)
    ce1 = pl.CostEstimate(flops=flops1, transcendentals=0, bytes_accessed=bytes1)

    kern1 = partial(_conv_stats_kernel, T=T, H=H, W=W, C=C, Cc=Cc, tT=tT, NT=NT)
    conv_out, stats = pl.pallas_call(
        kern1,
        out_shape=(jax.ShapeDtypeStruct((B, T, H, W, C), jnp.float32),
                   jax.ShapeDtypeStruct((B, 2, C), jnp.float32)),
        grid_spec=pltpu.PrefetchScalarGridSpec(
            num_scalar_prefetch=0,
            grid=(B, NT),
            in_specs=[
                pl.BlockSpec((1, tT, H, W, C), lambda b, t: (b, t, 0, 0, 0)),   # x tile
                pl.BlockSpec((1, 1, H, W, C),                                   # left halo frame
                             lambda b, t: (b, jnp.maximum(t * tT - 1, 0), 0, 0, 0)),
                pl.BlockSpec((1, 1, H, W, C),                                   # right halo frame
                             lambda b, t: (b, jnp.minimum(t * tT + tT, T - 1), 0, 0, 0)),
                pl.BlockSpec((1, H + 2, W + 2, Cc), lambda b, t: (b, 0, 0, 0)), # padded ctx
                pl.BlockSpec((9 * Cc, C), lambda b, t: (0, 0), **const_kw),     # conv2d W (im2col)
                pl.BlockSpec((1, C), lambda b, t: (0, 0), **const_kw),          # conv2d bias
                pl.BlockSpec((T, 1, 1, C), lambda b, t: (0, 0, 0, 0), **const_kw),  # temp_embed
                pl.BlockSpec((3, 9 * C, C), lambda b, t: (0, 0, 0), **const_kw),    # conv3d W (dt slabs)
                pl.BlockSpec((1, C), lambda b, t: (0, 0), **const_kw),          # conv3d bias
            ],
            out_specs=[
                pl.BlockSpec((1, tT, H, W, C), lambda b, t: (b, t, 0, 0, 0)),   # conv intermediate
                pl.BlockSpec((1, 2, C), lambda b, t: (b, 0, 0)),                # per-batch stats acc
            ],
            scratch_shapes=[
                pltpu.VMEM((tT + 2, H + 2, W + 2, C), jnp.float32),   # padded pre (see header)
                pltpu.VMEM((tT * H * W, 9 * C), jnp.bfloat16),        # dt-slab im2col patch
                pltpu.VMEM((H * W, 9 * Cc), jnp.bfloat16),            # conv2d im2col patch
                pltpu.VMEM((H * W, C), jnp.float32),                  # ctx' (per batch)
            ],
        ),
        compiler_params=pltpu.CompilerParams(
            dimension_semantics=("parallel", "arbitrary"),
            vmem_limit_bytes=vmem_limit),
        cost_estimate=ce1,
    )(x, x, x, ctx_pad, w2, params["b2"], params["temp"], w3, params["b3"])

    ce2 = pl.CostEstimate(flops=B * T * H * W * C * 8,
                          transcendentals=B * T * H * W * C,
                          bytes_accessed=3 * B * T * H * W * C * 4 + B * 2 * C * 4)

    kern2 = partial(_norm_swish_skip_kernel, T=T, H=H, W=W, C=C,
                    G=num_groups, tT=tT)
    out = pl.pallas_call(
        kern2,
        out_shape=jax.ShapeDtypeStruct((B, T, H, W, C), x.dtype),
        grid_spec=pltpu.PrefetchScalarGridSpec(
            num_scalar_prefetch=0,
            grid=(B, NT),
            in_specs=[
                pl.BlockSpec((1, tT, H, W, C), lambda b, t: (b, t, 0, 0, 0)),   # conv intermediate
                pl.BlockSpec((1, tT, H, W, C), lambda b, t: (b, t, 0, 0, 0)),   # x (skip)
                pl.BlockSpec((1, 2, C), lambda b, t: (b, 0, 0)),                # stats
                pl.BlockSpec((1, C), lambda b, t: (0, 0), **const_kw),          # gamma
                pl.BlockSpec((1, C), lambda b, t: (0, 0), **const_kw),          # beta
            ],
            out_specs=pl.BlockSpec((1, tT, H, W, C), lambda b, t: (b, t, 0, 0, 0)),
        ),
        compiler_params=pltpu.CompilerParams(
            dimension_semantics=("parallel", "parallel"),
            vmem_limit_bytes=vmem_limit),
        cost_estimate=ce2,
    )(conv_out, x, stats, params["gamma"], params["beta"])
    return out


def add_fusion_forward(x, context, params, *, num_groups, t_tile=None):
    """x: (B, T, H, W, C) f32, context: (B, H, W, Cc) f32."""
    try:
        return _forward_impl(x, context, params, num_groups=num_groups,
                             t_tile=t_tile, single_buffer_consts=True)
    except Exception:
        # pl.Buffered(1) on constant-index operands is purely a VMEM-footprint
        # optimization; fall back to default double buffering if this toolchain
        # rejects single-buffered blocks.
        return _forward_impl(x, context, params, num_groups=num_groups,
                             t_tile=t_tile, single_buffer_consts=False)


# --------------------------------------------------------------------------
# Pure-JAX f32 reference with identical tap / weight conventions.
# --------------------------------------------------------------------------
def add_fusion_reference(x, context, p, *, num_groups):
    B, T, H, W, C = x.shape
    ctxp = jnp.pad(context, ((0, 0), (1, 1), (1, 1), (0, 0)))
    ctx_out = jnp.zeros((B, H, W, C), jnp.float32)
    k = 0
    for dh in range(3):
        for dw in range(3):
            ctx_out = ctx_out + jnp.einsum(
                "bhwc,cd->bhwd", ctxp[:, dh:dh + H, dw:dw + W, :], p["w2"][k])
            k += 1
    ctx_out = ctx_out + p["b2"].reshape(1, 1, 1, C)
    pre = x + ctx_out[:, None] + p["temp"][None]
    prep = jnp.pad(pre, ((0, 0), (1, 1), (1, 1), (1, 1), (0, 0)))
    conv = jnp.zeros((B, T, H, W, C), jnp.float32)
    k = 0
    for dt in range(3):
        for dh in range(3):
            for dw in range(3):
                conv = conv + jnp.einsum(
                    "bthwc,cd->bthwd",
                    prep[:, dt:dt + T, dh:dh + H, dw:dw + W, :], p["w3"][k])
                k += 1
    conv = conv + p["b3"].reshape(1, 1, 1, 1, C)
    G, gs = num_groups, C // num_groups
    v = conv.reshape(B, T * H * W, G, gs)
    mean = v.mean(axis=(1, 3), keepdims=True)
    var = v.var(axis=(1, 3), keepdims=True)
    normed = ((v - mean) / jnp.sqrt(var + 1e-6)).reshape(B, T, H, W, C)
    normed = normed * p["gamma"].reshape(1, 1, 1, 1, C) + p["beta"].reshape(1, 1, 1, 1, C)
    act = normed * jax.nn.sigmoid(normed)
    return x + act


def init_params(key, C, Cc, T):
    # The module defaults to zero_init=True (conv + norm-affine zeroed), which
    # makes forward(x) == x trivially.  Use deterministic NON-zero init
    # (zero_init=False behavior) so the kernel path is actually exercised.
    k = jax.random.split(key, 7)
    return dict(
        w2=0.05 * jax.random.normal(k[0], (9, Cc, C), jnp.float32),    # (dh*3+dw, Cin, Cout)
        b2=0.05 * jax.random.normal(k[1], (1, C), jnp.float32),
        temp=(0.02 * jax.random.truncated_normal(k[2], -2.0, 2.0, (T, 1, 1, C))
              ).astype(jnp.float32),                                   # trunc_normal std=0.02
        w3=0.05 * jax.random.normal(k[3], (27, C, C), jnp.float32),    # (dt*9+dh*3+dw, Cin, Cout)
        b3=0.05 * jax.random.normal(k[4], (1, C), jnp.float32),
        gamma=1.0 + 0.1 * jax.random.normal(k[5], (1, C), jnp.float32),
        beta=0.05 * jax.random.normal(k[6], (1, C), jnp.float32),
    )


if __name__ == "__main__":
    # dim=32 so Normalize(dim) == GroupNorm(32, 32) is valid; temp_dim == T.
    B, DIM, CTX_DIM, T, H, W = 2, 32, 8, 4, 8, 8
    NUM_GROUPS = 32

    kx, kc = jax.random.split(jax.random.PRNGKey(0))
    x = jax.random.normal(kx, (B, T, H, W, DIM), jnp.float32)         # torch x: (B, DIM, T, H, W)
    context = jax.random.normal(kc, (B, H, W, CTX_DIM), jnp.float32)  # torch ctx: (B, CTX_DIM, H, W)
    params = init_params(jax.random.PRNGKey(1), DIM, CTX_DIM, T)

    # t_tile=2 -> 2 serial T tiles per batch: exercises the halo frames and the
    # cross-tile GroupNorm statistics path.
    out = add_fusion_forward(x, context, params, num_groups=NUM_GROUPS, t_tile=2)
    out = jax.block_until_ready(out)

    ref = add_fusion_reference(x, context, params, num_groups=NUM_GROUPS)
    err = float(jnp.max(jnp.abs(out - ref)))
    assert out.shape == (B, T, H, W, DIM)
    # bf16 MXU operands with f32 accumulation -> a few 1e-2 worst case.
    assert err < 5e-2, f"max abs err vs reference: {err}"
    print("KERNEL_OK")
</pallas_src>

<mosaic_0001>
module attributes {stable_mosaic.version = 11 : i64} {
  func.func @_conv_stats_kernel(%arg0: i32, %arg1: i32, %arg2: memref<1x2x8x8x32xf32, #tpu.memory_space<vmem>>, %arg3: memref<1x1x8x8x32xf32, #tpu.memory_space<vmem>>, %arg4: memref<1x1x8x8x32xf32, #tpu.memory_space<vmem>>, %arg5: memref<1x10x10x8xf32, #tpu.memory_space<vmem>>, %arg6: memref<72x32xbf16, #tpu.memory_space<vmem>>, %arg7: memref<1x32xf32, #tpu.memory_space<vmem>>, %arg8: memref<4x1x1x32xf32, #tpu.memory_space<vmem>>, %arg9: memref<3x288x32xbf16, #tpu.memory_space<vmem>>, %arg10: memref<1x32xf32, #tpu.memory_space<vmem>>, %arg11: memref<1x2x8x8x32xf32, #tpu.memory_space<vmem>>, %arg12: memref<1x2x32xf32, #tpu.memory_space<vmem>>, %arg13: memref<4x10x10x32xf32, #tpu.memory_space<vmem>>, %arg14: memref<128x288xbf16, #tpu.memory_space<vmem>>, %arg15: memref<64x72xbf16, #tpu.memory_space<vmem>>, %arg16: memref<64x32xf32, #tpu.memory_space<vmem>>) attributes {dimension_semantics = [#tpu.dimension_semantics<parallel>, #tpu.dimension_semantics<arbitrary>], iteration_bounds = array<i64: 2, 2>, scalar_prefetch = 0 : i64, scratch_operands = 4 : i64, tpu.core_type = #tpu.core_type<tc>, window_params = [{transform_indices = @transform_0, window_bounds = array<i64: 1, 2, 8, 8, 32>}, {transform_indices = @transform_1, window_bounds = array<i64: 1, 1, 8, 8, 32>}, {transform_indices = @transform_2, window_bounds = array<i64: 1, 1, 8, 8, 32>}, {transform_indices = @transform_3, window_bounds = array<i64: 1, 10, 10, 8>}, {pipeline_mode = #tpu.pipeline_mode<synchronous>, transform_indices = @transform_4, window_bounds = array<i64: 72, 32>}, {pipeline_mode = #tpu.pipeline_mode<synchronous>, transform_indices = @transform_5, window_bounds = array<i64: 1, 32>}, {pipeline_mode = #tpu.pipeline_mode<synchronous>, transform_indices = @transform_6, window_bounds = array<i64: 4, 1, 1, 32>}, {pipeline_mode = #tpu.pipeline_mode<synchronous>, transform_indices = @transform_7, window_bounds = array<i64: 3, 288, 32>}, {pipeline_mode = #tpu.pipeline_mode<synchronous>, transform_indices = @transform_8, window_bounds = array<i64: 1, 32>}, {transform_indices = @transform_9, window_bounds = array<i64: 1, 2, 8, 8, 32>}, {transform_indices = @transform_10, window_bounds = array<i64: 1, 2, 32>}]} {
    %c2_i32 = arith.constant 2 : i32
    %0 = arith.muli %arg1, %c2_i32 : i32
    %c0_i32 = arith.constant 0 : i32
    %1 = arith.cmpi eq, %arg1, %c0_i32 : i32
    %2 = arith.extui %1 : i1 to i32
    %c0_i32_0 = arith.constant 0 : i32
    %3 = arith.cmpi ne, %2, %c0_i32_0 : i32
    scf.if %3 {
      %cst_235 = arith.constant 0.000000e+00 : f32
      %197 = vector.broadcast %cst_235 : f32 to vector<4x1x10x32xf32>
      %c0_236 = arith.constant 0 : index
      %c0_237 = arith.constant 0 : index
      %c0_238 = arith.constant 0 : index
      %c0_239 = arith.constant 0 : index
      %198 = vector.load %arg13[%c0_236, %c0_237, %c0_238, %c0_239] : memref<4x10x10x32xf32, #tpu.memory_space<vmem>>, vector<4x1x10x32xf32>
      tpu.vector_store %arg13[%c0_236, %c0_237, %c0_238, %c0_239], %197 {strides = array<i32>} : memref<4x10x10x32xf32, #tpu.memory_space<vmem>>, vector<4x1x10x32xf32>,
      %cst_240 = arith.constant 0.000000e+00 : f32
      %199 = vector.broadcast %cst_240 : f32 to vector<4x1x10x32xf32>
      %c0_241 = arith.constant 0 : index
      %c9 = arith.constant 9 : index
      %c0_242 = arith.constant 0 : index
      %c0_243 = arith.constant 0 : index
      %200 = vector.load %arg13[%c0_241, %c9, %c0_242, %c0_243] : memref<4x10x10x32xf32, #tpu.memory_space<vmem>>, vector<4x1x10x32xf32>
      tpu.vector_store %arg13[%c0_241, %c9, %c0_242, %c0_243], %199 {strides = array<i32>} : memref<4x10x10x32xf32, #tpu.memory_space<vmem>>, vector<4x1x10x32xf32>,
      %cst_244 = arith.constant 0.000000e+00 : f32
      %201 = vector.broadcast %cst_244 : f32 to vector<4x8x1x32xf32>
      %c0_245 = arith.constant 0 : index
      %c1_246 = arith.constant 1 : index
      %c0_247 = arith.constant 0 : index
      %c0_248 = arith.constant 0 : index
      %202 = vector.load %arg13[%c0_245, %c1_246, %c0_247, %c0_248] : memref<4x10x10x32xf32, #tpu.memory_space<vmem>>, vector<4x8x1x32xf32>
      tpu.vector_store %arg13[%c0_245, %c1_246, %c0_247, %c0_248], %201 {strides = array<i32>} : memref<4x10x10x32xf32, #tpu.memory_space<vmem>>, vector<4x8x1x32xf32>,
      %cst_249 = arith.constant 0.000000e+00 : f32
      %203 = vector.broadcast %cst_249 : f32 to vector<4x8x1x32xf32>
      %c0_250 = arith.constant 0 : index
      %c1_251 = arith.constant 1 : index
      %c9_252 = arith.constant 9 : index
      %c0_253 = arith.constant 0 : index
      %204 = vector.load %arg13[%c0_250, %c1_251, %c9_252, %c0_253] : memref<4x10x10x32xf32, #tpu.memory_space<vmem>>, vector<4x8x1x32xf32>
      tpu.vector_store %arg13[%c0_250, %c1_251, %c9_252, %c0_253], %203 {strides = array<i32>} : memref<4x10x10x32xf32, #tpu.memory_space<vmem>>, vector<4x8x1x32xf32>,
      %c0_254 = arith.constant 0 : index
      %c0_255 = arith.constant 0 : index
      %c0_256 = arith.constant 0 : index
      %c0_257 = arith.constant 0 : index
      %205 = vector.load %arg5[%c0_254, %c0_255, %c0_256, %c0_257] : memref<1x10x10x8xf32, #tpu.memory_space<vmem>>, vector<1x8x8x8xf32>
      %206 = vector.shape_cast %205 : vector<1x8x8x8xf32> to vector<8x8x8xf32>
      %207 = vector.shape_cast %206 : vector<8x8x8xf32> to vector<64x8xf32>
      %208 = arith.truncf %207 : vector<64x8xf32> to vector<64x8xbf16>
      %c0_258 = arith.constant 0 : index
      %c0_259 = arith.constant 0 : index
      %209 = vector.load %arg15[%c0_258, %c0_259] : memref<64x72xbf16, #tpu.memory_space<vmem>>, vector<64x8xbf16>
      tpu.vector_store %arg15[%c0_258, %c0_259], %208 {strides = array<i32>} : memref<64x72xbf16, #tpu.memory_space<vmem>>, vector<64x8xbf16>,
      %c0_260 = arith.constant 0 : index
      %c0_261 = arith.constant 0 : index
      %c1_262 = arith.constant 1 : index
      %c0_263 = arith.constant 0 : index
      %210 = vector.load %arg5[%c0_260, %c0_261, %c1_262, %c0_263] : memref<1x10x10x8xf32, #tpu.memory_space<vmem>>, vector<1x8x8x8xf32>
      %211 = vector.shape_cast %210 : vector<1x8x8x8xf32> to vector<8x8x8xf32>
      %212 = vector.shape_cast %211 : vector<8x8x8xf32> to vector<64x8xf32>
      %213 = arith.truncf %212 : vector<64x8xf32> to vector<64x8xbf16>
      %c0_264 = arith.constant 0 : index
      %c8 = arith.constant 8 : index
      %214 = vector.load %arg15[%c0_264, %c8] : memref<64x72xbf16, #tpu.memory_space<vmem>>, vector<64x8xbf16>
      tpu.vector_store %arg15[%c0_264, %c8], %213 {strides = array<i32>} : memref<64x72xbf16, #tpu.memory_space<vmem>>, vector<64x8xbf16>,
      %c0_265 = arith.constant 0 : index
      %c0_266 = arith.constant 0 : index
      %c2_267 = arith.constant 2 : index
      %c0_268 = arith.constant 0 : index
      %215 = vector.load %arg5[%c0_265, %c0_266, %c2_267, %c0_268] : memref<1x10x10x8xf32, #tpu.memory_space<vmem>>, vector<1x8x8x8xf32>
      %216 = vector.shape_cast %215 : vector<1x8x8x8xf32> to vector<8x8x8xf32>
      %217 = vector.shape_cast %216 : vector<8x8x8xf32> to vector<64x8xf32>
      %218 = arith.truncf %217 : vector<64x8xf32> to vector<64x8xbf16>
      %c0_269 = arith.constant 0 : index
      %c16 = arith.constant 16 : index
      %219 = vector.load %arg15[%c0_269, %c16] : memref<64x72xbf16, #tpu.memory_space<vmem>>, vector<64x8xbf16>
      tpu.vector_store %arg15[%c0_269, %c16], %218 {strides = array<i32>} : memref<64x72xbf16, #tpu.memory_space<vmem>>, vector<64x8xbf16>,
      %c0_270 = arith.constant 0 : index
      %c1_271 = arith.constant 1 : index
      %c0_272 = arith.constant 0 : index
      %c0_273 = arith.constant 0 : index
      %220 = vector.load %arg5[%c0_270, %c1_271, %c0_272, %c0_273] : memref<1x10x10x8xf32, #tpu.memory_space<vmem>>, vector<1x8x8x8xf32>
      %221 = vector.shape_cast %220 : vector<1x8x8x8xf32> to vector<8x8x8xf32>
      %222 = vector.shape_cast %221 : vector<8x8x8xf32> to vector<64x8xf32>
      %223 = arith.truncf %222 : vector<64x8xf32> to vector<64x8xbf16>
      %c0_274 = arith.constant 0 : index
      %c24 = arith.constant 24 : index
      %224 = vector.load %arg15[%c0_274, %c24] : memref<64x72xbf16, #tpu.memory_space<vmem>>, vector<64x8xbf16>
      tpu.vector_store %arg15[%c0_274, %c24], %223 {strides = array<i32>} : memref<64x72xbf16, #tpu.memory_space<vmem>>, vector<64x8xbf16>,
      %c0_275 = arith.constant 0 : index
      %c1_276 = arith.constant 1 : index
      %c1_277 = arith.constant 1 : index
      %c0_278 = arith.constant 0 : index
      %225 = vector.load %arg5[%c0_275, %c1_276, %c1_277, %c0_278] : memref<1x10x10x8xf32, #tpu.memory_space<vmem>>, vector<1x8x8x8xf32>
      %226 = vector.shape_cast %225 : vector<1x8x8x8xf32> to vector<8x8x8xf32>
      %227 = vector.shape_cast %226 : vector<8x8x8xf32> to vector<64x8xf32>
      %228 = arith.truncf %227 : vector<64x8xf32> to vector<64x8xbf16>
      %c0_279 = arith.constant 0 : index
      %c32_280 = arith.constant 32 : index
      %229 = vector.load %arg15[%c0_279, %c32_280] : memref<64x72xbf16, #tpu.memory_space<vmem>>, vector<64x8xbf16>
      tpu.vector_store %arg15[%c0_279, %c32_280], %228 {strides = array<i32>} : memref<64x72xbf16, #tpu.memory_space<vmem>>, vector<64x8xbf16>,
      %c0_281 = arith.constant 0 : index
      %c1_282 = arith.constant 1 : index
      %c2_283 = arith.constant 2 : index
      %c0_284 = arith.constant 0 : index
      %230 = vector.load %arg5[%c0_281, %c1_282, %c2_283, %c0_284] : memref<1x10x10x8xf32, #tpu.memory_space<vmem>>, vector<1x8x8x8xf32>
      %231 = vector.shape_cast %230 : vector<1x8x8x8xf32> to vector<8x8x8xf32>
      %232 = vector.shape_cast %231 : vector<8x8x8xf32> to vector<64x8xf32>
      %233 = arith.truncf %232 : vector<64x8xf32> to vector<64x8xbf16>
      %c0_285 = arith.constant 0 : index
      %c40 = arith.constant 40 : index
      %234 = vector.load %arg15[%c0_285, %c40] : memref<64x72xbf16, #tpu.memory_space<vmem>>, vector<64x8xbf16>
      tpu.vector_store %arg15[%c0_285, %c40], %233 {strides = array<i32>} : memref<64x72xbf16, #tpu.memory_space<vmem>>, vector<64x8xbf16>,
      %c0_286 = arith.constant 0 : index
      %c2_287 = arith.constant 2 : index
      %c0_288 = arith.constant 0 : index
      %c0_289 = arith.constant 0 : index
      %235 = vector.load %arg5[%c0_286, %c2_287, %c0_288, %c0_289] : memref<1x10x10x8xf32, #tpu.memory_space<vmem>>, vector<1x8x8x8xf32>
      %236 = vector.shape_cast %235 : vector<1x8x8x8xf32> to vector<8x8x8xf32>
      %237 = vector.shape_cast %236 : vector<8x8x8xf32> to vector<64x8xf32>
      %238 = arith.truncf %237 : vector<64x8xf32> to vector<64x8xbf16>
      %c0_290 = arith.constant 0 : index
      %c48 = arith.constant 48 : index
      %239 = vector.load %arg15[%c0_290, %c48] : memref<64x72xbf16, #tpu.memory_space<vmem>>, vector<64x8xbf16>
      tpu.vector_store %arg15[%c0_290, %c48], %238 {strides = array<i32>} : memref<64x72xbf16, #tpu.memory_space<vmem>>, vector<64x8xbf16>,
      %c0_291 = arith.constant 0 : index
      %c2_292 = arith.constant 2 : index
      %c1_293 = arith.constant 1 : index
      %c0_294 = arith.constant 0 : index
      %240 = vector.load %arg5[%c0_291, %c2_292, %c1_293, %c0_294] : memref<1x10x10x8xf32, #tpu.memory_space<vmem>>, vector<1x8x8x8xf32>
      %241 = vector.shape_cast %240 : vector<1x8x8x8xf32> to vector<8x8x8xf32>
      %242 = vector.shape_cast %241 : vector<8x8x8xf32> to vector<64x8xf32>
      %243 = arith.truncf %242 : vector<64x8xf32> to vector<64x8xbf16>
      %c0_295 = arith.constant 0 : index
      %c56 = arith.constant 56 : index
      %244 = vector.load %arg15[%c0_295, %c56] : memref<64x72xbf16, #tpu.memory_space<vmem>>, vector<64x8xbf16>
      tpu.vector_store %arg15[%c0_295, %c56], %243 {strides = array<i32>} : memref<64x72xbf16, #tpu.memory_space<vmem>>, vector<64x8xbf16>,
      %c0_296 = arith.constant 0 : index
      %c2_297 = arith.constant 2 : index
      %c2_298 = arith.constant 2 : index
      %c0_299 = arith.constant 0 : index
      %245 = vector.load %arg5[%c0_296, %c2_297, %c2_298, %c0_299] : memref<1x10x10x8xf32, #tpu.memory_space<vmem>>, vector<1x8x8x8xf32>
      %246 = vector.shape_cast %245 : vector<1x8x8x8xf32> to vector<8x8x8xf32>
      %247 = vector.shape_cast %246 : vector<8x8x8xf32> to vector<64x8xf32>
      %248 = arith.truncf %247 : vector<64x8xf32> to vector<64x8xbf16>
      %c0_300 = arith.constant 0 : index
      %c64_301 = arith.constant 64 : index
      %249 = vector.load %arg15[%c0_300, %c64_301] : memref<64x72xbf16, #tpu.memory_space<vmem>>, vector<64x8xbf16>
      tpu.vector_store %arg15[%c0_300, %c64_301], %248 {strides = array<i32>} : memref<64x72xbf16, #tpu.memory_space<vmem>>, vector<64x8xbf16>,
      %c0_302 = arith.constant 0 : index
      %c0_303 = arith.constant 0 : index
      %250 = vector.load %arg15[%c0_302, %c0_303] : memref<64x72xbf16, #tpu.memory_space<vmem>>, vector<64x72xbf16>
      %c0_304 = arith.constant 0 : index
      %c0_305 = arith.constant 0 : index
      %251 = vector.load %arg6[%c0_304, %c0_305] : memref<72x32xbf16, #tpu.memory_space<vmem>>, vector<72x32xbf16>
      %cst_306 = arith.constant dense<0.000000e+00> : vector<64x32xf32>
      %252 = tpu.matmul %250, %251, %cst_306 {dimension_numbers = #tpu.dot_dimension_numbers<[1], [0], [0], [1], [0, 0, 1, 1], [], []>} : vector<64x72xbf16>, vector<72x32xbf16>, vector<64x32xf32> -> vector<64x32xf32>
      %c0_307 = arith.constant 0 : index
      %c0_308 = arith.constant 0 : index
      %253 = vector.load %arg7[%c0_307, %c0_308] : memref<1x32xf32, #tpu.memory_space<vmem>>, vector<1x32xf32>
      %254 = vector.broadcast %253 : vector<1x32xf32> to vector<64x32xf32>
      %255 = arith.addf %252, %254 : vector<64x32xf32>
      %c0_309 = arith.constant 0 : index
      %c0_310 = arith.constant 0 : index
      %256 = vector.load %arg16[%c0_309, %c0_310] : memref<64x32xf32, #tpu.memory_space<vmem>>, vector<64x32xf32>
      tpu.vector_store %arg16[%c0_309, %c0_310], %255 {strides = array<i32>} : memref<64x32xf32, #tpu.memory_space<vmem>>, vector<64x32xf32>,
    } else {
    }
    %c0 = arith.constant 0 : index
    %c0_1 = arith.constant 0 : index
    %4 = vector.load %arg16[%c0, %c0_1] : memref<64x32xf32, #tpu.memory_space<vmem>>, vector<64x32xf32>
    %5 = vector.shape_cast %4 : vector<64x32xf32> to vector<8x8x32xf32>
    %6 = arith.index_cast %0 : i32 to index
    %c0_2 = arith.constant 0 : index
    %c0_3 = arith.constant 0 : index
    %c0_4 = arith.constant 0 : index
    %7 = vector.load %arg8[%6, %c0_2, %c0_3, %c0_4] : memref<4x1x1x32xf32, #tpu.memory_space<vmem>>, vector<2x1x1x32xf32>
    %c0_5 = arith.constant 0 : index
    %c0_6 = arith.constant 0 : index
    %c0_7 = arith.constant 0 : index
    %c0_8 = arith.constant 0 : index
    %c0_9 = arith.constant 0 : index
    %8 = vector.load %arg2[%c0_5, %c0_6, %c0_7, %c0_8, %c0_9] : memref<1x2x8x8x32xf32, #tpu.memory_space<vmem>>, vector<1x2x8x8x32xf32>
    %9 = vector.shape_cast %8 : vector<1x2x8x8x32xf32> to vector<2x8x8x32xf32>
    %10 = vector.shape_cast %5 : vector<8x8x32xf32> to vector<1x8x8x32xf32>
    %11 = vector.broadcast %10 : vector<1x8x8x32xf32> to vector<2x8x8x32xf32>
    %12 = arith.addf %9, %11 : vector<2x8x8x32xf32>
    %13 = vector.broadcast %7 : vector<2x1x1x32xf32> to vector<2x8x8x32xf32>
    %14 = arith.addf %12, %13 : vector<2x8x8x32xf32>
    %c1 = arith.constant 1 : index
    %c1_10 = arith.constant 1 : index
    %c1_11 = arith.constant 1 : index
    %c0_12 = arith.constant 0 : index
    %15 = vector.load %arg13[%c1, %c1_10, %c1_11, %c0_12] : memref<4x10x10x32xf32, #tpu.memory_space<vmem>>, vector<2x8x8x32xf32>
    tpu.vector_store %arg13[%c1, %c1_10, %c1_11, %c0_12], %14 {strides = array<i32>} : memref<4x10x10x32xf32, #tpu.memory_space<vmem>>, vector<2x8x8x32xf32>,
    %c1_i32 = arith.constant 1 : i32
    %16 = arith.subi %0, %c1_i32 : i32
    %c0_i32_13 = arith.constant 0 : i32
    %17 = arith.maxsi %16, %c0_i32_13 : i32
    %c0_14 = arith.constant 0 : index
    %c0_15 = arith.constant 0 : index
    %c0_16 = arith.constant 0 : index
    %c0_17 = arith.constant 0 : index
    %c0_18 = arith.constant 0 : index
    %18 = vector.load %arg3[%c0_14, %c0_15, %c0_16, %c0_17, %c0_18] : memref<1x1x8x8x32xf32, #tpu.memory_space<vmem>>, vector<1x1x8x8x32xf32>
    %19 = vector.shape_cast %18 : vector<1x1x8x8x32xf32> to vector<8x8x32xf32>
    %20 = arith.addf %19, %5 : vector<8x8x32xf32>
    %21 = arith.index_cast %17 : i32 to index
    %c0_19 = arith.constant 0 : index
    %c0_20 = arith.constant 0 : index
    %c0_21 = arith.constant 0 : index
    %22 = vector.load %arg8[%21, %c0_19, %c0_20, %c0_21] : memref<4x1x1x32xf32, #tpu.memory_space<vmem>>, vector<1x1x1x32xf32>
    %23 = vector.shape_cast %22 : vector<1x1x1x32xf32> to vector<1x1x32xf32>
    %24 = vector.broadcast %23 : vector<1x1x32xf32> to vector<8x8x32xf32>
    %25 = arith.addf %20, %24 : vector<8x8x32xf32>
    %c0_i32_22 = arith.constant 0 : i32
    %26 = arith.cmpi sgt, %arg1, %c0_i32_22 : i32
    %cst = arith.constant 0.000000e+00 : f32
    %27 = vector.broadcast %cst : f32 to vector<8x8x32xf32>
    %28 = arith.select %26, %25, %27 : vector<8x8x32xf32>
    %c0_23 = arith.constant 0 : index
    %c1_24 = arith.constant 1 : index
    %c1_25 = arith.constant 1 : index
    %c0_26 = arith.constant 0 : index
    %29 = vector.load %arg13[%c0_23, %c1_24, %c1_25, %c0_26] : memref<4x10x10x32xf32, #tpu.memory_space<vmem>>, vector<1x8x8x32xf32>
    %30 = vector.shape_cast %29 : vector<1x8x8x32xf32> to vector<8x8x32xf32>
    %31 = vector.shape_cast %28 : vector<8x8x32xf32> to vector<1x8x8x32xf32>
    tpu.vector_store %arg13[%c0_23, %c1_24, %c1_25, %c0_26], %31 {strides = array<i32>} : memref<4x10x10x32xf32, #tpu.memory_space<vmem>>, vector<1x8x8x32xf32>,
    %c2_i32_27 = arith.constant 2 : i32
    %32 = arith.addi %0, %c2_i32_27 : i32
    %c3_i32 = arith.constant 3 : i32
    %33 = arith.minsi %32, %c3_i32 : i32
    %c0_28 = arith.constant 0 : index
    %c0_29 = arith.constant 0 : index
    %c0_30 = arith.constant 0 : index
    %c0_31 = arith.constant 0 : index
    %c0_32 = arith.constant 0 : index
    %34 = vector.load %arg4[%c0_28, %c0_29, %c0_30, %c0_31, %c0_32] : memref<1x1x8x8x32xf32, #tpu.memory_space<vmem>>, vector<1x1x8x8x32xf32>
    %35 = vector.shape_cast %34 : vector<1x1x8x8x32xf32> to vector<8x8x32xf32>
    %36 = arith.addf %35, %5 : vector<8x8x32xf32>
    %37 = arith.index_cast %33 : i32 to index
    %c0_33 = arith.constant 0 : index
    %c0_34 = arith.constant 0 : index
    %c0_35 = arith.constant 0 : index
    %38 = vector.load %arg8[%37, %c0_33, %c0_34, %c0_35] : memref<4x1x1x32xf32, #tpu.memory_space<vmem>>, vector<1x1x1x32xf32>
    %39 = vector.shape_cast %38 : vector<1x1x1x32xf32> to vector<1x1x32xf32>
    %40 = vector.broadcast %39 : vector<1x1x32xf32> to vector<8x8x32xf32>
    %41 = arith.addf %36, %40 : vector<8x8x32xf32>
    %c1_i32_36 = arith.constant 1 : i32
    %42 = arith.cmpi slt, %arg1, %c1_i32_36 : i32
    %cst_37 = arith.constant 0.000000e+00 : f32
    %43 = vector.broadcast %cst_37 : f32 to vector<8x8x32xf32>
    %44 = arith.select %42, %41, %43 : vector<8x8x32xf32>
    %c3 = arith.constant 3 : index
    %c1_38 = arith.constant 1 : index
    %c1_39 = arith.constant 1 : index
    %c0_40 = arith.constant 0 : index
    %45 = vector.load %arg13[%c3, %c1_38, %c1_39, %c0_40] : memref<4x10x10x32xf32, #tpu.memory_space<vmem>>, vector<1x8x8x32xf32>
    %46 = vector.shape_cast %45 : vector<1x8x8x32xf32> to vector<8x8x32xf32>
    %47 = vector.shape_cast %44 : vector<8x8x32xf32> to vector<1x8x8x32xf32>
    tpu.vector_store %arg13[%c3, %c1_38, %c1_39, %c0_40], %47 {strides = array<i32>} : memref<4x10x10x32xf32, #tpu.memory_space<vmem>>, vector<1x8x8x32xf32>,
    %c0_41 = arith.constant 0 : index
    %c0_42 = arith.constant 0 : index
    %c0_43 = arith.constant 0 : index
    %c0_44 = arith.constant 0 : index
    %48 = vector.load %arg13[%c0_41, %c0_42, %c0_43, %c0_44] : memref<4x10x10x32xf32, #tpu.memory_space<vmem>>, vector<2x8x8x32xf32>
    %49 = vector.shape_cast %48 : vector<2x8x8x32xf32> to vector<128x32xf32>
    %50 = arith.truncf %49 : vector<128x32xf32> to vector<128x32xbf16>
    %c0_45 = arith.constant 0 : index
    %c0_46 = arith.constant 0 : index
    %51 = vector.load %arg14[%c0_45, %c0_46] : memref<128x288xbf16, #tpu.memory_space<vmem>>, vector<128x32xbf16>
    tpu.vector_store %arg14[%c0_45, %c0_46], %50 {strides = array<i32>} : memref<128x288xbf16, #tpu.memory_space<vmem>>, vector<128x32xbf16>,
    %c0_47 = arith.constant 0 : index
    %c0_48 = arith.constant 0 : index
    %c1_49 = arith.constant 1 : index
    %c0_50 = arith.constant 0 : index
    %52 = vector.load %arg13[%c0_47, %c0_48, %c1_49, %c0_50] : memref<4x10x10x32xf32, #tpu.memory_space<vmem>>, vector<2x8x8x32xf32>
    %53 = vector.shape_cast %52 : vector<2x8x8x32xf32> to vector<128x32xf32>
    %54 = arith.truncf %53 : vector<128x32xf32> to vector<128x32xbf16>
    %c0_51 = arith.constant 0 : index
    %c32 = arith.constant 32 : index
    %55 = vector.load %arg14[%c0_51, %c32] : memref<128x288xbf16, #tpu.memory_space<vmem>>, vector<128x32xbf16>
    tpu.vector_store %arg14[%c0_51, %c32], %54 {strides = array<i32>} : memref<128x288xbf16, #tpu.memory_space<vmem>>, vector<128x32xbf16>,
    %c0_52 = arith.constant 0 : index
    %c0_53 = arith.constant 0 : index
    %c2 = arith.constant 2 : index
    %c0_54 = arith.constant 0 : index
    %56 = vector.load %arg13[%c0_52, %c0_53, %c2, %c0_54] : memref<4x10x10x32xf32, #tpu.memory_space<vmem>>, vector<2x8x8x32xf32>
    %57 = vector.shape_cast %56 : vector<2x8x8x32xf32> to vector<128x32xf32>
    %58 = arith.truncf %57 : vector<128x32xf32> to vector<128x32xbf16>
    %c0_55 = arith.constant 0 : index
    %c64 = arith.constant 64 : index
    %59 = vector.load %arg14[%c0_55, %c64] : memref<128x288xbf16, #tpu.memory_space<vmem>>, vector<128x32xbf16>
    tpu.vector_store %arg14[%c0_55, %c64], %58 {strides = array<i32>} : memref<128x288xbf16, #tpu.memory_space<vmem>>, vector<128x32xbf16>,
    %c0_56 = arith.constant 0 : index
    %c1_57 = arith.constant 1 : index
    %c0_58 = arith.constant 0 : index
    %c0_59 = arith.constant 0 : index
    %60 = vector.load %arg13[%c0_56, %c1_57, %c0_58, %c0_59] : memref<4x10x10x32xf32, #tpu.memory_space<vmem>>, vector<2x8x8x32xf32>
    %61 = vector.shape_cast %60 : vector<2x8x8x32xf32> to vector<128x32xf32>
    %62 = arith.truncf %61 : vector<128x32xf32> to vector<128x32xbf16>
    %c0_60 = arith.constant 0 : index
    %c96 = arith.constant 96 : index
    %63 = vector.load %arg14[%c0_60, %c96] : memref<128x288xbf16, #tpu.memory_space<vmem>>, vector<128x32xbf16>
    tpu.vector_store %arg14[%c0_60, %c96], %62 {strides = array<i32>} : memref<128x288xbf16, #tpu.memory_space<vmem>>, vector<128x32xbf16>,
    %c0_61 = arith.constant 0 : index
    %c1_62 = arith.constant 1 : index
    %c1_63 = arith.constant 1 : index
    %c0_64 = arith.constant 0 : index
    %64 = vector.load %arg13[%c0_61, %c1_62, %c1_63, %c0_64] : memref<4x10x10x32xf32, #tpu.memory_space<vmem>>, vector<2x8x8x32xf32>
    %65 = vector.shape_cast %64 : vector<2x8x8x32xf32> to vector<128x32xf32>
    %66 = arith.truncf %65 : vector<128x32xf32> to vector<128x32xbf16>
    %c0_65 = arith.constant 0 : index
    %c128 = arith.constant 128 : index
    %67 = vector.load %arg14[%c0_65, %c128] : memref<128x288xbf16, #tpu.memory_space<vmem>>, vector<128x32xbf16>
    tpu.vector_store %arg14[%c0_65, %c128], %66 {strides = array<i32>} : memref<128x288xbf16, #tpu.memory_space<vmem>>, vector<128x32xbf16>,
    %c0_66 = arith.constant 0 : index
    %c1_67 = arith.constant 1 : index
    %c2_68 = arith.constant 2 : index
    %c0_69 = arith.constant 0 : index
    %68 = vector.load %arg13[%c0_66, %c1_67, %c2_68, %c0_69] : memref<4x10x10x32xf32, #tpu.memory_space<vmem>>, vector<2x8x8x32xf32>
    %69 = vector.shape_cast %68 : vector<2x8x8x32xf32> to vector<128x32xf32>
    %70 = arith.truncf %69 : vector<128x32xf32> to vector<128x32xbf16>
    %c0_70 = arith.constant 0 : index
    %c160 = arith.constant 160 : index
    %71 = vector.load %arg14[%c0_70, %c160] : memref<128x288xbf16, #tpu.memory_space<vmem>>, vector<128x32xbf16>
    tpu.vector_store %arg14[%c0_70, %c160], %70 {strides = array<i32>} : memref<128x288xbf16, #tpu.memory_space<vmem>>, vector<128x32xbf16>,
    %c0_71 = arith.constant 0 : index
    %c2_72 = arith.constant 2 : index
    %c0_73 = arith.constant 0 : index
    %c0_74 = arith.constant 0 : index
    %72 = vector.load %arg13[%c0_71, %c2_72, %c0_73, %c0_74] : memref<4x10x10x32xf32, #tpu.memory_space<vmem>>, vector<2x8x8x32xf32>
    %73 = vector.shape_cast %72 : vector<2x8x8x32xf32> to vector<128x32xf32>
    %74 = arith.truncf %73 : vector<128x32xf32> to vector<128x32xbf16>
    %c0_75 = arith.constant 0 : index
    %c192 = arith.constant 192 : index
    %75 = vector.load %arg14[%c0_75, %c192] : memref<128x288xbf16, #tpu.memory_space<vmem>>, vector<128x32xbf16>
    tpu.vector_store %arg14[%c0_75, %c192], %74 {strides = array<i32>} : memref<128x288xbf16, #tpu.memory_space<vmem>>, vector<128x32xbf16>,
    %c0_76 = arith.constant 0 : index
    %c2_77 = arith.constant 2 : index
    %c1_78 = arith.constant 1 : index
    %c0_79 = arith.constant 0 : index
    %76 = vector.load %arg13[%c0_76, %c2_77, %c1_78, %c0_79] : memref<4x10x10x32xf32, #tpu.memory_space<vmem>>, vector<2x8x8x32xf32>
    %77 = vector.shape_cast %76 : vector<2x8x8x32xf32> to vector<128x32xf32>
    %78 = arith.truncf %77 : vector<128x32xf32> to vector<128x32xbf16>
    %c0_80 = arith.constant 0 : index
    %c224 = arith.constant 224 : index
    %79 = vector.load %arg14[%c0_80, %c224] : memref<128x288xbf16, #tpu.memory_space<vmem>>, vector<128x32xbf16>
    tpu.vector_store %arg14[%c0_80, %c224], %78 {strides = array<i32>} : memref<128x288xbf16, #tpu.memory_space<vmem>>, vector<128x32xbf16>,
    %c0_81 = arith.constant 0 : index
    %c2_82 = arith.constant 2 : index
    %c2_83 = arith.constant 2 : index
    %c0_84 = arith.constant 0 : index
    %80 = vector.load %arg13[%c0_81, %c2_82, %c2_83, %c0_84] : memref<4x10x10x32xf32, #tpu.memory_space<vmem>>, vector<2x8x8x32xf32>
    %81 = vector.shape_cast %80 : vector<2x8x8x32xf32> to vector<128x32xf32>
    %82 = arith.truncf %81 : vector<128x32xf32> to vector<128x32xbf16>
    %c0_85 = arith.constant 0 : index
    %c256 = arith.constant 256 : index
    %83 = vector.load %arg14[%c0_85, %c256] : memref<128x288xbf16, #tpu.memory_space<vmem>>, vector<128x32xbf16>
    tpu.vector_store %arg14[%c0_85, %c256], %82 {strides = array<i32>} : memref<128x288xbf16, #tpu.memory_space<vmem>>, vector<128x32xbf16>,
    %c0_86 = arith.constant 0 : index
    %c0_87 = arith.constant 0 : index
    %84 = vector.load %arg14[%c0_86, %c0_87] : memref<128x288xbf16, #tpu.memory_space<vmem>>, vector<128x288xbf16>
    %c0_88 = arith.constant 0 : index
    %c0_89 = arith.constant 0 : index
    %c0_90 = arith.constant 0 : index
    %85 = vector.load %arg9[%c0_88, %c0_89, %c0_90] : memref<3x288x32xbf16, #tpu.memory_space<vmem>>, vector<1x288x32xbf16>
    %86 = vector.shape_cast %85 : vector<1x288x32xbf16> to vector<288x32xbf16>
    %cst_91 = arith.constant dense<0.000000e+00> : vector<128x32xf32>
    %87 = tpu.matmul %84, %86, %cst_91 {dimension_numbers = #tpu.dot_dimension_numbers<[1], [0], [0], [1], [0, 0, 1, 1], [], []>} : vector<128x288xbf16>, vector<288x32xbf16>, vector<128x32xf32> -> vector<128x32xf32>
    %c1_92 = arith.constant 1 : index
    %c0_93 = arith.constant 0 : index
    %c0_94 = arith.constant 0 : index
    %c0_95 = arith.constant 0 : index
    %88 = vector.load %arg13[%c1_92, %c0_93, %c0_94, %c0_95] : memref<4x10x10x32xf32, #tpu.memory_space<vmem>>, vector<2x8x8x32xf32>
    %89 = vector.shape_cast %88 : vector<2x8x8x32xf32> to vector<128x32xf32>
    %90 = arith.truncf %89 : vector<128x32xf32> to vector<128x32xbf16>
    %c0_96 = arith.constant 0 : index
    %c0_97 = arith.constant 0 : index
    %91 = vector.load %arg14[%c0_96, %c0_97] : memref<128x288xbf16, #tpu.memory_space<vmem>>, vector<128x32xbf16>
    tpu.vector_store %arg14[%c0_96, %c0_97], %90 {strides = array<i32>} : memref<128x288xbf16, #tpu.memory_space<vmem>>, vector<128x32xbf16>,
    %c1_98 = arith.constant 1 : index
    %c0_99 = arith.constant 0 : index
    %c1_100 = arith.constant 1 : index
    %c0_101 = arith.constant 0 : index
    %92 = vector.load %arg13[%c1_98, %c0_99, %c1_100, %c0_101] : memref<4x10x10x32xf32, #tpu.memory_space<vmem>>, vector<2x8x8x32xf32>
    %93 = vector.shape_cast %92 : vector<2x8x8x32xf32> to vector<128x32xf32>
    %94 = arith.truncf %93 : vector<128x32xf32> to vector<128x32xbf16>
    %c0_102 = arith.constant 0 : index
    %c32_103 = arith.constant 32 : index
    %95 = vector.load %arg14[%c0_102, %c32_103] : memref<128x288xbf16, #tpu.memory_space<vmem>>, vector<128x32xbf16>
    tpu.vector_store %arg14[%c0_102, %c32_103], %94 {strides = array<i32>} : memref<128x288xbf16, #tpu.memory_space<vmem>>, vector<128x32xbf16>,
    %c1_104 = arith.constant 1 : index
    %c0_105 = arith.constant 0 : index
    %c2_106 = arith.constant 2 : index
    %c0_107 = arith.constant 0 : index
    %96 = vector.load %arg13[%c1_104, %c0_105, %c2_106, %c0_107] : memref<4x10x10x32xf32, #tpu.memory_space<vmem>>, vector<2x8x8x32xf32>
    %97 = vector.shape_cast %96 : vector<2x8x8x32xf32> to vector<128x32xf32>
    %98 = arith.truncf %97 : vector<128x32xf32> to vector<128x32xbf16>
    %c0_108 = arith.constant 0 : index
    %c64_109 = arith.constant 64 : index
    %99 = vector.load %arg14[%c0_108, %c64_109] : memref<128x288xbf16, #tpu.memory_space<vmem>>, vector<128x32xbf16>
    tpu.vector_store %arg14[%c0_108, %c64_109], %98 {strides = array<i32>} : memref<128x288xbf16, #tpu.memory_space<vmem>>, vector<128x32xbf16>,
    %c1_110 = arith.constant 1 : index
    %c1_111 = arith.constant 1 : index
    %c0_112 = arith.constant 0 : index
    %c0_113 = arith.constant 0 : index
    %100 = vector.load %arg13[%c1_110, %c1_111, %c0_112, %c0_113] : memref<4x10x10x32xf32, #tpu.memory_space<vmem>>, vector<2x8x8x32xf32>
    %101 = vector.shape_cast %100 : vector<2x8x8x32xf32> to vector<128x32xf32>
    %102 = arith.truncf %101 : vector<128x32xf32> to vector<128x32xbf16>
    %c0_114 = arith.constant 0 : index
    %c96_115 = arith.constant 96 : index
    %103 = vector.load %arg14[%c0_114, %c96_115] : memref<128x288xbf16, #tpu.memory_space<vmem>>, vector<128x32xbf16>
    tpu.vector_store %arg14[%c0_114, %c96_115], %102 {strides = array<i32>} : memref<128x288xbf16, #tpu.memory_space<vmem>>, vector<128x32xbf16>,
    %c1_116 = arith.constant 1 : index
    %c1_117 = arith.constant 1 : index
    %c1_118 = arith.constant 1 : index
    %c0_119 = arith.constant 0 : index
    %104 = vector.load %arg13[%c1_116, %c1_117, %c1_118, %c0_119] : memref<4x10x10x32xf32, #tpu.memory_space<vmem>>, vector<2x8x8x32xf32>
    %105 = vector.shape_cast %104 : vector<2x8x8x32xf32> to vector<128x32xf32>
    %106 = arith.truncf %105 : vector<128x32xf32> to vector<128x32xbf16>
    %c0_120 = arith.constant 0 : index
    %c128_121 = arith.constant 128 : index
    %107 = vector.load %arg14[%c0_120, %c128_121] : memref<128x288xbf16, #tpu.memory_space<vmem>>, vector<128x32xbf16>
    tpu.vector_store %arg14[%c0_120, %c128_121], %106 {strides = array<i32>} : memref<128x288xbf16, #tpu.memory_space<vmem>>, vector<128x32xbf16>,
    %c1_122 = arith.constant 1 : index
    %c1_123 = arith.constant 1 : index
    %c2_124 = arith.constant 2 : index
    %c0_125 = arith.constant 0 : index
    %108 = vector.load %arg13[%c1_122, %c1_123, %c2_124, %c0_125] : memref<4x10x10x32xf32, #tpu.memory_space<vmem>>, vector<2x8x8x32xf32>
    %109 = vector.shape_cast %108 : vector<2x8x8x32xf32> to vector<128x32xf32>
    %110 = arith.truncf %109 : vector<128x32xf32> to vector<128x32xbf16>
    %c0_126 = arith.constant 0 : index
    %c160_127 = arith.constant 160 : index
    %111 = vector.load %arg14[%c0_126, %c160_127] : memref<128x288xbf16, #tpu.memory_space<vmem>>, vector<128x32xbf16>
    tpu.vector_store %arg14[%c0_126, %c160_127], %110 {strides = array<i32>} : memref<128x288xbf16, #tpu.memory_space<vmem>>, vector<128x32xbf16>,
    %c1_128 = arith.constant 1 : index
    %c2_129 = arith.constant 2 : index
    %c0_130 = arith.constant 0 : index
    %c0_131 = arith.constant 0 : index
    %112 = vector.load %arg13[%c1_128, %c2_129, %c0_130, %c0_131] : memref<4x10x10x32xf32, #tpu.memory_space<vmem>>, vector<2x8x8x32xf32>
    %113 = vector.shape_cast %112 : vector<2x8x8x32xf32> to vector<128x32xf32>
    %114 = arith.truncf %113 : vector<128x32xf32> to vector<128x32xbf16>
    %c0_132 = arith.constant 0 : index
    %c192_133 = arith.constant 192 : index
    %115 = vector.load %arg14[%c0_132, %c192_133] : memref<128x288xbf16, #tpu.memory_space<vmem>>, vector<128x32xbf16>
    tpu.vector_store %arg14[%c0_132, %c192_133], %114 {strides = array<i32>} : memref<128x288xbf16, #tpu.memory_space<vmem>>, vector<128x32xbf16>,
    %c1_134 = arith.constant 1 : index
    %c2_135 = arith.constant 2 : index
    %c1_136 = arith.constant 1 : index
    %c0_137 = arith.constant 0 : index
    %116 = vector.load %arg13[%c1_134, %c2_135, %c1_136, %c0_137] : memref<4x10x10x32xf32, #tpu.memory_space<vmem>>, vector<2x8x8x32xf32>
    %117 = vector.shape_cast %116 : vector<2x8x8x32xf32> to vector<128x32xf32>
    %118 = arith.truncf %117 : vector<128x32xf32> to vector<128x32xbf16>
    %c0_138 = arith.constant 0 : index
    %c224_139 = arith.constant 224 : index
    %119 = vector.load %arg14[%c0_138, %c224_139] : memref<128x288xbf16, #tpu.memory_space<vmem>>, vector<128x32xbf16>
    tpu.vector_store %arg14[%c0_138, %c224_139], %118 {strides = array<i32>} : memref<128x288xbf16, #tpu.memory_space<vmem>>, vector<128x32xbf16>,
    %c1_140 = arith.constant 1 : index
    %c2_141 = arith.constant 2 : index
    %c2_142 = arith.constant 2 : index
    %c0_143 = arith.constant 0 : index
    %120 = vector.load %arg13[%c1_140, %c2_141, %c2_142, %c0_143] : memref<4x10x10x32xf32, #tpu.memory_space<vmem>>, vector<2x8x8x32xf32>
    %121 = vector.shape_cast %120 : vector<2x8x8x32xf32> to vector<128x32xf32>
    %122 = arith.truncf %121 : vector<128x32xf32> to vector<128x32xbf16>
    %c0_144 = arith.constant 0 : index
    %c256_145 = arith.constant 256 : index
    %123 = vector.load %arg14[%c0_144, %c256_145] : memref<128x288xbf16, #tpu.memory_space<vmem>>, vector<128x32xbf16>
    tpu.vector_store %arg14[%c0_144, %c256_145], %122 {strides = array<i32>} : memref<128x288xbf16, #tpu.memory_space<vmem>>, vector<128x32xbf16>,
    %c0_146 = arith.constant 0 : index
    %c0_147 = arith.constant 0 : index
    %124 = vector.load %arg14[%c0_146, %c0_147] : memref<128x288xbf16, #tpu.memory_space<vmem>>, vector<128x288xbf16>
    %c1_148 = arith.constant 1 : index
    %c0_149 = arith.constant 0 : index
    %c0_150 = arith.constant 0 : index
    %125 = vector.load %arg9[%c1_148, %c0_149, %c0_150] : memref<3x288x32xbf16, #tpu.memory_space<vmem>>, vector<1x288x32xbf16>
    %126 = vector.shape_cast %125 : vector<1x288x32xbf16> to vector<288x32xbf16>
    %cst_151 = arith.constant dense<0.000000e+00> : vector<128x32xf32>
    %127 = tpu.matmul %124, %126, %cst_151 {dimension_numbers = #tpu.dot_dimension_numbers<[1], [0], [0], [1], [0, 0, 1, 1], [], []>} : vector<128x288xbf16>, vector<288x32xbf16>, vector<128x32xf32> -> vector<128x32xf32>
    %128 = arith.addf %87, %127 : vector<128x32xf32>
    %c2_152 = arith.constant 2 : index
    %c0_153 = arith.constant 0 : index
    %c0_154 = arith.constant 0 : index
    %c0_155 = arith.constant 0 : index
    %129 = vector.load %arg13[%c2_152, %c0_153, %c0_154, %c0_155] : memref<4x10x10x32xf32, #tpu.memory_space<vmem>>, vector<2x8x8x32xf32>
    %130 = vector.shape_cast %129 : vector<2x8x8x32xf32> to vector<128x32xf32>
    %131 = arith.truncf %130 : vector<128x32xf32> to vector<128x32xbf16>
    %c0_156 = arith.constant 0 : index
    %c0_157 = arith.constant 0 : index
    %132 = vector.load %arg14[%c0_156, %c0_157] : memref<128x288xbf16, #tpu.memory_space<vmem>>, vector<128x32xbf16>
    tpu.vector_store %arg14[%c0_156, %c0_157], %131 {strides = array<i32>} : memref<128x288xbf16, #tpu.memory_space<vmem>>, vector<128x32xbf16>,
    %c2_158 = arith.constant 2 : index
    %c0_159 = arith.constant 0 : index
    %c1_160 = arith.constant 1 : index
    %c0_161 = arith.constant 0 : index
    %133 = vector.load %arg13[%c2_158, %c0_159, %c1_160, %c0_161] : memref<4x10x10x32xf32, #tpu.memory_space<vmem>>, vector<2x8x8x32xf32>
    %134 = vector.shape_cast %133 : vector<2x8x8x32xf32> to vector<128x32xf32>
    %135 = arith.truncf %134 : vector<128x32xf32> to vector<128x32xbf16>
    %c0_162 = arith.constant 0 : index
    %c32_163 = arith.constant 32 : index
    %136 = vector.load %arg14[%c0_162, %c32_163] : memref<128x288xbf16, #tpu.memory_space<vmem>>, vector<128x32xbf16>
    tpu.vector_store %arg14[%c0_162, %c32_163], %135 {strides = array<i32>} : memref<128x288xbf16, #tpu.memory_space<vmem>>, vector<128x32xbf16>,
    %c2_164 = arith.constant 2 : index
    %c0_165 = arith.constant 0 : index
    %c2_166 = arith.constant 2 : index
    %c0_167 = arith.constant 0 : index
    %137 = vector.load %arg13[%c2_164, %c0_165, %c2_166, %c0_167] : memref<4x10x10x32xf32, #tpu.memory_space<vmem>>, vector<2x8x8x32xf32>
    %138 = vector.shape_cast %137 : vector<2x8x8x32xf32> to vector<128x32xf32>
    %139 = arith.truncf %138 : vector<128x32xf32> to vector<128x32xbf16>
    %c0_168 = arith.constant 0 : index
    %c64_169 = arith.constant 64 : index
    %140 = vector.load %arg14[%c0_168, %c64_169] : memref<128x288xbf16, #tpu.memory_space<vmem>>, vector<128x32xbf16>
    tpu.vector_store %arg14[%c0_168, %c64_169], %139 {strides = array<i32>} : memref<128x288xbf16, #tpu.memory_space<vmem>>, vector<128x32xbf16>,
    %c2_170 = arith.constant 2 : index
    %c1_171 = arith.constant 1 : index
    %c0_172 = arith.constant 0 : index
    %c0_173 = arith.constant 0 : index
    %141 = vector.load %arg13[%c2_170, %c1_171, %c0_172, %c0_173] : memref<4x10x10x32xf32, #tpu.memory_space<vmem>>, vector<2x8x8x32xf32>
    %142 = vector.shape_cast %141 : vector<2x8x8x32xf32> to vector<128x32xf32>
    %143 = arith.truncf %142 : vector<128x32xf32> to vector<128x32xbf16>
    %c0_174 = arith.constant 0 : index
    %c96_175 = arith.constant 96 : index
    %144 = vector.load %arg14[%c0_174, %c96_175] : memref<128x288xbf16, #tpu.memory_space<vmem>>, vector<128x32xbf16>
    tpu.vector_store %arg14[%c0_174, %c96_175], %143 {strides = array<i32>} : memref<128x288xbf16, #tpu.memory_space<vmem>>, vector<128x32xbf16>,
    %c2_176 = arith.constant 2 : index
    %c1_177 = arith.constant 1 : index
    %c1_178 = arith.constant 1 : index
    %c0_179 = arith.constant 0 : index
    %145 = vector.load %arg13[%c2_176, %c1_177, %c1_178, %c0_179] : memref<4x10x10x32xf32, #tpu.memory_space<vmem>>, vector<2x8x8x32xf32>
    %146 = vector.shape_cast %145 : vector<2x8x8x32xf32> to vector<128x32xf32>
    %147 = arith.truncf %146 : vector<128x32xf32> to vector<128x32xbf16>
    %c0_180 = arith.constant 0 : index
    %c128_181 = arith.constant 128 : index
    %148 = vector.load %arg14[%c0_180, %c128_181] : memref<128x288xbf16, #tpu.memory_space<vmem>>, vector<128x32xbf16>
    tpu.vector_store %arg14[%c0_180, %c128_181], %147 {strides = array<i32>} : memref<128x288xbf16, #tpu.memory_space<vmem>>, vector<128x32xbf16>,
    %c2_182 = arith.constant 2 : index
    %c1_183 = arith.constant 1 : index
    %c2_184 = arith.constant 2 : index
    %c0_185 = arith.constant 0 : index
    %149 = vector.load %arg13[%c2_182, %c1_183, %c2_184, %c0_185] : memref<4x10x10x32xf32, #tpu.memory_space<vmem>>, vector<2x8x8x32xf32>
    %150 = vector.shape_cast %149 : vector<2x8x8x32xf32> to vector<128x32xf32>
    %151 = arith.truncf %150 : vector<128x32xf32> to vector<128x32xbf16>
    %c0_186 = arith.constant 0 : index
    %c160_187 = arith.constant 160 : index
    %152 = vector.load %arg14[%c0_186, %c160_187] : memref<128x288xbf16, #tpu.memory_space<vmem>>, vector<128x32xbf16>
    tpu.vector_store %arg14[%c0_186, %c160_187], %151 {strides = array<i32>} : memref<128x288xbf16, #tpu.memory_space<vmem>>, vector<128x32xbf16>,
    %c2_188 = arith.constant 2 : index
    %c2_189 = arith.constant 2 : index
    %c0_190 = arith.constant 0 : index
    %c0_191 = arith.constant 0 : index
    %153 = vector.load %arg13[%c2_188, %c2_189, %c0_190, %c0_191] : memref<4x10x10x32xf32, #tpu.memory_space<vmem>>, vector<2x8x8x32xf32>
    %154 = vector.shape_cast %153 : vector<2x8x8x32xf32> to vector<128x32xf32>
    %155 = arith.truncf %154 : vector<128x32xf32> to vector<128x32xbf16>
    %c0_192 = arith.constant 0 : index
    %c192_193 = arith.constant 192 : index
    %156 = vector.load %arg14[%c0_192, %c192_193] : memref<128x288xbf16, #tpu.memory_space<vmem>>, vector<128x32xbf16>
    tpu.vector_store %arg14[%c0_192, %c192_193], %155 {strides = array<i32>} : memref<128x288xbf16, #tpu.memory_space<vmem>>, vector<128x32xbf16>,
    %c2_194 = arith.constant 2 : index
    %c2_195 = arith.constant 2 : index
    %c1_196 = arith.constant 1 : index
    %c0_197 = arith.constant 0 : index
    %157 = vector.load %arg13[%c2_194, %c2_195, %c1_196, %c0_197] : memref<4x10x10x32xf32, #tpu.memory_space<vmem>>, vector<2x8x8x32xf32>
    %158 = vector.shape_cast %157 : vector<2x8x8x32xf32> to vector<128x32xf32>
    %159 = arith.truncf %158 : vector<128x32xf32> to vector<128x32xbf16>
    %c0_198 = arith.constant 0 : index
    %c224_199 = arith.constant 224 : index
    %160 = vector.load %arg14[%c0_198, %c224_199] : memref<128x288xbf16, #tpu.memory_space<vmem>>, vector<128x32xbf16>
    tpu.vector_store %arg14[%c0_198, %c224_199], %159 {strides = array<i32>} : memref<128x288xbf16, #tpu.memory_space<vmem>>, vector<128x32xbf16>,
    %c2_200 = arith.constant 2 : index
    %c2_201 = arith.constant 2 : index
    %c2_202 = arith.constant 2 : index
    %c0_203 = arith.constant 0 : index
    %161 = vector.load %arg13[%c2_200, %c2_201, %c2_202, %c0_203] : memref<4x10x10x32xf32, #tpu.memory_space<vmem>>, vector<2x8x8x32xf32>
    %162 = vector.shape_cast %161 : vector<2x8x8x32xf32> to vector<128x32xf32>
    %163 = arith.truncf %162 : vector<128x32xf32> to vector<128x32xbf16>
    %c0_204 = arith.constant 0 : index
    %c256_205 = arith.constant 256 : index
    %164 = vector.load %arg14[%c0_204, %c256_205] : memref<128x288xbf16, #tpu.memory_space<vmem>>, vector<128x32xbf16>
    tpu.vector_store %arg14[%c0_204, %c256_205], %163 {strides = array<i32>} : memref<128x288xbf16, #tpu.memory_space<vmem>>, vector<128x32xbf16>,
    %c0_206 = arith.constant 0 : index
    %c0_207 = arith.constant 0 : index
    %165 = vector.load %arg14[%c0_206, %c0_207] : memref<128x288xbf16, #tpu.memory_space<vmem>>, vector<128x288xbf16>
    %c2_208 = arith.constant 2 : index
    %c0_209 = arith.constant 0 : index
    %c0_210 = arith.constant 0 : index
    %166 = vector.load %arg9[%c2_208, %c0_209, %c0_210] : memref<3x288x32xbf16, #tpu.memory_space<vmem>>, vector<1x288x32xbf16>
    %167 = vector.shape_cast %166 : vector<1x288x32xbf16> to vector<288x32xbf16>
    %cst_211 = arith.constant dense<0.000000e+00> : vector<128x32xf32>
    %168 = tpu.matmul %165, %167, %cst_211 {dimension_numbers = #tpu.dot_dimension_numbers<[1], [0], [0], [1], [0, 0, 1, 1], [], []>} : vector<128x288xbf16>, vector<288x32xbf16>, vector<128x32xf32> -> vector<128x32xf32>
    %169 = arith.addf %128, %168 : vector<128x32xf32>
    %c0_212 = arith.constant 0 : index
    %c0_213 = arith.constant 0 : index
    %170 = vector.load %arg10[%c0_212, %c0_213] : memref<1x32xf32, #tpu.memory_space<vmem>>, vector<1x32xf32>
    %171 = vector.broadcast %170 : vector<1x32xf32> to vector<128x32xf32>
    %172 = arith.addf %169, %171 : vector<128x32xf32>
    %173 = vector.shape_cast %172 : vector<128x32xf32> to vector<2x8x8x32xf32>
    %c0_214 = arith.constant 0 : index
    %c0_215 = arith.constant 0 : index
    %c0_216 = arith.constant 0 : index
    %c0_217 = arith.constant 0 : index
    %c0_218 = arith.constant 0 : index
    %174 = vector.load %arg11[%c0_214, %c0_215, %c0_216, %c0_217, %c0_218] : memref<1x2x8x8x32xf32, #tpu.memory_space<vmem>>, vector<1x2x8x8x32xf32>
    %175 = vector.shape_cast %174 : vector<1x2x8x8x32xf32> to vector<2x8x8x32xf32>
    %176 = vector.shape_cast %173 : vector<2x8x8x32xf32> to vector<1x2x8x8x32xf32>
    tpu.vector_store %arg11[%c0_214, %c0_215, %c0_216, %c0_217, %c0_218], %176 {strides = array<i32>} : memref<1x2x8x8x32xf32, #tpu.memory_space<vmem>>, vector<1x2x8x8x32xf32>,
    %c0_i32_219 = arith.constant 0 : i32
    %177 = arith.cmpi eq, %arg1, %c0_i32_219 : i32
    %178 = arith.extui %177 : i1 to i32
    %c0_i32_220 = arith.constant 0 : i32
    %179 = arith.cmpi ne, %178, %c0_i32_220 : i32
    scf.if %179 {
      %cst_235 = arith.constant 0.000000e+00 : f32
      %197 = vector.broadcast %cst_235 : f32 to vector<1x2x32xf32>
      %c0_236 = arith.constant 0 : index
      %c0_237 = arith.constant 0 : index
      %c0_238 = arith.constant 0 : index
      %198 = vector.load %arg12[%c0_236, %c0_237, %c0_238] : memref<1x2x32xf32, #tpu.memory_space<vmem>>, vector<1x2x32xf32>
      tpu.vector_store %arg12[%c0_236, %c0_237, %c0_238], %197 {strides = array<i32>} : memref<1x2x32xf32, #tpu.memory_space<vmem>>, vector<1x2x32xf32>,
    } else {
    }
    %c0_221 = arith.constant 0 : index
    %c0_222 = arith.constant 0 : index
    %c0_223 = arith.constant 0 : index
    %180 = vector.load %arg12[%c0_221, %c0_222, %c0_223] : memref<1x2x32xf32, #tpu.memory_space<vmem>>, vector<1x1x32xf32>
    %181 = vector.shape_cast %180 : vector<1x1x32xf32> to vector<1x32xf32>
    %cst_224 = arith.constant dense<0.000000e+00> : vector<32xf32>
    %182 = vector.multi_reduction <add>, %172, %cst_224 [0] : vector<128x32xf32> to vector<32xf32>
    %183 = vector.shape_cast %182 : vector<32xf32> to vector<1x32xf32>
    %184 = arith.addf %181, %183 : vector<1x32xf32>
    %c0_225 = arith.constant 0 : index
    %c0_226 = arith.constant 0 : index
    %c0_227 = arith.constant 0 : index
    %185 = vector.load %arg12[%c0_225, %c0_226, %c0_227] : memref<1x2x32xf32, #tpu.memory_space<vmem>>, vector<1x1x32xf32>
    %186 = vector.shape_cast %185 : vector<1x1x32xf32> to vector<1x32xf32>
    %187 = vector.shape_cast %184 : vector<1x32xf32> to vector<1x1x32xf32>
    tpu.vector_store %arg12[%c0_225, %c0_226, %c0_227], %187 {strides = array<i32>} : memref<1x2x32xf32, #tpu.memory_space<vmem>>, vector<1x1x32xf32>,
    %c0_228 = arith.constant 0 : index
    %c1_229 = arith.constant 1 : index
    %c0_230 = arith.constant 0 : index
    %188 = vector.load %arg12[%c0_228, %c1_229, %c0_230] : memref<1x2x32xf32, #tpu.memory_space<vmem>>, vector<1x1x32xf32>
    %189 = vector.shape_cast %188 : vector<1x1x32xf32> to vector<1x32xf32>
    %190 = arith.mulf %172, %172 : vector<128x32xf32>
    %cst_231 = arith.constant dense<0.000000e+00> : vector<32xf32>
    %191 = vector.multi_reduction <add>, %190, %cst_231 [0] : vector<128x32xf32> to vector<32xf32>
    %192 = vector.shape_cast %191 : vector<32xf32> to vector<1x32xf32>
    %193 = arith.addf %189, %192 : vector<1x32xf32>
    %c0_232 = arith.constant 0 : index
    %c1_233 = arith.constant 1 : index
    %c0_234 = arith.constant 0 : index
    %194 = vector.load %arg12[%c0_232, %c1_233, %c0_234] : memref<1x2x32xf32, #tpu.memory_space<vmem>>, vector<1x1x32xf32>
    %195 = vector.shape_cast %194 : vector<1x1x32xf32> to vector<1x32xf32>
    %196 = vector.shape_cast %193 : vector<1x32xf32> to vector<1x1x32xf32>
    tpu.vector_store %arg12[%c0_232, %c1_233, %c0_234], %196 {strides = array<i32>} : memref<1x2x32xf32, #tpu.memory_space<vmem>>, vector<1x1x32xf32>,
    return
  }
  func.func @transform_0(%arg0: i32, %arg1: i32) -> (i32, i32, i32, i32, i32) {
    %c0_i32 = arith.constant 0 : i32
    %c0_i32_0 = arith.constant 0 : i32
    %c0_i32_1 = arith.constant 0 : i32
    %c0_i32_2 = arith.constant 0 : i32
    return %arg0, %arg1, %c0_i32, %c0_i32_0, %c0_i32_1 : i32, i32, i32, i32, i32
  }
  func.func @transform_1(%arg0: i32, %arg1: i32) -> (i32, i32, i32, i32, i32) {
    %c2_i32 = arith.constant 2 : i32
    %0 = arith.muli %arg1, %c2_i32 : i32
    %c1_i32 = arith.constant 1 : i32
    %1 = arith.subi %0, %c1_i32 : i32
    %c0_i32 = arith.constant 0 : i32
    %2 = arith.maxsi %1, %c0_i32 : i32
    %c0_i32_0 = arith.constant 0 : i32
    %c0_i32_1 = arith.constant 0 : i32
    %c0_i32_2 = arith.constant 0 : i32
    %c0_i32_3 = arith.constant 0 : i32
    return %arg0, %2, %c0_i32_0, %c0_i32_1, %c0_i32_2 : i32, i32, i32, i32, i32
  }
  func.func @transform_2(%arg0: i32, %arg1: i32) -> (i32, i32, i32, i32, i32) {
    %c2_i32 = arith.constant 2 : i32
    %0 = arith.muli %arg1, %c2_i32 : i32
    %c2_i32_0 = arith.constant 2 : i32
    %1 = arith.addi %0, %c2_i32_0 : i32
    %c3_i32 = arith.constant 3 : i32
    %2 = arith.minsi %1, %c3_i32 : i32
    %c0_i32 = arith.constant 0 : i32
    %c0_i32_1 = arith.constant 0 : i32
    %c0_i32_2 = arith.constant 0 : i32
    %c0_i32_3 = arith.constant 0 : i32
    return %arg0, %2, %c0_i32, %c0_i32_1, %c0_i32_2 : i32, i32, i32, i32, i32
  }
  func.func @transform_3(%arg0: i32, %arg1: i32) -> (i32, i32, i32, i32) {
    %c0_i32 = arith.constant 0 : i32
    %c0_i32_0 = arith.constant 0 : i32
    %c0_i32_1 = arith.constant 0 : i32
    %c0_i32_2 = arith.constant 0 : i32
    return %arg0, %c0_i32, %c0_i32_0, %c0_i32_1 : i32, i32, i32, i32
  }
  func.func @transform_4(%arg0: i32, %arg1: i32) -> (i32, i32) {
    %c0_i32 = arith.constant 0 : i32
    %c0_i32_0 = arith.constant 0 : i32
    %c0_i32_1 = arith.constant 0 : i32
    return %c0_i32, %c0_i32_0 : i32, i32
  }
  func.func @transform_5(%arg0: i32, %arg1: i32) -> (i32, i32) {
    %c0_i32 = arith.constant 0 : i32
    %c0_i32_0 = arith.constant 0 : i32
    %c0_i32_1 = arith.constant 0 : i32
    return %c0_i32, %c0_i32_0 : i32, i32
  }
  func.func @transform_6(%arg0: i32, %arg1: i32) -> (i32, i32, i32, i32) {
    %c0_i32 = arith.constant 0 : i32
    %c0_i32_0 = arith.constant 0 : i32
    %c0_i32_1 = arith.constant 0 : i32
    %c0_i32_2 = arith.constant 0 : i32
    %c0_i32_3 = arith.constant 0 : i32
    return %c0_i32, %c0_i32_0, %c0_i32_1, %c0_i32_2 : i32, i32, i32, i32
  }
  func.func @transform_7(%arg0: i32, %arg1: i32) -> (i32, i32, i32) {
    %c0_i32 = arith.constant 0 : i32
    %c0_i32_0 = arith.constant 0 : i32
    %c0_i32_1 = arith.constant 0 : i32
    %c0_i32_2 = arith.constant 0 : i32
    return %c0_i32, %c0_i32_0, %c0_i32_1 : i32, i32, i32
  }
  func.func @transform_8(%arg0: i32, %arg1: i32) -> (i32, i32) {
    %c0_i32 = arith.constant 0 : i32
    %c0_i32_0 = arith.constant 0 : i32
    %c0_i32_1 = arith.constant 0 : i32
    return %c0_i32, %c0_i32_0 : i32, i32
  }
  func.func @transform_9(%arg0: i32, %arg1: i32) -> (i32, i32, i32, i32, i32) {
    %c0_i32 = arith.constant 0 : i32
    %c0_i32_0 = arith.constant 0 : i32
    %c0_i32_1 = arith.constant 0 : i32
    %c0_i32_2 = arith.constant 0 : i32
    return %arg0, %arg1, %c0_i32, %c0_i32_0, %c0_i32_1 : i32, i32, i32, i32, i32
  }
  func.func @transform_10(%arg0: i32, %arg1: i32) -> (i32, i32, i32) {
    %c0_i32 = arith.constant 0 : i32
    %c0_i32_0 = arith.constant 0 : i32
    %c0_i32_1 = arith.constant 0 : i32
    return %arg0, %c0_i32, %c0_i32_0 : i32, i32, i32
  }
}

module attributes {stable_mosaic.version = 11 : i64} {
  func.func @_conv_stats_kernel(%arg0: i32, %arg1: i32, %arg2: memref<1x2x8x8x32xf32, #tpu.memory_space<vmem>>, %arg3: memref<1x1x8x8x32xf32, #tpu.memory_space<vmem>>, %arg4: memref<1x1x8x8x32xf32, #tpu.memory_space<vmem>>, %arg5: memref<1x10x10x8xf32, #tpu.memory_space<vmem>>, %arg6: memref<72x32xbf16, #tpu.memory_space<vmem>>, %arg7: memref<1x32xf32, #tpu.memory_space<vmem>>, %arg8: memref<4x1x1x32xf32, #tpu.memory_space<vmem>>, %arg9: memref<3x288x32xbf16, #tpu.memory_space<vmem>>, %arg10: memref<1x32xf32, #tpu.memory_space<vmem>>, %arg11: memref<1x2x8x8x32xf32, #tpu.memory_space<vmem>>, %arg12: memref<1x2x32xf32, #tpu.memory_space<vmem>>, %arg13: memref<4x10x10x32xf32, #tpu.memory_space<vmem>>, %arg14: memref<128x288xbf16, #tpu.memory_space<vmem>>, %arg15: memref<64x72xbf16, #tpu.memory_space<vmem>>, %arg16: memref<64x32xf32, #tpu.memory_space<vmem>>) attributes {dimension_semantics = [#tpu.dimension_semantics<parallel>, #tpu.dimension_semantics<arbitrary>], iteration_bounds = array<i64: 2, 2>, scalar_prefetch = 0 : i64, scratch_operands = 4 : i64, tpu.core_type = #tpu.core_type<tc>, window_params = [{transform_indices = @transform_0, window_bounds = array<i64: 1, 2, 8, 8, 32>}, {transform_indices = @transform_1, window_bounds = array<i64: 1, 1, 8, 8, 32>}, {transform_indices = @transform_2, window_bounds = array<i64: 1, 1, 8, 8, 32>}, {transform_indices = @transform_3, window_bounds = array<i64: 1, 10, 10, 8>}, {pipeline_mode = #tpu.pipeline_mode<synchronous>, transform_indices = @transform_4, window_bounds = array<i64: 72, 32>}, {pipeline_mode = #tpu.pipeline_mode<synchronous>, transform_indices = @transform_5, window_bounds = array<i64: 1, 32>}, {pipeline_mode = #tpu.pipeline_mode<synchronous>, transform_indices = @transform_6, window_bounds = array<i64: 4, 1, 1, 32>}, {pipeline_mode = #tpu.pipeline_mode<synchronous>, transform_indices = @transform_7, window_bounds = array<i64: 3, 288, 32>}, {pipeline_mode = #tpu.pipeline_mode<synchronous>, transform_indices = @transform_8, window_bounds = array<i64: 1, 32>}, {transform_indices = @transform_9, window_bounds = array<i64: 1, 2, 8, 8, 32>}, {transform_indices = @transform_10, window_bounds = array<i64: 1, 2, 32>}]} {
    %c2_i32 = arith.constant 2 : i32
    %0 = arith.muli %arg1, %c2_i32 : i32
    %c0_i32 = arith.constant 0 : i32
    %1 = arith.cmpi eq, %arg1, %c0_i32 : i32
    %2 = arith.extui %1 : i1 to i32
    %c0_i32_0 = arith.constant 0 : i32
    %3 = arith.cmpi ne, %2, %c0_i32_0 : i32
    scf.if %3 {
      %cst_235 = arith.constant 0.000000e+00 : f32
      %197 = vector.broadcast %cst_235 : f32 to vector<4x1x10x32xf32>
      %c0_236 = arith.constant 0 : index
      %c0_237 = arith.constant 0 : index
      %c0_238 = arith.constant 0 : index
      %c0_239 = arith.constant 0 : index
      %198 = vector.load %arg13[%c0_236, %c0_237, %c0_238, %c0_239] : memref<4x10x10x32xf32, #tpu.memory_space<vmem>>, vector<4x1x10x32xf32>
      tpu.vector_store %arg13[%c0_236, %c0_237, %c0_238, %c0_239], %197 {strides = array<i32>} : memref<4x10x10x32xf32, #tpu.memory_space<vmem>>, vector<4x1x10x32xf32>,
      %cst_240 = arith.constant 0.000000e+00 : f32
      %199 = vector.broadcast %cst_240 : f32 to vector<4x1x10x32xf32>
      %c0_241 = arith.constant 0 : index
      %c9 = arith.constant 9 : index
      %c0_242 = arith.constant 0 : index
      %c0_243 = arith.constant 0 : index
      %200 = vector.load %arg13[%c0_241, %c9, %c0_242, %c0_243] : memref<4x10x10x32xf32, #tpu.memory_space<vmem>>, vector<4x1x10x32xf32>
      tpu.vector_store %arg13[%c0_241, %c9, %c0_242, %c0_243], %199 {strides = array<i32>} : memref<4x10x10x32xf32, #tpu.memory_space<vmem>>, vector<4x1x10x32xf32>,
      %cst_244 = arith.constant 0.000000e+00 : f32
      %201 = vector.broadcast %cst_244 : f32 to vector<4x8x1x32xf32>
      %c0_245 = arith.constant 0 : index
      %c1_246 = arith.constant 1 : index
      %c0_247 = arith.constant 0 : index
      %c0_248 = arith.constant 0 : index
      %202 = vector.load %arg13[%c0_245, %c1_246, %c0_247, %c0_248] : memref<4x10x10x32xf32, #tpu.memory_space<vmem>>, vector<4x8x1x32xf32>
      tpu.vector_store %arg13[%c0_245, %c1_246, %c0_247, %c0_248], %201 {strides = array<i32>} : memref<4x10x10x32xf32, #tpu.memory_space<vmem>>, vector<4x8x1x32xf32>,
      %cst_249 = arith.constant 0.000000e+00 : f32
      %203 = vector.broadcast %cst_249 : f32 to vector<4x8x1x32xf32>
      %c0_250 = arith.constant 0 : index
      %c1_251 = arith.constant 1 : index
      %c9_252 = arith.constant 9 : index
      %c0_253 = arith.constant 0 : index
      %204 = vector.load %arg13[%c0_250, %c1_251, %c9_252, %c0_253] : memref<4x10x10x32xf32, #tpu.memory_space<vmem>>, vector<4x8x1x32xf32>
      tpu.vector_store %arg13[%c0_250, %c1_251, %c9_252, %c0_253], %203 {strides = array<i32>} : memref<4x10x10x32xf32, #tpu.memory_space<vmem>>, vector<4x8x1x32xf32>,
      %c0_254 = arith.constant 0 : index
      %c0_255 = arith.constant 0 : index
      %c0_256 = arith.constant 0 : index
      %c0_257 = arith.constant 0 : index
      %205 = vector.load %arg5[%c0_254, %c0_255, %c0_256, %c0_257] : memref<1x10x10x8xf32, #tpu.memory_space<vmem>>, vector<1x8x8x8xf32>
      %206 = vector.shape_cast %205 : vector<1x8x8x8xf32> to vector<8x8x8xf32>
      %207 = vector.shape_cast %206 : vector<8x8x8xf32> to vector<64x8xf32>
      %208 = arith.truncf %207 : vector<64x8xf32> to vector<64x8xbf16>
      %c0_258 = arith.constant 0 : index
      %c0_259 = arith.constant 0 : index
      %209 = vector.load %arg15[%c0_258, %c0_259] : memref<64x72xbf16, #tpu.memory_space<vmem>>, vector<64x8xbf16>
      tpu.vector_store %arg15[%c0_258, %c0_259], %208 {strides = array<i32>} : memref<64x72xbf16, #tpu.memory_space<vmem>>, vector<64x8xbf16>,
      %c0_260 = arith.constant 0 : index
      %c0_261 = arith.constant 0 : index
      %c1_262 = arith.constant 1 : index
      %c0_263 = arith.constant 0 : index
      %210 = vector.load %arg5[%c0_260, %c0_261, %c1_262, %c0_263] : memref<1x10x10x8xf32, #tpu.memory_space<vmem>>, vector<1x8x8x8xf32>
      %211 = vector.shape_cast %210 : vector<1x8x8x8xf32> to vector<8x8x8xf32>
      %212 = vector.shape_cast %211 : vector<8x8x8xf32> to vector<64x8xf32>
      %213 = arith.truncf %212 : vector<64x8xf32> to vector<64x8xbf16>
      %c0_264 = arith.constant 0 : index
      %c8 = arith.constant 8 : index
      %214 = vector.load %arg15[%c0_264, %c8] : memref<64x72xbf16, #tpu.memory_space<vmem>>, vector<64x8xbf16>
      tpu.vector_store %arg15[%c0_264, %c8], %213 {strides = array<i32>} : memref<64x72xbf16, #tpu.memory_space<vmem>>, vector<64x8xbf16>,
      %c0_265 = arith.constant 0 : index
      %c0_266 = arith.constant 0 : index
      %c2_267 = arith.constant 2 : index
      %c0_268 = arith.constant 0 : index
      %215 = vector.load %arg5[%c0_265, %c0_266, %c2_267, %c0_268] : memref<1x10x10x8xf32, #tpu.memory_space<vmem>>, vector<1x8x8x8xf32>
      %216 = vector.shape_cast %215 : vector<1x8x8x8xf32> to vector<8x8x8xf32>
      %217 = vector.shape_cast %216 : vector<8x8x8xf32> to vector<64x8xf32>
      %218 = arith.truncf %217 : vector<64x8xf32> to vector<64x8xbf16>
      %c0_269 = arith.constant 0 : index
      %c16 = arith.constant 16 : index
      %219 = vector.load %arg15[%c0_269, %c16] : memref<64x72xbf16, #tpu.memory_space<vmem>>, vector<64x8xbf16>
      tpu.vector_store %arg15[%c0_269, %c16], %218 {strides = array<i32>} : memref<64x72xbf16, #tpu.memory_space<vmem>>, vector<64x8xbf16>,
      %c0_270 = arith.constant 0 : index
      %c1_271 = arith.constant 1 : index
      %c0_272 = arith.constant 0 : index
      %c0_273 = arith.constant 0 : index
      %220 = vector.load %arg5[%c0_270, %c1_271, %c0_272, %c0_273] : memref<1x10x10x8xf32, #tpu.memory_space<vmem>>, vector<1x8x8x8xf32>
      %221 = vector.shape_cast %220 : vector<1x8x8x8xf32> to vector<8x8x8xf32>
      %222 = vector.shape_cast %221 : vector<8x8x8xf32> to vector<64x8xf32>
      %223 = arith.truncf %222 : vector<64x8xf32> to vector<64x8xbf16>
      %c0_274 = arith.constant 0 : index
      %c24 = arith.constant 24 : index
      %224 = vector.load %arg15[%c0_274, %c24] : memref<64x72xbf16, #tpu.memory_space<vmem>>, vector<64x8xbf16>
      tpu.vector_store %arg15[%c0_274, %c24], %223 {strides = array<i32>} : memref<64x72xbf16, #tpu.memory_space<vmem>>, vector<64x8xbf16>,
      %c0_275 = arith.constant 0 : index
      %c1_276 = arith.constant 1 : index
      %c1_277 = arith.constant 1 : index
      %c0_278 = arith.constant 0 : index
      %225 = vector.load %arg5[%c0_275, %c1_276, %c1_277, %c0_278] : memref<1x10x10x8xf32, #tpu.memory_space<vmem>>, vector<1x8x8x8xf32>
      %226 = vector.shape_cast %225 : vector<1x8x8x8xf32> to vector<8x8x8xf32>
      %227 = vector.shape_cast %226 : vector<8x8x8xf32> to vector<64x8xf32>
      %228 = arith.truncf %227 : vector<64x8xf32> to vector<64x8xbf16>
      %c0_279 = arith.constant 0 : index
      %c32_280 = arith.constant 32 : index
      %229 = vector.load %arg15[%c0_279, %c32_280] : memref<64x72xbf16, #tpu.memory_space<vmem>>, vector<64x8xbf16>
      tpu.vector_store %arg15[%c0_279, %c32_280], %228 {strides = array<i32>} : memref<64x72xbf16, #tpu.memory_space<vmem>>, vector<64x8xbf16>,
      %c0_281 = arith.constant 0 : index
      %c1_282 = arith.constant 1 : index
      %c2_283 = arith.constant 2 : index
      %c0_284 = arith.constant 0 : index
      %230 = vector.load %arg5[%c0_281, %c1_282, %c2_283, %c0_284] : memref<1x10x10x8xf32, #tpu.memory_space<vmem>>, vector<1x8x8x8xf32>
      %231 = vector.shape_cast %230 : vector<1x8x8x8xf32> to vector<8x8x8xf32>
      %232 = vector.shape_cast %231 : vector<8x8x8xf32> to vector<64x8xf32>
      %233 = arith.truncf %232 : vector<64x8xf32> to vector<64x8xbf16>
      %c0_285 = arith.constant 0 : index
      %c40 = arith.constant 40 : index
      %234 = vector.load %arg15[%c0_285, %c40] : memref<64x72xbf16, #tpu.memory_space<vmem>>, vector<64x8xbf16>
      tpu.vector_store %arg15[%c0_285, %c40], %233 {strides = array<i32>} : memref<64x72xbf16, #tpu.memory_space<vmem>>, vector<64x8xbf16>,
      %c0_286 = arith.constant 0 : index
      %c2_287 = arith.constant 2 : index
      %c0_288 = arith.constant 0 : index
      %c0_289 = arith.constant 0 : index
      %235 = vector.load %arg5[%c0_286, %c2_287, %c0_288, %c0_289] : memref<1x10x10x8xf32, #tpu.memory_space<vmem>>, vector<1x8x8x8xf32>
      %236 = vector.shape_cast %235 : vector<1x8x8x8xf32> to vector<8x8x8xf32>
      %237 = vector.shape_cast %236 : vector<8x8x8xf32> to vector<64x8xf32>
      %238 = arith.truncf %237 : vector<64x8xf32> to vector<64x8xbf16>
      %c0_290 = arith.constant 0 : index
      %c48 = arith.constant 48 : index
      %239 = vector.load %arg15[%c0_290, %c48] : memref<64x72xbf16, #tpu.memory_space<vmem>>, vector<64x8xbf16>
      tpu.vector_store %arg15[%c0_290, %c48], %238 {strides = array<i32>} : memref<64x72xbf16, #tpu.memory_space<vmem>>, vector<64x8xbf16>,
      %c0_291 = arith.constant 0 : index
      %c2_292 = arith.constant 2 : index
      %c1_293 = arith.constant 1 : index
      %c0_294 = arith.constant 0 : index
      %240 = vector.load %arg5[%c0_291, %c2_292, %c1_293, %c0_294] : memref<1x10x10x8xf32, #tpu.memory_space<vmem>>, vector<1x8x8x8xf32>
      %241 = vector.shape_cast %240 : vector<1x8x8x8xf32> to vector<8x8x8xf32>
      %242 = vector.shape_cast %241 : vector<8x8x8xf32> to vector<64x8xf32>
      %243 = arith.truncf %242 : vector<64x8xf32> to vector<64x8xbf16>
      %c0_295 = arith.constant 0 : index
      %c56 = arith.constant 56 : index
      %244 = vector.load %arg15[%c0_295, %c56] : memref<64x72xbf16, #tpu.memory_space<vmem>>, vector<64x8xbf16>
      tpu.vector_store %arg15[%c0_295, %c56], %243 {strides = array<i32>} : memref<64x72xbf16, #tpu.memory_space<vmem>>, vector<64x8xbf16>,
      %c0_296 = arith.constant 0 : index
      %c2_297 = arith.constant 2 : index
      %c2_298 = arith.constant 2 : index
      %c0_299 = arith.constant 0 : index
      %245 = vector.load %arg5[%c0_296, %c2_297, %c2_298, %c0_299] : memref<1x10x10x8xf32, #tpu.memory_space<vmem>>, vector<1x8x8x8xf32>
      %246 = vector.shape_cast %245 : vector<1x8x8x8xf32> to vector<8x8x8xf32>
      %247 = vector.shape_cast %246 : vector<8x8x8xf32> to vector<64x8xf32>
      %248 = arith.truncf %247 : vector<64x8xf32> to vector<64x8xbf16>
      %c0_300 = arith.constant 0 : index
      %c64_301 = arith.constant 64 : index
      %249 = vector.load %arg15[%c0_300, %c64_301] : memref<64x72xbf16, #tpu.memory_space<vmem>>, vector<64x8xbf16>
      tpu.vector_store %arg15[%c0_300, %c64_301], %248 {strides = array<i32>} : memref<64x72xbf16, #tpu.memory_space<vmem>>, vector<64x8xbf16>,
      %c0_302 = arith.constant 0 : index
      %c0_303 = arith.constant 0 : index
      %250 = vector.load %arg15[%c0_302, %c0_303] : memref<64x72xbf16, #tpu.memory_space<vmem>>, vector<64x72xbf16>
      %c0_304 = arith.constant 0 : index
      %c0_305 = arith.constant 0 : index
      %251 = vector.load %arg6[%c0_304, %c0_305] : memref<72x32xbf16, #tpu.memory_space<vmem>>, vector<72x32xbf16>
      %cst_306 = arith.constant dense<0.000000e+00> : vector<64x32xf32>
      %252 = tpu.matmul %250, %251, %cst_306 {dimension_numbers = #tpu.dot_dimension_numbers<[1], [0], [0], [1], [0, 0, 1, 1], [], []>} : vector<64x72xbf16>, vector<72x32xbf16>, vector<64x32xf32> -> vector<64x32xf32>
      %c0_307 = arith.constant 0 : index
      %c0_308 = arith.constant 0 : index
      %253 = vector.load %arg7[%c0_307, %c0_308] : memref<1x32xf32, #tpu.memory_space<vmem>>, vector<1x32xf32>
      %254 = vector.broadcast %253 : vector<1x32xf32> to vector<64x32xf32>
      %255 = arith.addf %252, %254 : vector<64x32xf32>
      %c0_309 = arith.constant 0 : index
      %c0_310 = arith.constant 0 : index
      %256 = vector.load %arg16[%c0_309, %c0_310] : memref<64x32xf32, #tpu.memory_space<vmem>>, vector<64x32xf32>
      tpu.vector_store %arg16[%c0_309, %c0_310], %255 {strides = array<i32>} : memref<64x32xf32, #tpu.memory_space<vmem>>, vector<64x32xf32>,
    } else {
    }
    %c0 = arith.constant 0 : index
    %c0_1 = arith.constant 0 : index
    %4 = vector.load %arg16[%c0, %c0_1] : memref<64x32xf32, #tpu.memory_space<vmem>>, vector<64x32xf32>
    %5 = vector.shape_cast %4 : vector<64x32xf32> to vector<8x8x32xf32>
    %6 = arith.index_cast %0 : i32 to index
    %c0_2 = arith.constant 0 : index
    %c0_3 = arith.constant 0 : index
    %c0_4 = arith.constant 0 : index
    %7 = vector.load %arg8[%6, %c0_2, %c0_3, %c0_4] : memref<4x1x1x32xf32, #tpu.memory_space<vmem>>, vector<2x1x1x32xf32>
    %c0_5 = arith.constant 0 : index
    %c0_6 = arith.constant 0 : index
    %c0_7 = arith.constant 0 : index
    %c0_8 = arith.constant 0 : index
    %c0_9 = arith.constant 0 : index
    %8 = vector.load %arg2[%c0_5, %c0_6, %c0_7, %c0_8, %c0_9] : memref<1x2x8x8x32xf32, #tpu.memory_space<vmem>>, vector<1x2x8x8x32xf32>
    %9 = vector.shape_cast %8 : vector<1x2x8x8x32xf32> to vector<2x8x8x32xf32>
    %10 = vector.shape_cast %5 : vector<8x8x32xf32> to vector<1x8x8x32xf32>
    %11 = vector.broadcast %10 : vector<1x8x8x32xf32> to vector<2x8x8x32xf32>
    %12 = arith.addf %9, %11 : vector<2x8x8x32xf32>
    %13 = vector.broadcast %7 : vector<2x1x1x32xf32> to vector<2x8x8x32xf32>
    %14 = arith.addf %12, %13 : vector<2x8x8x32xf32>
    %c1 = arith.constant 1 : index
    %c1_10 = arith.constant 1 : index
    %c1_11 = arith.constant 1 : index
    %c0_12 = arith.constant 0 : index
    %15 = vector.load %arg13[%c1, %c1_10, %c1_11, %c0_12] : memref<4x10x10x32xf32, #tpu.memory_space<vmem>>, vector<2x8x8x32xf32>
    tpu.vector_store %arg13[%c1, %c1_10, %c1_11, %c0_12], %14 {strides = array<i32>} : memref<4x10x10x32xf32, #tpu.memory_space<vmem>>, vector<2x8x8x32xf32>,
    %c1_i32 = arith.constant 1 : i32
    %16 = arith.subi %0, %c1_i32 : i32
    %c0_i32_13 = arith.constant 0 : i32
    %17 = arith.maxsi %16, %c0_i32_13 : i32
    %c0_14 = arith.constant 0 : index
    %c0_15 = arith.constant 0 : index
    %c0_16 = arith.constant 0 : index
    %c0_17 = arith.constant 0 : index
    %c0_18 = arith.constant 0 : index
    %18 = vector.load %arg3[%c0_14, %c0_15, %c0_16, %c0_17, %c0_18] : memref<1x1x8x8x32xf32, #tpu.memory_space<vmem>>, vector<1x1x8x8x32xf32>
    %19 = vector.shape_cast %18 : vector<1x1x8x8x32xf32> to vector<8x8x32xf32>
    %20 = arith.addf %19, %5 : vector<8x8x32xf32>
    %21 = arith.index_cast %17 : i32 to index
    %c0_19 = arith.constant 0 : index
    %c0_20 = arith.constant 0 : index
    %c0_21 = arith.constant 0 : index
    %22 = vector.load %arg8[%21, %c0_19, %c0_20, %c0_21] : memref<4x1x1x32xf32, #tpu.memory_space<vmem>>, vector<1x1x1x32xf32>
    %23 = vector.shape_cast %22 : vector<1x1x1x32xf32> to vector<1x1x32xf32>
    %24 = vector.broadcast %23 : vector<1x1x32xf32> to vector<8x8x32xf32>
    %25 = arith.addf %20, %24 : vector<8x8x32xf32>
    %c0_i32_22 = arith.constant 0 : i32
    %26 = arith.cmpi sgt, %arg1, %c0_i32_22 : i32
    %cst = arith.constant 0.000000e+00 : f32
    %27 = vector.broadcast %cst : f32 to vector<8x8x32xf32>
    %28 = arith.select %26, %25, %27 : vector<8x8x32xf32>
    %c0_23 = arith.constant 0 : index
    %c1_24 = arith.constant 1 : index
    %c1_25 = arith.constant 1 : index
    %c0_26 = arith.constant 0 : index
    %29 = vector.load %arg13[%c0_23, %c1_24, %c1_25, %c0_26] : memref<4x10x10x32xf32, #tpu.memory_space<vmem>>, vector<1x8x8x32xf32>
    %30 = vector.shape_cast %29 : vector<1x8x8x32xf32> to vector<8x8x32xf32>
    %31 = vector.shape_cast %28 : vector<8x8x32xf32> to vector<1x8x8x32xf32>
    tpu.vector_store %arg13[%c0_23, %c1_24, %c1_25, %c0_26], %31 {strides = array<i32>} : memref<4x10x10x32xf32, #tpu.memory_space<vmem>>, vector<1x8x8x32xf32>,
    %c2_i32_27 = arith.constant 2 : i32
    %32 = arith.addi %0, %c2_i32_27 : i32
    %c3_i32 = arith.constant 3 : i32
    %33 = arith.minsi %32, %c3_i32 : i32
    %c0_28 = arith.constant 0 : index
    %c0_29 = arith.constant 0 : index
    %c0_30 = arith.constant 0 : index
    %c0_31 = arith.constant 0 : index
    %c0_32 = arith.constant 0 : index
    %34 = vector.load %arg4[%c0_28, %c0_29, %c0_30, %c0_31, %c0_32] : memref<1x1x8x8x32xf32, #tpu.memory_space<vmem>>, vector<1x1x8x8x32xf32>
    %35 = vector.shape_cast %34 : vector<1x1x8x8x32xf32> to vector<8x8x32xf32>
    %36 = arith.addf %35, %5 : vector<8x8x32xf32>
    %37 = arith.index_cast %33 : i32 to index
    %c0_33 = arith.constant 0 : index
    %c0_34 = arith.constant 0 : index
    %c0_35 = arith.constant 0 : index
    %38 = vector.load %arg8[%37, %c0_33, %c0_34, %c0_35] : memref<4x1x1x32xf32, #tpu.memory_space<vmem>>, vector<1x1x1x32xf32>
    %39 = vector.shape_cast %38 : vector<1x1x1x32xf32> to vector<1x1x32xf32>
    %40 = vector.broadcast %39 : vector<1x1x32xf32> to vector<8x8x32xf32>
    %41 = arith.addf %36, %40 : vector<8x8x32xf32>
    %c1_i32_36 = arith.constant 1 : i32
    %42 = arith.cmpi slt, %arg1, %c1_i32_36 : i32
    %cst_37 = arith.constant 0.000000e+00 : f32
    %43 = vector.broadcast %cst_37 : f32 to vector<8x8x32xf32>
    %44 = arith.select %42, %41, %43 : vector<8x8x32xf32>
    %c3 = arith.constant 3 : index
    %c1_38 = arith.constant 1 : index
    %c1_39 = arith.constant 1 : index
    %c0_40 = arith.constant 0 : index
    %45 = vector.load %arg13[%c3, %c1_38, %c1_39, %c0_40] : memref<4x10x10x32xf32, #tpu.memory_space<vmem>>, vector<1x8x8x32xf32>
    %46 = vector.shape_cast %45 : vector<1x8x8x32xf32> to vector<8x8x32xf32>
    %47 = vector.shape_cast %44 : vector<8x8x32xf32> to vector<1x8x8x32xf32>
    tpu.vector_store %arg13[%c3, %c1_38, %c1_39, %c0_40], %47 {strides = array<i32>} : memref<4x10x10x32xf32, #tpu.memory_space<vmem>>, vector<1x8x8x32xf32>,
    %c0_41 = arith.constant 0 : index
    %c0_42 = arith.constant 0 : index
    %c0_43 = arith.constant 0 : index
    %c0_44 = arith.constant 0 : index
    %48 = vector.load %arg13[%c0_41, %c0_42, %c0_43, %c0_44] : memref<4x10x10x32xf32, #tpu.memory_space<vmem>>, vector<2x8x8x32xf32>
    %49 = vector.shape_cast %48 : vector<2x8x8x32xf32> to vector<128x32xf32>
    %50 = arith.truncf %49 : vector<128x32xf32> to vector<128x32xbf16>
    %c0_45 = arith.constant 0 : index
    %c0_46 = arith.constant 0 : index
    %51 = vector.load %arg14[%c0_45, %c0_46] : memref<128x288xbf16, #tpu.memory_space<vmem>>, vector<128x32xbf16>
    tpu.vector_store %arg14[%c0_45, %c0_46], %50 {strides = array<i32>} : memref<128x288xbf16, #tpu.memory_space<vmem>>, vector<128x32xbf16>,
    %c0_47 = arith.constant 0 : index
    %c0_48 = arith.constant 0 : index
    %c1_49 = arith.constant 1 : index
    %c0_50 = arith.constant 0 : index
    %52 = vector.load %arg13[%c0_47, %c0_48, %c1_49, %c0_50] : memref<4x10x10x32xf32, #tpu.memory_space<vmem>>, vector<2x8x8x32xf32>
    %53 = vector.shape_cast %52 : vector<2x8x8x32xf32> to vector<128x32xf32>
    %54 = arith.truncf %53 : vector<128x32xf32> to vector<128x32xbf16>
    %c0_51 = arith.constant 0 : index
    %c32 = arith.constant 32 : index
    %55 = vector.load %arg14[%c0_51, %c32] : memref<128x288xbf16, #tpu.memory_space<vmem>>, vector<128x32xbf16>
    tpu.vector_store %arg14[%c0_51, %c32], %54 {strides = array<i32>} : memref<128x288xbf16, #tpu.memory_space<vmem>>, vector<128x32xbf16>,
    %c0_52 = arith.constant 0 : index
    %c0_53 = arith.constant 0 : index
    %c2 = arith.constant 2 : index
    %c0_54 = arith.constant 0 : index
    %56 = vector.load %arg13[%c0_52, %c0_53, %c2, %c0_54] : memref<4x10x10x32xf32, #tpu.memory_space<vmem>>, vector<2x8x8x32xf32>
    %57 = vector.shape_cast %56 : vector<2x8x8x32xf32> to vector<128x32xf32>
    %58 = arith.truncf %57 : vector<128x32xf32> to vector<128x32xbf16>
    %c0_55 = arith.constant 0 : index
    %c64 = arith.constant 64 : index
    %59 = vector.load %arg14[%c0_55, %c64] : memref<128x288xbf16, #tpu.memory_space<vmem>>, vector<128x32xbf16>
    tpu.vector_store %arg14[%c0_55, %c64], %58 {strides = array<i32>} : memref<128x288xbf16, #tpu.memory_space<vmem>>, vector<128x32xbf16>,
    %c0_56 = arith.constant 0 : index
    %c1_57 = arith.constant 1 : index
    %c0_58 = arith.constant 0 : index
    %c0_59 = arith.constant 0 : index
    %60 = vector.load %arg13[%c0_56, %c1_57, %c0_58, %c0_59] : memref<4x10x10x32xf32, #tpu.memory_space<vmem>>, vector<2x8x8x32xf32>
    %61 = vector.shape_cast %60 : vector<2x8x8x32xf32> to vector<128x32xf32>
    %62 = arith.truncf %61 : vector<128x32xf32> to vector<128x32xbf16>
    %c0_60 = arith.constant 0 : index
    %c96 = arith.constant 96 : index
    %63 = vector.load %arg14[%c0_60, %c96] : memref<128x288xbf16, #tpu.memory_space<vmem>>, vector<128x32xbf16>
    tpu.vector_store %arg14[%c0_60, %c96], %62 {strides = array<i32>} : memref<128x288xbf16, #tpu.memory_space<vmem>>, vector<128x32xbf16>,
    %c0_61 = arith.constant 0 : index
    %c1_62 = arith.constant 1 : index
    %c1_63 = arith.constant 1 : index
    %c0_64 = arith.constant 0 : index
    %64 = vector.load %arg13[%c0_61, %c1_62, %c1_63, %c0_64] : memref<4x10x10x32xf32, #tpu.memory_space<vmem>>, vector<2x8x8x32xf32>
    %65 = vector.shape_cast %64 : vector<2x8x8x32xf32> to vector<128x32xf32>
    %66 = arith.truncf %65 : vector<128x32xf32> to vector<128x32xbf16>
    %c0_65 = arith.constant 0 : index
    %c128 = arith.constant 128 : index
    %67 = vector.load %arg14[%c0_65, %c128] : memref<128x288xbf16, #tpu.memory_space<vmem>>, vector<128x32xbf16>
    tpu.vector_store %arg14[%c0_65, %c128], %66 {strides = array<i32>} : memref<128x288xbf16, #tpu.memory_space<vmem>>, vector<128x32xbf16>,
    %c0_66 = arith.constant 0 : index
    %c1_67 = arith.constant 1 : index
    %c2_68 = arith.constant 2 : index
    %c0_69 = arith.constant 0 : index
    %68 = vector.load %arg13[%c0_66, %c1_67, %c2_68, %c0_69] : memref<4x10x10x32xf32, #tpu.memory_space<vmem>>, vector<2x8x8x32xf32>
    %69 = vector.shape_cast %68 : vector<2x8x8x32xf32> to vector<128x32xf32>
    %70 = arith.truncf %69 : vector<128x32xf32> to vector<128x32xbf16>
    %c0_70 = arith.constant 0 : index
    %c160 = arith.constant 160 : index
    %71 = vector.load %arg14[%c0_70, %c160] : memref<128x288xbf16, #tpu.memory_space<vmem>>, vector<128x32xbf16>
    tpu.vector_store %arg14[%c0_70, %c160], %70 {strides = array<i32>} : memref<128x288xbf16, #tpu.memory_space<vmem>>, vector<128x32xbf16>,
    %c0_71 = arith.constant 0 : index
    %c2_72 = arith.constant 2 : index
    %c0_73 = arith.constant 0 : index
    %c0_74 = arith.constant 0 : index
    %72 = vector.load %arg13[%c0_71, %c2_72, %c0_73, %c0_74] : memref<4x10x10x32xf32, #tpu.memory_space<vmem>>, vector<2x8x8x32xf32>
    %73 = vector.shape_cast %72 : vector<2x8x8x32xf32> to vector<128x32xf32>
    %74 = arith.truncf %73 : vector<128x32xf32> to vector<128x32xbf16>
    %c0_75 = arith.constant 0 : index
    %c192 = arith.constant 192 : index
    %75 = vector.load %arg14[%c0_75, %c192] : memref<128x288xbf16, #tpu.memory_space<vmem>>, vector<128x32xbf16>
    tpu.vector_store %arg14[%c0_75, %c192], %74 {strides = array<i32>} : memref<128x288xbf16, #tpu.memory_space<vmem>>, vector<128x32xbf16>,
    %c0_76 = arith.constant 0 : index
    %c2_77 = arith.constant 2 : index
    %c1_78 = arith.constant 1 : index
    %c0_79 = arith.constant 0 : index
    %76 = vector.load %arg13[%c0_76, %c2_77, %c1_78, %c0_79] : memref<4x10x10x32xf32, #tpu.memory_space<vmem>>, vector<2x8x8x32xf32>
    %77 = vector.shape_cast %76 : vector<2x8x8x32xf32> to vector<128x32xf32>
    %78 = arith.truncf %77 : vector<128x32xf32> to vector<128x32xbf16>
    %c0_80 = arith.constant 0 : index
    %c224 = arith.constant 224 : index
    %79 = vector.load %arg14[%c0_80, %c224] : memref<128x288xbf16, #tpu.memory_space<vmem>>, vector<128x32xbf16>
    tpu.vector_store %arg14[%c0_80, %c224], %78 {strides = array<i32>} : memref<128x288xbf16, #tpu.memory_space<vmem>>, vector<128x32xbf16>,
    %c0_81 = arith.constant 0 : index
    %c2_82 = arith.constant 2 : index
    %c2_83 = arith.constant 2 : index
    %c0_84 = arith.constant 0 : index
    %80 = vector.load %arg13[%c0_81, %c2_82, %c2_83, %c0_84] : memref<4x10x10x32xf32, #tpu.memory_space<vmem>>, vector<2x8x8x32xf32>
    %81 = vector.shape_cast %80 : vector<2x8x8x32xf32> to vector<128x32xf32>
    %82 = arith.truncf %81 : vector<128x32xf32> to vector<128x32xbf16>
    %c0_85 = arith.constant 0 : index
    %c256 = arith.constant 256 : index
    %83 = vector.load %arg14[%c0_85, %c256] : memref<128x288xbf16, #tpu.memory_space<vmem>>, vector<128x32xbf16>
    tpu.vector_store %arg14[%c0_85, %c256], %82 {strides = array<i32>} : memref<128x288xbf16, #tpu.memory_space<vmem>>, vector<128x32xbf16>,
    %c0_86 = arith.constant 0 : index
    %c0_87 = arith.constant 0 : index
    %84 = vector.load %arg14[%c0_86, %c0_87] : memref<128x288xbf16, #tpu.memory_space<vmem>>, vector<128x288xbf16>
    %c0_88 = arith.constant 0 : index
    %c0_89 = arith.constant 0 : index
    %c0_90 = arith.constant 0 : index
    %85 = vector.load %arg9[%c0_88, %c0_89, %c0_90] : memref<3x288x32xbf16, #tpu.memory_space<vmem>>, vector<1x288x32xbf16>
    %86 = vector.shape_cast %85 : vector<1x288x32xbf16> to vector<288x32xbf16>
    %cst_91 = arith.constant dense<0.000000e+00> : vector<128x32xf32>
    %87 = tpu.matmul %84, %86, %cst_91 {dimension_numbers = #tpu.dot_dimension_numbers<[1], [0], [0], [1], [0, 0, 1, 1], [], []>} : vector<128x288xbf16>, vector<288x32xbf16>, vector<128x32xf32> -> vector<128x32xf32>
    %c1_92 = arith.constant 1 : index
    %c0_93 = arith.constant 0 : index
    %c0_94 = arith.constant 0 : index
    %c0_95 = arith.constant 0 : index
    %88 = vector.load %arg13[%c1_92, %c0_93, %c0_94, %c0_95] : memref<4x10x10x32xf32, #tpu.memory_space<vmem>>, vector<2x8x8x32xf32>
    %89 = vector.shape_cast %88 : vector<2x8x8x32xf32> to vector<128x32xf32>
    %90 = arith.truncf %89 : vector<128x32xf32> to vector<128x32xbf16>
    %c0_96 = arith.constant 0 : index
    %c0_97 = arith.constant 0 : index
    %91 = vector.load %arg14[%c0_96, %c0_97] : memref<128x288xbf16, #tpu.memory_space<vmem>>, vector<128x32xbf16>
    tpu.vector_store %arg14[%c0_96, %c0_97], %90 {strides = array<i32>} : memref<128x288xbf16, #tpu.memory_space<vmem>>, vector<128x32xbf16>,
    %c1_98 = arith.constant 1 : index
    %c0_99 = arith.constant 0 : index
    %c1_100 = arith.constant 1 : index
    %c0_101 = arith.constant 0 : index
    %92 = vector.load %arg13[%c1_98, %c0_99, %c1_100, %c0_101] : memref<4x10x10x32xf32, #tpu.memory_space<vmem>>, vector<2x8x8x32xf32>
    %93 = vector.shape_cast %92 : vector<2x8x8x32xf32> to vector<128x32xf32>
    %94 = arith.truncf %93 : vector<128x32xf32> to vector<128x32xbf16>
    %c0_102 = arith.constant 0 : index
    %c32_103 = arith.constant 32 : index
    %95 = vector.load %arg14[%c0_102, %c32_103] : memref<128x288xbf16, #tpu.memory_space<vmem>>, vector<128x32xbf16>
    tpu.vector_store %arg14[%c0_102, %c32_103], %94 {strides = array<i32>} : memref<128x288xbf16, #tpu.memory_space<vmem>>, vector<128x32xbf16>,
    %c1_104 = arith.constant 1 : index
    %c0_105 = arith.constant 0 : index
    %c2_106 = arith.constant 2 : index
    %c0_107 = arith.constant 0 : index
    %96 = vector.load %arg13[%c1_104, %c0_105, %c2_106, %c0_107] : memref<4x10x10x32xf32, #tpu.memory_space<vmem>>, vector<2x8x8x32xf32>
    %97 = vector.shape_cast %96 : vector<2x8x8x32xf32> to vector<128x32xf32>
    %98 = arith.truncf %97 : vector<128x32xf32> to vector<128x32xbf16>
    %c0_108 = arith.constant 0 : index
    %c64_109 = arith.constant 64 : index
    %99 = vector.load %arg14[%c0_108, %c64_109] : memref<128x288xbf16, #tpu.memory_space<vmem>>, vector<128x32xbf16>
    tpu.vector_store %arg14[%c0_108, %c64_109], %98 {strides = array<i32>} : memref<128x288xbf16, #tpu.memory_space<vmem>>, vector<128x32xbf16>,
    %c1_110 = arith.constant 1 : index
    %c1_111 = arith.constant 1 : index
    %c0_112 = arith.constant 0 : index
    %c0_113 = arith.constant 0 : index
    %100 = vector.load %arg13[%c1_110, %c1_111, %c0_112, %c0_113] : memref<4x10x10x32xf32, #tpu.memory_space<vmem>>, vector<2x8x8x32xf32>
    %101 = vector.shape_cast %100 : vector<2x8x8x32xf32> to vector<128x32xf32>
    %102 = arith.truncf %101 : vector<128x32xf32> to vector<128x32xbf16>
    %c0_114 = arith.constant 0 : index
    %c96_115 = arith.constant 96 : index
    %103 = vector.load %arg14[%c0_114, %c96_115] : memref<128x288xbf16, #tpu.memory_space<vmem>>, vector<128x32xbf16>
    tpu.vector_store %arg14[%c0_114, %c96_115], %102 {strides = array<i32>} : memref<128x288xbf16, #tpu.memory_space<vmem>>, vector<128x32xbf16>,
    %c1_116 = arith.constant 1 : index
    %c1_117 = arith.constant 1 : index
    %c1_118 = arith.constant 1 : index
    %c0_119 = arith.constant 0 : index
    %104 = vector.load %arg13[%c1_116, %c1_117, %c1_118, %c0_119] : memref<4x10x10x32xf32, #tpu.memory_space<vmem>>, vector<2x8x8x32xf32>
    %105 = vector.shape_cast %104 : vector<2x8x8x32xf32> to vector<128x32xf32>
    %106 = arith.truncf %105 : vector<128x32xf32> to vector<128x32xbf16>
    %c0_120 = arith.constant 0 : index
    %c128_121 = arith.constant 128 : index
    %107 = vector.load %arg14[%c0_120, %c128_121] : memref<128x288xbf16, #tpu.memory_space<vmem>>, vector<128x32xbf16>
    tpu.vector_store %arg14[%c0_120, %c128_121], %106 {strides = array<i32>} : memref<128x288xbf16, #tpu.memory_space<vmem>>, vector<128x32xbf16>,
    %c1_122 = arith.constant 1 : index
    %c1_123 = arith.constant 1 : index
    %c2_124 = arith.constant 2 : index
    %c0_125 = arith.constant 0 : index
    %108 = vector.load %arg13[%c1_122, %c1_123, %c2_124, %c0_125] : memref<4x10x10x32xf32, #tpu.memory_space<vmem>>, vector<2x8x8x32xf32>
    %109 = vector.shape_cast %108 : vector<2x8x8x32xf32> to vector<128x32xf32>
    %110 = arith.truncf %109 : vector<128x32xf32> to vector<128x32xbf16>
    %c0_126 = arith.constant 0 : index
    %c160_127 = arith.constant 160 : index
    %111 = vector.load %arg14[%c0_126, %c160_127] : memref<128x288xbf16, #tpu.memory_space<vmem>>, vector<128x32xbf16>
    tpu.vector_store %arg14[%c0_126, %c160_127], %110 {strides = array<i32>} : memref<128x288xbf16, #tpu.memory_space<vmem>>, vector<128x32xbf16>,
    %c1_128 = arith.constant 1 : index
    %c2_129 = arith.constant 2 : index
    %c0_130 = arith.constant 0 : index
    %c0_131 = arith.constant 0 : index
    %112 = vector.load %arg13[%c1_128, %c2_129, %c0_130, %c0_131] : memref<4x10x10x32xf32, #tpu.memory_space<vmem>>, vector<2x8x8x32xf32>
    %113 = vector.shape_cast %112 : vector<2x8x8x32xf32> to vector<128x32xf32>
    %114 = arith.truncf %113 : vector<128x32xf32> to vector<128x32xbf16>
    %c0_132 = arith.constant 0 : index
    %c192_133 = arith.constant 192 : index
    %115 = vector.load %arg14[%c0_132, %c192_133] : memref<128x288xbf16, #tpu.memory_space<vmem>>, vector<128x32xbf16>
    tpu.vector_store %arg14[%c0_132, %c192_133], %114 {strides = array<i32>} : memref<128x288xbf16, #tpu.memory_space<vmem>>, vector<128x32xbf16>,
    %c1_134 = arith.constant 1 : index
    %c2_135 = arith.constant 2 : index
    %c1_136 = arith.constant 1 : index
    %c0_137 = arith.constant 0 : index
    %116 = vector.load %arg13[%c1_134, %c2_135, %c1_136, %c0_137] : memref<4x10x10x32xf32, #tpu.memory_space<vmem>>, vector<2x8x8x32xf32>
    %117 = vector.shape_cast %116 : vector<2x8x8x32xf32> to vector<128x32xf32>
    %118 = arith.truncf %117 : vector<128x32xf32> to vector<128x32xbf16>
    %c0_138 = arith.constant 0 : index
    %c224_139 = arith.constant 224 : index
    %119 = vector.load %arg14[%c0_138, %c224_139] : memref<128x288xbf16, #tpu.memory_space<vmem>>, vector<128x32xbf16>
    tpu.vector_store %arg14[%c0_138, %c224_139], %118 {strides = array<i32>} : memref<128x288xbf16, #tpu.memory_space<vmem>>, vector<128x32xbf16>,
    %c1_140 = arith.constant 1 : index
    %c2_141 = arith.constant 2 : index
    %c2_142 = arith.constant 2 : index
    %c0_143 = arith.constant 0 : index
    %120 = vector.load %arg13[%c1_140, %c2_141, %c2_142, %c0_143] : memref<4x10x10x32xf32, #tpu.memory_space<vmem>>, vector<2x8x8x32xf32>
    %121 = vector.shape_cast %120 : vector<2x8x8x32xf32> to vector<128x32xf32>
    %122 = arith.truncf %121 : vector<128x32xf32> to vector<128x32xbf16>
    %c0_144 = arith.constant 0 : index
    %c256_145 = arith.constant 256 : index
    %123 = vector.load %arg14[%c0_144, %c256_145] : memref<128x288xbf16, #tpu.memory_space<vmem>>, vector<128x32xbf16>
    tpu.vector_store %arg14[%c0_144, %c256_145], %122 {strides = array<i32>} : memref<128x288xbf16, #tpu.memory_space<vmem>>, vector<128x32xbf16>,
    %c0_146 = arith.constant 0 : index
    %c0_147 = arith.constant 0 : index
    %124 = vector.load %arg14[%c0_146, %c0_147] : memref<128x288xbf16, #tpu.memory_space<vmem>>, vector<128x288xbf16>
    %c1_148 = arith.constant 1 : index
    %c0_149 = arith.constant 0 : index
    %c0_150 = arith.constant 0 : index
    %125 = vector.load %arg9[%c1_148, %c0_149, %c0_150] : memref<3x288x32xbf16, #tpu.memory_space<vmem>>, vector<1x288x32xbf16>
    %126 = vector.shape_cast %125 : vector<1x288x32xbf16> to vector<288x32xbf16>
    %cst_151 = arith.constant dense<0.000000e+00> : vector<128x32xf32>
    %127 = tpu.matmul %124, %126, %cst_151 {dimension_numbers = #tpu.dot_dimension_numbers<[1], [0], [0], [1], [0, 0, 1, 1], [], []>} : vector<128x288xbf16>, vector<288x32xbf16>, vector<128x32xf32> -> vector<128x32xf32>
    %128 = arith.addf %87, %127 : vector<128x32xf32>
    %c2_152 = arith.constant 2 : index
    %c0_153 = arith.constant 0 : index
    %c0_154 = arith.constant 0 : index
    %c0_155 = arith.constant 0 : index
    %129 = vector.load %arg13[%c2_152, %c0_153, %c0_154, %c0_155] : memref<4x10x10x32xf32, #tpu.memory_space<vmem>>, vector<2x8x8x32xf32>
    %130 = vector.shape_cast %129 : vector<2x8x8x32xf32> to vector<128x32xf32>
    %131 = arith.truncf %130 : vector<128x32xf32> to vector<128x32xbf16>
    %c0_156 = arith.constant 0 : index
    %c0_157 = arith.constant 0 : index
    %132 = vector.load %arg14[%c0_156, %c0_157] : memref<128x288xbf16, #tpu.memory_space<vmem>>, vector<128x32xbf16>
    tpu.vector_store %arg14[%c0_156, %c0_157], %131 {strides = array<i32>} : memref<128x288xbf16, #tpu.memory_space<vmem>>, vector<128x32xbf16>,
    %c2_158 = arith.constant 2 : index
    %c0_159 = arith.constant 0 : index
    %c1_160 = arith.constant 1 : index
    %c0_161 = arith.constant 0 : index
    %133 = vector.load %arg13[%c2_158, %c0_159, %c1_160, %c0_161] : memref<4x10x10x32xf32, #tpu.memory_space<vmem>>, vector<2x8x8x32xf32>
    %134 = vector.shape_cast %133 : vector<2x8x8x32xf32> to vector<128x32xf32>
    %135 = arith.truncf %134 : vector<128x32xf32> to vector<128x32xbf16>
    %c0_162 = arith.constant 0 : index
    %c32_163 = arith.constant 32 : index
    %136 = vector.load %arg14[%c0_162, %c32_163] : memref<128x288xbf16, #tpu.memory_space<vmem>>, vector<128x32xbf16>
    tpu.vector_store %arg14[%c0_162, %c32_163], %135 {strides = array<i32>} : memref<128x288xbf16, #tpu.memory_space<vmem>>, vector<128x32xbf16>,
    %c2_164 = arith.constant 2 : index
    %c0_165 = arith.constant 0 : index
    %c2_166 = arith.constant 2 : index
    %c0_167 = arith.constant 0 : index
    %137 = vector.load %arg13[%c2_164, %c0_165, %c2_166, %c0_167] : memref<4x10x10x32xf32, #tpu.memory_space<vmem>>, vector<2x8x8x32xf32>
    %138 = vector.shape_cast %137 : vector<2x8x8x32xf32> to vector<128x32xf32>
    %139 = arith.truncf %138 : vector<128x32xf32> to vector<128x32xbf16>
    %c0_168 = arith.constant 0 : index
    %c64_169 = arith.constant 64 : index
    %140 = vector.load %arg14[%c0_168, %c64_169] : memref<128x288xbf16, #tpu.memory_space<vmem>>, vector<128x32xbf16>
    tpu.vector_store %arg14[%c0_168, %c64_169], %139 {strides = array<i32>} : memref<128x288xbf16, #tpu.memory_space<vmem>>, vector<128x32xbf16>,
    %c2_170 = arith.constant 2 : index
    %c1_171 = arith.constant 1 : index
    %c0_172 = arith.constant 0 : index
    %c0_173 = arith.constant 0 : index
    %141 = vector.load %arg13[%c2_170, %c1_171, %c0_172, %c0_173] : memref<4x10x10x32xf32, #tpu.memory_space<vmem>>, vector<2x8x8x32xf32>
    %142 = vector.shape_cast %141 : vector<2x8x8x32xf32> to vector<128x32xf32>
    %143 = arith.truncf %142 : vector<128x32xf32> to vector<128x32xbf16>
    %c0_174 = arith.constant 0 : index
    %c96_175 = arith.constant 96 : index
    %144 = vector.load %arg14[%c0_174, %c96_175] : memref<128x288xbf16, #tpu.memory_space<vmem>>, vector<128x32xbf16>
    tpu.vector_store %arg14[%c0_174, %c96_175], %143 {strides = array<i32>} : memref<128x288xbf16, #tpu.memory_space<vmem>>, vector<128x32xbf16>,
    %c2_176 = arith.constant 2 : index
    %c1_177 = arith.constant 1 : index
    %c1_178 = arith.constant 1 : index
    %c0_179 = arith.constant 0 : index
    %145 = vector.load %arg13[%c2_176, %c1_177, %c1_178, %c0_179] : memref<4x10x10x32xf32, #tpu.memory_space<vmem>>, vector<2x8x8x32xf32>
    %146 = vector.shape_cast %145 : vector<2x8x8x32xf32> to vector<128x32xf32>
    %147 = arith.truncf %146 : vector<128x32xf32> to vector<128x32xbf16>
    %c0_180 = arith.constant 0 : index
    %c128_181 = arith.constant 128 : index
    %148 = vector.load %arg14[%c0_180, %c128_181] : memref<128x288xbf16, #tpu.memory_space<vmem>>, vector<128x32xbf16>
    tpu.vector_store %arg14[%c0_180, %c128_181], %147 {strides = array<i32>} : memref<128x288xbf16, #tpu.memory_space<vmem>>, vector<128x32xbf16>,
    %c2_182 = arith.constant 2 : index
    %c1_183 = arith.constant 1 : index
    %c2_184 = arith.constant 2 : index
    %c0_185 = arith.constant 0 : index
    %149 = vector.load %arg13[%c2_182, %c1_183, %c2_184, %c0_185] : memref<4x10x10x32xf32, #tpu.memory_space<vmem>>, vector<2x8x8x32xf32>
    %150 = vector.shape_cast %149 : vector<2x8x8x32xf32> to vector<128x32xf32>
    %151 = arith.truncf %150 : vector<128x32xf32> to vector<128x32xbf16>
    %c0_186 = arith.constant 0 : index
    %c160_187 = arith.constant 160 : index
    %152 = vector.load %arg14[%c0_186, %c160_187] : memref<128x288xbf16, #tpu.memory_space<vmem>>, vector<128x32xbf16>
    tpu.vector_store %arg14[%c0_186, %c160_187], %151 {strides = array<i32>} : memref<128x288xbf16, #tpu.memory_space<vmem>>, vector<128x32xbf16>,
    %c2_188 = arith.constant 2 : index
    %c2_189 = arith.constant 2 : index
    %c0_190 = arith.constant 0 : index
    %c0_191 = arith.constant 0 : index
    %153 = vector.load %arg13[%c2_188, %c2_189, %c0_190, %c0_191] : memref<4x10x10x32xf32, #tpu.memory_space<vmem>>, vector<2x8x8x32xf32>
    %154 = vector.shape_cast %153 : vector<2x8x8x32xf32> to vector<128x32xf32>
    %155 = arith.truncf %154 : vector<128x32xf32> to vector<128x32xbf16>
    %c0_192 = arith.constant 0 : index
    %c192_193 = arith.constant 192 : index
    %156 = vector.load %arg14[%c0_192, %c192_193] : memref<128x288xbf16, #tpu.memory_space<vmem>>, vector<128x32xbf16>
    tpu.vector_store %arg14[%c0_192, %c192_193], %155 {strides = array<i32>} : memref<128x288xbf16, #tpu.memory_space<vmem>>, vector<128x32xbf16>,
    %c2_194 = arith.constant 2 : index
    %c2_195 = arith.constant 2 : index
    %c1_196 = arith.constant 1 : index
    %c0_197 = arith.constant 0 : index
    %157 = vector.load %arg13[%c2_194, %c2_195, %c1_196, %c0_197] : memref<4x10x10x32xf32, #tpu.memory_space<vmem>>, vector<2x8x8x32xf32>
    %158 = vector.shape_cast %157 : vector<2x8x8x32xf32> to vector<128x32xf32>
    %159 = arith.truncf %158 : vector<128x32xf32> to vector<128x32xbf16>
    %c0_198 = arith.constant 0 : index
    %c224_199 = arith.constant 224 : index
    %160 = vector.load %arg14[%c0_198, %c224_199] : memref<128x288xbf16, #tpu.memory_space<vmem>>, vector<128x32xbf16>
    tpu.vector_store %arg14[%c0_198, %c224_199], %159 {strides = array<i32>} : memref<128x288xbf16, #tpu.memory_space<vmem>>, vector<128x32xbf16>,
    %c2_200 = arith.constant 2 : index
    %c2_201 = arith.constant 2 : index
    %c2_202 = arith.constant 2 : index
    %c0_203 = arith.constant 0 : index
    %161 = vector.load %arg13[%c2_200, %c2_201, %c2_202, %c0_203] : memref<4x10x10x32xf32, #tpu.memory_space<vmem>>, vector<2x8x8x32xf32>
    %162 = vector.shape_cast %161 : vector<2x8x8x32xf32> to vector<128x32xf32>
    %163 = arith.truncf %162 : vector<128x32xf32> to vector<128x32xbf16>
    %c0_204 = arith.constant 0 : index
    %c256_205 = arith.constant 256 : index
    %164 = vector.load %arg14[%c0_204, %c256_205] : memref<128x288xbf16, #tpu.memory_space<vmem>>, vector<128x32xbf16>
    tpu.vector_store %arg14[%c0_204, %c256_205], %163 {strides = array<i32>} : memref<128x288xbf16, #tpu.memory_space<vmem>>, vector<128x32xbf16>,
    %c0_206 = arith.constant 0 : index
    %c0_207 = arith.constant 0 : index
    %165 = vector.load %arg14[%c0_206, %c0_207] : memref<128x288xbf16, #tpu.memory_space<vmem>>, vector<128x288xbf16>
    %c2_208 = arith.constant 2 : index
    %c0_209 = arith.constant 0 : index
    %c0_210 = arith.constant 0 : index
    %166 = vector.load %arg9[%c2_208, %c0_209, %c0_210] : memref<3x288x32xbf16, #tpu.memory_space<vmem>>, vector<1x288x32xbf16>
    %167 = vector.shape_cast %166 : vector<1x288x32xbf16> to vector<288x32xbf16>
    %cst_211 = arith.constant dense<0.000000e+00> : vector<128x32xf32>
    %168 = tpu.matmul %165, %167, %cst_211 {dimension_numbers = #tpu.dot_dimension_numbers<[1], [0], [0], [1], [0, 0, 1, 1], [], []>} : vector<128x288xbf16>, vector<288x32xbf16>, vector<128x32xf32> -> vector<128x32xf32>
    %169 = arith.addf %128, %168 : vector<128x32xf32>
    %c0_212 = arith.constant 0 : index
    %c0_213 = arith.constant 0 : index
    %170 = vector.load %arg10[%c0_212, %c0_213] : memref<1x32xf32, #tpu.memory_space<vmem>>, vector<1x32xf32>
    %171 = vector.broadcast %170 : vector<1x32xf32> to vector<128x32xf32>
    %172 = arith.addf %169, %171 : vector<128x32xf32>
    %173 = vector.shape_cast %172 : vector<128x32xf32> to vector<2x8x8x32xf32>
    %c0_214 = arith.constant 0 : index
    %c0_215 = arith.constant 0 : index
    %c0_216 = arith.constant 0 : index
    %c0_217 = arith.constant 0 : index
    %c0_218 = arith.constant 0 : index
    %174 = vector.load %arg11[%c0_214, %c0_215, %c0_216, %c0_217, %c0_218] : memref<1x2x8x8x32xf32, #tpu.memory_space<vmem>>, vector<1x2x8x8x32xf32>
    %175 = vector.shape_cast %174 : vector<1x2x8x8x32xf32> to vector<2x8x8x32xf32>
    %176 = vector.shape_cast %173 : vector<2x8x8x32xf32> to vector<1x2x8x8x32xf32>
    tpu.vector_store %arg11[%c0_214, %c0_215, %c0_216, %c0_217, %c0_218], %176 {strides = array<i32>} : memref<1x2x8x8x32xf32, #tpu.memory_space<vmem>>, vector<1x2x8x8x32xf32>,
    %c0_i32_219 = arith.constant 0 : i32
    %177 = arith.cmpi eq, %arg1, %c0_i32_219 : i32
    %178 = arith.extui %177 : i1 to i32
    %c0_i32_220 = arith.constant 0 : i32
    %179 = arith.cmpi ne, %178, %c0_i32_220 : i32
    scf.if %179 {
      %cst_235 = arith.constant 0.000000e+00 : f32
      %197 = vector.broadcast %cst_235 : f32 to vector<1x2x32xf32>
      %c0_236 = arith.constant 0 : index
      %c0_237 = arith.constant 0 : index
      %c0_238 = arith.constant 0 : index
      %198 = vector.load %arg12[%c0_236, %c0_237, %c0_238] : memref<1x2x32xf32, #tpu.memory_space<vmem>>, vector<1x2x32xf32>
      tpu.vector_store %arg12[%c0_236, %c0_237, %c0_238], %197 {strides = array<i32>} : memref<1x2x32xf32, #tpu.memory_space<vmem>>, vector<1x2x32xf32>,
    } else {
    }
    %c0_221 = arith.constant 0 : index
    %c0_222 = arith.constant 0 : index
    %c0_223 = arith.constant 0 : index
    %180 = vector.load %arg12[%c0_221, %c0_222, %c0_223] : memref<1x2x32xf32, #tpu.memory_space<vmem>>, vector<1x1x32xf32>
    %181 = vector.shape_cast %180 : vector<1x1x32xf32> to vector<1x32xf32>
    %cst_224 = arith.constant dense<0.000000e+00> : vector<32xf32>
    %182 = vector.multi_reduction <add>, %172, %cst_224 [0] : vector<128x32xf32> to vector<32xf32>
    %183 = vector.shape_cast %182 : vector<32xf32> to vector<1x32xf32>
    %184 = arith.addf %181, %183 : vector<1x32xf32>
    %c0_225 = arith.constant 0 : index
    %c0_226 = arith.constant 0 : index
    %c0_227 = arith.constant 0 : index
    %185 = vector.load %arg12[%c0_225, %c0_226, %c0_227] : memref<1x2x32xf32, #tpu.memory_space<vmem>>, vector<1x1x32xf32>
    %186 = vector.shape_cast %185 : vector<1x1x32xf32> to vector<1x32xf32>
    %187 = vector.shape_cast %184 : vector<1x32xf32> to vector<1x1x32xf32>
    tpu.vector_store %arg12[%c0_225, %c0_226, %c0_227], %187 {strides = array<i32>} : memref<1x2x32xf32, #tpu.memory_space<vmem>>, vector<1x1x32xf32>,
    %c0_228 = arith.constant 0 : index
    %c1_229 = arith.constant 1 : index
    %c0_230 = arith.constant 0 : index
    %188 = vector.load %arg12[%c0_228, %c1_229, %c0_230] : memref<1x2x32xf32, #tpu.memory_space<vmem>>, vector<1x1x32xf32>
    %189 = vector.shape_cast %188 : vector<1x1x32xf32> to vector<1x32xf32>
    %190 = arith.mulf %172, %172 : vector<128x32xf32>
    %cst_231 = arith.constant dense<0.000000e+00> : vector<32xf32>
    %191 = vector.multi_reduction <add>, %190, %cst_231 [0] : vector<128x32xf32> to vector<32xf32>
    %192 = vector.shape_cast %191 : vector<32xf32> to vector<1x32xf32>
    %193 = arith.addf %189, %192 : vector<1x32xf32>
    %c0_232 = arith.constant 0 : index
    %c1_233 = arith.constant 1 : index
    %c0_234 = arith.constant 0 : index
    %194 = vector.load %arg12[%c0_232, %c1_233, %c0_234] : memref<1x2x32xf32, #tpu.memory_space<vmem>>, vector<1x1x32xf32>
    %195 = vector.shape_cast %194 : vector<1x1x32xf32> to vector<1x32xf32>
    %196 = vector.shape_cast %193 : vector<1x32xf32> to vector<1x1x32xf32>
    tpu.vector_store %arg12[%c0_232, %c1_233, %c0_234], %196 {strides = array<i32>} : memref<1x2x32xf32, #tpu.memory_space<vmem>>, vector<1x1x32xf32>,
    return
  }
  func.func @transform_0(%arg0: i32, %arg1: i32) -> (i32, i32, i32, i32, i32) {
    %c0_i32 = arith.constant 0 : i32
    %c0_i32_0 = arith.constant 0 : i32
    %c0_i32_1 = arith.constant 0 : i32
    %c0_i32_2 = arith.constant 0 : i32
    return %arg0, %arg1, %c0_i32, %c0_i32_0, %c0_i32_1 : i32, i32, i32, i32, i32
  }
  func.func @transform_1(%arg0: i32, %arg1: i32) -> (i32, i32, i32, i32, i32) {
    %c2_i32 = arith.constant 2 : i32
    %0 = arith.muli %arg1, %c2_i32 : i32
    %c1_i32 = arith.constant 1 : i32
    %1 = arith.subi %0, %c1_i32 : i32
    %c0_i32 = arith.constant 0 : i32
    %2 = arith.maxsi %1, %c0_i32 : i32
    %c0_i32_0 = arith.constant 0 : i32
    %c0_i32_1 = arith.constant 0 : i32
    %c0_i32_2 = arith.constant 0 : i32
    %c0_i32_3 = arith.constant 0 : i32
    return %arg0, %2, %c0_i32_0, %c0_i32_1, %c0_i32_2 : i32, i32, i32, i32, i32
  }
  func.func @transform_2(%arg0: i32, %arg1: i32) -> (i32, i32, i32, i32, i32) {
    %c2_i32 = arith.constant 2 : i32
    %0 = arith.muli %arg1, %c2_i32 : i32
    %c2_i32_0 = arith.constant 2 : i32
    %1 = arith.addi %0, %c2_i32_0 : i32
    %c3_i32 = arith.constant 3 : i32
    %2 = arith.minsi %1, %c3_i32 : i32
    %c0_i32 = arith.constant 0 : i32
    %c0_i32_1 = arith.constant 0 : i32
    %c0_i32_2 = arith.constant 0 : i32
    %c0_i32_3 = arith.constant 0 : i32
    return %arg0, %2, %c0_i32, %c0_i32_1, %c0_i32_2 : i32, i32, i32, i32, i32
  }
  func.func @transform_3(%arg0: i32, %arg1: i32) -> (i32, i32, i32, i32) {
    %c0_i32 = arith.constant 0 : i32
    %c0_i32_0 = arith.constant 0 : i32
    %c0_i32_1 = arith.constant 0 : i32
    %c0_i32_2 = arith.constant 0 : i32
    return %arg0, %c0_i32, %c0_i32_0, %c0_i32_1 : i32, i32, i32, i32
  }
  func.func @transform_4(%arg0: i32, %arg1: i32) -> (i32, i32) {
    %c0_i32 = arith.constant 0 : i32
    %c0_i32_0 = arith.constant 0 : i32
    %c0_i32_1 = arith.constant 0 : i32
    return %c0_i32, %c0_i32_0 : i32, i32
  }
  func.func @transform_5(%arg0: i32, %arg1: i32) -> (i32, i32) {
    %c0_i32 = arith.constant 0 : i32
    %c0_i32_0 = arith.constant 0 : i32
    %c0_i32_1 = arith.constant 0 : i32
    return %c0_i32, %c0_i32_0 : i32, i32
  }
  func.func @transform_6(%arg0: i32, %arg1: i32) -> (i32, i32, i32, i32) {
    %c0_i32 = arith.constant 0 : i32
    %c0_i32_0 = arith.constant 0 : i32
    %c0_i32_1 = arith.constant 0 : i32
    %c0_i32_2 = arith.constant 0 : i32
    %c0_i32_3 = arith.constant 0 : i32
    return %c0_i32, %c0_i32_0, %c0_i32_1, %c0_i32_2 : i32, i32, i32, i32
  }
  func.func @transform_7(%arg0: i32, %arg1: i32) -> (i32, i32, i32) {
    %c0_i32 = arith.constant 0 : i32
    %c0_i32_0 = arith.constant 0 : i32
    %c0_i32_1 = arith.constant 0 : i32
    %c0_i32_2 = arith.constant 0 : i32
    return %c0_i32, %c0_i32_0, %c0_i32_1 : i32, i32, i32
  }
  func.func @transform_8(%arg0: i32, %arg1: i32) -> (i32, i32) {
    %c0_i32 = arith.constant 0 : i32
    %c0_i32_0 = arith.constant 0 : i32
    %c0_i32_1 = arith.constant 0 : i32
    return %c0_i32, %c0_i32_0 : i32, i32
  }
  func.func @transform_9(%arg0: i32, %arg1: i32) -> (i32, i32, i32, i32, i32) {
    %c0_i32 = arith.constant 0 : i32
    %c0_i32_0 = arith.constant 0 : i32
    %c0_i32_1 = arith.constant 0 : i32
    %c0_i32_2 = arith.constant 0 : i32
    return %arg0, %arg1, %c0_i32, %c0_i32_0, %c0_i32_1 : i32, i32, i32, i32, i32
  }
  func.func @transform_10(%arg0: i32, %arg1: i32) -> (i32, i32, i32) {
    %c0_i32 = arith.constant 0 : i32
    %c0_i32_0 = arith.constant 0 : i32
    %c0_i32_1 = arith.constant 0 : i32
    return %arg0, %c0_i32, %c0_i32_0 : i32, i32, i32
  }
}

</mosaic_0001>

<llo_original>
// kernel: tpu_custom_call.1
$region0: #{tpu_custom_call.1}
  #allocation0 [shape = 'u32[]', space=smem, size = 0x4, offset = 0x4, fixed_abs, tag = 'smem constant byte address 0x4 - core index']
  #allocation1 [shape = 'u32[144,128]{1,0:T(1,128)}', space=vmem, size = 0x12000, scoped, tag = 'internal scratch']
  #allocation2 [shape = 'f32[4,10,10,32]{3,2,1,0:T(8,128)}', space=vmem, size = 0x50000, scoped, tag = 'scratch operand']
  #allocation3 [shape = 'bf16[128,288]{1,0:T(16,128)(2,1)}', space=vmem, size = 0x18000, scoped, tag = 'scratch operand']
  #allocation4 [shape = 'bf16[64,72]{1,0:T(16,128)(2,1)}', space=vmem, size = 0x4000, scoped, tag = 'scratch operand']
  #allocation5 [shape = 'f32[64,32]{1,0:T(8,128)}', space=vmem, size = 0x8000, scoped, tag = 'scratch operand']
  %s0 = inlined_call_operand.vmem [shape: f32[2,4,8,8,32], index: 0, kind: input, shape index: {}]
  %s1 = inlined_call_operand.vmem [shape: f32[2,4,8,8,32], index: 1, kind: input, shape index: {}]
  %s2 = inlined_call_operand.hbm [shape: f32[2,4,8,8,32], index: 2, kind: input, shape index: {}]
  %s3 = inlined_call_operand.vmem [shape: f32[2,10,10,8], index: 3, kind: input, shape index: {}]
  %s4 = inlined_call_operand.vmem [shape: bf16[72,32], index: 4, kind: input, shape index: {}]
  %s5 = inlined_call_operand.vmem [shape: f32[1,32], index: 5, kind: input, shape index: {}]
  %s6 = inlined_call_operand.vmem [shape: f32[4,1,1,32], index: 6, kind: input, shape index: {}]
  %s7 = inlined_call_operand.vmem [shape: bf16[3,288,32], index: 7, kind: input, shape index: {}]
  %s8 = inlined_call_operand.vmem [shape: f32[1,32], index: 8, kind: input, shape index: {}]
  %s9 = inlined_call_operand.hbm [shape: f32[2,4,8,8,32], index: 9, kind: output, shape index: {0}]
  %s10 = inlined_call_operand.hbm [shape: f32[2,2,32], index: 10, kind: output, shape index: {1}]
  %11 = xla_tuple %s9, %s10
  %s12 = sld [smem:[#allocation0]]
  $region89: #{tpu_custom_call.1} parent=0
    _
  %s14 = ssub.s32 1, %s12
  %s15 = scalar_select 0, %s14, %s12
  $region1: #{tpu_custom_call.1} parent=0
    #allocation6 [shape = 'u8[65536]{0}', space=vmem, size = 0x10000, scoped, tag = 'input window, operand 2']
    #allocation7 [shape = 's32[2]{0}', space=sflag, size = 0x8, scoped, tag = 'scoped memory for tpu_custom_call.1']
    #allocation8 [shape = 's32[2]{0}', space=sflag, size = 0x8, scoped, tag = 'scoped memory for tpu_custom_call.1']
    #allocation9 [shape = 'u8[131072]{0}', space=vmem, size = 0x20000, scoped, tag = 'output window, operand 0']
    #allocation10 [shape = 'u8[2048]{0}', space=vmem, size = 0x800, scoped, tag = 'output window, operand 1']
    #allocation11 [shape = 's32[2]{0}', space=sflag, size = 0x8, scoped, tag = 'scoped memory for tpu_custom_call.1']
    %16 = vsyncpa [#allocation7], 0
    %s17 = scalar_lea.sflag [#allocation7], 1
    %18 = vsyncpa %s17, 0
    %19 = vsyncpa [#allocation8], 0
    %s20 = scalar_lea.sflag [#allocation8], 1
    %21 = vsyncpa %s20, 0
    %22 = vsyncpa [#allocation11], 0
    %s23 = scalar_lea.sflag [#allocation11], 1
    %24 = vsyncpa %s23, 0
    loop: start=0, step=1, limit=6
    $region2: #{tpu_custom_call.1} parent=1 // loop_pre_header
      _
    $region3: #{tpu_custom_call.1} parent=1 // loop_header
      %s26 = sphi 0, %s30
      %p27 = scmp.ge.s32.totalorder %s26, 6
      %s33 = sphi 0, %s45
      %s34 = sphi 0, %s41
      %s35 = sphi 0, %s33
      %s36 = sphi 0, %s34
      %s37 = sphi 0, %s35
      %s38 = sphi 0, %s36
      %s50 = sphi 0, %s52
      %s53 = sphi 0, %s50
      %s54 = sphi 0, %s53
      %s70 = sphi 0, %s54
      %s86 = sphi 0, %s88
      %s89 = sphi 0, %s86
      %s90 = sphi 0, %s89
      %s106 = sphi 0, %s90
      %s122 = sphi 0, %s124
      %s125 = sphi 0, %s122
      %s126 = sphi 0, %s125
      %s142 = sphi 0, %s126
      %s148 = sphi 0, %s150
      %s151 = sphi 0, %s148
      %s152 = sphi 0, %s151
      %s168 = sphi 0, %s152
      %s172 = sphi 0, %s172
      %s174 = sphi 0, %s172
      %s175 = sphi 0, %s174
      %s189 = sphi 0, %s175
      %s193 = sphi 0, %s193
      %s195 = sphi 0, %s193
      %s196 = sphi 0, %s195
      %s210 = sphi 0, %s196
      %s214 = sphi 0, %s214
      %s216 = sphi 0, %s214
      %s217 = sphi 0, %s216
      %s231 = sphi 0, %s217
      %s235 = sphi 0, %s235
      %s237 = sphi 0, %s235
      %s238 = sphi 0, %s237
      %s252 = sphi 0, %s238
      %s256 = sphi 0, %s256
      %s258 = sphi 0, %s256
      %s259 = sphi 0, %s258
      %s273 = sphi 0, %s259
      %s281 = sphi 0, %s283
      %s284 = sphi 0, %s281
      %s285 = sphi 0, %s284
      %s301 = sphi 0, %s285
      %s307 = sphi 0, %s309
      %s310 = sphi 0, %s307
      %s311 = sphi 0, %s310
      %s327 = sphi 0, %s311
    $region4: #{tpu_custom_call.1} parent=1 // loop_header_branch
      %29 = sbr.rel (%p27) target = $region8
    $region5: #{tpu_custom_call.1} parent=1 // loop_body
      %s31 = ssub.s32 %s26, 1
      %s32 = ssub.s32 %s26, 2
      %s39 = sadd.s32 1, %s34
      %p40 = scmp.ge.s32.totalorder %s39, 2
      %s41 = scalar_select %p40, 0, %s39
      %s42 = sadd.s32 1, %s33
      %s43 = scalar_select %p40, %s42, %s33
      %p44 = scmp.ge.s32.totalorder %s43, 2
      %s45 = scalar_select %p44, 0, %s43
      %s46 = ssub.s32 %s33, %s45
      %s47 = ssub.s32 %s34, %s41
      %s48 = sor.u32 %s46, %s47
      %p49 = scmp.eq.s32.totalorder %s48, 0
      %s51 = sadd.s32 %s50, 1
      %s52 = scalar_select %p49, %s50, %s51
      %p55 = pneg %p49
      %p56 = scmp.eq.s32.totalorder %s26, 3
      %p57 = por %p55, %p56
      %p58 = scmp.ne.s32.totalorder %s50, %s53
      %p59 = scmp.eq.s32.totalorder %s26, 0
      %p60 = por %p58, %p59
      %p61 = scmp.ne.s32.totalorder %s50, %s53
      %p62 = scmp.eq.s32.totalorder %s31, 3
      %p63 = por %p61, %p62
      %p64 = scmp.ne.s32.totalorder %s53, %s54
      %p65 = scmp.eq.s32.totalorder %s31, 0
      %p66 = por %p64, %p65
      %p67 = scmp.ne.s32.totalorder %s53, %s54
      %p68 = scmp.eq.s32.totalorder %s32, 3
      %p69 = por %p67, %p68
      %p71 = scmp.ne.s32.totalorder %s54, %s70
      %p72 = scmp.eq.s32.totalorder %s32, 0
      %p73 = por %p71, %p72
      %s74 = smul.u32 %s34, 2
      %s75 = ssub.s32 %s74, 1
      %p76 = scmp.gt.s32.totalorder %s75, 0
      %s77 = scalar_select %p76, %s75, 0
      %s78 = smul.u32 %s41, 2
      %s79 = ssub.s32 %s78, 1
      %p80 = scmp.gt.s32.totalorder %s79, 0
      %s81 = scalar_select %p80, %s79, 0
      %s82 = ssub.s32 %s33, %s45
      %s83 = ssub.s32 %s77, %s81
      %s84 = sor.u32 %s82, %s83
      %p85 = scmp.eq.s32.totalorder %s84, 0
      %s87 = sadd.s32 %s86, 1
      %s88 = scalar_select %p85, %s86, %s87
      %p91 = pneg %p85
      %p92 = scmp.eq.s32.totalorder %s26, 3
      %p93 = por %p91, %p92
      %p94 = scmp.ne.s32.totalorder %s86, %s89
      %p95 = scmp.eq.s32.totalorder %s26, 0
      %p96 = por %p94, %p95
      %p97 = scmp.ne.s32.totalorder %s86, %s89
      %p98 = scmp.eq.s32.totalorder %s31, 3
      %p99 = por %p97, %p98
      %p100 = scmp.ne.s32.totalorder %s89, %s90
      %p101 = scmp.eq.s32.totalorder %s31, 0
      %p102 = por %p100, %p101
      %p103 = scmp.ne.s32.totalorder %s89, %s90
      %p104 = scmp.eq.s32.totalorder %s32, 3
      %p105 = por %p103, %p104
      %p107 = scmp.ne.s32.totalorder %s90, %s106
      %p108 = scmp.eq.s32.totalorder %s32, 0
      %p109 = por %p107, %p108
      %s110 = smul.u32 %s34, 2
      %s111 = sadd.s32 %s110, 2
      %p112 = scmp.lt.s32.totalorder %s111, 3
      %s113 = scalar_select %p112, %s111, 3
      %s114 = smul.u32 %s41, 2
      %s115 = sadd.s32 %s114, 2
      %p116 = scmp.lt.s32.totalorder %s115, 3
      %s117 = scalar_select %p116, %s115, 3
      %s118 = ssub.s32 %s33, %s45
      %s119 = ssub.s32 %s113, %s117
      %s120 = sor.u32 %s118, %s119
      %p121 = scmp.eq.s32.totalorder %s120, 0
      %s123 = sadd.s32 %s122, 1
      %s124 = scalar_select %p121, %s122, %s123
      %p127 = pneg %p121
      %p128 = scmp.eq.s32.totalorder %s26, 3
      %p129 = por %p127, %p128
      %p130 = scmp.ne.s32.totalorder %s122, %s125
      %p131 = scmp.eq.s32.totalorder %s26, 0
      %p132 = por %p130, %p131
      %p133 = scmp.ne.s32.totalorder %s122, %s125
      %p134 = scmp.eq.s32.totalorder %s31, 3
      %p135 = por %p133, %p134
      %p136 = scmp.ne.s32.totalorder %s125, %s126
      %p137 = scmp.eq.s32.totalorder %s31, 0
      %p138 = por %p136, %p137
      %p139 = scmp.ne.s32.totalorder %s125, %s126
      %p140 = scmp.eq.s32.totalorder %s32, 3
      %p141 = por %p139, %p140
      %p143 = scmp.ne.s32.totalorder %s126, %s142
      %p144 = scmp.eq.s32.totalorder %s32, 0
      %p145 = por %p143, %p144
      %s146 = ssub.s32 %s33, %s45
      %p147 = scmp.eq.s32.totalorder %s146, 0
      %s149 = sadd.s32 %s148, 1
      %s150 = scalar_select %p147, %s148, %s149
      %p153 = pneg %p147
      %p154 = scmp.eq.s32.totalorder %s26, 3
      %p155 = por %p153, %p154
      %p156 = scmp.ne.s32.totalorder %s148, %s151
      %p157 = scmp.eq.s32.totalorder %s26, 0
      %p158 = por %p156, %p157
      %p159 = scmp.ne.s32.totalorder %s148, %s151
      %p160 = scmp.eq.s32.totalorder %s31, 3
      %p161 = por %p159, %p160
      %p162 = scmp.ne.s32.totalorder %s151, %s152
      %p163 = scmp.eq.s32.totalorder %s31, 0
      %p164 = por %p162, %p163
      %p165 = scmp.ne.s32.totalorder %s151, %s152
      %p166 = scmp.eq.s32.totalorder %s32, 3
      %p167 = por %p165, %p166
      %p169 = scmp.ne.s32.totalorder %s152, %s168
      %p170 = scmp.eq.s32.totalorder %s32, 0
      %p171 = por %p169, %p170
      %s173 = sadd.s32 %s172, 1
      %p176 = scmp.eq.s32.totalorder %s26, 3
      %p177 = scmp.ne.s32.totalorder %s172, %s174
      %p178 = scmp.eq.s32.totalorder %s26, 0
      %p179 = por %p177, %p178
      %p180 = scmp.ne.s32.totalorder %s172, %s174
      %p181 = scmp.eq.s32.totalorder %s31, 3
      %p182 = por %p180, %p181
      %p183 = scmp.ne.s32.totalorder %s174, %s175
      %p184 = scmp.eq.s32.totalorder %s31, 0
      %p185 = por %p183, %p184
      %p186 = scmp.ne.s32.totalorder %s174, %s175
      %p187 = scmp.eq.s32.totalorder %s32, 3
      %p188 = por %p186, %p187
      %p190 = scmp.ne.s32.totalorder %s175, %s189
      %p191 = scmp.eq.s32.totalorder %s32, 0
      %p192 = por %p190, %p191
      %s194 = sadd.s32 %s193, 1
      %p197 = scmp.eq.s32.totalorder %s26, 3
      %p198 = scmp.ne.s32.totalorder %s193, %s195
      %p199 = scmp.eq.s32.totalorder %s26, 0
      %p200 = por %p198, %p199
      %p201 = scmp.ne.s32.totalorder %s193, %s195
      %p202 = scmp.eq.s32.totalorder %s31, 3
      %p203 = por %p201, %p202
      %p204 = scmp.ne.s32.totalorder %s195, %s196
      %p205 = scmp.eq.s32.totalorder %s31, 0
      %p206 = por %p204, %p205
      %p207 = scmp.ne.s32.totalorder %s195, %s196
      %p208 = scmp.eq.s32.totalorder %s32, 3
      %p209 = por %p207, %p208
      %p211 = scmp.ne.s32.totalorder %s196, %s210
      %p212 = scmp.eq.s32.totalorder %s32, 0
      %p213 = por %p211, %p212
      %s215 = sadd.s32 %s214, 1
      %p218 = scmp.eq.s32.totalorder %s26, 3
      %p219 = scmp.ne.s32.totalorder %s214, %s216
      %p220 = scmp.eq.s32.totalorder %s26, 0
      %p221 = por %p219, %p220
      %p222 = scmp.ne.s32.totalorder %s214, %s216
      %p223 = scmp.eq.s32.totalorder %s31, 3
      %p224 = por %p222, %p223
      %p225 = scmp.ne.s32.totalorder %s216, %s217
      %p226 = scmp.eq.s32.totalorder %s31, 0
      %p227 = por %p225, %p226
      %p228 = scmp.ne.s32.totalorder %s216, %s217
      %p229 = scmp.eq.s32.totalorder %s32, 3
      %p230 = por %p228, %p229
      %p232 = scmp.ne.s32.totalorder %s217, %s231
      %p233 = scmp.eq.s32.totalorder %s32, 0
      %p234 = por %p232, %p233
      %s236 = sadd.s32 %s235, 1
      %p239 = scmp.eq.s32.totalorder %s26, 3
      %p240 = scmp.ne.s32.totalorder %s235, %s237
      %p241 = scmp.eq.s32.totalorder %s26, 0
      %p242 = por %p240, %p241
      %p243 = scmp.ne.s32.totalorder %s235, %s237
      %p244 = scmp.eq.s32.totalorder %s31, 3
      %p245 = por %p243, %p244
      %p246 = scmp.ne.s32.totalorder %s237, %s238
      %p247 = scmp.eq.s32.totalorder %s31, 0
      %p248 = por %p246, %p247
      %p249 = scmp.ne.s32.totalorder %s237, %s238
      %p250 = scmp.eq.s32.totalorder %s32, 3
      %p251 = por %p249, %p250
      %p253 = scmp.ne.s32.totalorder %s238, %s252
      %p254 = scmp.eq.s32.totalorder %s32, 0
      %p255 = por %p253, %p254
      %s257 = sadd.s32 %s256, 1
      %p260 = scmp.eq.s32.totalorder %s26, 3
      %p261 = scmp.ne.s32.totalorder %s256, %s258
      %p262 = scmp.eq.s32.totalorder %s26, 0
      %p263 = por %p261, %p262
      %p264 = scmp.ne.s32.totalorder %s256, %s258
      %p265 = scmp.eq.s32.totalorder %s31, 3
      %p266 = por %p264, %p265
      %p267 = scmp.ne.s32.totalorder %s258, %s259
      %p268 = scmp.eq.s32.totalorder %s31, 0
      %p269 = por %p267, %p268
      %p270 = scmp.ne.s32.totalorder %s258, %s259
      %p271 = scmp.eq.s32.totalorder %s32, 3
      %p272 = por %p270, %p271
      %p274 = scmp.ne.s32.totalorder %s259, %s273
      %p275 = scmp.eq.s32.totalorder %s32, 0
      %p276 = por %p274, %p275
      %s277 = ssub.s32 %s33, %s45
      %s278 = ssub.s32 %s34, %s41
      %s279 = sor.u32 %s277, %s278
      %p280 = scmp.eq.s32.totalorder %s279, 0
      %s282 = sadd.s32 %s281, 1
      %s283 = scalar_select %p280, %s281, %s282
      %p286 = pneg %p280
      %p287 = scmp.eq.s32.totalorder %s26, 3
      %p288 = por %p286, %p287
      %p289 = scmp.ne.s32.totalorder %s281, %s284
      %p290 = scmp.eq.s32.totalorder %s26, 0
      %p291 = por %p289, %p290
      %p292 = scmp.ne.s32.totalorder %s281, %s284
      %p293 = scmp.eq.s32.totalorder %s31, 3
      %p294 = por %p292, %p293
      %p295 = scmp.ne.s32.totalorder %s284, %s285
      %p296 = scmp.eq.s32.totalorder %s31, 0
      %p297 = por %p295, %p296
      %p298 = scmp.ne.s32.totalorder %s284, %s285
      %p299 = scmp.eq.s32.totalorder %s32, 3
      %p300 = por %p298, %p299
      %p302 = scmp.ne.s32.totalorder %s285, %s301
      %p303 = scmp.eq.s32.totalorder %s32, 0
      %p304 = por %p302, %p303
      %s305 = ssub.s32 %s33, %s45
      %p306 = scmp.eq.s32.totalorder %s305, 0
      %s308 = sadd.s32 %s307, 1
      %s309 = scalar_select %p306, %s307, %s308
      %p312 = pneg %p306
      %p313 = scmp.eq.s32.totalorder %s26, 3
      %p314 = por %p312, %p313
      %p315 = scmp.ne.s32.totalorder %s307, %s310
      %p316 = scmp.eq.s32.totalorder %s26, 0
      %p317 = por %p315, %p316
      %p318 = scmp.ne.s32.totalorder %s307, %s310
      %p319 = scmp.eq.s32.totalorder %s31, 3
      %p320 = por %p318, %p319
      %p321 = scmp.ne.s32.totalorder %s310, %s311
      %p322 = scmp.eq.s32.totalorder %s31, 0
      %p323 = por %p321, %p322
      %p324 = scmp.ne.s32.totalorder %s310, %s311
      %p325 = scmp.eq.s32.totalorder %s32, 3
      %p326 = por %p324, %p325
      %p328 = scmp.ne.s32.totalorder %s311, %s327
      %p329 = scmp.eq.s32.totalorder %s32, 0
      %p330 = por %p328, %p329
      %p331 = scmp.le.s32.totalorder 1, %s26
      %p332 = scmp.lt.s32.totalorder %s26, 5
      %p333 = pnand %p331, %p332
      %p334 = pneg %p333
      // Predicated region
      $region9: #{tpu_custom_call.1} parent=5 // pred_check
        _
      $region10: #{tpu_custom_call.1} parent=5 // pred_check_branch
        %336 = sbr.rel (%p333) target = $region12
      $region11: #{tpu_custom_call.1} parent=5 // pred_region
        %s337 = ssub.s32 %s26, 1
        // Predicated region
        $region13: #{tpu_custom_call.1} parent=11 // pred_check
          %p338 = pneg %p185
        $region14: #{tpu_custom_call.1} parent=11 // pred_check_branch
          %340 = sbr.rel (%p338) target = $region16
        $region15: #{tpu_custom_call.1} parent=11 // pred_region
          _
        $region16: #{tpu_custom_call.1} parent=11 // pred_fallthru
          _
        // Predicated region
        $region17: #{tpu_custom_call.1} parent=11 // pred_check
          %p341 = pneg %p206
        $region18: #{tpu_custom_call.1} parent=11 // pred_check_branch
          %343 = sbr.rel (%p341) target = $region20
        $region19: #{tpu_custom_call.1} parent=11 // pred_region
          _
        $region20: #{tpu_custom_call.1} parent=11 // pred_fallthru
          _
        // Predicated region
        $region21: #{tpu_custom_call.1} parent=11 // pred_check
          %p344 = pneg %p227
        $region22: #{tpu_custom_call.1} parent=11 // pred_check_branch
          %346 = sbr.rel (%p344) target = $region24
        $region23: #{tpu_custom_call.1} parent=11 // pred_region
          _
        $region24: #{tpu_custom_call.1} parent=11 // pred_fallthru
          _
        // Predicated region
        $region25: #{tpu_custom_call.1} parent=11 // pred_check
          %p347 = pneg %p248
        $region26: #{tpu_custom_call.1} parent=11 // pred_check_branch
          %349 = sbr.rel (%p347) target = $region28
        $region27: #{tpu_custom_call.1} parent=11 // pred_region
          _
        $region28: #{tpu_custom_call.1} parent=11 // pred_fallthru
          _
        // Predicated region
        $region29: #{tpu_custom_call.1} parent=11 // pred_check
          %p350 = pneg %p269
        $region30: #{tpu_custom_call.1} parent=11 // pred_check_branch
          %352 = sbr.rel (%p350) target = $region32
        $region31: #{tpu_custom_call.1} parent=11 // pred_region
          _
        $region32: #{tpu_custom_call.1} parent=11 // pred_fallthru
          _
      $region12: #{tpu_custom_call.1} parent=5 // pred_fallthru
        _
      %p353 = scmp.lt.s32.totalorder %s26, 4
      // Predicated region
      $region33: #{tpu_custom_call.1} parent=5 // pred_check
        %p354 = pneg %p353
      $region34: #{tpu_custom_call.1} parent=5 // pred_check_branch
        %356 = sbr.rel (%p354) target = $region36
      $region35: #{tpu_custom_call.1} parent=5 // pred_region
        // Predicated region
        $region37: #{tpu_custom_call.1} parent=35 // pred_check
          %p357 = pneg %p60
        $region38: #{tpu_custom_call.1} parent=35 // pred_check_branch
          %359 = sbr.rel (%p357) target = $region40
        $region39: #{tpu_custom_call.1} parent=35 // pred_region
          %s360 = smul.u32 2, %s34
          %p361 = scmp.lt.s32.totalorder %s33, 1
          %s362 = scalar_select %p361, %s33, 1
          %p363 = scmp.lt.s32.totalorder %s360, 3
          %s364 = scalar_select %p363, %s360, 3
          %s365 = smul.addr %s364, 8
          %s366 = smul.addr %s362, 32
          %s367 = sadd.s32 %s365, %s366
          %s368 = smul.addr %s367, 8
          %s369 = scalar_lea.vmem %s0, %s368
          %s370 = smul.u32 2, %s34
        $region40: #{tpu_custom_call.1} parent=35 // pred_fallthru
          _
        // Predicated region
        $region41: #{tpu_custom_call.1} parent=35 // pred_check
          %p371 = pneg %p96
        $region42: #{tpu_custom_call.1} parent=35 // pred_check_branch
          %373 = sbr.rel (%p371) target = $region44
        $region43: #{tpu_custom_call.1} parent=35 // pred_region
          %s374 = smul.u32 %s34, 2
          %s375 = ssub.s32 %s374, 1
          %p376 = scmp.gt.s32.totalorder %s375, 0
          %s377 = scalar_select %p376, %s375, 0
          %p378 = scmp.lt.s32.totalorder %s33, 1
          %s379 = scalar_select %p378, %s33, 1
          %p380 = scmp.lt.s32.totalorder %s377, 3
          %s381 = scalar_select %p380, %s377, 3
          %s382 = smul.addr %s381, 8
          %s383 = smul.addr %s379, 32
          %s384 = sadd.s32 %s382, %s383
          %s385 = smul.addr %s384, 8
          %s386 = scalar_lea.vmem %s1, %s385
          %s387 = smul.u32 %s34, 2
          %s388 = ssub.s32 %s387, 1
          %p389 = scmp.gt.s32.totalorder %s388, 0
          %s390 = scalar_select %p389, %s388, 0
        $region44: #{tpu_custom_call.1} parent=35 // pred_fallthru
          _
        // Predicated region
        $region45: #{tpu_custom_call.1} parent=35 // pred_check
          %p391 = pneg %p132
        $region46: #{tpu_custom_call.1} parent=35 // pred_check_branch
          %393 = sbr.rel (%p391) target = $region48
        $region47: #{tpu_custom_call.1} parent=35 // pred_region
          %s394 = sand.u32 %s122, 1
          %s395 = scalar_lea.sflag [#allocation7], %s394
          %s396 = sand.u32 %s122, 1
          %s397 = smul.addr %s396, 64
          %s398 = scalar_lea.vmem [#allocation6], %s397
          %s399 = smul.u32 %s34, 2
          %s400 = sadd.s32 %s399, 2
          %p401 = scmp.lt.s32.totalorder %s400, 3
          %s402 = scalar_select %p401, %s400, 3
          %s404 = ssub.s32 1024, 1024
          %405 = vsyncadd %s395, %s404
          %s406 = smul.addr %s402, 8
          %s407 = smul.addr %s33, 32
          %s408 = sadd.s32 %s406, %s407
          %s409 = smul.addr %s408, 128
          %s410 = scalar_lea.hbm %s2, %s409
          %s411 = sshll.u32 %s398, 4
          %s412 = int_to_ptr.vmem [resolvable:$true] %s411
          %417 = dma.hbm_to_vmem [thread:$0]  %s410, 1024, %s412, %s395, 128, 128, 8
        $region48: #{tpu_custom_call.1} parent=35 // pred_fallthru
          _
        // Predicated region
        $region49: #{tpu_custom_call.1} parent=35 // pred_check
          %p418 = pneg %p158
        $region50: #{tpu_custom_call.1} parent=35 // pred_check_branch
          %420 = sbr.rel (%p418) target = $region52
        $region51: #{tpu_custom_call.1} parent=35 // pred_region
          %p421 = scmp.lt.s32.totalorder %s33, 1
          %s422 = scalar_select %p421, %s33, 1
          %s423 = smul.addr %s422, 20
          %s424 = smul.addr %s423, 8
          %s425 = scalar_lea.vmem %s3, %s424
        $region52: #{tpu_custom_call.1} parent=35 // pred_fallthru
          _
      $region36: #{tpu_custom_call.1} parent=5 // pred_fallthru
        _
      %p426 = scmp.le.s32.totalorder 1, %s26
      %p427 = scmp.lt.s32.totalorder %s26, 5
      %p428 = pnand %p426, %p427
      %p429 = pneg %p428
      // Predicated region
      $region53: #{tpu_custom_call.1} parent=5 // pred_check
        _
      $region54: #{tpu_custom_call.1} parent=5 // pred_check_branch
        %431 = sbr.rel (%p428) target = $region56
      $region55: #{tpu_custom_call.1} parent=5 // pred_region
        %s432 = ssub.s32 %s26, 1
        %s433 = sand.u32 %s125, 1
        %s434 = scalar_lea.sflag [#allocation7], %s433
        %s435 = sand.u32 %s125, 1
        %s436 = smul.addr %s435, 64
        %s437 = scalar_lea.vmem [#allocation6], %s436
        // Predicated region
        $region57: #{tpu_custom_call.1} parent=55 // pred_check
          %p438 = pneg %p138
        $region58: #{tpu_custom_call.1} parent=55 // pred_check_branch
          %440 = sbr.rel (%p438) target = $region60
        $region59: #{tpu_custom_call.1} parent=55 // pred_region
          %441 = dma.done %s434, 1024
        $region60: #{tpu_custom_call.1} parent=55 // pred_fallthru
          _
        %s442 = smul.u32 2, %s36
        %p443 = scmp.lt.s32.totalorder %s35, 1
        %s444 = scalar_select %p443, %s35, 1
        %p445 = scmp.lt.s32.totalorder %s442, 3
        %s446 = scalar_select %p445, %s442, 3
        %s447 = smul.addr %s446, 8
        %s448 = smul.addr %s444, 32
        %s449 = sadd.s32 %s447, %s448
        %s450 = smul.addr %s449, 8
        %s451 = scalar_lea.vmem %s0, %s450
        %p452 = pneg %p66
        %p453 = pneg %p63
        %s454 = smul.u32 %s36, 2
        %s455 = ssub.s32 %s454, 1
        %p456 = scmp.gt.s32.totalorder %s455, 0
        %s457 = scalar_select %p456, %s455, 0
        %p458 = scmp.lt.s32.totalorder %s35, 1
        %s459 = scalar_select %p458, %s35, 1
        %p460 = scmp.lt.s32.totalorder %s457, 3
        %s461 = scalar_select %p460, %s457, 3
        %s462 = smul.addr %s461, 8
        %s463 = smul.addr %s459, 32
        %s464 = sadd.s32 %s462, %s463
        %s465 = smul.addr %s464, 8
        %s466 = scalar_lea.vmem %s1, %s465
        %p467 = pneg %p102
        %p468 = pneg %p99
        %s469 = sand.u32 %s125, 1
        %s470 = scalar_lea.sflag [#allocation7], %s469
        %s471 = sand.u32 %s125, 1
        %s472 = smul.addr %s471, 64
        %s473 = scalar_lea.vmem [#allocation6], %s472
        %p474 = pneg %p138
        %p475 = pneg %p135
        %p476 = scmp.lt.s32.totalorder %s35, 1
        %s477 = scalar_select %p476, %s35, 1
        %s478 = smul.addr %s477, 20
        %s479 = smul.addr %s478, 8
        %s480 = scalar_lea.vmem %s3, %s479
        %p481 = pneg %p164
        %p482 = pneg %p161
        %p483 = pneg %p185
        %p484 = pneg %p182
        %p485 = pneg %p206
        %p486 = pneg %p203
        %p487 = pneg %p227
        %p488 = pneg %p224
        %p489 = pneg %p248
        %p490 = pneg %p245
        %p491 = pneg %p269
        %p492 = pneg %p266
        %p493 = pneg %p297
        %p494 = pneg %p294
        %s495 = sand.u32 %s284, 1
        %s496 = scalar_lea.sflag [#allocation8], %s495
        %s497 = sand.u32 %s284, 1
        %s498 = smul.addr %s497, 128
        %s499 = scalar_lea.vmem [#allocation9], %s498
        %p500 = pneg %p323
        %p501 = pneg %p320
        %s502 = sand.u32 %s310, 1
        %s503 = scalar_lea.sflag [#allocation11], %s502
        %s504 = sand.u32 %s310, 1
        %s505 = smul.addr %s504, 2
        %s506 = scalar_lea.vmem [#allocation10], %s505
        %s507 = smul.u32 2, %s36
        %p508 = scmp.lt.s32.totalorder %s35, 1
        %s509 = scalar_select %p508, %s35, 1
        %p510 = scmp.lt.s32.totalorder %s507, 3
        %s511 = scalar_select %p510, %s507, 3
        %s512 = smul.addr %s511, 8
        %s513 = smul.addr %s509, 32
        %s514 = sadd.s32 %s512, %s513
        %s515 = smul.addr %s514, 8
        %s516 = scalar_lea.vmem %s0, %s515
        %s517 = smul.u32 2, %s36
        %s518 = smul.u32 %s36, 2
        %s519 = ssub.s32 %s518, 1
        %p520 = scmp.gt.s32.totalorder %s519, 0
        %s521 = scalar_select %p520, %s519, 0
        %p522 = scmp.lt.s32.totalorder %s35, 1
        %s523 = scalar_select %p522, %s35, 1
        %p524 = scmp.lt.s32.totalorder %s521, 3
        %s525 = scalar_select %p524, %s521, 3
        %s526 = smul.addr %s525, 8
        %s527 = smul.addr %s523, 32
        %s528 = sadd.s32 %s526, %s527
        %s529 = smul.addr %s528, 8
        %s530 = scalar_lea.vmem %s1, %s529
        %s531 = smul.u32 %s36, 2
        %s532 = ssub.s32 %s531, 1
        %p533 = scmp.gt.s32.totalorder %s532, 0
        %s534 = scalar_select %p533, %s532, 0
        %s535 = smul.u32 %s36, 2
        %s536 = sadd.s32 %s535, 2
        %p537 = scmp.lt.s32.totalorder %s536, 3
        %s538 = scalar_select %p537, %s536, 3
        %p539 = scmp.lt.s32.totalorder %s35, 1
        %s540 = scalar_select %p539, %s35, 1
        %s541 = smul.addr %s540, 20
        %s542 = smul.addr %s541, 8
        %s543 = scalar_lea.vmem %s3, %s542
        %s544 = smul.u32 2, %s36
        %s546 = smul.u32 %s36, 2
        %p547 = scmp.eq.s32.totalorder %s36, 0
        // Predicated region
        $region61: #{tpu_custom_call.1} parent=55 // pred_check
          %p548 = pneg %p547
        $region62: #{tpu_custom_call.1} parent=55 // pred_check_branch
          %550 = sbr.rel (%p548) target = $region64
        $region63: #{tpu_custom_call.1} parent=55 // pred_region
          %vm551 = vcmask 261120
          %552 = vst.msk [vmem:[#allocation2] sm:$0xff] %vm551, 0.0
          %vm553 = vcmask 254976
          %554 = vst.msk [vmem:[#allocation2 + $0x8] sm:$0x3] %vm553, 0.0
          %555 = vst.msk [vmem:[#allocation2 + $0xa0] sm:$0xff] %vm551, 0.0
          %556 = vst.msk [vmem:[#allocation2 + $0xa8] sm:$0x3] %vm553, 0.0
          %557 = vst.msk [vmem:[#allocation2 + $0x140] sm:$0xff] %vm551, 0.0
          %558 = vst.msk [vmem:[#allocation2 + $0x148] sm:$0x3] %vm553, 0.0
          %559 = vst.msk [vmem:[#allocation2 + $0x1e0] sm:$0xff] %vm551, 0.0
          %560 = vst.msk [vmem:[#allocation2 + $0x1e8] sm:$0x3] %vm553, 0.0
          %s561 = scalar_lea.vmem [#allocation2], 144
          %562 = vst.msk [vmem:[%s561] sm:$0xff] %vm551, 0.0
          %563 = vst.msk [vmem:[%s561 + $0x8] sm:$0x3] %vm553, 0.0
          %564 = vst.msk [vmem:[%s561 + $0xa0] sm:$0xff] %vm551, 0.0
          %565 = vst.msk [vmem:[%s561 + $0xa8] sm:$0x3] %vm553, 0.0
          %566 = vst.msk [vmem:[%s561 + $0x140] sm:$0xff] %vm551, 0.0
          %567 = vst.msk [vmem:[%s561 + $0x148] sm:$0x3] %vm553, 0.0
          %568 = vst.msk [vmem:[%s561 + $0x1e0] sm:$0xff] %vm551, 0.0
          %569 = vst.msk [vmem:[%s561 + $0x1e8] sm:$0x3] %vm553, 0.0
          %s570 = scalar_lea.vmem [#allocation2], 16
          %vm571 = vcmask 253952
          %572 = vst.msk [vmem:[%s570] sm:$0x1] %vm571, 0.0
          %573 = vst.msk [vmem:[%s570 + $0x10] sm:$0x1] %vm571, 0.0
          %574 = vst.msk [vmem:[%s570 + $0x20] sm:$0x1] %vm571, 0.0
          %575 = vst.msk [vmem:[%s570 + $0x30] sm:$0x1] %vm571, 0.0
          %576 = vst.msk [vmem:[%s570 + $0x40] sm:$0x1] %vm571, 0.0
          %577 = vst.msk [vmem:[%s570 + $0x50] sm:$0x1] %vm571, 0.0
          %578 = vst.msk [vmem:[%s570 + $0x60] sm:$0x1] %vm571, 0.0
          %579 = vst.msk [vmem:[%s570 + $0x70] sm:$0x1] %vm571, 0.0
          %580 = vst.msk [vmem:[%s570 + $0xa0] sm:$0x1] %vm571, 0.0
          %581 = vst.msk [vmem:[%s570 + $0xb0] sm:$0x1] %vm571, 0.0
          %582 = vst.msk [vmem:[%s570 + $0xc0] sm:$0x1] %vm571, 0.0
          %583 = vst.msk [vmem:[%s570 + $0xd0] sm:$0x1] %vm571, 0.0
          %584 = vst.msk [vmem:[%s570 + $0xe0] sm:$0x1] %vm571, 0.0
          %585 = vst.msk [vmem:[%s570 + $0xf0] sm:$0x1] %vm571, 0.0
          %586 = vst.msk [vmem:[%s570 + $0x100] sm:$0x1] %vm571, 0.0
          %587 = vst.msk [vmem:[%s570 + $0x110] sm:$0x1] %vm571, 0.0
          %588 = vst.msk [vmem:[%s570 + $0x140] sm:$0x1] %vm571, 0.0
          %589 = vst.msk [vmem:[%s570 + $0x150] sm:$0x1] %vm571, 0.0
          %590 = vst.msk [vmem:[%s570 + $0x160] sm:$0x1] %vm571, 0.0
          %591 = vst.msk [vmem:[%s570 + $0x170] sm:$0x1] %vm571, 0.0
          %592 = vst.msk [vmem:[%s570 + $0x180] sm:$0x1] %vm571, 0.0
          %593 = vst.msk [vmem:[%s570 + $0x190] sm:$0x1] %vm571, 0.0
          %594 = vst.msk [vmem:[%s570 + $0x1a0] sm:$0x1] %vm571, 0.0
          %595 = vst.msk [vmem:[%s570 + $0x1b0] sm:$0x1] %vm571, 0.0
          %596 = vst.msk [vmem:[%s570 + $0x1e0] sm:$0x1] %vm571, 0.0
          %597 = vst.msk [vmem:[%s570 + $0x1f0] sm:$0x1] %vm571, 0.0
          %598 = vst.msk [vmem:[%s570 + $0x200] sm:$0x1] %vm571, 0.0
          %599 = vst.msk [vmem:[%s570 + $0x210] sm:$0x1] %vm571, 0.0
          %600 = vst.msk [vmem:[%s570 + $0x220] sm:$0x1] %vm571, 0.0
          %601 = vst.msk [vmem:[%s570 + $0x230] sm:$0x1] %vm571, 0.0
          %602 = vst.msk [vmem:[%s570 + $0x240] sm:$0x1] %vm571, 0.0
          %603 = vst.msk [vmem:[%s570 + $0x250] sm:$0x1] %vm571, 0.0
          %604 = vst.msk [vmem:[%s570 + $0x9] sm:$0x1] %vm571, 0.0
          %605 = vst.msk [vmem:[%s570 + $0x19] sm:$0x1] %vm571, 0.0
          %606 = vst.msk [vmem:[%s570 + $0x29] sm:$0x1] %vm571, 0.0
          %607 = vst.msk [vmem:[%s570 + $0x39] sm:$0x1] %vm571, 0.0
          %608 = vst.msk [vmem:[%s570 + $0x49] sm:$0x1] %vm571, 0.0
          %609 = vst.msk [vmem:[%s570 + $0x59] sm:$0x1] %vm571, 0.0
          %610 = vst.msk [vmem:[%s570 + $0x69] sm:$0x1] %vm571, 0.0
          %611 = vst.msk [vmem:[%s570 + $0x79] sm:$0x1] %vm571, 0.0
          %612 = vst.msk [vmem:[%s570 + $0xa9] sm:$0x1] %vm571, 0.0
          %613 = vst.msk [vmem:[%s570 + $0xb9] sm:$0x1] %vm571, 0.0
          %614 = vst.msk [vmem:[%s570 + $0xc9] sm:$0x1] %vm571, 0.0
          %615 = vst.msk [vmem:[%s570 + $0xd9] sm:$0x1] %vm571, 0.0
          %616 = vst.msk [vmem:[%s570 + $0xe9] sm:$0x1] %vm571, 0.0
          %617 = vst.msk [vmem:[%s570 + $0xf9] sm:$0x1] %vm571, 0.0
          %618 = vst.msk [vmem:[%s570 + $0x109] sm:$0x1] %vm571, 0.0
          %619 = vst.msk [vmem:[%s570 + $0x119] sm:$0x1] %vm571, 0.0
          %620 = vst.msk [vmem:[%s570 + $0x149] sm:$0x1] %vm571, 0.0
          %621 = vst.msk [vmem:[%s570 + $0x159] sm:$0x1] %vm571, 0.0
          %622 = vst.msk [vmem:[%s570 + $0x169] sm:$0x1] %vm571, 0.0
          %623 = vst.msk [vmem:[%s570 + $0x179] sm:$0x1] %vm571, 0.0
          %624 = vst.msk [vmem:[%s570 + $0x189] sm:$0x1] %vm571, 0.0
          %625 = vst.msk [vmem:[%s570 + $0x199] sm:$0x1] %vm571, 0.0
          %626 = vst.msk [vmem:[%s570 + $0x1a9] sm:$0x1] %vm571, 0.0
          %627 = vst.msk [vmem:[%s570 + $0x1b9] sm:$0x1] %vm571, 0.0
          %628 = vst.msk [vmem:[%s570 + $0x1e9] sm:$0x1] %vm571, 0.0
          %629 = vst.msk [vmem:[%s570 + $0x1f9] sm:$0x1] %vm571, 0.0
          %630 = vst.msk [vmem:[%s570 + $0x209] sm:$0x1] %vm571, 0.0
          %631 = vst.msk [vmem:[%s570 + $0x219] sm:$0x1] %vm571, 0.0
          %632 = vst.msk [vmem:[%s570 + $0x229] sm:$0x1] %vm571, 0.0
          %633 = vst.msk [vmem:[%s570 + $0x239] sm:$0x1] %vm571, 0.0
          %634 = vst.msk [vmem:[%s570 + $0x249] sm:$0x1] %vm571, 0.0
          %635 = vst.msk [vmem:[%s570 + $0x259] sm:$0x1] %vm571, 0.0
          %v636 = vld [vmem:[%s543] sm:$0xff]
          %v637 = vld [vmem:[%s543 + $0x10] sm:$0xff]
          %v638 = vld [vmem:[%s543 + $0x20] sm:$0xff]
          %v639 = vld [vmem:[%s543 + $0x30] sm:$0xff]
          %v640 = vld [vmem:[%s543 + $0x40] sm:$0xff]
          %v641 = vld [vmem:[%s543 + $0x50] sm:$0xff]
          %v642 = vld [vmem:[%s543 + $0x60] sm:$0xff]
          %v643 = vld [vmem:[%s543 + $0x70] sm:$0xff]
          %v644 = vpack.c.bf16 %v637, %v636
          %v645 = vpack.c.bf16 %v639, %v638
          %v646 = vpack.c.bf16 %v641, %v640
          %v647 = vpack.c.bf16 %v643, %v642
          %vm648 = vcmask 64512
          %649 = vst.msk [vmem:[#allocation4] sm:$0xff] %vm648, %v644
          %650 = vst.msk [vmem:[#allocation4 + $0x8] sm:$0xff] %vm648, %v645
          %651 = vst.msk [vmem:[#allocation4 + $0x10] sm:$0xff] %vm648, %v646
          %652 = vst.msk [vmem:[#allocation4 + $0x18] sm:$0xff] %vm648, %v647
          %v653 = vld [vmem:[%s543 + $0x1] sm:$0xff]
          %v654 = vld [vmem:[%s543 + $0x11] sm:$0xff]
          %v655 = vld [vmem:[%s543 + $0x21] sm:$0xff]
          %v656 = vld [vmem:[%s543 + $0x31] sm:$0xff]
          %v657 = vld [vmem:[%s543 + $0x41] sm:$0xff]
          %v658 = vld [vmem:[%s543 + $0x51] sm:$0xff]
          %v659 = vld [vmem:[%s543 + $0x61] sm:$0xff]
          %v660 = vld [vmem:[%s543 + $0x71] sm:$0xff]
          %v661 = vpack.c.bf16 %v654, %v653
          %v662 = vpack.c.bf16 %v656, %v655
          %v663 = vpack.c.bf16 %v658, %v657
          %v664 = vpack.c.bf16 %v660, %v659
          %669 = vrot.lane.b32.xlu0 %v661, 8
          %v670 = vpop.permute.xlu0 %669
          %671 = vrot.lane.b32.xlu0 %v662, 8
          %v672 = vpop.permute.xlu0 %671
          %673 = vrot.lane.b32.xlu0 %v663, 8
          %v674 = vpop.permute.xlu0 %673
          %675 = vrot.lane.b32.xlu0 %v664, 8
          %v676 = vpop.permute.xlu0 %675
          %vm681 = vcmask 130112
          %682 = vst.msk [vmem:[#allocation4] sm:$0xff] %vm681, %v670
          %683 = vst.msk [vmem:[#allocation4 + $0x8] sm:$0xff] %vm681, %v672
          %684 = vst.msk [vmem:[#allocation4 + $0x10] sm:$0xff] %vm681, %v674
          %685 = vst.msk [vmem:[#allocation4 + $0x18] sm:$0xff] %vm681, %v676
          %v686 = vld [vmem:[%s543 + $0x2] sm:$0xff]
          %v687 = vld [vmem:[%s543 + $0x12] sm:$0xff]
          %v688 = vld [vmem:[%s543 + $0x22] sm:$0xff]
          %v689 = vld [vmem:[%s543 + $0x32] sm:$0xff]
          %v690 = vld [vmem:[%s543 + $0x42] sm:$0xff]
          %v691 = vld [vmem:[%s543 + $0x52] sm:$0xff]
          %v692 = vld [vmem:[%s543 + $0x62] sm:$0xff]
          %v693 = vld [vmem:[%s543 + $0x72] sm:$0xff]
          %v694 = vpack.c.bf16 %v687, %v686
          %v695 = vpack.c.bf16 %v689, %v688
          %v696 = vpack.c.bf16 %v691, %v690
          %v697 = vpack.c.bf16 %v693, %v692
          %702 = vrot.lane.b32.xlu0 %v694, 16
          %v703 = vpop.permute.xlu0 %702
          %704 = vrot.lane.b32.xlu0 %v695, 16
          %v705 = vpop.permute.xlu0 %704
          %706 = vrot.lane.b32.xlu0 %v696, 16
          %v707 = vpop.permute.xlu0 %706
          %708 = vrot.lane.b32.xlu0 %v697, 16
          %v709 = vpop.permute.xlu0 %708
          %vm714 = vcmask 195712
          %715 = vst.msk [vmem:[#allocation4] sm:$0xff] %vm714, %v703
          %716 = vst.msk [vmem:[#allocation4 + $0x8] sm:$0xff] %vm714, %v705
          %717 = vst.msk [vmem:[#allocation4 + $0x10] sm:$0xff] %vm714, %v707
          %718 = vst.msk [vmem:[#allocation4 + $0x18] sm:$0xff] %vm714, %v709
          %s719 = scalar_lea.vmem %s543, 16
          %v720 = vld [vmem:[%s719] sm:$0xff]
          %v721 = vld [vmem:[%s719 + $0x10] sm:$0xff]
          %v722 = vld [vmem:[%s719 + $0x20] sm:$0xff]
          %v723 = vld [vmem:[%s719 + $0x30] sm:$0xff]
          %v724 = vld [vmem:[%s719 + $0x40] sm:$0xff]
          %v725 = vld [vmem:[%s719 + $0x50] sm:$0xff]
          %v726 = vld [vmem:[%s719 + $0x60] sm:$0xff]
          %v727 = vld [vmem:[%s719 + $0x70] sm:$0xff]
          %v728 = vpack.c.bf16 %v721, %v720
          %v729 = vpack.c.bf16 %v723, %v722
          %v730 = vpack.c.bf16 %v725, %v724
          %v731 = vpack.c.bf16 %v727, %v726
          %736 = vrot.lane.b32.xlu0 %v728, 24
          %v737 = vpop.permute.xlu0 %736
          %738 = vrot.lane.b32.xlu0 %v729, 24
          %v739 = vpop.permute.xlu0 %738
          %740 = vrot.lane.b32.xlu0 %v730, 24
          %v741 = vpop.permute.xlu0 %740
          %742 = vrot.lane.b32.xlu0 %v731, 24
          %v743 = vpop.permute.xlu0 %742
          %vm748 = vcmask 261312
          %749 = vst.msk [vmem:[#allocation4] sm:$0xff] %vm748, %v737
          %750 = vst.msk [vmem:[#allocation4 + $0x8] sm:$0xff] %vm748, %v739
          %751 = vst.msk [vmem:[#allocation4 + $0x10] sm:$0xff] %vm748, %v741
          %752 = vst.msk [vmem:[#allocation4 + $0x18] sm:$0xff] %vm748, %v743
          %v753 = vld [vmem:[%s719 + $0x1] sm:$0xff]
          %v754 = vld [vmem:[%s719 + $0x11] sm:$0xff]
          %v755 = vld [vmem:[%s719 + $0x21] sm:$0xff]
          %v756 = vld [vmem:[%s719 + $0x31] sm:$0xff]
          %v757 = vld [vmem:[%s719 + $0x41] sm:$0xff]
          %v758 = vld [vmem:[%s719 + $0x51] sm:$0xff]
          %v759 = vld [vmem:[%s719 + $0x61] sm:$0xff]
          %v760 = vld [vmem:[%s719 + $0x71] sm:$0xff]
          %v761 = vpack.c.bf16 %v754, %v753
          %v762 = vpack.c.bf16 %v756, %v755
          %v763 = vpack.c.bf16 %v758, %v757
          %v764 = vpack.c.bf16 %v760, %v759
          %769 = vrot.lane.b32.xlu0 %v761, 32
          %v770 = vpop.permute.xlu0 %769
          %771 = vrot.lane.b32.xlu0 %v762, 32
          %v772 = vpop.permute.xlu0 %771
          %773 = vrot.lane.b32.xlu0 %v763, 32
          %v774 = vpop.permute.xlu0 %773
          %775 = vrot.lane.b32.xlu0 %v764, 32
          %v776 = vpop.permute.xlu0 %775
          %vm781 = vcmask 326912
          %782 = vst.msk [vmem:[#allocation4] sm:$0xff] %vm781, %v770
          %783 = vst.msk [vmem:[#allocation4 + $0x8] sm:$0xff] %vm781, %v772
          %784 = vst.msk [vmem:[#allocation4 + $0x10] sm:$0xff] %vm781, %v774
          %785 = vst.msk [vmem:[#allocation4 + $0x18] sm:$0xff] %vm781, %v776
          %v786 = vld [vmem:[%s719 + $0x2] sm:$0xff]
          %v787 = vld [vmem:[%s719 + $0x12] sm:$0xff]
          %v788 = vld [vmem:[%s719 + $0x22] sm:$0xff]
          %v789 = vld [vmem:[%s719 + $0x32] sm:$0xff]
          %v790 = vld [vmem:[%s719 + $0x42] sm:$0xff]
          %v791 = vld [vmem:[%s719 + $0x52] sm:$0xff]
          %v792 = vld [vmem:[%s719 + $0x62] sm:$0xff]
          %v793 = vld [vmem:[%s719 + $0x72] sm:$0xff]
          %v794 = vpack.c.bf16 %v787, %v786
          %v795 = vpack.c.bf16 %v789, %v788
          %v796 = vpack.c.bf16 %v791, %v790
          %v797 = vpack.c.bf16 %v793, %v792
          %802 = vrot.lane.b32.xlu0 %v794, 40
          %v803 = vpop.permute.xlu0 %802
          %804 = vrot.lane.b32.xlu0 %v795, 40
          %v805 = vpop.permute.xlu0 %804
          %806 = vrot.lane.b32.xlu0 %v796, 40
          %v807 = vpop.permute.xlu0 %806
          %808 = vrot.lane.b32.xlu0 %v797, 40
          %v809 = vpop.permute.xlu0 %808
          %vm814 = vcmask 392512
          %815 = vst.msk [vmem:[#allocation4] sm:$0xff] %vm814, %v803
          %816 = vst.msk [vmem:[#allocation4 + $0x8] sm:$0xff] %vm814, %v805
          %817 = vst.msk [vmem:[#allocation4 + $0x10] sm:$0xff] %vm814, %v807
          %818 = vst.msk [vmem:[#allocation4 + $0x18] sm:$0xff] %vm814, %v809
          %s819 = scalar_lea.vmem %s543, 32
          %v820 = vld [vmem:[%s819] sm:$0xff]
          %v821 = vld [vmem:[%s819 + $0x10] sm:$0xff]
          %v822 = vld [vmem:[%s819 + $0x20] sm:$0xff]
          %v823 = vld [vmem:[%s819 + $0x30] sm:$0xff]
          %v824 = vld [vmem:[%s819 + $0x40] sm:$0xff]
          %v825 = vld [vmem:[%s819 + $0x50] sm:$0xff]
          %v826 = vld [vmem:[%s819 + $0x60] sm:$0xff]
          %v827 = vld [vmem:[%s819 + $0x70] sm:$0xff]
          %v828 = vpack.c.bf16 %v821, %v820
          %v829 = vpack.c.bf16 %v823, %v822
          %v830 = vpack.c.bf16 %v825, %v824
          %v831 = vpack.c.bf16 %v827, %v826
          %836 = vrot.lane.b32.xlu0 %v828, 48
          %v837 = vpop.permute.xlu0 %836
          %838 = vrot.lane.b32.xlu0 %v829, 48
          %v839 = vpop.permute.xlu0 %838
          %840 = vrot.lane.b32.xlu0 %v830, 48
          %v841 = vpop.permute.xlu0 %840
          %842 = vrot.lane.b32.xlu0 %v831, 48
          %v843 = vpop.permute.xlu0 %842
          %vm848 = vcmask 458112
          %849 = vst.msk [vmem:[#allocation4] sm:$0xff] %vm848, %v837
          %850 = vst.msk [vmem:[#allocation4 + $0x8] sm:$0xff] %vm848, %v839
          %851 = vst.msk [vmem:[#allocation4 + $0x10] sm:$0xff] %vm848, %v841
          %852 = vst.msk [vmem:[#allocation4 + $0x18] sm:$0xff] %vm848, %v843
          %v853 = vld [vmem:[%s819 + $0x1] sm:$0xff]
          %v854 = vld [vmem:[%s819 + $0x11] sm:$0xff]
          %v855 = vld [vmem:[%s819 + $0x21] sm:$0xff]
          %v856 = vld [vmem:[%s819 + $0x31] sm:$0xff]
          %v857 = vld [vmem:[%s819 + $0x41] sm:$0xff]
          %v858 = vld [vmem:[%s819 + $0x51] sm:$0xff]
          %v859 = vld [vmem:[%s819 + $0x61] sm:$0xff]
          %v860 = vld [vmem:[%s819 + $0x71] sm:$0xff]
          %v861 = vpack.c.bf16 %v854, %v853
          %v862 = vpack.c.bf16 %v856, %v855
          %v863 = vpack.c.bf16 %v858, %v857
          %v864 = vpack.c.bf16 %v860, %v859
          %869 = vrot.lane.b32.xlu0 %v861, 56
          %v870 = vpop.permute.xlu0 %869
          %871 = vrot.lane.b32.xlu0 %v862, 56
          %v872 = vpop.permute.xlu0 %871
          %873 = vrot.lane.b32.xlu0 %v863, 56
          %v874 = vpop.permute.xlu0 %873
          %875 = vrot.lane.b32.xlu0 %v864, 56
          %v876 = vpop.permute.xlu0 %875
          %vm881 = vcmask 523712
          %882 = vst.msk [vmem:[#allocation4] sm:$0xff] %vm881, %v870
          %883 = vst.msk [vmem:[#allocation4 + $0x8] sm:$0xff] %vm881, %v872
          %884 = vst.msk [vmem:[#allocation4 + $0x10] sm:$0xff] %vm881, %v874
          %885 = vst.msk [vmem:[#allocation4 + $0x18] sm:$0xff] %vm881, %v876
          %v886 = vld [vmem:[%s819 + $0x2] sm:$0xff]
          %v887 = vld [vmem:[%s819 + $0x12] sm:$0xff]
          %v888 = vld [vmem:[%s819 + $0x22] sm:$0xff]
          %v889 = vld [vmem:[%s819 + $0x32] sm:$0xff]
          %v890 = vld [vmem:[%s819 + $0x42] sm:$0xff]
          %v891 = vld [vmem:[%s819 + $0x52] sm:$0xff]
          %v892 = vld [vmem:[%s819 + $0x62] sm:$0xff]
          %v893 = vld [vmem:[%s819 + $0x72] sm:$0xff]
          %v894 = vpack.c.bf16 %v887, %v886
          %v895 = vpack.c.bf16 %v889, %v888
          %v896 = vpack.c.bf16 %v891, %v890
          %v897 = vpack.c.bf16 %v893, %v892
          %902 = vrot.lane.b32.xlu0 %v894, 64
          %v903 = vpop.permute.xlu0 %902
          %904 = vrot.lane.b32.xlu0 %v895, 64
          %v905 = vpop.permute.xlu0 %904
          %906 = vrot.lane.b32.xlu0 %v896, 64
          %v907 = vpop.permute.xlu0 %906
          %908 = vrot.lane.b32.xlu0 %v897, 64
          %v909 = vpop.permute.xlu0 %908
          %vm914 = vcmask 589312
          %915 = vst.msk [vmem:[#allocation4] sm:$0xff] %vm914, %v903
          %916 = vst.msk [vmem:[#allocation4 + $0x8] sm:$0xff] %vm914, %v905
          %917 = vst.msk [vmem:[#allocation4 + $0x10] sm:$0xff] %vm914, %v907
          %918 = vst.msk [vmem:[#allocation4 + $0x18] sm:$0xff] %vm914, %v909
          %v919 = vld [vmem:[#allocation4] sm:$0xff]
          %v920 = vld [vmem:[#allocation4 + $0x8] sm:$0xff]
          %v921 = vld [vmem:[#allocation4 + $0x10] sm:$0xff]
          %v922 = vld [vmem:[#allocation4 + $0x18] sm:$0xff]
          %v923 = vld [vmem:[%s4] sm:$0xf]
          %v924 = vld [vmem:[%s4 + $0x4] sm:$0xf]
          %v925 = vld [vmem:[%s4 + $0x8] sm:$0xf]
          %v926 = vld [vmem:[%s4 + $0xc] sm:$0xf]
          %v927 = vld [vmem:[%s4 + $0x10] sm:$0xf]
          %v928 = vld [vmem:[%s4 + $0x14] sm:$0xf]
          %v929 = vld [vmem:[%s4 + $0x18] sm:$0xf]
          %v930 = vld [vmem:[%s4 + $0x1c] sm:$0xf]
          %v931 = vld [vmem:[%s4 + $0x20] sm:$0xf]
          %v932 = vld [vmem:[%s5] sm:$0x1]
          %v934 = vlaneseq
          %v935 = vshrl.u32 %v934, 7
          %v936 = vsub.s32 0, %v935
          %v937 = vrot.slane %v932, %v936
          %v948 = vunpack.c.l.b16 %v923
          %v949 = vunpack.c.l.b16 %v924
          %v950 = vunpack.c.l.b16 %v925
          %v951 = vunpack.c.l.b16 %v926
          %v952 = vunpack.c.l.b16 %v927
          %v953 = vunpack.c.l.b16 %v928
          %v954 = vunpack.c.l.b16 %v929
          %v955 = vunpack.c.l.b16 %v930
          %v956 = vunpack.c.l.b16 %v931
          %v957 = vpack.c.b16 %v949, %v948
          %v958 = vpack.c.b16 %v951, %v950
          %v959 = vpack.c.b16 %v953, %v952
          %v960 = vpack.c.b16 %v955, %v954
          %v961 = vpack.c.b16 %v956, %v956
          %vm966 = vcmask 588800
          %v968 = vsel %vm966, %v919, 0
          %v971 = vsel %vm966, %v920, 0
          %v974 = vsel %vm966, %v921, 0
          %v977 = vsel %vm966, %v922, 0
          %vm979 = vcmask 1043456
          %v981 = vsel %vm979, %v961, 0
          %983 = vmatprep.subr.bf16.mxu0 0
          %984 = vmatpush1.bf16.msra.mxu0 %v957
          %985 = vmatprep.subr.bf16.mxu0 0
          %986 = vmatpush1.bf16.msra.mxu0 %v958
          %987 = vmatprep.subr.bf16.mxu0 0
          %988 = vmatpush1.bf16.msra.mxu0 %v959
          %989 = vmatprep.subr.bf16.mxu0 0
          %990 = vmatpush1.bf16.msra.mxu0 %v960
          %991 = vmatprep.subr.bf16.mxu0 0
          %992 = vmatpush1.bf16.msra.mxu0 %v981
          %993 = vmatprep.subr.bf16.mxu0 0
          %994 = vmatpush1.bf16.msra.mxu0 0
          %995 = vmatprep.subr.bf16.mxu0 0
          %996 = vmatpush1.bf16.msra.mxu0 0
          %997 = vmatprep.subr.bf16.mxu0 0
          %998 = vmatpush1.bf16.msra.mxu0 0
          %999 = vmatprep.subr.bf16.mxu0 0
          %1000 = vmatpush1.bf16.msra.mxu0 0
          %1001 = vmatprep.subr.bf16.mxu0 0
          %1002 = vmatpush1.bf16.msra.mxu0 0
          %1003 = vmatprep.subr.bf16.mxu0 0
          %1004 = vmatpush1.bf16.msra.mxu0 0
          %1005 = vmatprep.subr.bf16.mxu0 0
          %1006 = vmatpush1.bf16.msra.mxu0 0
          %1007 = vmatprep.subr.bf16.mxu0 0
          %1008 = vmatpush1.bf16.msra.mxu0 0
          %1009 = vmatprep.subr.bf16.mxu0 0
          %1010 = vmatpush1.bf16.msra.mxu0 0
          %1011 = vmatprep.subr.bf16.mxu0 0
          %1012 = vmatpush1.bf16.msra.mxu0 0
          %1013 = vmatprep.subr.bf16.mxu0 0
          %1014 = vmatpush1.bf16.msra.mxu0 0
          %1015 = vmatprep.mubr.bf16.mxu0 0
          %1016 = vmatmul.mubr.bf16.gmra.mrb[0].mxu0 %v968
          %v1017 = vpop.f32.mrb[0].mxu0
          %v1018 = vadd.f32 %v937, %v1017
          %v1019 = vpop.f32.mrb[0].mxu0
          %v1020 = vpop.f32.mrb[0].mxu0
          %v1021 = vadd.f32 %v937, %v1020
          %v1022 = vpop.f32.mrb[0].mxu0
          %1023 = vmatprep.mubr.bf16.mxu0 0
          %1024 = vmatmul.mubr.bf16.gmra.mrb[0].mxu0 %v971
          %v1025 = vpop.f32.mrb[0].mxu0
          %v1026 = vadd.f32 %v937, %v1025
          %v1027 = vpop.f32.mrb[0].mxu0
          %v1028 = vpop.f32.mrb[0].mxu0
          %v1029 = vadd.f32 %v937, %v1028
          %v1030 = vpop.f32.mrb[0].mxu0
          %1031 = vmatprep.mubr.bf16.mxu0 0
          %1032 = vmatmul.mubr.bf16.gmra.mrb[0].mxu0 %v974
          %v1033 = vpop.f32.mrb[0].mxu0
          %v1034 = vadd.f32 %v937, %v1033
          %v1035 = vpop.f32.mrb[0].mxu0
          %v1036 = vpop.f32.mrb[0].mxu0
          %v1037 = vadd.f32 %v937, %v1036
          %v1038 = vpop.f32.mrb[0].mxu0
          %1039 = vmatprep.mubr.bf16.mxu0 0
          %1040 = vmatmul.mubr.bf16.gmra.mrb[0].mxu0 %v977
          %v1041 = vpop.f32.mrb[0].mxu0
          %v1042 = vadd.f32 %v937, %v1041
          %v1043 = vpop.f32.mrb[0].mxu0
          %v1044 = vpop.f32.mrb[0].mxu0
          %v1045 = vadd.f32 %v937, %v1044
          %v1046 = vpop.f32.mrb[0].mxu0
          %1047 = vdwg.mxu0
          %1048 = vst.msk [vmem:[#allocation5] sm:$0xff] %vm551, %v1018
          %1049 = vst.msk [vmem:[#allocation5 + $0x8] sm:$0xff] %vm551, %v1021
          %1050 = vst.msk [vmem:[#allocation5 + $0x10] sm:$0xff] %vm551, %v1026
          %1051 = vst.msk [vmem:[#allocation5 + $0x18] sm:$0xff] %vm551, %v1029
          %1052 = vst.msk [vmem:[#allocation5 + $0x20] sm:$0xff] %vm551, %v1034
          %1053 = vst.msk [vmem:[#allocation5 + $0x28] sm:$0xff] %vm551, %v1037
          %1054 = vst.msk [vmem:[#allocation5 + $0x30] sm:$0xff] %vm551, %v1042
          %1055 = vst.msk [vmem:[#allocation5 + $0x38] sm:$0xff] %vm551, %v1045
        $region64: #{tpu_custom_call.1} parent=55 // pred_fallthru
          _
        %v1056 = vld [vmem:[#allocation5] sm:$0xff]
        %v1057 = vld [vmem:[#allocation5 + $0x8] sm:$0xff]
        %v1058 = vld [vmem:[#allocation5 + $0x10] sm:$0xff]
        %v1059 = vld [vmem:[#allocation5 + $0x18] sm:$0xff]
        %v1060 = vld [vmem:[#allocation5 + $0x20] sm:$0xff]
        %v1061 = vld [vmem:[#allocation5 + $0x28] sm:$0xff]
        %v1062 = vld [vmem:[#allocation5 + $0x30] sm:$0xff]
        %v1063 = vld [vmem:[#allocation5 + $0x38] sm:$0xff]
        %s1064 = scalar_lea.vmem %s6, %s546
        %v1065 = vld [vmem:[%s1064] sm:$0x1]
        %v1066 = vld [vmem:[%s1064 + $0x1] sm:$0x1]
        %v1067 = vld [vmem:[%s516] sm:$0xff]
        %v1068 = vld [vmem:[%s516 + $0x8] sm:$0xff]
        %v1069 = vld [vmem:[%s516 + $0x10] sm:$0xff]
        %v1070 = vld [vmem:[%s516 + $0x18] sm:$0xff]
        %v1071 = vld [vmem:[%s516 + $0x20] sm:$0xff]
        %v1072 = vld [vmem:[%s516 + $0x28] sm:$0xff]
        %v1073 = vld [vmem:[%s516 + $0x30] sm:$0xff]
        %v1074 = vld [vmem:[%s516 + $0x38] sm:$0xff]
        %v1075 = vld [vmem:[%s516 + $0x40] sm:$0xff]
        %v1076 = vld [vmem:[%s516 + $0x48] sm:$0xff]
        %v1077 = vld [vmem:[%s516 + $0x50] sm:$0xff]
        %v1078 = vld [vmem:[%s516 + $0x58] sm:$0xff]
        %v1079 = vld [vmem:[%s516 + $0x60] sm:$0xff]
        %v1080 = vld [vmem:[%s516 + $0x68] sm:$0xff]
        %v1081 = vld [vmem:[%s516 + $0x70] sm:$0xff]
        %v1082 = vld [vmem:[%s516 + $0x78] sm:$0xff]
        %v1083 = vadd.f32 %v1067, %v1056
        %v1084 = vadd.f32 %v1068, %v1057
        %v1085 = vadd.f32 %v1069, %v1058
        %v1086 = vadd.f32 %v1070, %v1059
        %v1087 = vadd.f32 %v1071, %v1060
        %v1088 = vadd.f32 %v1072, %v1061
        %v1089 = vadd.f32 %v1073, %v1062
        %v1090 = vadd.f32 %v1074, %v1063
        %v1091 = vadd.f32 %v1075, %v1056
        %v1092 = vadd.f32 %v1076, %v1057
        %v1093 = vadd.f32 %v1077, %v1058
        %v1094 = vadd.f32 %v1078, %v1059
        %v1095 = vadd.f32 %v1079, %v1060
        %v1096 = vadd.f32 %v1080, %v1061
        %v1097 = vadd.f32 %v1081, %v1062
        %v1098 = vadd.f32 %v1082, %v1063
        %v1101 = vlaneseq
        %v1102 = vshrl.u32 %v1101, 7
        %v1103 = vsub.s32 0, %v1102
        %v1104 = vrot.slane %v1065, %v1103
        %v1105 = vlaneseq
        %v1106 = vshrl.u32 %v1105, 7
        %v1107 = vsub.s32 0, %v1106
        %v1108 = vrot.slane %v1066, %v1107
        %v1111 = vadd.f32 %v1083, %v1104
        %v1112 = vadd.f32 %v1084, %v1104
        %v1113 = vadd.f32 %v1085, %v1104
        %v1114 = vadd.f32 %v1086, %v1104
        %v1115 = vadd.f32 %v1087, %v1104
        %v1116 = vadd.f32 %v1088, %v1104
        %v1117 = vadd.f32 %v1089, %v1104
        %v1118 = vadd.f32 %v1090, %v1104
        %v1119 = vadd.f32 %v1091, %v1108
        %v1120 = vadd.f32 %v1092, %v1108
        %v1121 = vadd.f32 %v1093, %v1108
        %v1122 = vadd.f32 %v1094, %v1108
        %v1123 = vadd.f32 %v1095, %v1108
        %v1124 = vadd.f32 %v1096, %v1108
        %v1125 = vadd.f32 %v1097, %v1108
        %v1126 = vadd.f32 %v1098, %v1108
        %s1127 = scalar_lea.vmem [#allocation2], 176
        %vm1128 = vcmask 261120
        %1129 = vst.msk [vmem:[%s1127 + $0x1] sm:$0xff] %vm1128, %v1111
        %1130 = vst.msk [vmem:[%s1127 + $0x11] sm:$0xff] %vm1128, %v1112
        %1131 = vst.msk [vmem:[%s1127 + $0x21] sm:$0xff] %vm1128, %v1113
        %1132 = vst.msk [vmem:[%s1127 + $0x31] sm:$0xff] %vm1128, %v1114
        %1133 = vst.msk [vmem:[%s1127 + $0x41] sm:$0xff] %vm1128, %v1115
        %1134 = vst.msk [vmem:[%s1127 + $0x51] sm:$0xff] %vm1128, %v1116
        %1135 = vst.msk [vmem:[%s1127 + $0x61] sm:$0xff] %vm1128, %v1117
        %1136 = vst.msk [vmem:[%s1127 + $0x71] sm:$0xff] %vm1128, %v1118
        %1137 = vst.msk [vmem:[%s1127 + $0xa1] sm:$0xff] %vm1128, %v1119
        %1138 = vst.msk [vmem:[%s1127 + $0xb1] sm:$0xff] %vm1128, %v1120
        %1139 = vst.msk [vmem:[%s1127 + $0xc1] sm:$0xff] %vm1128, %v1121
        %1140 = vst.msk [vmem:[%s1127 + $0xd1] sm:$0xff] %vm1128, %v1122
        %1141 = vst.msk [vmem:[%s1127 + $0xe1] sm:$0xff] %vm1128, %v1123
        %1142 = vst.msk [vmem:[%s1127 + $0xf1] sm:$0xff] %vm1128, %v1124
        %1143 = vst.msk [vmem:[%s1127 + $0x101] sm:$0xff] %vm1128, %v1125
        %1144 = vst.msk [vmem:[%s1127 + $0x111] sm:$0xff] %vm1128, %v1126
        %s1145 = ssub.s32 %s546, 1
        %p1146 = scmp.gt.s32.totalorder %s1145, 0
        %s1147 = scalar_select %p1146, %s1145, 0
        %v1148 = vld [vmem:[%s530] sm:$0xff]
        %v1149 = vld [vmem:[%s530 + $0x8] sm:$0xff]
        %v1150 = vld [vmem:[%s530 + $0x10] sm:$0xff]
        %v1151 = vld [vmem:[%s530 + $0x18] sm:$0xff]
        %v1152 = vld [vmem:[%s530 + $0x20] sm:$0xff]
        %v1153 = vld [vmem:[%s530 + $0x28] sm:$0xff]
        %v1154 = vld [vmem:[%s530 + $0x30] sm:$0xff]
        %v1155 = vld [vmem:[%s530 + $0x38] sm:$0xff]
        %v1156 = vadd.f32 %v1148, %v1056
        %v1157 = vadd.f32 %v1149, %v1057
        %v1158 = vadd.f32 %v1150, %v1058
        %v1159 = vadd.f32 %v1151, %v1059
        %v1160 = vadd.f32 %v1152, %v1060
        %v1161 = vadd.f32 %v1153, %v1061
        %v1162 = vadd.f32 %v1154, %v1062
        %v1163 = vadd.f32 %v1155, %v1063
        %s1164 = scalar_lea.vmem %s6, %s1147
        %v1165 = vld [vmem:[%s1164] sm:$0x1]
        %v1167 = vlaneseq
        %v1168 = vshrl.u32 %v1167, 7
        %v1169 = vsub.s32 0, %v1168
        %v1170 = vrot.slane %v1165, %v1169
        %v1172 = vadd.f32 %v1156, %v1170
        %v1173 = vadd.f32 %v1157, %v1170
        %v1174 = vadd.f32 %v1158, %v1170
        %v1175 = vadd.f32 %v1159, %v1170
        %v1176 = vadd.f32 %v1160, %v1170
        %v1177 = vadd.f32 %v1161, %v1170
        %v1178 = vadd.f32 %v1162, %v1170
        %v1179 = vadd.f32 %v1163, %v1170
        %p1180 = scmp.gt.s32.totalorder %s36, 0
        %s1181 = scalar_select %p1180, 1, 0
        %v1182 = vstv %s1181
        %vm1183 = vcmp.eq.s32.totalorder %v1182, 1
        %v1184 = vsel %vm1183, %v1172, 0.0
        %v1185 = vsel %vm1183, %v1173, 0.0
        %v1186 = vsel %vm1183, %v1174, 0.0
        %v1187 = vsel %vm1183, %v1175, 0.0
        %v1188 = vsel %vm1183, %v1176, 0.0
        %v1189 = vsel %vm1183, %v1177, 0.0
        %v1190 = vsel %vm1183, %v1178, 0.0
        %v1191 = vsel %vm1183, %v1179, 0.0
        %s1192 = scalar_lea.vmem [#allocation2], 16
        %1193 = vst.msk [vmem:[%s1192 + $0x1] sm:$0xff] %vm1128, %v1184
        %1194 = vst.msk [vmem:[%s1192 + $0x11] sm:$0xff] %vm1128, %v1185
        %1195 = vst.msk [vmem:[%s1192 + $0x21] sm:$0xff] %vm1128, %v1186
        %1196 = vst.msk [vmem:[%s1192 + $0x31] sm:$0xff] %vm1128, %v1187
        %1197 = vst.msk [vmem:[%s1192 + $0x41] sm:$0xff] %vm1128, %v1188
        %1198 = vst.msk [vmem:[%s1192 + $0x51] sm:$0xff] %vm1128, %v1189
        %1199 = vst.msk [vmem:[%s1192 + $0x61] sm:$0xff] %vm1128, %v1190
        %1200 = vst.msk [vmem:[%s1192 + $0x71] sm:$0xff] %vm1128, %v1191
        %s1201 = sadd.s32 %s546, 2
        %p1202 = scmp.lt.s32.totalorder %s1201, 3
        %s1203 = scalar_select %p1202, %s1201, 3
        %v1204 = vld [vmem:[%s437] sm:$0xff]
        %v1205 = vld [vmem:[%s437 + $0x8] sm:$0xff]
        %v1206 = vld [vmem:[%s437 + $0x10] sm:$0xff]
        %v1207 = vld [vmem:[%s437 + $0x18] sm:$0xff]
        %v1208 = vld [vmem:[%s437 + $0x20] sm:$0xff]
        %v1209 = vld [vmem:[%s437 + $0x28] sm:$0xff]
        %v1210 = vld [vmem:[%s437 + $0x30] sm:$0xff]
        %v1211 = vld [vmem:[%s437 + $0x38] sm:$0xff]
        %v1212 = vadd.f32 %v1204, %v1056
        %v1213 = vadd.f32 %v1205, %v1057
        %v1214 = vadd.f32 %v1206, %v1058
        %v1215 = vadd.f32 %v1207, %v1059
        %v1216 = vadd.f32 %v1208, %v1060
        %v1217 = vadd.f32 %v1209, %v1061
        %v1218 = vadd.f32 %v1210, %v1062
        %v1219 = vadd.f32 %v1211, %v1063
        %s1220 = scalar_lea.vmem %s6, %s1203
        %v1221 = vld [vmem:[%s1220] sm:$0x1]
        %v1223 = vlaneseq
        %v1224 = vshrl.u32 %v1223, 7
        %v1225 = vsub.s32 0, %v1224
        %v1226 = vrot.slane %v1221, %v1225
        %v1228 = vadd.f32 %v1212, %v1226
        %v1229 = vadd.f32 %v1213, %v1226
        %v1230 = vadd.f32 %v1214, %v1226
        %v1231 = vadd.f32 %v1215, %v1226
        %v1232 = vadd.f32 %v1216, %v1226
        %v1233 = vadd.f32 %v1217, %v1226
        %v1234 = vadd.f32 %v1218, %v1226
        %v1235 = vadd.f32 %v1219, %v1226
        %p1236 = scmp.lt.s32.totalorder %s36, 1
        %s1237 = scalar_select %p1236, 1, 0
        %v1238 = vstv %s1237
        %vm1239 = vcmp.eq.s32.totalorder %v1238, 1
        %v1240 = vsel %vm1239, %v1228, 0.0
        %v1241 = vsel %vm1239, %v1229, 0.0
        %v1242 = vsel %vm1239, %v1230, 0.0
        %v1243 = vsel %vm1239, %v1231, 0.0
        %v1244 = vsel %vm1239, %v1232, 0.0
        %v1245 = vsel %vm1239, %v1233, 0.0
        %v1246 = vsel %vm1239, %v1234, 0.0
        %v1247 = vsel %vm1239, %v1235, 0.0
        %s1248 = scalar_lea.vmem [#allocation2], 496
        %1249 = vst.msk [vmem:[%s1248 + $0x1] sm:$0xff] %vm1128, %v1240
        %1250 = vst.msk [vmem:[%s1248 + $0x11] sm:$0xff] %vm1128, %v1241
        %1251 = vst.msk [vmem:[%s1248 + $0x21] sm:$0xff] %vm1128, %v1242
        %1252 = vst.msk [vmem:[%s1248 + $0x31] sm:$0xff] %vm1128, %v1243
        %1253 = vst.msk [vmem:[%s1248 + $0x41] sm:$0xff] %vm1128, %v1244
        %1254 = vst.msk [vmem:[%s1248 + $0x51] sm:$0xff] %vm1128, %v1245
        %1255 = vst.msk [vmem:[%s1248 + $0x61] sm:$0xff] %vm1128, %v1246
        %1256 = vst.msk [vmem:[%s1248 + $0x71] sm:$0xff] %vm1128, %v1247
        %v1257 = vld [vmem:[#allocation2] sm:$0xff]
        %v1258 = vld [vmem:[#allocation2 + $0x10] sm:$0xff]
        %v1259 = vld [vmem:[#allocation2 + $0x20] sm:$0xff]
        %v1260 = vld [vmem:[#allocation2 + $0x30] sm:$0xff]
        %v1261 = vld [vmem:[#allocation2 + $0x40] sm:$0xff]
        %v1262 = vld [vmem:[#allocation2 + $0x50] sm:$0xff]
        %v1263 = vld [vmem:[#allocation2 + $0x60] sm:$0xff]
        %v1264 = vld [vmem:[#allocation2 + $0x70] sm:$0xff]
        %v1265 = vld [vmem:[#allocation2 + $0xa0] sm:$0xff]
        %v1266 = vld [vmem:[#allocation2 + $0xb0] sm:$0xff]
        %v1267 = vld [vmem:[#allocation2 + $0xc0] sm:$0xff]
        %v1268 = vld [vmem:[#allocation2 + $0xd0] sm:$0xff]
        %v1269 = vld [vmem:[#allocation2 + $0xe0] sm:$0xff]
        %v1270 = vld [vmem:[#allocation2 + $0xf0] sm:$0xff]
        %v1271 = vld [vmem:[#allocation2 + $0x100] sm:$0xff]
        %v1272 = vld [vmem:[#allocation2 + $0x110] sm:$0xff]
        %v1273 = vpack.c.bf16 %v1258, %v1257
        %v1274 = vpack.c.bf16 %v1260, %v1259
        %v1275 = vpack.c.bf16 %v1262, %v1261
        %v1276 = vpack.c.bf16 %v1264, %v1263
        %v1277 = vpack.c.bf16 %v1266, %v1265
        %v1278 = vpack.c.bf16 %v1268, %v1267
        %v1279 = vpack.c.bf16 %v1270, %v1269
        %v1280 = vpack.c.bf16 %v1272, %v1271
        %1281 = vst.msk [vmem:[#allocation3] sm:$0xff] %vm1128, %v1273
        %1282 = vst.msk [vmem:[#allocation3 + $0x18] sm:$0xff] %vm1128, %v1274
        %1283 = vst.msk [vmem:[#allocation3 + $0x30] sm:$0xff] %vm1128, %v1275
        %1284 = vst.msk [vmem:[#allocation3 + $0x48] sm:$0xff] %vm1128, %v1276
        %1285 = vst.msk [vmem:[#allocation3 + $0x60] sm:$0xff] %vm1128, %v1277
        %1286 = vst.msk [vmem:[#allocation3 + $0x78] sm:$0xff] %vm1128, %v1278
        %1287 = vst.msk [vmem:[#allocation3 + $0x90] sm:$0xff] %vm1128, %v1279
        %1288 = vst.msk [vmem:[#allocation3 + $0xa8] sm:$0xff] %vm1128, %v1280
        %v1289 = vld [vmem:[#allocation2 + $0x1] sm:$0xff]
        %v1290 = vld [vmem:[#allocation2 + $0x11] sm:$0xff]
        %v1291 = vld [vmem:[#allocation2 + $0x21] sm:$0xff]
        %v1292 = vld [vmem:[#allocation2 + $0x31] sm:$0xff]
        %v1293 = vld [vmem:[#allocation2 + $0x41] sm:$0xff]
        %v1294 = vld [vmem:[#allocation2 + $0x51] sm:$0xff]
        %v1295 = vld [vmem:[#allocation2 + $0x61] sm:$0xff]
        %v1296 = vld [vmem:[#allocation2 + $0x71] sm:$0xff]
        %v1297 = vld [vmem:[#allocation2 + $0xa1] sm:$0xff]
        %v1298 = vld [vmem:[#allocation2 + $0xb1] sm:$0xff]
        %v1299 = vld [vmem:[#allocation2 + $0xc1] sm:$0xff]
        %v1300 = vld [vmem:[#allocation2 + $0xd1] sm:$0xff]
        %v1301 = vld [vmem:[#allocation2 + $0xe1] sm:$0xff]
        %v1302 = vld [vmem:[#allocation2 + $0xf1] sm:$0xff]
        %v1303 = vld [vmem:[#allocation2 + $0x101] sm:$0xff]
        %v1304 = vld [vmem:[#allocation2 + $0x111] sm:$0xff]
        %v1305 = vpack.c.bf16 %v1290, %v1289
        %v1306 = vpack.c.bf16 %v1292, %v1291
        %v1307 = vpack.c.bf16 %v1294, %v1293
        %v1308 = vpack.c.bf16 %v1296, %v1295
        %v1309 = vpack.c.bf16 %v1298, %v1297
        %v1310 = vpack.c.bf16 %v1300, %v1299
        %v1311 = vpack.c.bf16 %v1302, %v1301
        %v1312 = vpack.c.bf16 %v1304, %v1303
        %1321 = vrot.lane.b32.xlu0 %v1305, 32
        %v1322 = vpop.permute.xlu0 %1321
        %1323 = vrot.lane.b32.xlu0 %v1306, 32
        %v1324 = vpop.permute.xlu0 %1323
        %1325 = vrot.lane.b32.xlu0 %v1307, 32
        %v1326 = vpop.permute.xlu0 %1325
        %1327 = vrot.lane.b32.xlu0 %v1308, 32
        %v1328 = vpop.permute.xlu0 %1327
        %1329 = vrot.lane.b32.xlu0 %v1309, 32
        %v1330 = vpop.permute.xlu0 %1329
        %1331 = vrot.lane.b32.xlu0 %v1310, 32
        %v1332 = vpop.permute.xlu0 %1331
        %1333 = vrot.lane.b32.xlu0 %v1311, 32
        %v1334 = vpop.permute.xlu0 %1333
        %1335 = vrot.lane.b32.xlu0 %v1312, 32
        %v1336 = vpop.permute.xlu0 %1335
        %vm1345 = vcmask 523520
        %1346 = vst.msk [vmem:[#allocation3] sm:$0xff] %vm1345, %v1322
        %1347 = vst.msk [vmem:[#allocation3 + $0x18] sm:$0xff] %vm1345, %v1324
        %1348 = vst.msk [vmem:[#allocation3 + $0x30] sm:$0xff] %vm1345, %v1326
        %1349 = vst.msk [vmem:[#allocation3 + $0x48] sm:$0xff] %vm1345, %v1328
        %1350 = vst.msk [vmem:[#allocation3 + $0x60] sm:$0xff] %vm1345, %v1330
        %1351 = vst.msk [vmem:[#allocation3 + $0x78] sm:$0xff] %vm1345, %v1332
        %1352 = vst.msk [vmem:[#allocation3 + $0x90] sm:$0xff] %vm1345, %v1334
        %1353 = vst.msk [vmem:[#allocation3 + $0xa8] sm:$0xff] %vm1345, %v1336
        %v1354 = vld [vmem:[#allocation2 + $0x2] sm:$0xff]
        %v1355 = vld [vmem:[#allocation2 + $0x12] sm:$0xff]
        %v1356 = vld [vmem:[#allocation2 + $0x22] sm:$0xff]
        %v1357 = vld [vmem:[#allocation2 + $0x32] sm:$0xff]
        %v1358 = vld [vmem:[#allocation2 + $0x42] sm:$0xff]
        %v1359 = vld [vmem:[#allocation2 + $0x52] sm:$0xff]
        %v1360 = vld [vmem:[#allocation2 + $0x62] sm:$0xff]
        %v1361 = vld [vmem:[#allocation2 + $0x72] sm:$0xff]
        %v1362 = vld [vmem:[#allocation2 + $0xa2] sm:$0xff]
        %v1363 = vld [vmem:[#allocation2 + $0xb2] sm:$0xff]
        %v1364 = vld [vmem:[#allocation2 + $0xc2] sm:$0xff]
        %v1365 = vld [vmem:[#allocation2 + $0xd2] sm:$0xff]
        %v1366 = vld [vmem:[#allocation2 + $0xe2] sm:$0xff]
        %v1367 = vld [vmem:[#allocation2 + $0xf2] sm:$0xff]
        %v1368 = vld [vmem:[#allocation2 + $0x102] sm:$0xff]
        %v1369 = vld [vmem:[#allocation2 + $0x112] sm:$0xff]
        %v1370 = vpack.c.bf16 %v1355, %v1354
        %v1371 = vpack.c.bf16 %v1357, %v1356
        %v1372 = vpack.c.bf16 %v1359, %v1358
        %v1373 = vpack.c.bf16 %v1361, %v1360
        %v1374 = vpack.c.bf16 %v1363, %v1362
        %v1375 = vpack.c.bf16 %v1365, %v1364
        %v1376 = vpack.c.bf16 %v1367, %v1366
        %v1377 = vpack.c.bf16 %v1369, %v1368
        %1386 = vrot.lane.b32.xlu0 %v1370, 64
        %v1387 = vpop.permute.xlu0 %1386
        %1388 = vrot.lane.b32.xlu0 %v1371, 64
        %v1389 = vpop.permute.xlu0 %1388
        %1390 = vrot.lane.b32.xlu0 %v1372, 64
        %v1391 = vpop.permute.xlu0 %1390
        %1392 = vrot.lane.b32.xlu0 %v1373, 64
        %v1393 = vpop.permute.xlu0 %1392
        %1394 = vrot.lane.b32.xlu0 %v1374, 64
        %v1395 = vpop.permute.xlu0 %1394
        %1396 = vrot.lane.b32.xlu0 %v1375, 64
        %v1397 = vpop.permute.xlu0 %1396
        %1398 = vrot.lane.b32.xlu0 %v1376, 64
        %v1399 = vpop.permute.xlu0 %1398
        %1400 = vrot.lane.b32.xlu0 %v1377, 64
        %v1401 = vpop.permute.xlu0 %1400
        %vm1410 = vcmask 785920
        %1411 = vst.msk [vmem:[#allocation3] sm:$0xff] %vm1410, %v1387
        %1412 = vst.msk [vmem:[#allocation3 + $0x18] sm:$0xff] %vm1410, %v1389
        %1413 = vst.msk [vmem:[#allocation3 + $0x30] sm:$0xff] %vm1410, %v1391
        %1414 = vst.msk [vmem:[#allocation3 + $0x48] sm:$0xff] %vm1410, %v1393
        %1415 = vst.msk [vmem:[#allocation3 + $0x60] sm:$0xff] %vm1410, %v1395
        %1416 = vst.msk [vmem:[#allocation3 + $0x78] sm:$0xff] %vm1410, %v1397
        %1417 = vst.msk [vmem:[#allocation3 + $0x90] sm:$0xff] %vm1410, %v1399
        %1418 = vst.msk [vmem:[#allocation3 + $0xa8] sm:$0xff] %vm1410, %v1401
        %v1419 = vld [vmem:[%s1192] sm:$0xff]
        %v1420 = vld [vmem:[%s1192 + $0x10] sm:$0xff]
        %v1421 = vld [vmem:[%s1192 + $0x20] sm:$0xff]
        %v1422 = vld [vmem:[%s1192 + $0x30] sm:$0xff]
        %v1423 = vld [vmem:[%s1192 + $0x40] sm:$0xff]
        %v1424 = vld [vmem:[%s1192 + $0x50] sm:$0xff]
        %v1425 = vld [vmem:[%s1192 + $0x60] sm:$0xff]
        %v1426 = vld [vmem:[%s1192 + $0x70] sm:$0xff]
        %v1427 = vld [vmem:[%s1192 + $0xa0] sm:$0xff]
        %v1428 = vld [vmem:[%s1192 + $0xb0] sm:$0xff]
        %v1429 = vld [vmem:[%s1192 + $0xc0] sm:$0xff]
        %v1430 = vld [vmem:[%s1192 + $0xd0] sm:$0xff]
        %v1431 = vld [vmem:[%s1192 + $0xe0] sm:$0xff]
        %v1432 = vld [vmem:[%s1192 + $0xf0] sm:$0xff]
        %v1433 = vld [vmem:[%s1192 + $0x100] sm:$0xff]
        %v1434 = vld [vmem:[%s1192 + $0x110] sm:$0xff]
        %v1435 = vpack.c.bf16 %v1420, %v1419
        %v1436 = vpack.c.bf16 %v1422, %v1421
        %v1437 = vpack.c.bf16 %v1424, %v1423
        %v1438 = vpack.c.bf16 %v1426, %v1425
        %v1439 = vpack.c.bf16 %v1428, %v1427
        %v1440 = vpack.c.bf16 %v1430, %v1429
        %v1441 = vpack.c.bf16 %v1432, %v1431
        %v1442 = vpack.c.bf16 %v1434, %v1433
        %1451 = vrot.lane.b32.xlu0 %v1435, 96
        %v1452 = vpop.permute.xlu0 %1451
        %1453 = vrot.lane.b32.xlu0 %v1436, 96
        %v1454 = vpop.permute.xlu0 %1453
        %1455 = vrot.lane.b32.xlu0 %v1437, 96
        %v1456 = vpop.permute.xlu0 %1455
        %1457 = vrot.lane.b32.xlu0 %v1438, 96
        %v1458 = vpop.permute.xlu0 %1457
        %1459 = vrot.lane.b32.xlu0 %v1439, 96
        %v1460 = vpop.permute.xlu0 %1459
        %1461 = vrot.lane.b32.xlu0 %v1440, 96
        %v1462 = vpop.permute.xlu0 %1461
        %1463 = vrot.lane.b32.xlu0 %v1441, 96
        %v1464 = vpop.permute.xlu0 %1463
        %1465 = vrot.lane.b32.xlu0 %v1442, 96
        %v1466 = vpop.permute.xlu0 %1465
        %vm1475 = vcmask 1048320
        %1476 = vst.msk [vmem:[#allocation3] sm:$0xff] %vm1475, %v1452
        %1477 = vst.msk [vmem:[#allocation3 + $0x18] sm:$0xff] %vm1475, %v1454
        %1478 = vst.msk [vmem:[#allocation3 + $0x30] sm:$0xff] %vm1475, %v1456
        %1479 = vst.msk [vmem:[#allocation3 + $0x48] sm:$0xff] %vm1475, %v1458
        %1480 = vst.msk [vmem:[#allocation3 + $0x60] sm:$0xff] %vm1475, %v1460
        %1481 = vst.msk [vmem:[#allocation3 + $0x78] sm:$0xff] %vm1475, %v1462
        %1482 = vst.msk [vmem:[#allocation3 + $0x90] sm:$0xff] %vm1475, %v1464
        %1483 = vst.msk [vmem:[#allocation3 + $0xa8] sm:$0xff] %vm1475, %v1466
        %v1484 = vld [vmem:[%s1192 + $0x1] sm:$0xff]
        %v1485 = vld [vmem:[%s1192 + $0x11] sm:$0xff]
        %v1486 = vld [vmem:[%s1192 + $0x21] sm:$0xff]
        %v1487 = vld [vmem:[%s1192 + $0x31] sm:$0xff]
        %v1488 = vld [vmem:[%s1192 + $0x41] sm:$0xff]
        %v1489 = vld [vmem:[%s1192 + $0x51] sm:$0xff]
        %v1490 = vld [vmem:[%s1192 + $0x61] sm:$0xff]
        %v1491 = vld [vmem:[%s1192 + $0x71] sm:$0xff]
        %v1492 = vld [vmem:[%s1192 + $0xa1] sm:$0xff]
        %v1493 = vld [vmem:[%s1192 + $0xb1] sm:$0xff]
        %v1494 = vld [vmem:[%s1192 + $0xc1] sm:$0xff]
        %v1495 = vld [vmem:[%s1192 + $0xd1] sm:$0xff]
        %v1496 = vld [vmem:[%s1192 + $0xe1] sm:$0xff]
        %v1497 = vld [vmem:[%s1192 + $0xf1] sm:$0xff]
        %v1498 = vld [vmem:[%s1192 + $0x101] sm:$0xff]
        %v1499 = vld [vmem:[%s1192 + $0x111] sm:$0xff]
        %v1500 = vpack.c.bf16 %v1485, %v1484
        %v1501 = vpack.c.bf16 %v1487, %v1486
        %v1502 = vpack.c.bf16 %v1489, %v1488
        %v1503 = vpack.c.bf16 %v1491, %v1490
        %v1504 = vpack.c.bf16 %v1493, %v1492
        %v1505 = vpack.c.bf16 %v1495, %v1494
        %v1506 = vpack.c.bf16 %v1497, %v1496
        %v1507 = vpack.c.bf16 %v1499, %v1498
        %1508 = vst.msk [vmem:[#allocation3 + $0x8] sm:$0xff] %vm1128, %v1500
        %1509 = vst.msk [vmem:[#allocation3 + $0x20] sm:$0xff] %vm1128, %v1501
        %1510 = vst.msk [vmem:[#allocation3 + $0x38] sm:$0xff] %vm1128, %v1502
        %1511 = vst.msk [vmem:[#allocation3 + $0x50] sm:$0xff] %vm1128, %v1503
        %1512 = vst.msk [vmem:[#allocation3 + $0x68] sm:$0xff] %vm1128, %v1504
        %1513 = vst.msk [vmem:[#allocation3 + $0x80] sm:$0xff] %vm1128, %v1505
        %1514 = vst.msk [vmem:[#allocation3 + $0x98] sm:$0xff] %vm1128, %v1506
        %1515 = vst.msk [vmem:[#allocation3 + $0xb0] sm:$0xff] %vm1128, %v1507
        %v1516 = vld [vmem:[%s1192 + $0x2] sm:$0xff]
        %v1517 = vld [vmem:[%s1192 + $0x12] sm:$0xff]
        %v1518 = vld [vmem:[%s1192 + $0x22] sm:$0xff]
        %v1519 = vld [vmem:[%s1192 + $0x32] sm:$0xff]
        %v1520 = vld [vmem:[%s1192 + $0x42] sm:$0xff]
        %v1521 = vld [vmem:[%s1192 + $0x52] sm:$0xff]
        %v1522 = vld [vmem:[%s1192 + $0x62] sm:$0xff]
        %v1523 = vld [vmem:[%s1192 + $0x72] sm:$0xff]
        %v1524 = vld [vmem:[%s1192 + $0xa2] sm:$0xff]
        %v1525 = vld [vmem:[%s1192 + $0xb2] sm:$0xff]
        %v1526 = vld [vmem:[%s1192 + $0xc2] sm:$0xff]
        %v1527 = vld [vmem:[%s1192 + $0xd2] sm:$0xff]
        %v1528 = vld [vmem:[%s1192 + $0xe2] sm:$0xff]
        %v1529 = vld [vmem:[%s1192 + $0xf2] sm:$0xff]
        %v1530 = vld [vmem:[%s1192 + $0x102] sm:$0xff]
        %v1531 = vld [vmem:[%s1192 + $0x112] sm:$0xff]
        %v1532 = vpack.c.bf16 %v1517, %v1516
        %v1533 = vpack.c.bf16 %v1519, %v1518
        %v1534 = vpack.c.bf16 %v1521, %v1520
        %v1535 = vpack.c.bf16 %v1523, %v1522
        %v1536 = vpack.c.bf16 %v1525, %v1524
        %v1537 = vpack.c.bf16 %v1527, %v1526
        %v1538 = vpack.c.bf16 %v1529, %v1528
        %v1539 = vpack.c.bf16 %v1531, %v1530
        %1548 = vrot.lane.b32.xlu0 %v1532, 32
        %v1549 = vpop.permute.xlu0 %1548
        %1550 = vrot.lane.b32.xlu0 %v1533, 32
        %v1551 = vpop.permute.xlu0 %1550
        %1552 = vrot.lane.b32.xlu0 %v1534, 32
        %v1553 = vpop.permute.xlu0 %1552
        %1554 = vrot.lane.b32.xlu0 %v1535, 32
        %v1555 = vpop.permute.xlu0 %1554
        %1556 = vrot.lane.b32.xlu0 %v1536, 32
        %v1557 = vpop.permute.xlu0 %1556
        %1558 = vrot.lane.b32.xlu0 %v1537, 32
        %v1559 = vpop.permute.xlu0 %1558
        %1560 = vrot.lane.b32.xlu0 %v1538, 32
        %v1561 = vpop.permute.xlu0 %1560
        %1562 = vrot.lane.b32.xlu0 %v1539, 32
        %v1563 = vpop.permute.xlu0 %1562
        %1572 = vst.msk [vmem:[#allocation3 + $0x8] sm:$0xff] %vm1345, %v1549
        %1573 = vst.msk [vmem:[#allocation3 + $0x20] sm:$0xff] %vm1345, %v1551
        %1574 = vst.msk [vmem:[#allocation3 + $0x38] sm:$0xff] %vm1345, %v1553
        %1575 = vst.msk [vmem:[#allocation3 + $0x50] sm:$0xff] %vm1345, %v1555
        %1576 = vst.msk [vmem:[#allocation3 + $0x68] sm:$0xff] %vm1345, %v1557
        %1577 = vst.msk [vmem:[#allocation3 + $0x80] sm:$0xff] %vm1345, %v1559
        %1578 = vst.msk [vmem:[#allocation3 + $0x98] sm:$0xff] %vm1345, %v1561
        %1579 = vst.msk [vmem:[#allocation3 + $0xb0] sm:$0xff] %vm1345, %v1563
        %s1580 = scalar_lea.vmem [#allocation2], 32
        %v1581 = vld [vmem:[%s1580] sm:$0xff]
        %v1582 = vld [vmem:[%s1580 + $0x10] sm:$0xff]
        %v1583 = vld [vmem:[%s1580 + $0x20] sm:$0xff]
        %v1584 = vld [vmem:[%s1580 + $0x30] sm:$0xff]
        %v1585 = vld [vmem:[%s1580 + $0x40] sm:$0xff]
        %v1586 = vld [vmem:[%s1580 + $0x50] sm:$0xff]
        %v1587 = vld [vmem:[%s1580 + $0x60] sm:$0xff]
        %v1588 = vld [vmem:[%s1580 + $0x70] sm:$0xff]
        %v1589 = vld [vmem:[%s1580 + $0xa0] sm:$0xff]
        %v1590 = vld [vmem:[%s1580 + $0xb0] sm:$0xff]
        %v1591 = vld [vmem:[%s1580 + $0xc0] sm:$0xff]
        %v1592 = vld [vmem:[%s1580 + $0xd0] sm:$0xff]
        %v1593 = vld [vmem:[%s1580 + $0xe0] sm:$0xff]
        %v1594 = vld [vmem:[%s1580 + $0xf0] sm:$0xff]
        %v1595 = vld [vmem:[%s1580 + $0x100] sm:$0xff]
        %v1596 = vld [vmem:[%s1580 + $0x110] sm:$0xff]
        %v1597 = vpack.c.bf16 %v1582, %v1581
        %v1598 = vpack.c.bf16 %v1584, %v1583
        %v1599 = vpack.c.bf16 %v1586, %v1585
        %v1600 = vpack.c.bf16 %v1588, %v1587
        %v1601 = vpack.c.bf16 %v1590, %v1589
        %v1602 = vpack.c.bf16 %v1592, %v1591
        %v1603 = vpack.c.bf16 %v1594, %v1593
        %v1604 = vpack.c.bf16 %v1596, %v1595
        %1613 = vrot.lane.b32.xlu0 %v1597, 64
        %v1614 = vpop.permute.xlu0 %1613
        %1615 = vrot.lane.b32.xlu0 %v1598, 64
        %v1616 = vpop.permute.xlu0 %1615
        %1617 = vrot.lane.b32.xlu0 %v1599, 64
        %v1618 = vpop.permute.xlu0 %1617
        %1619 = vrot.lane.b32.xlu0 %v1600, 64
        %v1620 = vpop.permute.xlu0 %1619
        %1621 = vrot.lane.b32.xlu0 %v1601, 64
        %v1622 = vpop.permute.xlu0 %1621
        %1623 = vrot.lane.b32.xlu0 %v1602, 64
        %v1624 = vpop.permute.xlu0 %1623
        %1625 = vrot.lane.b32.xlu0 %v1603, 64
        %v1626 = vpop.permute.xlu0 %1625
        %1627 = vrot.lane.b32.xlu0 %v1604, 64
        %v1628 = vpop.permute.xlu0 %1627
        %1637 = vst.msk [vmem:[#allocation3 + $0x8] sm:$0xff] %vm1410, %v1614
        %1638 = vst.msk [vmem:[#allocation3 + $0x20] sm:$0xff] %vm1410, %v1616
        %1639 = vst.msk [vmem:[#allocation3 + $0x38] sm:$0xff] %vm1410, %v1618
        %1640 = vst.msk [vmem:[#allocation3 + $0x50] sm:$0xff] %vm1410, %v1620
        %1641 = vst.msk [vmem:[#allocation3 + $0x68] sm:$0xff] %vm1410, %v1622
        %1642 = vst.msk [vmem:[#allocation3 + $0x80] sm:$0xff] %vm1410, %v1624
        %1643 = vst.msk [vmem:[#allocation3 + $0x98] sm:$0xff] %vm1410, %v1626
        %1644 = vst.msk [vmem:[#allocation3 + $0xb0] sm:$0xff] %vm1410, %v1628
        %v1645 = vld [vmem:[%s1580 + $0x1] sm:$0xff]
        %v1646 = vld [vmem:[%s1580 + $0x11] sm:$0xff]
        %v1647 = vld [vmem:[%s1580 + $0x21] sm:$0xff]
        %v1648 = vld [vmem:[%s1580 + $0x31] sm:$0xff]
        %v1649 = vld [vmem:[%s1580 + $0x41] sm:$0xff]
        %v1650 = vld [vmem:[%s1580 + $0x51] sm:$0xff]
        %v1651 = vld [vmem:[%s1580 + $0x61] sm:$0xff]
        %v1652 = vld [vmem:[%s1580 + $0x71] sm:$0xff]
        %v1653 = vld [vmem:[%s1580 + $0xa1] sm:$0xff]
        %v1654 = vld [vmem:[%s1580 + $0xb1] sm:$0xff]
        %v1655 = vld [vmem:[%s1580 + $0xc1] sm:$0xff]
        %v1656 = vld [vmem:[%s1580 + $0xd1] sm:$0xff]
        %v1657 = vld [vmem:[%s1580 + $0xe1] sm:$0xff]
        %v1658 = vld [vmem:[%s1580 + $0xf1] sm:$0xff]
        %v1659 = vld [vmem:[%s1580 + $0x101] sm:$0xff]
        %v1660 = vld [vmem:[%s1580 + $0x111] sm:$0xff]
        %v1661 = vpack.c.bf16 %v1646, %v1645
        %v1662 = vpack.c.bf16 %v1648, %v1647
        %v1663 = vpack.c.bf16 %v1650, %v1649
        %v1664 = vpack.c.bf16 %v1652, %v1651
        %v1665 = vpack.c.bf16 %v1654, %v1653
        %v1666 = vpack.c.bf16 %v1656, %v1655
        %v1667 = vpack.c.bf16 %v1658, %v1657
        %v1668 = vpack.c.bf16 %v1660, %v1659
        %1677 = vrot.lane.b32.xlu0 %v1661, 96
        %v1678 = vpop.permute.xlu0 %1677
        %1679 = vrot.lane.b32.xlu0 %v1662, 96
        %v1680 = vpop.permute.xlu0 %1679
        %1681 = vrot.lane.b32.xlu0 %v1663, 96
        %v1682 = vpop.permute.xlu0 %1681
        %1683 = vrot.lane.b32.xlu0 %v1664, 96
        %v1684 = vpop.permute.xlu0 %1683
        %1685 = vrot.lane.b32.xlu0 %v1665, 96
        %v1686 = vpop.permute.xlu0 %1685
        %1687 = vrot.lane.b32.xlu0 %v1666, 96
        %v1688 = vpop.permute.xlu0 %1687
        %1689 = vrot.lane.b32.xlu0 %v1667, 96
        %v1690 = vpop.permute.xlu0 %1689
        %1691 = vrot.lane.b32.xlu0 %v1668, 96
        %v1692 = vpop.permute.xlu0 %1691
        %1701 = vst.msk [vmem:[#allocation3 + $0x8] sm:$0xff] %vm1475, %v1678
        %1702 = vst.msk [vmem:[#allocation3 + $0x20] sm:$0xff] %vm1475, %v1680
        %1703 = vst.msk [vmem:[#allocation3 + $0x38] sm:$0xff] %vm1475, %v1682
        %1704 = vst.msk [vmem:[#allocation3 + $0x50] sm:$0xff] %vm1475, %v1684
        %1705 = vst.msk [vmem:[#allocation3 + $0x68] sm:$0xff] %vm1475, %v1686
        %1706 = vst.msk [vmem:[#allocation3 + $0x80] sm:$0xff] %vm1475, %v1688
        %1707 = vst.msk [vmem:[#allocation3 + $0x98] sm:$0xff] %vm1475, %v1690
        %1708 = vst.msk [vmem:[#allocation3 + $0xb0] sm:$0xff] %vm1475, %v1692
        %v1709 = vld [vmem:[%s1580 + $0x2] sm:$0xff]
        %v1710 = vld [vmem:[%s1580 + $0x12] sm:$0xff]
        %v1711 = vld [vmem:[%s1580 + $0x22] sm:$0xff]
        %v1712 = vld [vmem:[%s1580 + $0x32] sm:$0xff]
        %v1713 = vld [vmem:[%s1580 + $0x42] sm:$0xff]
        %v1714 = vld [vmem:[%s1580 + $0x52] sm:$0xff]
        %v1715 = vld [vmem:[%s1580 + $0x62] sm:$0xff]
        %v1716 = vld [vmem:[%s1580 + $0x72] sm:$0xff]
        %v1717 = vld [vmem:[%s1580 + $0xa2] sm:$0xff]
        %v1718 = vld [vmem:[%s1580 + $0xb2] sm:$0xff]
        %v1719 = vld [vmem:[%s1580 + $0xc2] sm:$0xff]
        %v1720 = vld [vmem:[%s1580 + $0xd2] sm:$0xff]
        %v1721 = vld [vmem:[%s1580 + $0xe2] sm:$0xff]
        %v1722 = vld [vmem:[%s1580 + $0xf2] sm:$0xff]
        %v1723 = vld [vmem:[%s1580 + $0x102] sm:$0xff]
        %v1724 = vld [vmem:[%s1580 + $0x112] sm:$0xff]
        %v1725 = vpack.c.bf16 %v1710, %v1709
        %v1726 = vpack.c.bf16 %v1712, %v1711
        %v1727 = vpack.c.bf16 %v1714, %v1713
        %v1728 = vpack.c.bf16 %v1716, %v1715
        %v1729 = vpack.c.bf16 %v1718, %v1717
        %v1730 = vpack.c.bf16 %v1720, %v1719
        %v1731 = vpack.c.bf16 %v1722, %v1721
        %v1732 = vpack.c.bf16 %v1724, %v1723
        %1733 = vst.msk [vmem:[#allocation3 + $0x10] sm:$0xff] %vm1128, %v1725
        %1734 = vst.msk [vmem:[#allocation3 + $0x28] sm:$0xff] %vm1128, %v1726
        %1735 = vst.msk [vmem:[#allocation3 + $0x40] sm:$0xff] %vm1128, %v1727
        %1736 = vst.msk [vmem:[#allocation3 + $0x58] sm:$0xff] %vm1128, %v1728
        %1737 = vst.msk [vmem:[#allocation3 + $0x70] sm:$0xff] %vm1128, %v1729
        %1738 = vst.msk [vmem:[#allocation3 + $0x88] sm:$0xff] %vm1128, %v1730
        %1739 = vst.msk [vmem:[#allocation3 + $0xa0] sm:$0xff] %vm1128, %v1731
        %1740 = vst.msk [vmem:[#allocation3 + $0xb8] sm:$0xff] %vm1128, %v1732
        %v1741 = vld [vmem:[#allocation3] sm:$0xff]
        %v1742 = vld [vmem:[#allocation3 + $0x8] sm:$0xff]
        %v1743 = vld [vmem:[#allocation3 + $0x10] sm:$0xff]
        %v1744 = vld [vmem:[#allocation3 + $0x18] sm:$0xff]
        %v1745 = vld [vmem:[#allocation3 + $0x20] sm:$0xff]
        %v1746 = vld [vmem:[#allocation3 + $0x28] sm:$0xff]
        %v1747 = vld [vmem:[#allocation3 + $0x30] sm:$0xff]
        %v1748 = vld [vmem:[#allocation3 + $0x38] sm:$0xff]
        %v1749 = vld [vmem:[#allocation3 + $0x40] sm:$0xff]
        %v1750 = vld [vmem:[#allocation3 + $0x48] sm:$0xff]
        %v1751 = vld [vmem:[#allocation3 + $0x50] sm:$0xff]
        %v1752 = vld [vmem:[#allocation3 + $0x58] sm:$0xff]
        %v1753 = vld [vmem:[#allocation3 + $0x60] sm:$0xff]
        %v1754 = vld [vmem:[#allocation3 + $0x68] sm:$0xff]
        %v1755 = vld [vmem:[#allocation3 + $0x70] sm:$0xff]
        %v1756 = vld [vmem:[#allocation3 + $0x78] sm:$0xff]
        %v1757 = vld [vmem:[#allocation3 + $0x80] sm:$0xff]
        %v1758 = vld [vmem:[#allocation3 + $0x88] sm:$0xff]
        %v1759 = vld [vmem:[#allocation3 + $0x90] sm:$0xff]
        %v1760 = vld [vmem:[#allocation3 + $0x98] sm:$0xff]
        %v1761 = vld [vmem:[#allocation3 + $0xa0] sm:$0xff]
        %v1762 = vld [vmem:[#allocation3 + $0xa8] sm:$0xff]
        %v1763 = vld [vmem:[#allocation3 + $0xb0] sm:$0xff]
        %v1764 = vld [vmem:[#allocation3 + $0xb8] sm:$0xff]
        %v1765 = vld [vmem:[%s7] sm:$0xf]
        %v1766 = vld [vmem:[%s7 + $0x4] sm:$0xf]
        %v1767 = vld [vmem:[%s7 + $0x8] sm:$0xf]
        %v1768 = vld [vmem:[%s7 + $0xc] sm:$0xf]
        %v1769 = vld [vmem:[%s7 + $0x10] sm:$0xf]
        %v1770 = vld [vmem:[%s7 + $0x14] sm:$0xf]
        %v1771 = vld [vmem:[%s7 + $0x18] sm:$0xf]
        %v1772 = vld [vmem:[%s7 + $0x1c] sm:$0xf]
        %v1773 = vld [vmem:[%s7 + $0x20] sm:$0xf]
        %v1774 = vld [vmem:[%s7 + $0x24] sm:$0xf]
        %v1775 = vld [vmem:[%s7 + $0x28] sm:$0xf]
        %v1776 = vld [vmem:[%s7 + $0x2c] sm:$0xf]
        %v1777 = vld [vmem:[%s7 + $0x30] sm:$0xf]
        %v1778 = vld [vmem:[%s7 + $0x34] sm:$0xf]
        %v1779 = vld [vmem:[%s7 + $0x38] sm:$0xf]
        %v1780 = vld [vmem:[%s7 + $0x3c] sm:$0xf]
        %v1781 = vld [vmem:[%s7 + $0x40] sm:$0xf]
        %v1782 = vld [vmem:[%s7 + $0x44] sm:$0xf]
        %v1783 = vld [vmem:[%s7 + $0x48] sm:$0xf]
        %v1784 = vld [vmem:[%s7 + $0x4c] sm:$0xf]
        %v1785 = vld [vmem:[%s7 + $0x50] sm:$0xf]
        %v1786 = vld [vmem:[%s7 + $0x54] sm:$0xf]
        %v1787 = vld [vmem:[%s7 + $0x58] sm:$0xf]
        %v1788 = vld [vmem:[%s7 + $0x5c] sm:$0xf]
        %v1789 = vld [vmem:[%s7 + $0x60] sm:$0xf]
        %v1790 = vld [vmem:[%s7 + $0x64] sm:$0xf]
        %v1791 = vld [vmem:[%s7 + $0x68] sm:$0xf]
        %v1792 = vld [vmem:[%s7 + $0x6c] sm:$0xf]
        %v1793 = vld [vmem:[%s7 + $0x70] sm:$0xf]
        %v1794 = vld [vmem:[%s7 + $0x74] sm:$0xf]
        %v1795 = vld [vmem:[%s7 + $0x78] sm:$0xf]
        %v1796 = vld [vmem:[%s7 + $0x7c] sm:$0xf]
        %v1797 = vld [vmem:[%s7 + $0x80] sm:$0xf]
        %v1798 = vld [vmem:[%s7 + $0x84] sm:$0xf]
        %v1799 = vld [vmem:[%s7 + $0x88] sm:$0xf]
        %v1800 = vld [vmem:[%s7 + $0x8c] sm:$0xf]
        %s1801 = scalar_lea.vmem [#allocation2], 160
        %v1802 = vld [vmem:[%s1801] sm:$0xff]
        %v1803 = vld [vmem:[%s1801 + $0x10] sm:$0xff]
        %v1804 = vld [vmem:[%s1801 + $0x20] sm:$0xff]
        %v1805 = vld [vmem:[%s1801 + $0x30] sm:$0xff]
        %v1806 = vld [vmem:[%s1801 + $0x40] sm:$0xff]
        %v1807 = vld [vmem:[%s1801 + $0x50] sm:$0xff]
        %v1808 = vld [vmem:[%s1801 + $0x60] sm:$0xff]
        %v1809 = vld [vmem:[%s1801 + $0x70] sm:$0xff]
        %v1810 = vld [vmem:[%s1801 + $0xa0] sm:$0xff]
        %v1811 = vld [vmem:[%s1801 + $0xb0] sm:$0xff]
        %v1812 = vld [vmem:[%s1801 + $0xc0] sm:$0xff]
        %v1813 = vld [vmem:[%s1801 + $0xd0] sm:$0xff]
        %v1814 = vld [vmem:[%s1801 + $0xe0] sm:$0xff]
        %v1815 = vld [vmem:[%s1801 + $0xf0] sm:$0xff]
        %v1816 = vld [vmem:[%s1801 + $0x100] sm:$0xff]
        %v1817 = vld [vmem:[%s1801 + $0x110] sm:$0xff]
        %v1818 = vpack.c.bf16 %v1803, %v1802
        %v1819 = vpack.c.bf16 %v1805, %v1804
        %v1820 = vpack.c.bf16 %v1807, %v1806
        %v1821 = vpack.c.bf16 %v1809, %v1808
        %v1822 = vpack.c.bf16 %v1811, %v1810
        %v1823 = vpack.c.bf16 %v1813, %v1812
        %v1824 = vpack.c.bf16 %v1815, %v1814
        %v1825 = vpack.c.bf16 %v1817, %v1816
        %1826 = vst.msk [vmem:[#allocation3] sm:$0xff] %vm1128, %v1818
        %1827 = vst.msk [vmem:[#allocation3 + $0x18] sm:$0xff] %vm1128, %v1819
        %1828 = vst.msk [vmem:[#allocation3 + $0x30] sm:$0xff] %vm1128, %v1820
        %1829 = vst.msk [vmem:[#allocation3 + $0x48] sm:$0xff] %vm1128, %v1821
        %1830 = vst.msk [vmem:[#allocation3 + $0x60] sm:$0xff] %vm1128, %v1822
        %1831 = vst.msk [vmem:[#allocation3 + $0x78] sm:$0xff] %vm1128, %v1823
        %1832 = vst.msk [vmem:[#allocation3 + $0x90] sm:$0xff] %vm1128, %v1824
        %1833 = vst.msk [vmem:[#allocation3 + $0xa8] sm:$0xff] %vm1128, %v1825
        %v1834 = vld [vmem:[%s1801 + $0x1] sm:$0xff]
        %v1835 = vld [vmem:[%s1801 + $0x11] sm:$0xff]
        %v1836 = vld [vmem:[%s1801 + $0x21] sm:$0xff]
        %v1837 = vld [vmem:[%s1801 + $0x31] sm:$0xff]
        %v1838 = vld [vmem:[%s1801 + $0x41] sm:$0xff]
        %v1839 = vld [vmem:[%s1801 + $0x51] sm:$0xff]
        %v1840 = vld [vmem:[%s1801 + $0x61] sm:$0xff]
        %v1841 = vld [vmem:[%s1801 + $0x71] sm:$0xff]
        %v1842 = vld [vmem:[%s1801 + $0xa1] sm:$0xff]
        %v1843 = vld [vmem:[%s1801 + $0xb1] sm:$0xff]
        %v1844 = vld [vmem:[%s1801 + $0xc1] sm:$0xff]
        %v1845 = vld [vmem:[%s1801 + $0xd1] sm:$0xff]
        %v1846 = vld [vmem:[%s1801 + $0xe1] sm:$0xff]
        %v1847 = vld [vmem:[%s1801 + $0xf1] sm:$0xff]
        %v1848 = vld [vmem:[%s1801 + $0x101] sm:$0xff]
        %v1849 = vld [vmem:[%s1801 + $0x111] sm:$0xff]
        %v1850 = vpack.c.bf16 %v1835, %v1834
        %v1851 = vpack.c.bf16 %v1837, %v1836
        %v1852 = vpack.c.bf16 %v1839, %v1838
        %v1853 = vpack.c.bf16 %v1841, %v1840
        %v1854 = vpack.c.bf16 %v1843, %v1842
        %v1855 = vpack.c.bf16 %v1845, %v1844
        %v1856 = vpack.c.bf16 %v1847, %v1846
        %v1857 = vpack.c.bf16 %v1849, %v1848
        %1866 = vrot.lane.b32.xlu0 %v1850, 32
        %v1867 = vpop.permute.xlu0 %1866
        %1868 = vrot.lane.b32.xlu0 %v1851, 32
        %v1869 = vpop.permute.xlu0 %1868
        %1870 = vrot.lane.b32.xlu0 %v1852, 32
        %v1871 = vpop.permute.xlu0 %1870
        %1872 = vrot.lane.b32.xlu0 %v1853, 32
        %v1873 = vpop.permute.xlu0 %1872
        %1874 = vrot.lane.b32.xlu0 %v1854, 32
        %v1875 = vpop.permute.xlu0 %1874
        %1876 = vrot.lane.b32.xlu0 %v1855, 32
        %v1877 = vpop.permute.xlu0 %1876
        %1878 = vrot.lane.b32.xlu0 %v1856, 32
        %v1879 = vpop.permute.xlu0 %1878
        %1880 = vrot.lane.b32.xlu0 %v1857, 32
        %v1881 = vpop.permute.xlu0 %1880
        %1890 = vst.msk [vmem:[#allocation3] sm:$0xff] %vm1345, %v1867
        %1891 = vst.msk [vmem:[#allocation3 + $0x18] sm:$0xff] %vm1345, %v1869
        %1892 = vst.msk [vmem:[#allocation3 + $0x30] sm:$0xff] %vm1345, %v1871
        %1893 = vst.msk [vmem:[#allocation3 + $0x48] sm:$0xff] %vm1345, %v1873
        %1894 = vst.msk [vmem:[#allocation3 + $0x60] sm:$0xff] %vm1345, %v1875
        %1895 = vst.msk [vmem:[#allocation3 + $0x78] sm:$0xff] %vm1345, %v1877
        %1896 = vst.msk [vmem:[#allocation3 + $0x90] sm:$0xff] %vm1345, %v1879
        %1897 = vst.msk [vmem:[#allocation3 + $0xa8] sm:$0xff] %vm1345, %v1881
        %v1898 = vld [vmem:[%s1801 + $0x2] sm:$0xff]
        %v1899 = vld [vmem:[%s1801 + $0x12] sm:$0xff]
        %v1900 = vld [vmem:[%s1801 + $0x22] sm:$0xff]
        %v1901 = vld [vmem:[%s1801 + $0x32] sm:$0xff]
        %v1902 = vld [vmem:[%s1801 + $0x42] sm:$0xff]
        %v1903 = vld [vmem:[%s1801 + $0x52] sm:$0xff]
        %v1904 = vld [vmem:[%s1801 + $0x62] sm:$0xff]
        %v1905 = vld [vmem:[%s1801 + $0x72] sm:$0xff]
        %v1906 = vld [vmem:[%s1801 + $0xa2] sm:$0xff]
        %v1907 = vld [vmem:[%s1801 + $0xb2] sm:$0xff]
        %v1908 = vld [vmem:[%s1801 + $0xc2] sm:$0xff]
        %v1909 = vld [vmem:[%s1801 + $0xd2] sm:$0xff]
        %v1910 = vld [vmem:[%s1801 + $0xe2] sm:$0xff]
        %v1911 = vld [vmem:[%s1801 + $0xf2] sm:$0xff]
        %v1912 = vld [vmem:[%s1801 + $0x102] sm:$0xff]
        %v1913 = vld [vmem:[%s1801 + $0x112] sm:$0xff]
        %v1914 = vpack.c.bf16 %v1899, %v1898
        %v1915 = vpack.c.bf16 %v1901, %v1900
        %v1916 = vpack.c.bf16 %v1903, %v1902
        %v1917 = vpack.c.bf16 %v1905, %v1904
        %v1918 = vpack.c.bf16 %v1907, %v1906
        %v1919 = vpack.c.bf16 %v1909, %v1908
        %v1920 = vpack.c.bf16 %v1911, %v1910
        %v1921 = vpack.c.bf16 %v1913, %v1912
        %1930 = vrot.lane.b32.xlu0 %v1914, 64
        %v1931 = vpop.permute.xlu0 %1930
        %1932 = vrot.lane.b32.xlu0 %v1915, 64
        %v1933 = vpop.permute.xlu0 %1932
        %1934 = vrot.lane.b32.xlu0 %v1916, 64
        %v1935 = vpop.permute.xlu0 %1934
        %1936 = vrot.lane.b32.xlu0 %v1917, 64
        %v1937 = vpop.permute.xlu0 %1936
        %1938 = vrot.lane.b32.xlu0 %v1918, 64
        %v1939 = vpop.permute.xlu0 %1938
        %1940 = vrot.lane.b32.xlu0 %v1919, 64
        %v1941 = vpop.permute.xlu0 %1940
        %1942 = vrot.lane.b32.xlu0 %v1920, 64
        %v1943 = vpop.permute.xlu0 %1942
        %1944 = vrot.lane.b32.xlu0 %v1921, 64
        %v1945 = vpop.permute.xlu0 %1944
        %1954 = vst.msk [vmem:[#allocation3] sm:$0xff] %vm1410, %v1931
        %1955 = vst.msk [vmem:[#allocation3 + $0x18] sm:$0xff] %vm1410, %v1933
        %1956 = vst.msk [vmem:[#allocation3 + $0x30] sm:$0xff] %vm1410, %v1935
        %1957 = vst.msk [vmem:[#allocation3 + $0x48] sm:$0xff] %vm1410, %v1937
        %1958 = vst.msk [vmem:[#allocation3 + $0x60] sm:$0xff] %vm1410, %v1939
        %1959 = vst.msk [vmem:[#allocation3 + $0x78] sm:$0xff] %vm1410, %v1941
        %1960 = vst.msk [vmem:[#allocation3 + $0x90] sm:$0xff] %vm1410, %v1943
        %1961 = vst.msk [vmem:[#allocation3 + $0xa8] sm:$0xff] %vm1410, %v1945
        %v1962 = vld [vmem:[%s1127] sm:$0xff]
        %v1963 = vld [vmem:[%s1127 + $0x10] sm:$0xff]
        %v1964 = vld [vmem:[%s1127 + $0x20] sm:$0xff]
        %v1965 = vld [vmem:[%s1127 + $0x30] sm:$0xff]
        %v1966 = vld [vmem:[%s1127 + $0x40] sm:$0xff]
        %v1967 = vld [vmem:[%s1127 + $0x50] sm:$0xff]
        %v1968 = vld [vmem:[%s1127 + $0x60] sm:$0xff]
        %v1969 = vld [vmem:[%s1127 + $0x70] sm:$0xff]
        %v1970 = vld [vmem:[%s1127 + $0xa0] sm:$0xff]
        %v1971 = vld [vmem:[%s1127 + $0xb0] sm:$0xff]
        %v1972 = vld [vmem:[%s1127 + $0xc0] sm:$0xff]
        %v1973 = vld [vmem:[%s1127 + $0xd0] sm:$0xff]
        %v1974 = vld [vmem:[%s1127 + $0xe0] sm:$0xff]
        %v1975 = vld [vmem:[%s1127 + $0xf0] sm:$0xff]
        %v1976 = vld [vmem:[%s1127 + $0x100] sm:$0xff]
        %v1977 = vld [vmem:[%s1127 + $0x110] sm:$0xff]
        %v1978 = vpack.c.bf16 %v1963, %v1962
        %v1979 = vpack.c.bf16 %v1965, %v1964
        %v1980 = vpack.c.bf16 %v1967, %v1966
        %v1981 = vpack.c.bf16 %v1969, %v1968
        %v1982 = vpack.c.bf16 %v1971, %v1970
        %v1983 = vpack.c.bf16 %v1973, %v1972
        %v1984 = vpack.c.bf16 %v1975, %v1974
        %v1985 = vpack.c.bf16 %v1977, %v1976
        %1994 = vrot.lane.b32.xlu0 %v1978, 96
        %v1995 = vpop.permute.xlu0 %1994
        %1996 = vrot.lane.b32.xlu0 %v1979, 96
        %v1997 = vpop.permute.xlu0 %1996
        %1998 = vrot.lane.b32.xlu0 %v1980, 96
        %v1999 = vpop.permute.xlu0 %1998
        %2000 = vrot.lane.b32.xlu0 %v1981, 96
        %v2001 = vpop.permute.xlu0 %2000
        %2002 = vrot.lane.b32.xlu0 %v1982, 96
        %v2003 = vpop.permute.xlu0 %2002
        %2004 = vrot.lane.b32.xlu0 %v1983, 96
        %v2005 = vpop.permute.xlu0 %2004
        %2006 = vrot.lane.b32.xlu0 %v1984, 96
        %v2007 = vpop.permute.xlu0 %2006
        %2008 = vrot.lane.b32.xlu0 %v1985, 96
        %v2009 = vpop.permute.xlu0 %2008
        %2018 = vst.msk [vmem:[#allocation3] sm:$0xff] %vm1475, %v1995
        %2019 = vst.msk [vmem:[#allocation3 + $0x18] sm:$0xff] %vm1475, %v1997
        %2020 = vst.msk [vmem:[#allocation3 + $0x30] sm:$0xff] %vm1475, %v1999
        %2021 = vst.msk [vmem:[#allocation3 + $0x48] sm:$0xff] %vm1475, %v2001
        %2022 = vst.msk [vmem:[#allocation3 + $0x60] sm:$0xff] %vm1475, %v2003
        %2023 = vst.msk [vmem:[#allocation3 + $0x78] sm:$0xff] %vm1475, %v2005
        %2024 = vst.msk [vmem:[#allocation3 + $0x90] sm:$0xff] %vm1475, %v2007
        %2025 = vst.msk [vmem:[#allocation3 + $0xa8] sm:$0xff] %vm1475, %v2009
        %v2026 = vld [vmem:[%s1127 + $0x1] sm:$0xff]
        %v2027 = vld [vmem:[%s1127 + $0x11] sm:$0xff]
        %v2028 = vld [vmem:[%s1127 + $0x21] sm:$0xff]
        %v2029 = vld [vmem:[%s1127 + $0x31] sm:$0xff]
        %v2030 = vld [vmem:[%s1127 + $0x41] sm:$0xff]
        %v2031 = vld [vmem:[%s1127 + $0x51] sm:$0xff]
        %v2032 = vld [vmem:[%s1127 + $0x61] sm:$0xff]
        %v2033 = vld [vmem:[%s1127 + $0x71] sm:$0xff]
        %v2034 = vld [vmem:[%s1127 + $0xa1] sm:$0xff]
        %v2035 = vld [vmem:[%s1127 + $0xb1] sm:$0xff]
        %v2036 = vld [vmem:[%s1127 + $0xc1] sm:$0xff]
        %v2037 = vld [vmem:[%s1127 + $0xd1] sm:$0xff]
        %v2038 = vld [vmem:[%s1127 + $0xe1] sm:$0xff]
        %v2039 = vld [vmem:[%s1127 + $0xf1] sm:$0xff]
        %v2040 = vld [vmem:[%s1127 + $0x101] sm:$0xff]
        %v2041 = vld [vmem:[%s1127 + $0x111] sm:$0xff]
        %v2042 = vpack.c.bf16 %v2027, %v2026
        %v2043 = vpack.c.bf16 %v2029, %v2028
        %v2044 = vpack.c.bf16 %v2031, %v2030
        %v2045 = vpack.c.bf16 %v2033, %v2032
        %v2046 = vpack.c.bf16 %v2035, %v2034
        %v2047 = vpack.c.bf16 %v2037, %v2036
        %v2048 = vpack.c.bf16 %v2039, %v2038
        %v2049 = vpack.c.bf16 %v2041, %v2040
        %2050 = vst.msk [vmem:[#allocation3 + $0x8] sm:$0xff] %vm1128, %v2042
        %2051 = vst.msk [vmem:[#allocation3 + $0x20] sm:$0xff] %vm1128, %v2043
        %2052 = vst.msk [vmem:[#allocation3 + $0x38] sm:$0xff] %vm1128, %v2044
        %2053 = vst.msk [vmem:[#allocation3 + $0x50] sm:$0xff] %vm1128, %v2045
        %2054 = vst.msk [vmem:[#allocation3 + $0x68] sm:$0xff] %vm1128, %v2046
        %2055 = vst.msk [vmem:[#allocation3 + $0x80] sm:$0xff] %vm1128, %v2047
        %2056 = vst.msk [vmem:[#allocation3 + $0x98] sm:$0xff] %vm1128, %v2048
        %2057 = vst.msk [vmem:[#allocation3 + $0xb0] sm:$0xff] %vm1128, %v2049
        %v2058 = vld [vmem:[%s1127 + $0x2] sm:$0xff]
        %v2059 = vld [vmem:[%s1127 + $0x12] sm:$0xff]
        %v2060 = vld [vmem:[%s1127 + $0x22] sm:$0xff]
        %v2061 = vld [vmem:[%s1127 + $0x32] sm:$0xff]
        %v2062 = vld [vmem:[%s1127 + $0x42] sm:$0xff]
        %v2063 = vld [vmem:[%s1127 + $0x52] sm:$0xff]
        %v2064 = vld [vmem:[%s1127 + $0x62] sm:$0xff]
        %v2065 = vld [vmem:[%s1127 + $0x72] sm:$0xff]
        %v2066 = vld [vmem:[%s1127 + $0xa2] sm:$0xff]
        %v2067 = vld [vmem:[%s1127 + $0xb2] sm:$0xff]
        %v2068 = vld [vmem:[%s1127 + $0xc2] sm:$0xff]
        %v2069 = vld [vmem:[%s1127 + $0xd2] sm:$0xff]
        %v2070 = vld [vmem:[%s1127 + $0xe2] sm:$0xff]
        %v2071 = vld [vmem:[%s1127 + $0xf2] sm:$0xff]
        %v2072 = vld [vmem:[%s1127 + $0x102] sm:$0xff]
        %v2073 = vld [vmem:[%s1127 + $0x112] sm:$0xff]
        %v2074 = vpack.c.bf16 %v2059, %v2058
        %v2075 = vpack.c.bf16 %v2061, %v2060
        %v2076 = vpack.c.bf16 %v2063, %v2062
        %v2077 = vpack.c.bf16 %v2065, %v2064
        %v2078 = vpack.c.bf16 %v2067, %v2066
        %v2079 = vpack.c.bf16 %v2069, %v2068
        %v2080 = vpack.c.bf16 %v2071, %v2070
        %v2081 = vpack.c.bf16 %v2073, %v2072
        %2090 = vrot.lane.b32.xlu0 %v2074, 32
        %v2091 = vpop.permute.xlu0 %2090
        %2092 = vrot.lane.b32.xlu0 %v2075, 32
        %v2093 = vpop.permute.xlu0 %2092
        %2094 = vrot.lane.b32.xlu0 %v2076, 32
        %v2095 = vpop.permute.xlu0 %2094
        %2096 = vrot.lane.b32.xlu0 %v2077, 32
        %v2097 = vpop.permute.xlu0 %2096
        %2098 = vrot.lane.b32.xlu0 %v2078, 32
        %v2099 = vpop.permute.xlu0 %2098
        %2100 = vrot.lane.b32.xlu0 %v2079, 32
        %v2101 = vpop.permute.xlu0 %2100
        %2102 = vrot.lane.b32.xlu0 %v2080, 32
        %v2103 = vpop.permute.xlu0 %2102
        %2104 = vrot.lane.b32.xlu0 %v2081, 32
        %v2105 = vpop.permute.xlu0 %2104
        %2114 = vst.msk [vmem:[#allocation3 + $0x8] sm:$0xff] %vm1345, %v2091
        %2115 = vst.msk [vmem:[#allocation3 + $0x20] sm:$0xff] %vm1345, %v2093
        %2116 = vst.msk [vmem:[#allocation3 + $0x38] sm:$0xff] %vm1345, %v2095
        %2117 = vst.msk [vmem:[#allocation3 + $0x50] sm:$0xff] %vm1345, %v2097
        %2118 = vst.msk [vmem:[#allocation3 + $0x68] sm:$0xff] %vm1345, %v2099
        %2119 = vst.msk [vmem:[#allocation3 + $0x80] sm:$0xff] %vm1345, %v2101
        %2120 = vst.msk [vmem:[#allocation3 + $0x98] sm:$0xff] %vm1345, %v2103
        %2121 = vst.msk [vmem:[#allocation3 + $0xb0] sm:$0xff] %vm1345, %v2105
        %s2122 = scalar_lea.vmem [#allocation2], 192
        %v2123 = vld [vmem:[%s2122] sm:$0xff]
        %v2124 = vld [vmem:[%s2122 + $0x10] sm:$0xff]
        %v2125 = vld [vmem:[%s2122 + $0x20] sm:$0xff]
        %v2126 = vld [vmem:[%s2122 + $0x30] sm:$0xff]
        %v2127 = vld [vmem:[%s2122 + $0x40] sm:$0xff]
        %v2128 = vld [vmem:[%s2122 + $0x50] sm:$0xff]
        %v2129 = vld [vmem:[%s2122 + $0x60] sm:$0xff]
        %v2130 = vld [vmem:[%s2122 + $0x70] sm:$0xff]
        %v2131 = vld [vmem:[%s2122 + $0xa0] sm:$0xff]
        %v2132 = vld [vmem:[%s2122 + $0xb0] sm:$0xff]
        %v2133 = vld [vmem:[%s2122 + $0xc0] sm:$0xff]
        %v2134 = vld [vmem:[%s2122 + $0xd0] sm:$0xff]
        %v2135 = vld [vmem:[%s2122 + $0xe0] sm:$0xff]
        %v2136 = vld [vmem:[%s2122 + $0xf0] sm:$0xff]
        %v2137 = vld [vmem:[%s2122 + $0x100] sm:$0xff]
        %v2138 = vld [vmem:[%s2122 + $0x110] sm:$0xff]
        %v2139 = vpack.c.bf16 %v2124, %v2123
        %v2140 = vpack.c.bf16 %v2126, %v2125
        %v2141 = vpack.c.bf16 %v2128, %v2127
        %v2142 = vpack.c.bf16 %v2130, %v2129
        %v2143 = vpack.c.bf16 %v2132, %v2131
        %v2144 = vpack.c.bf16 %v2134, %v2133
        %v2145 = vpack.c.bf16 %v2136, %v2135
        %v2146 = vpack.c.bf16 %v2138, %v2137
        %2155 = vrot.lane.b32.xlu0 %v2139, 64
        %v2156 = vpop.permute.xlu0 %2155
        %2157 = vrot.lane.b32.xlu0 %v2140, 64
        %v2158 = vpop.permute.xlu0 %2157
        %2159 = vrot.lane.b32.xlu0 %v2141, 64
        %v2160 = vpop.permute.xlu0 %2159
        %2161 = vrot.lane.b32.xlu0 %v2142, 64
        %v2162 = vpop.permute.xlu0 %2161
        %2163 = vrot.lane.b32.xlu0 %v2143, 64
        %v2164 = vpop.permute.xlu0 %2163
        %2165 = vrot.lane.b32.xlu0 %v2144, 64
        %v2166 = vpop.permute.xlu0 %2165
        %2167 = vrot.lane.b32.xlu0 %v2145, 64
        %v2168 = vpop.permute.xlu0 %2167
        %2169 = vrot.lane.b32.xlu0 %v2146, 64
        %v2170 = vpop.permute.xlu0 %2169
        %2179 = vst.msk [vmem:[#allocation3 + $0x8] sm:$0xff] %vm1410, %v2156
        %2180 = vst.msk [vmem:[#allocation3 + $0x20] sm:$0xff] %vm1410, %v2158
        %2181 = vst.msk [vmem:[#allocation3 + $0x38] sm:$0xff] %vm1410, %v2160
        %2182 = vst.msk [vmem:[#allocation3 + $0x50] sm:$0xff] %vm1410, %v2162
        %2183 = vst.msk [vmem:[#allocation3 + $0x68] sm:$0xff] %vm1410, %v2164
        %2184 = vst.msk [vmem:[#allocation3 + $0x80] sm:$0xff] %vm1410, %v2166
        %2185 = vst.msk [vmem:[#allocation3 + $0x98] sm:$0xff] %vm1410, %v2168
        %2186 = vst.msk [vmem:[#allocation3 + $0xb0] sm:$0xff] %vm1410, %v2170
        %v2187 = vld [vmem:[%s2122 + $0x1] sm:$0xff]
        %v2188 = vld [vmem:[%s2122 + $0x11] sm:$0xff]
        %v2189 = vld [vmem:[%s2122 + $0x21] sm:$0xff]
        %v2190 = vld [vmem:[%s2122 + $0x31] sm:$0xff]
        %v2191 = vld [vmem:[%s2122 + $0x41] sm:$0xff]
        %v2192 = vld [vmem:[%s2122 + $0x51] sm:$0xff]
        %v2193 = vld [vmem:[%s2122 + $0x61] sm:$0xff]
        %v2194 = vld [vmem:[%s2122 + $0x71] sm:$0xff]
        %v2195 = vld [vmem:[%s2122 + $0xa1] sm:$0xff]
        %v2196 = vld [vmem:[%s2122 + $0xb1] sm:$0xff]
        %v2197 = vld [vmem:[%s2122 + $0xc1] sm:$0xff]
        %v2198 = vld [vmem:[%s2122 + $0xd1] sm:$0xff]
        %v2199 = vld [vmem:[%s2122 + $0xe1] sm:$0xff]
        %v2200 = vld [vmem:[%s2122 + $0xf1] sm:$0xff]
        %v2201 = vld [vmem:[%s2122 + $0x101] sm:$0xff]
        %v2202 = vld [vmem:[%s2122 + $0x111] sm:$0xff]
        %v2203 = vpack.c.bf16 %v2188, %v2187
        %v2204 = vpack.c.bf16 %v2190, %v2189
        %v2205 = vpack.c.bf16 %v2192, %v2191
        %v2206 = vpack.c.bf16 %v2194, %v2193
        %v2207 = vpack.c.bf16 %v2196, %v2195
        %v2208 = vpack.c.bf16 %v2198, %v2197
        %v2209 = vpack.c.bf16 %v2200, %v2199
        %v2210 = vpack.c.bf16 %v2202, %v2201
        %2219 = vrot.lane.b32.xlu0 %v2203, 96
        %v2220 = vpop.permute.xlu0 %2219
        %2221 = vrot.lane.b32.xlu0 %v2204, 96
        %v2222 = vpop.permute.xlu0 %2221
        %2223 = vrot.lane.b32.xlu0 %v2205, 96
        %v2224 = vpop.permute.xlu0 %2223
        %2225 = vrot.lane.b32.xlu0 %v2206, 96
        %v2226 = vpop.permute.xlu0 %2225
        %2227 = vrot.lane.b32.xlu0 %v2207, 96
        %v2228 = vpop.permute.xlu0 %2227
        %2229 = vrot.lane.b32.xlu0 %v2208, 96
        %v2230 = vpop.permute.xlu0 %2229
        %2231 = vrot.lane.b32.xlu0 %v2209, 96
        %v2232 = vpop.permute.xlu0 %2231
        %2233 = vrot.lane.b32.xlu0 %v2210, 96
        %v2234 = vpop.permute.xlu0 %2233
        %2243 = vst.msk [vmem:[#allocation3 + $0x8] sm:$0xff] %vm1475, %v2220
        %2244 = vst.msk [vmem:[#allocation3 + $0x20] sm:$0xff] %vm1475, %v2222
        %2245 = vst.msk [vmem:[#allocation3 + $0x38] sm:$0xff] %vm1475, %v2224
        %2246 = vst.msk [vmem:[#allocation3 + $0x50] sm:$0xff] %vm1475, %v2226
        %2247 = vst.msk [vmem:[#allocation3 + $0x68] sm:$0xff] %vm1475, %v2228
        %2248 = vst.msk [vmem:[#allocation3 + $0x80] sm:$0xff] %vm1475, %v2230
        %2249 = vst.msk [vmem:[#allocation3 + $0x98] sm:$0xff] %vm1475, %v2232
        %2250 = vst.msk [vmem:[#allocation3 + $0xb0] sm:$0xff] %vm1475, %v2234
        %v2251 = vld [vmem:[%s2122 + $0x2] sm:$0xff]
        %v2252 = vld [vmem:[%s2122 + $0x12] sm:$0xff]
        %v2253 = vld [vmem:[%s2122 + $0x22] sm:$0xff]
        %v2254 = vld [vmem:[%s2122 + $0x32] sm:$0xff]
        %v2255 = vld [vmem:[%s2122 + $0x42] sm:$0xff]
        %v2256 = vld [vmem:[%s2122 + $0x52] sm:$0xff]
        %v2257 = vld [vmem:[%s2122 + $0x62] sm:$0xff]
        %v2258 = vld [vmem:[%s2122 + $0x72] sm:$0xff]
        %v2259 = vld [vmem:[%s2122 + $0xa2] sm:$0xff]
        %v2260 = vld [vmem:[%s2122 + $0xb2] sm:$0xff]
        %v2261 = vld [vmem:[%s2122 + $0xc2] sm:$0xff]
        %v2262 = vld [vmem:[%s2122 + $0xd2] sm:$0xff]
        %v2263 = vld [vmem:[%s2122 + $0xe2] sm:$0xff]
        %v2264 = vld [vmem:[%s2122 + $0xf2] sm:$0xff]
        %v2265 = vld [vmem:[%s2122 + $0x102] sm:$0xff]
        %v2266 = vld [vmem:[%s2122 + $0x112] sm:$0xff]
        %v2267 = vpack.c.bf16 %v2252, %v2251
        %v2268 = vpack.c.bf16 %v2254, %v2253
        %v2269 = vpack.c.bf16 %v2256, %v2255
        %v2270 = vpack.c.bf16 %v2258, %v2257
        %v2271 = vpack.c.bf16 %v2260, %v2259
        %v2272 = vpack.c.bf16 %v2262, %v2261
        %v2273 = vpack.c.bf16 %v2264, %v2263
        %v2274 = vpack.c.bf16 %v2266, %v2265
        %2275 = vst.msk [vmem:[#allocation3 + $0x10] sm:$0xff] %vm1128, %v2267
        %2276 = vst.msk [vmem:[#allocation3 + $0x28] sm:$0xff] %vm1128, %v2268
        %2277 = vst.msk [vmem:[#allocation3 + $0x40] sm:$0xff] %vm1128, %v2269
        %2278 = vst.msk [vmem:[#allocation3 + $0x58] sm:$0xff] %vm1128, %v2270
        %2279 = vst.msk [vmem:[#allocation3 + $0x70] sm:$0xff] %vm1128, %v2271
        %2280 = vst.msk [vmem:[#allocation3 + $0x88] sm:$0xff] %vm1128, %v2272
        %2281 = vst.msk [vmem:[#allocation3 + $0xa0] sm:$0xff] %vm1128, %v2273
        %2282 = vst.msk [vmem:[#allocation3 + $0xb8] sm:$0xff] %vm1128, %v2274
        %v2283 = vld [vmem:[#allocation3] sm:$0xff]
        %v2284 = vld [vmem:[#allocation3 + $0x8] sm:$0xff]
        %v2285 = vld [vmem:[#allocation3 + $0x10] sm:$0xff]
        %v2286 = vld [vmem:[#allocation3 + $0x18] sm:$0xff]
        %v2287 = vld [vmem:[#allocation3 + $0x20] sm:$0xff]
        %v2288 = vld [vmem:[#allocation3 + $0x28] sm:$0xff]
        %v2289 = vld [vmem:[#allocation3 + $0x30] sm:$0xff]
        %v2290 = vld [vmem:[#allocation3 + $0x38] sm:$0xff]
        %v2291 = vld [vmem:[#allocation3 + $0x40] sm:$0xff]
        %v2292 = vld [vmem:[#allocation3 + $0x48] sm:$0xff]
        %v2293 = vld [vmem:[#allocation3 + $0x50] sm:$0xff]
        %v2294 = vld [vmem:[#allocation3 + $0x58] sm:$0xff]
        %v2295 = vld [vmem:[#allocation3 + $0x60] sm:$0xff]
        %v2296 = vld [vmem:[#allocation3 + $0x68] sm:$0xff]
        %v2297 = vld [vmem:[#allocation3 + $0x70] sm:$0xff]
        %v2298 = vld [vmem:[#allocation3 + $0x78] sm:$0xff]
        %v2299 = vld [vmem:[#allocation3 + $0x80] sm:$0xff]
        %v2300 = vld [vmem:[#allocation3 + $0x88] sm:$0xff]
        %v2301 = vld [vmem:[#allocation3 + $0x90] sm:$0xff]
        %v2302 = vld [vmem:[#allocation3 + $0x98] sm:$0xff]
        %v2303 = vld [vmem:[#allocation3 + $0xa0] sm:$0xff]
        %v2304 = vld [vmem:[#allocation3 + $0xa8] sm:$0xff]
        %v2305 = vld [vmem:[#allocation3 + $0xb0] sm:$0xff]
        %v2306 = vld [vmem:[#allocation3 + $0xb8] sm:$0xff]
        %s2307 = scalar_lea.vmem %s7, 144
        %v2308 = vld [vmem:[%s2307] sm:$0xf]
        %v2309 = vld [vmem:[%s2307 + $0x4] sm:$0xf]
        %v2310 = vld [vmem:[%s2307 + $0x8] sm:$0xf]
        %v2311 = vld [vmem:[%s2307 + $0xc] sm:$0xf]
        %v2312 = vld [vmem:[%s2307 + $0x10] sm:$0xf]
        %v2313 = vld [vmem:[%s2307 + $0x14] sm:$0xf]
        %v2314 = vld [vmem:[%s2307 + $0x18] sm:$0xf]
        %v2315 = vld [vmem:[%s2307 + $0x1c] sm:$0xf]
        %v2316 = vld [vmem:[%s2307 + $0x20] sm:$0xf]
        %v2317 = vld [vmem:[%s2307 + $0x24] sm:$0xf]
        %v2318 = vld [vmem:[%s2307 + $0x28] sm:$0xf]
        %v2319 = vld [vmem:[%s2307 + $0x2c] sm:$0xf]
        %v2320 = vld [vmem:[%s2307 + $0x30] sm:$0xf]
        %v2321 = vld [vmem:[%s2307 + $0x34] sm:$0xf]
        %v2322 = vld [vmem:[%s2307 + $0x38] sm:$0xf]
        %v2323 = vld [vmem:[%s2307 + $0x3c] sm:$0xf]
        %v2324 = vld [vmem:[%s2307 + $0x40] sm:$0xf]
        %v2325 = vld [vmem:[%s2307 + $0x44] sm:$0xf]
        %v2326 = vld [vmem:[%s2307 + $0x48] sm:$0xf]
        %v2327 = vld [vmem:[%s2307 + $0x4c] sm:$0xf]
        %v2328 = vld [vmem:[%s2307 + $0x50] sm:$0xf]
        %v2329 = vld [vmem:[%s2307 + $0x54] sm:$0xf]
        %v2330 = vld [vmem:[%s2307 + $0x58] sm:$0xf]
        %v2331 = vld [vmem:[%s2307 + $0x5c] sm:$0xf]
        %v2332 = vld [vmem:[%s2307 + $0x60] sm:$0xf]
        %v2333 = vld [vmem:[%s2307 + $0x64] sm:$0xf]
        %v2334 = vld [vmem:[%s2307 + $0x68] sm:$0xf]
        %v2335 = vld [vmem:[%s2307 + $0x6c] sm:$0xf]
        %v2336 = vld [vmem:[%s2307 + $0x70] sm:$0xf]
        %v2337 = vld [vmem:[%s2307 + $0x74] sm:$0xf]
        %v2338 = vld [vmem:[%s2307 + $0x78] sm:$0xf]
        %v2339 = vld [vmem:[%s2307 + $0x7c] sm:$0xf]
        %v2340 = vld [vmem:[%s2307 + $0x80] sm:$0xf]
        %v2341 = vld [vmem:[%s2307 + $0x84] sm:$0xf]
        %v2342 = vld [vmem:[%s2307 + $0x88] sm:$0xf]
        %v2343 = vld [vmem:[%s2307 + $0x8c] sm:$0xf]
        %v2380 = vunpack.c.l.b16 %v2308
        %v2381 = vunpack.c.l.b16 %v2309
        %v2382 = vunpack.c.l.b16 %v2310
        %v2383 = vunpack.c.l.b16 %v2311
        %v2384 = vunpack.c.l.b16 %v2312
        %v2385 = vunpack.c.l.b16 %v2313
        %v2386 = vunpack.c.l.b16 %v2314
        %v2387 = vunpack.c.l.b16 %v2315
        %v2388 = vunpack.c.l.b16 %v2316
        %v2389 = vunpack.c.l.b16 %v2317
        %v2390 = vunpack.c.l.b16 %v2318
        %v2391 = vunpack.c.l.b16 %v2319
        %v2392 = vunpack.c.l.b16 %v2320
        %v2393 = vunpack.c.l.b16 %v2321
        %v2394 = vunpack.c.l.b16 %v2322
        %v2395 = vunpack.c.l.b16 %v2323
        %v2396 = vunpack.c.l.b16 %v2324
        %v2397 = vunpack.c.l.b16 %v2325
        %v2398 = vunpack.c.l.b16 %v2326
        %v2399 = vunpack.c.l.b16 %v2327
        %v2400 = vunpack.c.l.b16 %v2328
        %v2401 = vunpack.c.l.b16 %v2329
        %v2402 = vunpack.c.l.b16 %v2330
        %v2403 = vunpack.c.l.b16 %v2331
        %v2404 = vunpack.c.l.b16 %v2332
        %v2405 = vunpack.c.l.b16 %v2333
        %v2406 = vunpack.c.l.b16 %v2334
        %v2407 = vunpack.c.l.b16 %v2335
        %v2408 = vunpack.c.l.b16 %v2336
        %v2409 = vunpack.c.l.b16 %v2337
        %v2410 = vunpack.c.l.b16 %v2338
        %v2411 = vunpack.c.l.b16 %v2339
        %v2412 = vunpack.c.l.b16 %v2340
        %v2413 = vunpack.c.l.b16 %v2341
        %v2414 = vunpack.c.l.b16 %v2342
        %v2415 = vunpack.c.l.b16 %v2343
        %v2416 = vpack.c.b16 %v2381, %v2380
        %v2417 = vpack.c.b16 %v2383, %v2382
        %v2418 = vpack.c.b16 %v2385, %v2384
        %v2419 = vpack.c.b16 %v2387, %v2386
        %v2420 = vpack.c.b16 %v2389, %v2388
        %v2421 = vpack.c.b16 %v2391, %v2390
        %v2422 = vpack.c.b16 %v2393, %v2392
        %v2423 = vpack.c.b16 %v2395, %v2394
        %v2424 = vpack.c.b16 %v2397, %v2396
        %v2425 = vpack.c.b16 %v2399, %v2398
        %v2426 = vpack.c.b16 %v2401, %v2400
        %v2427 = vpack.c.b16 %v2403, %v2402
        %v2428 = vpack.c.b16 %v2405, %v2404
        %v2429 = vpack.c.b16 %v2407, %v2406
        %v2430 = vpack.c.b16 %v2409, %v2408
        %v2431 = vpack.c.b16 %v2411, %v2410
        %v2432 = vpack.c.b16 %v2413, %v2412
        %v2433 = vpack.c.b16 %v2415, %v2414
        %v2453 = vsel %vm1128, %v2285, 0
        %v2456 = vsel %vm1128, %v2288, 0
        %v2459 = vsel %vm1128, %v2291, 0
        %v2462 = vsel %vm1128, %v2294, 0
        %v2465 = vsel %vm1128, %v2297, 0
        %v2468 = vsel %vm1128, %v2300, 0
        %v2471 = vsel %vm1128, %v2303, 0
        %v2474 = vsel %vm1128, %v2306, 0
        %2476 = vmatprep.subr.bf16.mxu0 0
        %2477 = vmatpush1.bf16.msra.mxu0 %v2416
        %2478 = vmatprep.subr.bf16.mxu0 0
        %2479 = vmatpush1.bf16.msra.mxu0 %v2417
        %2480 = vmatprep.subr.bf16.mxu0 0
        %2481 = vmatpush1.bf16.msra.mxu0 %v2418
        %2482 = vmatprep.subr.bf16.mxu0 0
        %2483 = vmatpush1.bf16.msra.mxu0 %v2419
        %2484 = vmatprep.subr.bf16.mxu0 0
        %2485 = vmatpush1.bf16.msra.mxu0 %v2420
        %2486 = vmatprep.subr.bf16.mxu0 0
        %2487 = vmatpush1.bf16.msra.mxu0 %v2421
        %2488 = vmatprep.subr.bf16.mxu0 0
        %2489 = vmatpush1.bf16.msra.mxu0 %v2422
        %2490 = vmatprep.subr.bf16.mxu0 0
        %2491 = vmatpush1.bf16.msra.mxu0 %v2423
        %2492 = vmatprep.subr.bf16.mxu0 0
        %2493 = vmatpush1.bf16.msra.mxu0 %v2424
        %2494 = vmatprep.subr.bf16.mxu0 0
        %2495 = vmatpush1.bf16.msra.mxu0 %v2425
        %2496 = vmatprep.subr.bf16.mxu0 0
        %2497 = vmatpush1.bf16.msra.mxu0 %v2426
        %2498 = vmatprep.subr.bf16.mxu0 0
        %2499 = vmatpush1.bf16.msra.mxu0 %v2427
        %2500 = vmatprep.subr.bf16.mxu0 0
        %2501 = vmatpush1.bf16.msra.mxu0 %v2428
        %2502 = vmatprep.subr.bf16.mxu0 0
        %2503 = vmatpush1.bf16.msra.mxu0 %v2429
        %2504 = vmatprep.subr.bf16.mxu0 0
        %2505 = vmatpush1.bf16.msra.mxu0 %v2430
        %2506 = vmatprep.subr.bf16.mxu0 0
        %2507 = vmatpush1.bf16.msra.mxu0 %v2431
        %2508 = vmatprep.mubr.bf16.mxu0 %v2284
        %2509 = vmatmul.mubr.bf16.gmra.mrb[0].mxu0 %v2283
        %v2510 = vpop.f32.mrb[0].mxu0
        %v2511 = vadd.f32 0.0, %v2510
        %v2512 = vpop.f32.mrb[0].mxu0
        %v2513 = vpop.f32.mrb[0].mxu0
        %v2514 = vadd.f32 0.0, %v2513
        %v2515 = vpop.f32.mrb[0].mxu0
        %2516 = vmatprep.mubr.bf16.mxu0 %v2287
        %2517 = vmatmul.mubr.bf16.gmra.mrb[0].mxu0 %v2286
        %v2518 = vpop.f32.mrb[0].mxu0
        %v2519 = vadd.f32 0.0, %v2518
        %v2520 = vpop.f32.mrb[0].mxu0
        %v2521 = vpop.f32.mrb[0].mxu0
        %v2522 = vadd.f32 0.0, %v2521
        %v2523 = vpop.f32.mrb[0].mxu0
        %2524 = vmatprep.mubr.bf16.mxu0 %v2290
        %2525 = vmatmul.mubr.bf16.gmra.mrb[0].mxu0 %v2289
        %v2526 = vpop.f32.mrb[0].mxu0
        %v2527 = vadd.f32 0.0, %v2526
        %v2528 = vpop.f32.mrb[0].mxu0
        %v2529 = vpop.f32.mrb[0].mxu0
        %v2530 = vadd.f32 0.0, %v2529
        %v2531 = vpop.f32.mrb[0].mxu0
        %2532 = vmatprep.mubr.bf16.mxu0 %v2293
        %2533 = vmatmul.mubr.bf16.gmra.mrb[0].mxu0 %v2292
        %v2534 = vpop.f32.mrb[0].mxu0
        %v2535 = vadd.f32 0.0, %v2534
        %v2536 = vpop.f32.mrb[0].mxu0
        %v2537 = vpop.f32.mrb[0].mxu0
        %v2538 = vadd.f32 0.0, %v2537
        %v2539 = vpop.f32.mrb[0].mxu0
        %2540 = vmatprep.mubr.bf16.mxu0 %v2296
        %2541 = vmatmul.mubr.bf16.gmra.mrb[0].mxu0 %v2295
        %v2542 = vpop.f32.mrb[0].mxu0
        %v2543 = vadd.f32 0.0, %v2542
        %v2544 = vpop.f32.mrb[0].mxu0
        %v2545 = vpop.f32.mrb[0].mxu0
        %v2546 = vadd.f32 0.0, %v2545
        %v2547 = vpop.f32.mrb[0].mxu0
        %2548 = vmatprep.mubr.bf16.mxu0 %v2299
        %2549 = vmatmul.mubr.bf16.gmra.mrb[0].mxu0 %v2298
        %v2550 = vpop.f32.mrb[0].mxu0
        %v2551 = vadd.f32 0.0, %v2550
        %v2552 = vpop.f32.mrb[0].mxu0
        %v2553 = vpop.f32.mrb[0].mxu0
        %v2554 = vadd.f32 0.0, %v2553
        %v2555 = vpop.f32.mrb[0].mxu0
        %2556 = vmatprep.mubr.bf16.mxu0 %v2302
        %2557 = vmatmul.mubr.bf16.gmra.mrb[0].mxu0 %v2301
        %v2558 = vpop.f32.mrb[0].mxu0
        %v2559 = vadd.f32 0.0, %v2558
        %v2560 = vpop.f32.mrb[0].mxu0
        %v2561 = vpop.f32.mrb[0].mxu0
        %v2562 = vadd.f32 0.0, %v2561
        %v2563 = vpop.f32.mrb[0].mxu0
        %2564 = vmatprep.mubr.bf16.mxu0 %v2305
        %2565 = vmatmul.mubr.bf16.gmra.mrb[0].mxu0 %v2304
        %v2566 = vpop.f32.mrb[0].mxu0
        %v2567 = vadd.f32 0.0, %v2566
        %v2568 = vpop.f32.mrb[0].mxu0
        %v2569 = vpop.f32.mrb[0].mxu0
        %v2570 = vadd.f32 0.0, %v2569
        %v2571 = vpop.f32.mrb[0].mxu0
        %2572 = vdwg.mxu0
        %2573 = vmatprep.subr.bf16.mxu0 0
        %2574 = vmatpush1.bf16.msra.mxu0 %v2432
        %2575 = vmatprep.subr.bf16.mxu0 0
        %2576 = vmatpush1.bf16.msra.mxu0 %v2433
        %2577 = vmatprep.subr.bf16.mxu0 0
        %2578 = vmatpush1.bf16.msra.mxu0 0
        %2579 = vmatprep.subr.bf16.mxu0 0
        %2580 = vmatpush1.bf16.msra.mxu0 0
        %2581 = vmatprep.subr.bf16.mxu0 0
        %2582 = vmatpush1.bf16.msra.mxu0 0
        %2583 = vmatprep.subr.bf16.mxu0 0
        %2584 = vmatpush1.bf16.msra.mxu0 0
        %2585 = vmatprep.subr.bf16.mxu0 0
        %2586 = vmatpush1.bf16.msra.mxu0 0
        %2587 = vmatprep.subr.bf16.mxu0 0
        %2588 = vmatpush1.bf16.msra.mxu0 0
        %2589 = vmatprep.subr.bf16.mxu0 0
        %2590 = vmatpush1.bf16.msra.mxu0 0
        %2591 = vmatprep.subr.bf16.mxu0 0
        %2592 = vmatpush1.bf16.msra.mxu0 0
        %2593 = vmatprep.subr.bf16.mxu0 0
        %2594 = vmatpush1.bf16.msra.mxu0 0
        %2595 = vmatprep.subr.bf16.mxu0 0
        %2596 = vmatpush1.bf16.msra.mxu0 0
        %2597 = vmatprep.subr.bf16.mxu0 0
        %2598 = vmatpush1.bf16.msra.mxu0 0
        %2599 = vmatprep.subr.bf16.mxu0 0
        %2600 = vmatpush1.bf16.msra.mxu0 0
        %2601 = vmatprep.subr.bf16.mxu0 0
        %2602 = vmatpush1.bf16.msra.mxu0 0
        %2603 = vmatprep.subr.bf16.mxu0 0
        %2604 = vmatpush1.bf16.msra.mxu0 0
        %2605 = vmatprep.mubr.bf16.mxu0 0
        %2606 = vmatmul.mubr.bf16.gmra.mrb[0].mxu0 %v2453
        %v2607 = vpop.f32.mrb[0].mxu0
        %v2608 = vadd.f32 %v2511, %v2607
        %v2609 = vpop.f32.mrb[0].mxu0
        %v2610 = vpop.f32.mrb[0].mxu0
        %v2611 = vadd.f32 %v2514, %v2610
        %v2612 = vpop.f32.mrb[0].mxu0
        %2613 = vmatprep.mubr.bf16.mxu0 0
        %2614 = vmatmul.mubr.bf16.gmra.mrb[0].mxu0 %v2456
        %v2615 = vpop.f32.mrb[0].mxu0
        %v2616 = vadd.f32 %v2519, %v2615
        %v2617 = vpop.f32.mrb[0].mxu0
        %v2618 = vpop.f32.mrb[0].mxu0
        %v2619 = vadd.f32 %v2522, %v2618
        %v2620 = vpop.f32.mrb[0].mxu0
        %2621 = vmatprep.mubr.bf16.mxu0 0
        %2622 = vmatmul.mubr.bf16.gmra.mrb[0].mxu0 %v2459
        %v2623 = vpop.f32.mrb[0].mxu0
        %v2624 = vadd.f32 %v2527, %v2623
        %v2625 = vpop.f32.mrb[0].mxu0
        %v2626 = vpop.f32.mrb[0].mxu0
        %v2627 = vadd.f32 %v2530, %v2626
        %v2628 = vpop.f32.mrb[0].mxu0
        %2629 = vmatprep.mubr.bf16.mxu0 0
        %2630 = vmatmul.mubr.bf16.gmra.mrb[0].mxu0 %v2462
        %v2631 = vpop.f32.mrb[0].mxu0
        %v2632 = vadd.f32 %v2535, %v2631
        %v2633 = vpop.f32.mrb[0].mxu0
        %v2634 = vpop.f32.mrb[0].mxu0
        %v2635 = vadd.f32 %v2538, %v2634
        %v2636 = vpop.f32.mrb[0].mxu0
        %2637 = vmatprep.mubr.bf16.mxu0 0
        %2638 = vmatmul.mubr.bf16.gmra.mrb[0].mxu0 %v2465
        %v2639 = vpop.f32.mrb[0].mxu0
        %v2640 = vadd.f32 %v2543, %v2639
        %v2641 = vpop.f32.mrb[0].mxu0
        %v2642 = vpop.f32.mrb[0].mxu0
        %v2643 = vadd.f32 %v2546, %v2642
        %v2644 = vpop.f32.mrb[0].mxu0
        %2645 = vmatprep.mubr.bf16.mxu0 0
        %2646 = vmatmul.mubr.bf16.gmra.mrb[0].mxu0 %v2468
        %v2647 = vpop.f32.mrb[0].mxu0
        %v2648 = vadd.f32 %v2551, %v2647
        %v2649 = vpop.f32.mrb[0].mxu0
        %v2650 = vpop.f32.mrb[0].mxu0
        %v2651 = vadd.f32 %v2554, %v2650
        %v2652 = vpop.f32.mrb[0].mxu0
        %2653 = vmatprep.mubr.bf16.mxu0 0
        %2654 = vmatmul.mubr.bf16.gmra.mrb[0].mxu0 %v2471
        %v2655 = vpop.f32.mrb[0].mxu0
        %v2656 = vadd.f32 %v2559, %v2655
        %v2657 = vpop.f32.mrb[0].mxu0
        %v2658 = vpop.f32.mrb[0].mxu0
        %v2659 = vadd.f32 %v2562, %v2658
        %v2660 = vpop.f32.mrb[0].mxu0
        %2661 = vmatprep.mubr.bf16.mxu0 0
        %2662 = vmatmul.mubr.bf16.gmra.mrb[0].mxu0 %v2474
        %v2663 = vpop.f32.mrb[0].mxu0
        %v2664 = vadd.f32 %v2567, %v2663
        %v2665 = vpop.f32.mrb[0].mxu0
        %v2666 = vpop.f32.mrb[0].mxu0
        %v2667 = vadd.f32 %v2570, %v2666
        %v2668 = vpop.f32.mrb[0].mxu0
        %2669 = vdwg.mxu0
        %v2706 = vunpack.c.l.b16 %v1765
        %v2707 = vunpack.c.l.b16 %v1766
        %v2708 = vunpack.c.l.b16 %v1767
        %v2709 = vunpack.c.l.b16 %v1768
        %v2710 = vunpack.c.l.b16 %v1769
        %v2711 = vunpack.c.l.b16 %v1770
        %v2712 = vunpack.c.l.b16 %v1771
        %v2713 = vunpack.c.l.b16 %v1772
        %v2714 = vunpack.c.l.b16 %v1773
        %v2715 = vunpack.c.l.b16 %v1774
        %v2716 = vunpack.c.l.b16 %v1775
        %v2717 = vunpack.c.l.b16 %v1776
        %v2718 = vunpack.c.l.b16 %v1777
        %v2719 = vunpack.c.l.b16 %v1778
        %v2720 = vunpack.c.l.b16 %v1779
        %v2721 = vunpack.c.l.b16 %v1780
        %v2722 = vunpack.c.l.b16 %v1781
        %v2723 = vunpack.c.l.b16 %v1782
        %v2724 = vunpack.c.l.b16 %v1783
        %v2725 = vunpack.c.l.b16 %v1784
        %v2726 = vunpack.c.l.b16 %v1785
        %v2727 = vunpack.c.l.b16 %v1786
        %v2728 = vunpack.c.l.b16 %v1787
        %v2729 = vunpack.c.l.b16 %v1788
        %v2730 = vunpack.c.l.b16 %v1789
        %v2731 = vunpack.c.l.b16 %v1790
        %v2732 = vunpack.c.l.b16 %v1791
        %v2733 = vunpack.c.l.b16 %v1792
        %v2734 = vunpack.c.l.b16 %v1793
        %v2735 = vunpack.c.l.b16 %v1794
        %v2736 = vunpack.c.l.b16 %v1795
        %v2737 = vunpack.c.l.b16 %v1796
        %v2738 = vunpack.c.l.b16 %v1797
        %v2739 = vunpack.c.l.b16 %v1798
        %v2740 = vunpack.c.l.b16 %v1799
        %v2741 = vunpack.c.l.b16 %v1800
        %v2742 = vpack.c.b16 %v2707, %v2706
        %v2743 = vpack.c.b16 %v2709, %v2708
        %v2744 = vpack.c.b16 %v2711, %v2710
        %v2745 = vpack.c.b16 %v2713, %v2712
        %v2746 = vpack.c.b16 %v2715, %v2714
        %v2747 = vpack.c.b16 %v2717, %v2716
        %v2748 = vpack.c.b16 %v2719, %v2718
        %v2749 = vpack.c.b16 %v2721, %v2720
        %v2750 = vpack.c.b16 %v2723, %v2722
        %v2751 = vpack.c.b16 %v2725, %v2724
        %v2752 = vpack.c.b16 %v2727, %v2726
        %v2753 = vpack.c.b16 %v2729, %v2728
        %v2754 = vpack.c.b16 %v2731, %v2730
        %v2755 = vpack.c.b16 %v2733, %v2732
        %v2756 = vpack.c.b16 %v2735, %v2734
        %v2757 = vpack.c.b16 %v2737, %v2736
        %v2758 = vpack.c.b16 %v2739, %v2738
        %v2759 = vpack.c.b16 %v2741, %v2740
        %v2779 = vsel %vm1128, %v1743, 0
        %v2782 = vsel %vm1128, %v1746, 0
        %v2785 = vsel %vm1128, %v1749, 0
        %v2788 = vsel %vm1128, %v1752, 0
        %v2791 = vsel %vm1128, %v1755, 0
        %v2794 = vsel %vm1128, %v1758, 0
        %v2797 = vsel %vm1128, %v1761, 0
        %v2800 = vsel %vm1128, %v1764, 0
        %2802 = vmatprep.subr.bf16.mxu0 0
        %2803 = vmatpush1.bf16.msra.mxu0 %v2742
        %2804 = vmatprep.subr.bf16.mxu0 0
        %2805 = vmatpush1.bf16.msra.mxu0 %v2743
        %2806 = vmatprep.subr.bf16.mxu0 0
        %2807 = vmatpush1.bf16.msra.mxu0 %v2744
        %2808 = vmatprep.subr.bf16.mxu0 0
        %2809 = vmatpush1.bf16.msra.mxu0 %v2745
        %2810 = vmatprep.subr.bf16.mxu0 0
        %2811 = vmatpush1.bf16.msra.mxu0 %v2746
        %2812 = vmatprep.subr.bf16.mxu0 0
        %2813 = vmatpush1.bf16.msra.mxu0 %v2747
        %2814 = vmatprep.subr.bf16.mxu0 0
        %2815 = vmatpush1.bf16.msra.mxu0 %v2748
        %2816 = vmatprep.subr.bf16.mxu0 0
        %2817 = vmatpush1.bf16.msra.mxu0 %v2749
        %2818 = vmatprep.subr.bf16.mxu0 0
        %2819 = vmatpush1.bf16.msra.mxu0 %v2750
        %2820 = vmatprep.subr.bf16.mxu0 0
        %2821 = vmatpush1.bf16.msra.mxu0 %v2751
        %2822 = vmatprep.subr.bf16.mxu0 0
        %2823 = vmatpush1.bf16.msra.mxu0 %v2752
        %2824 = vmatprep.subr.bf16.mxu0 0
        %2825 = vmatpush1.bf16.msra.mxu0 %v2753
        %2826 = vmatprep.subr.bf16.mxu0 0
        %2827 = vmatpush1.bf16.msra.mxu0 %v2754
        %2828 = vmatprep.subr.bf16.mxu0 0
        %2829 = vmatpush1.bf16.msra.mxu0 %v2755
        %2830 = vmatprep.subr.bf16.mxu0 0
        %2831 = vmatpush1.bf16.msra.mxu0 %v2756
        %2832 = vmatprep.subr.bf16.mxu0 0
        %2833 = vmatpush1.bf16.msra.mxu0 %v2757
        %2834 = vmatprep.mubr.bf16.mxu0 %v1742
        %2835 = vmatmul.mubr.bf16.gmra.mrb[0].mxu0 %v1741
        %v2836 = vpop.f32.mrb[0].mxu0
        %v2837 = vadd.f32 %v2608, %v2836
        %v2838 = vpop.f32.mrb[0].mxu0
        %v2839 = vpop.f32.mrb[0].mxu0
        %v2840 = vadd.f32 %v2611, %v2839
        %v2841 = vpop.f32.mrb[0].mxu0
        %2842 = vmatprep.mubr.bf16.mxu0 %v1745
        %2843 = vmatmul.mubr.bf16.gmra.mrb[0].mxu0 %v1744
        %v2844 = vpop.f32.mrb[0].mxu0
        %v2845 = vadd.f32 %v2616, %v2844
        %v2846 = vpop.f32.mrb[0].mxu0
        %v2847 = vpop.f32.mrb[0].mxu0
        %v2848 = vadd.f32 %v2619, %v2847
        %v2849 = vpop.f32.mrb[0].mxu0
        %2850 = vmatprep.mubr.bf16.mxu0 %v1748
        %2851 = vmatmul.mubr.bf16.gmra.mrb[0].mxu0 %v1747
        %v2852 = vpop.f32.mrb[0].mxu0
        %v2853 = vadd.f32 %v2624, %v2852
        %v2854 = vpop.f32.mrb[0].mxu0
        %v2855 = vpop.f32.mrb[0].mxu0
        %v2856 = vadd.f32 %v2627, %v2855
        %v2857 = vpop.f32.mrb[0].mxu0
        %2858 = vmatprep.mubr.bf16.mxu0 %v1751
        %2859 = vmatmul.mubr.bf16.gmra.mrb[0].mxu0 %v1750
        %v2860 = vpop.f32.mrb[0].mxu0
        %v2861 = vadd.f32 %v2632, %v2860
        %v2862 = vpop.f32.mrb[0].mxu0
        %v2863 = vpop.f32.mrb[0].mxu0
        %v2864 = vadd.f32 %v2635, %v2863
        %v2865 = vpop.f32.mrb[0].mxu0
        %2866 = vmatprep.mubr.bf16.mxu0 %v1754
        %2867 = vmatmul.mubr.bf16.gmra.mrb[0].mxu0 %v1753
        %v2868 = vpop.f32.mrb[0].mxu0
        %v2869 = vadd.f32 %v2640, %v2868
        %v2870 = vpop.f32.mrb[0].mxu0
        %v2871 = vpop.f32.mrb[0].mxu0
        %v2872 = vadd.f32 %v2643, %v2871
        %v2873 = vpop.f32.mrb[0].mxu0
        %2874 = vmatprep.mubr.bf16.mxu0 %v1757
        %2875 = vmatmul.mubr.bf16.gmra.mrb[0].mxu0 %v1756
        %v2876 = vpop.f32.mrb[0].mxu0
        %v2877 = vadd.f32 %v2648, %v2876
        %v2878 = vpop.f32.mrb[0].mxu0
        %v2879 = vpop.f32.mrb[0].mxu0
        %v2880 = vadd.f32 %v2651, %v2879
        %v2881 = vpop.f32.mrb[0].mxu0
        %2882 = vmatprep.mubr.bf16.mxu0 %v1760
        %2883 = vmatmul.mubr.bf16.gmra.mrb[0].mxu0 %v1759
        %v2884 = vpop.f32.mrb[0].mxu0
        %v2885 = vadd.f32 %v2656, %v2884
        %v2886 = vpop.f32.mrb[0].mxu0
        %v2887 = vpop.f32.mrb[0].mxu0
        %v2888 = vadd.f32 %v2659, %v2887
        %v2889 = vpop.f32.mrb[0].mxu0
        %2890 = vmatprep.mubr.bf16.mxu0 %v1763
        %2891 = vmatmul.mubr.bf16.gmra.mrb[0].mxu0 %v1762
        %v2892 = vpop.f32.mrb[0].mxu0
        %v2893 = vadd.f32 %v2664, %v2892
        %v2894 = vpop.f32.mrb[0].mxu0
        %v2895 = vpop.f32.mrb[0].mxu0
        %v2896 = vadd.f32 %v2667, %v2895
        %v2897 = vpop.f32.mrb[0].mxu0
        %2898 = vdwg.mxu0
        %2899 = vmatprep.subr.bf16.mxu0 0
        %2900 = vmatpush1.bf16.msra.mxu0 %v2758
        %2901 = vmatprep.subr.bf16.mxu0 0
        %2902 = vmatpush1.bf16.msra.mxu0 %v2759
        %2903 = vmatprep.subr.bf16.mxu0 0
        %2904 = vmatpush1.bf16.msra.mxu0 0
        %2905 = vmatprep.subr.bf16.mxu0 0
        %2906 = vmatpush1.bf16.msra.mxu0 0
        %2907 = vmatprep.subr.bf16.mxu0 0
        %2908 = vmatpush1.bf16.msra.mxu0 0
        %2909 = vmatprep.subr.bf16.mxu0 0
        %2910 = vmatpush1.bf16.msra.mxu0 0
        %2911 = vmatprep.subr.bf16.mxu0 0
        %2912 = vmatpush1.bf16.msra.mxu0 0
        %2913 = vmatprep.subr.bf16.mxu0 0
        %2914 = vmatpush1.bf16.msra.mxu0 0
        %2915 = vmatprep.subr.bf16.mxu0 0
        %2916 = vmatpush1.bf16.msra.mxu0 0
        %2917 = vmatprep.subr.bf16.mxu0 0
        %2918 = vmatpush1.bf16.msra.mxu0 0
        %2919 = vmatprep.subr.bf16.mxu0 0
        %2920 = vmatpush1.bf16.msra.mxu0 0
        %2921 = vmatprep.subr.bf16.mxu0 0
        %2922 = vmatpush1.bf16.msra.mxu0 0
        %2923 = vmatprep.subr.bf16.mxu0 0
        %2924 = vmatpush1.bf16.msra.mxu0 0
        %2925 = vmatprep.subr.bf16.mxu0 0
        %2926 = vmatpush1.bf16.msra.mxu0 0
        %2927 = vmatprep.subr.bf16.mxu0 0
        %2928 = vmatpush1.bf16.msra.mxu0 0
        %2929 = vmatprep.subr.bf16.mxu0 0
        %2930 = vmatpush1.bf16.msra.mxu0 0
        %2931 = vmatprep.mubr.bf16.mxu0 0
        %2932 = vmatmul.mubr.bf16.gmra.mrb[0].mxu0 %v2779
        %v2933 = vpop.f32.mrb[0].mxu0
        %v2934 = vadd.f32 %v2837, %v2933
        %v2935 = vpop.f32.mrb[0].mxu0
        %v2936 = vpop.f32.mrb[0].mxu0
        %v2937 = vadd.f32 %v2840, %v2936
        %v2938 = vpop.f32.mrb[0].mxu0
        %2939 = vmatprep.mubr.bf16.mxu0 0
        %2940 = vmatmul.mubr.bf16.gmra.mrb[0].mxu0 %v2782
        %v2941 = vpop.f32.mrb[0].mxu0
        %v2942 = vadd.f32 %v2845, %v2941
        %v2943 = vpop.f32.mrb[0].mxu0
        %v2944 = vpop.f32.mrb[0].mxu0
        %v2945 = vadd.f32 %v2848, %v2944
        %v2946 = vpop.f32.mrb[0].mxu0
        %2947 = vmatprep.mubr.bf16.mxu0 0
        %2948 = vmatmul.mubr.bf16.gmra.mrb[0].mxu0 %v2785
        %v2949 = vpop.f32.mrb[0].mxu0
        %v2950 = vadd.f32 %v2853, %v2949
        %v2951 = vpop.f32.mrb[0].mxu0
        %v2952 = vpop.f32.mrb[0].mxu0
        %v2953 = vadd.f32 %v2856, %v2952
        %v2954 = vpop.f32.mrb[0].mxu0
        %2955 = vmatprep.mubr.bf16.mxu0 0
        %2956 = vmatmul.mubr.bf16.gmra.mrb[0].mxu0 %v2788
        %v2957 = vpop.f32.mrb[0].mxu0
        %v2958 = vadd.f32 %v2861, %v2957
        %v2959 = vpop.f32.mrb[0].mxu0
        %v2960 = vpop.f32.mrb[0].mxu0
        %v2961 = vadd.f32 %v2864, %v2960
        %v2962 = vpop.f32.mrb[0].mxu0
        %2963 = vmatprep.mubr.bf16.mxu0 0
        %2964 = vmatmul.mubr.bf16.gmra.mrb[0].mxu0 %v2791
        %v2965 = vpop.f32.mrb[0].mxu0
        %v2966 = vadd.f32 %v2869, %v2965
        %v2967 = vpop.f32.mrb[0].mxu0
        %v2968 = vpop.f32.mrb[0].mxu0
        %v2969 = vadd.f32 %v2872, %v2968
        %v2970 = vpop.f32.mrb[0].mxu0
        %2971 = vmatprep.mubr.bf16.mxu0 0
        %2972 = vmatmul.mubr.bf16.gmra.mrb[0].mxu0 %v2794
        %v2973 = vpop.f32.mrb[0].mxu0
        %v2974 = vadd.f32 %v2877, %v2973
        %v2975 = vpop.f32.mrb[0].mxu0
        %v2976 = vpop.f32.mrb[0].mxu0
        %v2977 = vadd.f32 %v2880, %v2976
        %v2978 = vpop.f32.mrb[0].mxu0
        %2979 = vmatprep.mubr.bf16.mxu0 0
        %2980 = vmatmul.mubr.bf16.gmra.mrb[0].mxu0 %v2797
        %v2981 = vpop.f32.mrb[0].mxu0
        %v2982 = vadd.f32 %v2885, %v2981
        %v2983 = vpop.f32.mrb[0].mxu0
        %v2984 = vpop.f32.mrb[0].mxu0
        %v2985 = vadd.f32 %v2888, %v2984
        %v2986 = vpop.f32.mrb[0].mxu0
        %2987 = vmatprep.mubr.bf16.mxu0 0
        %2988 = vmatmul.mubr.bf16.gmra.mrb[0].mxu0 %v2800
        %v2989 = vpop.f32.mrb[0].mxu0
        %v2990 = vadd.f32 %v2893, %v2989
        %v2991 = vpop.f32.mrb[0].mxu0
        %v2992 = vpop.f32.mrb[0].mxu0
        %v2993 = vadd.f32 %v2896, %v2992
        %v2994 = vpop.f32.mrb[0].mxu0
        %2995 = vdwg.mxu0
        %s2996 = scalar_lea.vmem [#allocation2], 320
        %v2997 = vld [vmem:[%s2996] sm:$0xff]
        %v2998 = vld [vmem:[%s2996 + $0x10] sm:$0xff]
        %v2999 = vld [vmem:[%s2996 + $0x20] sm:$0xff]
        %v3000 = vld [vmem:[%s2996 + $0x30] sm:$0xff]
        %v3001 = vld [vmem:[%s2996 + $0x40] sm:$0xff]
        %v3002 = vld [vmem:[%s2996 + $0x50] sm:$0xff]
        %v3003 = vld [vmem:[%s2996 + $0x60] sm:$0xff]
        %v3004 = vld [vmem:[%s2996 + $0x70] sm:$0xff]
        %v3005 = vld [vmem:[%s2996 + $0xa0] sm:$0xff]
        %v3006 = vld [vmem:[%s2996 + $0xb0] sm:$0xff]
        %v3007 = vld [vmem:[%s2996 + $0xc0] sm:$0xff]
        %v3008 = vld [vmem:[%s2996 + $0xd0] sm:$0xff]
        %v3009 = vld [vmem:[%s2996 + $0xe0] sm:$0xff]
        %v3010 = vld [vmem:[%s2996 + $0xf0] sm:$0xff]
        %v3011 = vld [vmem:[%s2996 + $0x100] sm:$0xff]
        %v3012 = vld [vmem:[%s2996 + $0x110] sm:$0xff]
        %v3013 = vpack.c.bf16 %v2998, %v2997
        %v3014 = vpack.c.bf16 %v3000, %v2999
        %v3015 = vpack.c.bf16 %v3002, %v3001
        %v3016 = vpack.c.bf16 %v3004, %v3003
        %v3017 = vpack.c.bf16 %v3006, %v3005
        %v3018 = vpack.c.bf16 %v3008, %v3007
        %v3019 = vpack.c.bf16 %v3010, %v3009
        %v3020 = vpack.c.bf16 %v3012, %v3011
        %3021 = vst.msk [vmem:[#allocation3] sm:$0xff] %vm1128, %v3013
        %3022 = vst.msk [vmem:[#allocation3 + $0x18] sm:$0xff] %vm1128, %v3014
        %3023 = vst.msk [vmem:[#allocation3 + $0x30] sm:$0xff] %vm1128, %v3015
        %3024 = vst.msk [vmem:[#allocation3 + $0x48] sm:$0xff] %vm1128, %v3016
        %3025 = vst.msk [vmem:[#allocation3 + $0x60] sm:$0xff] %vm1128, %v3017
        %3026 = vst.msk [vmem:[#allocation3 + $0x78] sm:$0xff] %vm1128, %v3018
        %3027 = vst.msk [vmem:[#allocation3 + $0x90] sm:$0xff] %vm1128, %v3019
        %3028 = vst.msk [vmem:[#allocation3 + $0xa8] sm:$0xff] %vm1128, %v3020
        %v3029 = vld [vmem:[%s2996 + $0x1] sm:$0xff]
        %v3030 = vld [vmem:[%s2996 + $0x11] sm:$0xff]
        %v3031 = vld [vmem:[%s2996 + $0x21] sm:$0xff]
        %v3032 = vld [vmem:[%s2996 + $0x31] sm:$0xff]
        %v3033 = vld [vmem:[%s2996 + $0x41] sm:$0xff]
        %v3034 = vld [vmem:[%s2996 + $0x51] sm:$0xff]
        %v3035 = vld [vmem:[%s2996 + $0x61] sm:$0xff]
        %v3036 = vld [vmem:[%s2996 + $0x71] sm:$0xff]
        %v3037 = vld [vmem:[%s2996 + $0xa1] sm:$0xff]
        %v3038 = vld [vmem:[%s2996 + $0xb1] sm:$0xff]
        %v3039 = vld [vmem:[%s2996 + $0xc1] sm:$0xff]
        %v3040 = vld [vmem:[%s2996 + $0xd1] sm:$0xff]
        %v3041 = vld [vmem:[%s2996 + $0xe1] sm:$0xff]
        %v3042 = vld [vmem:[%s2996 + $0xf1] sm:$0xff]
        %v3043 = vld [vmem:[%s2996 + $0x101] sm:$0xff]
        %v3044 = vld [vmem:[%s2996 + $0x111] sm:$0xff]
        %v3045 = vpack.c.bf16 %v3030, %v3029
        %v3046 = vpack.c.bf16 %v3032, %v3031
        %v3047 = vpack.c.bf16 %v3034, %v3033
        %v3048 = vpack.c.bf16 %v3036, %v3035
        %v3049 = vpack.c.bf16 %v3038, %v3037
        %v3050 = vpack.c.bf16 %v3040, %v3039
        %v3051 = vpack.c.bf16 %v3042, %v3041
        %v3052 = vpack.c.bf16 %v3044, %v3043
        %3061 = vrot.lane.b32.xlu0 %v3045, 32
        %v3062 = vpop.permute.xlu0 %3061
        %3063 = vrot.lane.b32.xlu0 %v3046, 32
        %v3064 = vpop.permute.xlu0 %3063
        %3065 = vrot.lane.b32.xlu0 %v3047, 32
        %v3066 = vpop.permute.xlu0 %3065
        %3067 = vrot.lane.b32.xlu0 %v3048, 32
        %v3068 = vpop.permute.xlu0 %3067
        %3069 = vrot.lane.b32.xlu0 %v3049, 32
        %v3070 = vpop.permute.xlu0 %3069
        %3071 = vrot.lane.b32.xlu0 %v3050, 32
        %v3072 = vpop.permute.xlu0 %3071
        %3073 = vrot.lane.b32.xlu0 %v3051, 32
        %v3074 = vpop.permute.xlu0 %3073
        %3075 = vrot.lane.b32.xlu0 %v3052, 32
        %v3076 = vpop.permute.xlu0 %3075
        %3085 = vst.msk [vmem:[#allocation3] sm:$0xff] %vm1345, %v3062
        %3086 = vst.msk [vmem:[#allocation3 + $0x18] sm:$0xff] %vm1345, %v3064
        %3087 = vst.msk [vmem:[#allocation3 + $0x30] sm:$0xff] %vm1345, %v3066
        %3088 = vst.msk [vmem:[#allocation3 + $0x48] sm:$0xff] %vm1345, %v3068
        %3089 = vst.msk [vmem:[#allocation3 + $0x60] sm:$0xff] %vm1345, %v3070
        %3090 = vst.msk [vmem:[#allocation3 + $0x78] sm:$0xff] %vm1345, %v3072
        %3091 = vst.msk [vmem:[#allocation3 + $0x90] sm:$0xff] %vm1345, %v3074
        %3092 = vst.msk [vmem:[#allocation3 + $0xa8] sm:$0xff] %vm1345, %v3076
        %v3093 = vld [vmem:[%s2996 + $0x2] sm:$0xff]
        %v3094 = vld [vmem:[%s2996 + $0x12] sm:$0xff]
        %v3095 = vld [vmem:[%s2996 + $0x22] sm:$0xff]
        %v3096 = vld [vmem:[%s2996 + $0x32] sm:$0xff]
        %v3097 = vld [vmem:[%s2996 + $0x42] sm:$0xff]
        %v3098 = vld [vmem:[%s2996 + $0x52] sm:$0xff]
        %v3099 = vld [vmem:[%s2996 + $0x62] sm:$0xff]
        %v3100 = vld [vmem:[%s2996 + $0x72] sm:$0xff]
        %v3101 = vld [vmem:[%s2996 + $0xa2] sm:$0xff]
        %v3102 = vld [vmem:[%s2996 + $0xb2] sm:$0xff]
        %v3103 = vld [vmem:[%s2996 + $0xc2] sm:$0xff]
        %v3104 = vld [vmem:[%s2996 + $0xd2] sm:$0xff]
        %v3105 = vld [vmem:[%s2996 + $0xe2] sm:$0xff]
        %v3106 = vld [vmem:[%s2996 + $0xf2] sm:$0xff]
        %v3107 = vld [vmem:[%s2996 + $0x102] sm:$0xff]
        %v3108 = vld [vmem:[%s2996 + $0x112] sm:$0xff]
        %v3109 = vpack.c.bf16 %v3094, %v3093
        %v3110 = vpack.c.bf16 %v3096, %v3095
        %v3111 = vpack.c.bf16 %v3098, %v3097
        %v3112 = vpack.c.bf16 %v3100, %v3099
        %v3113 = vpack.c.bf16 %v3102, %v3101
        %v3114 = vpack.c.bf16 %v3104, %v3103
        %v3115 = vpack.c.bf16 %v3106, %v3105
        %v3116 = vpack.c.bf16 %v3108, %v3107
        %3125 = vrot.lane.b32.xlu0 %v3109, 64
        %v3126 = vpop.permute.xlu0 %3125
        %3127 = vrot.lane.b32.xlu0 %v3110, 64
        %v3128 = vpop.permute.xlu0 %3127
        %3129 = vrot.lane.b32.xlu0 %v3111, 64
        %v3130 = vpop.permute.xlu0 %3129
        %3131 = vrot.lane.b32.xlu0 %v3112, 64
        %v3132 = vpop.permute.xlu0 %3131
        %3133 = vrot.lane.b32.xlu0 %v3113, 64
        %v3134 = vpop.permute.xlu0 %3133
        %3135 = vrot.lane.b32.xlu0 %v3114, 64
        %v3136 = vpop.permute.xlu0 %3135
        %3137 = vrot.lane.b32.xlu0 %v3115, 64
        %v3138 = vpop.permute.xlu0 %3137
        %3139 = vrot.lane.b32.xlu0 %v3116, 64
        %v3140 = vpop.permute.xlu0 %3139
        %3149 = vst.msk [vmem:[#allocation3] sm:$0xff] %vm1410, %v3126
        %3150 = vst.msk [vmem:[#allocation3 + $0x18] sm:$0xff] %vm1410, %v3128
        %3151 = vst.msk [vmem:[#allocation3 + $0x30] sm:$0xff] %vm1410, %v3130
        %3152 = vst.msk [vmem:[#allocation3 + $0x48] sm:$0xff] %vm1410, %v3132
        %3153 = vst.msk [vmem:[#allocation3 + $0x60] sm:$0xff] %vm1410, %v3134
        %3154 = vst.msk [vmem:[#allocation3 + $0x78] sm:$0xff] %vm1410, %v3136
        %3155 = vst.msk [vmem:[#allocation3 + $0x90] sm:$0xff] %vm1410, %v3138
        %3156 = vst.msk [vmem:[#allocation3 + $0xa8] sm:$0xff] %vm1410, %v3140
        %s3157 = scalar_lea.vmem [#allocation2], 336
        %v3158 = vld [vmem:[%s3157] sm:$0xff]
        %v3159 = vld [vmem:[%s3157 + $0x10] sm:$0xff]
        %v3160 = vld [vmem:[%s3157 + $0x20] sm:$0xff]
        %v3161 = vld [vmem:[%s3157 + $0x30] sm:$0xff]
        %v3162 = vld [vmem:[%s3157 + $0x40] sm:$0xff]
        %v3163 = vld [vmem:[%s3157 + $0x50] sm:$0xff]
        %v3164 = vld [vmem:[%s3157 + $0x60] sm:$0xff]
        %v3165 = vld [vmem:[%s3157 + $0x70] sm:$0xff]
        %v3166 = vld [vmem:[%s3157 + $0xa0] sm:$0xff]
        %v3167 = vld [vmem:[%s3157 + $0xb0] sm:$0xff]
        %v3168 = vld [vmem:[%s3157 + $0xc0] sm:$0xff]
        %v3169 = vld [vmem:[%s3157 + $0xd0] sm:$0xff]
        %v3170 = vld [vmem:[%s3157 + $0xe0] sm:$0xff]
        %v3171 = vld [vmem:[%s3157 + $0xf0] sm:$0xff]
        %v3172 = vld [vmem:[%s3157 + $0x100] sm:$0xff]
        %v3173 = vld [vmem:[%s3157 + $0x110] sm:$0xff]
        %v3174 = vpack.c.bf16 %v3159, %v3158
        %v3175 = vpack.c.bf16 %v3161, %v3160
        %v3176 = vpack.c.bf16 %v3163, %v3162
        %v3177 = vpack.c.bf16 %v3165, %v3164
        %v3178 = vpack.c.bf16 %v3167, %v3166
        %v3179 = vpack.c.bf16 %v3169, %v3168
        %v3180 = vpack.c.bf16 %v3171, %v3170
        %v3181 = vpack.c.bf16 %v3173, %v3172
        %3190 = vrot.lane.b32.xlu0 %v3174, 96
        %v3191 = vpop.permute.xlu0 %3190
        %3192 = vrot.lane.b32.xlu0 %v3175, 96
        %v3193 = vpop.permute.xlu0 %3192
        %3194 = vrot.lane.b32.xlu0 %v3176, 96
        %v3195 = vpop.permute.xlu0 %3194
        %3196 = vrot.lane.b32.xlu0 %v3177, 96
        %v3197 = vpop.permute.xlu0 %3196
        %3198 = vrot.lane.b32.xlu0 %v3178, 96
        %v3199 = vpop.permute.xlu0 %3198
        %3200 = vrot.lane.b32.xlu0 %v3179, 96
        %v3201 = vpop.permute.xlu0 %3200
        %3202 = vrot.lane.b32.xlu0 %v3180, 96
        %v3203 = vpop.permute.xlu0 %3202
        %3204 = vrot.lane.b32.xlu0 %v3181, 96
        %v3205 = vpop.permute.xlu0 %3204
        %3214 = vst.msk [vmem:[#allocation3] sm:$0xff] %vm1475, %v3191
        %3215 = vst.msk [vmem:[#allocation3 + $0x18] sm:$0xff] %vm1475, %v3193
        %3216 = vst.msk [vmem:[#allocation3 + $0x30] sm:$0xff] %vm1475, %v3195
        %3217 = vst.msk [vmem:[#allocation3 + $0x48] sm:$0xff] %vm1475, %v3197
        %3218 = vst.msk [vmem:[#allocation3 + $0x60] sm:$0xff] %vm1475, %v3199
        %3219 = vst.msk [vmem:[#allocation3 + $0x78] sm:$0xff] %vm1475, %v3201
        %3220 = vst.msk [vmem:[#allocation3 + $0x90] sm:$0xff] %vm1475, %v3203
        %3221 = vst.msk [vmem:[#allocation3 + $0xa8] sm:$0xff] %vm1475, %v3205
        %v3222 = vld [vmem:[%s3157 + $0x1] sm:$0xff]
        %v3223 = vld [vmem:[%s3157 + $0x11] sm:$0xff]
        %v3224 = vld [vmem:[%s3157 + $0x21] sm:$0xff]
        %v3225 = vld [vmem:[%s3157 + $0x31] sm:$0xff]
        %v3226 = vld [vmem:[%s3157 + $0x41] sm:$0xff]
        %v3227 = vld [vmem:[%s3157 + $0x51] sm:$0xff]
        %v3228 = vld [vmem:[%s3157 + $0x61] sm:$0xff]
        %v3229 = vld [vmem:[%s3157 + $0x71] sm:$0xff]
        %v3230 = vld [vmem:[%s3157 + $0xa1] sm:$0xff]
        %v3231 = vld [vmem:[%s3157 + $0xb1] sm:$0xff]
        %v3232 = vld [vmem:[%s3157 + $0xc1] sm:$0xff]
        %v3233 = vld [vmem:[%s3157 + $0xd1] sm:$0xff]
        %v3234 = vld [vmem:[%s3157 + $0xe1] sm:$0xff]
        %v3235 = vld [vmem:[%s3157 + $0xf1] sm:$0xff]
        %v3236 = vld [vmem:[%s3157 + $0x101] sm:$0xff]
        %v3237 = vld [vmem:[%s3157 + $0x111] sm:$0xff]
        %v3238 = vpack.c.bf16 %v3223, %v3222
        %v3239 = vpack.c.bf16 %v3225, %v3224
        %v3240 = vpack.c.bf16 %v3227, %v3226
        %v3241 = vpack.c.bf16 %v3229, %v3228
        %v3242 = vpack.c.bf16 %v3231, %v3230
        %v3243 = vpack.c.bf16 %v3233, %v3232
        %v3244 = vpack.c.bf16 %v3235, %v3234
        %v3245 = vpack.c.bf16 %v3237, %v3236
        %3246 = vst.msk [vmem:[#allocation3 + $0x8] sm:$0xff] %vm1128, %v3238
        %3247 = vst.msk [vmem:[#allocation3 + $0x20] sm:$0xff] %vm1128, %v3239
        %3248 = vst.msk [vmem:[#allocation3 + $0x38] sm:$0xff] %vm1128, %v3240
        %3249 = vst.msk [vmem:[#allocation3 + $0x50] sm:$0xff] %vm1128, %v3241
        %3250 = vst.msk [vmem:[#allocation3 + $0x68] sm:$0xff] %vm1128, %v3242
        %3251 = vst.msk [vmem:[#allocation3 + $0x80] sm:$0xff] %vm1128, %v3243
        %3252 = vst.msk [vmem:[#allocation3 + $0x98] sm:$0xff] %vm1128, %v3244
        %3253 = vst.msk [vmem:[#allocation3 + $0xb0] sm:$0xff] %vm1128, %v3245
        %v3254 = vld [vmem:[%s3157 + $0x2] sm:$0xff]
        %v3255 = vld [vmem:[%s3157 + $0x12] sm:$0xff]
        %v3256 = vld [vmem:[%s3157 + $0x22] sm:$0xff]
        %v3257 = vld [vmem:[%s3157 + $0x32] sm:$0xff]
        %v3258 = vld [vmem:[%s3157 + $0x42] sm:$0xff]
        %v3259 = vld [vmem:[%s3157 + $0x52] sm:$0xff]
        %v3260 = vld [vmem:[%s3157 + $0x62] sm:$0xff]
        %v3261 = vld [vmem:[%s3157 + $0x72] sm:$0xff]
        %v3262 = vld [vmem:[%s3157 + $0xa2] sm:$0xff]
        %v3263 = vld [vmem:[%s3157 + $0xb2] sm:$0xff]
        %v3264 = vld [vmem:[%s3157 + $0xc2] sm:$0xff]
        %v3265 = vld [vmem:[%s3157 + $0xd2] sm:$0xff]
        %v3266 = vld [vmem:[%s3157 + $0xe2] sm:$0xff]
        %v3267 = vld [vmem:[%s3157 + $0xf2] sm:$0xff]
        %v3268 = vld [vmem:[%s3157 + $0x102] sm:$0xff]
        %v3269 = vld [vmem:[%s3157 + $0x112] sm:$0xff]
        %v3270 = vpack.c.bf16 %v3255, %v3254
        %v3271 = vpack.c.bf16 %v3257, %v3256
        %v3272 = vpack.c.bf16 %v3259, %v3258
        %v3273 = vpack.c.bf16 %v3261, %v3260
        %v3274 = vpack.c.bf16 %v3263, %v3262
        %v3275 = vpack.c.bf16 %v3265, %v3264
        %v3276 = vpack.c.bf16 %v3267, %v3266
        %v3277 = vpack.c.bf16 %v3269, %v3268
        %3286 = vrot.lane.b32.xlu0 %v3270, 32
        %v3287 = vpop.permute.xlu0 %3286
        %3288 = vrot.lane.b32.xlu0 %v3271, 32
        %v3289 = vpop.permute.xlu0 %3288
        %3290 = vrot.lane.b32.xlu0 %v3272, 32
        %v3291 = vpop.permute.xlu0 %3290
        %3292 = vrot.lane.b32.xlu0 %v3273, 32
        %v3293 = vpop.permute.xlu0 %3292
        %3294 = vrot.lane.b32.xlu0 %v3274, 32
        %v3295 = vpop.permute.xlu0 %3294
        %3296 = vrot.lane.b32.xlu0 %v3275, 32
        %v3297 = vpop.permute.xlu0 %3296
        %3298 = vrot.lane.b32.xlu0 %v3276, 32
        %v3299 = vpop.permute.xlu0 %3298
        %3300 = vrot.lane.b32.xlu0 %v3277, 32
        %v3301 = vpop.permute.xlu0 %3300
        %3310 = vst.msk [vmem:[#allocation3 + $0x8] sm:$0xff] %vm1345, %v3287
        %3311 = vst.msk [vmem:[#allocation3 + $0x20] sm:$0xff] %vm1345, %v3289
        %3312 = vst.msk [vmem:[#allocation3 + $0x38] sm:$0xff] %vm1345, %v3291
        %3313 = vst.msk [vmem:[#allocation3 + $0x50] sm:$0xff] %vm1345, %v3293
        %3314 = vst.msk [vmem:[#allocation3 + $0x68] sm:$0xff] %vm1345, %v3295
        %3315 = vst.msk [vmem:[#allocation3 + $0x80] sm:$0xff] %vm1345, %v3297
        %3316 = vst.msk [vmem:[#allocation3 + $0x98] sm:$0xff] %vm1345, %v3299
        %3317 = vst.msk [vmem:[#allocation3 + $0xb0] sm:$0xff] %vm1345, %v3301
        %s3318 = scalar_lea.vmem [#allocation2], 352
        %v3319 = vld [vmem:[%s3318] sm:$0xff]
        %v3320 = vld [vmem:[%s3318 + $0x10] sm:$0xff]
        %v3321 = vld [vmem:[%s3318 + $0x20] sm:$0xff]
        %v3322 = vld [vmem:[%s3318 + $0x30] sm:$0xff]
        %v3323 = vld [vmem:[%s3318 + $0x40] sm:$0xff]
        %v3324 = vld [vmem:[%s3318 + $0x50] sm:$0xff]
        %v3325 = vld [vmem:[%s3318 + $0x60] sm:$0xff]
        %v3326 = vld [vmem:[%s3318 + $0x70] sm:$0xff]
        %v3327 = vld [vmem:[%s3318 + $0xa0] sm:$0xff]
        %v3328 = vld [vmem:[%s3318 + $0xb0] sm:$0xff]
        %v3329 = vld [vmem:[%s3318 + $0xc0] sm:$0xff]
        %v3330 = vld [vmem:[%s3318 + $0xd0] sm:$0xff]
        %v3331 = vld [vmem:[%s3318 + $0xe0] sm:$0xff]
        %v3332 = vld [vmem:[%s3318 + $0xf0] sm:$0xff]
        %v3333 = vld [vmem:[%s3318 + $0x100] sm:$0xff]
        %v3334 = vld [vmem:[%s3318 + $0x110] sm:$0xff]
        %v3335 = vpack.c.bf16 %v3320, %v3319
        %v3336 = vpack.c.bf16 %v3322, %v3321
        %v3337 = vpack.c.bf16 %v3324, %v3323
        %v3338 = vpack.c.bf16 %v3326, %v3325
        %v3339 = vpack.c.bf16 %v3328, %v3327
        %v3340 = vpack.c.bf16 %v3330, %v3329
        %v3341 = vpack.c.bf16 %v3332, %v3331
        %v3342 = vpack.c.bf16 %v3334, %v3333
        %3351 = vrot.lane.b32.xlu0 %v3335, 64
        %v3352 = vpop.permute.xlu0 %3351
        %3353 = vrot.lane.b32.xlu0 %v3336, 64
        %v3354 = vpop.permute.xlu0 %3353
        %3355 = vrot.lane.b32.xlu0 %v3337, 64
        %v3356 = vpop.permute.xlu0 %3355
        %3357 = vrot.lane.b32.xlu0 %v3338, 64
        %v3358 = vpop.permute.xlu0 %3357
        %3359 = vrot.lane.b32.xlu0 %v3339, 64
        %v3360 = vpop.permute.xlu0 %3359
        %3361 = vrot.lane.b32.xlu0 %v3340, 64
        %v3362 = vpop.permute.xlu0 %3361
        %3363 = vrot.lane.b32.xlu0 %v3341, 64
        %v3364 = vpop.permute.xlu0 %3363
        %3365 = vrot.lane.b32.xlu0 %v3342, 64
        %v3366 = vpop.permute.xlu0 %3365
        %3375 = vst.msk [vmem:[#allocation3 + $0x8] sm:$0xff] %vm1410, %v3352
        %3376 = vst.msk [vmem:[#allocation3 + $0x20] sm:$0xff] %vm1410, %v3354
        %3377 = vst.msk [vmem:[#allocation3 + $0x38] sm:$0xff] %vm1410, %v3356
        %3378 = vst.msk [vmem:[#allocation3 + $0x50] sm:$0xff] %vm1410, %v3358
        %3379 = vst.msk [vmem:[#allocation3 + $0x68] sm:$0xff] %vm1410, %v3360
        %3380 = vst.msk [vmem:[#allocation3 + $0x80] sm:$0xff] %vm1410, %v3362
        %3381 = vst.msk [vmem:[#allocation3 + $0x98] sm:$0xff] %vm1410, %v3364
        %3382 = vst.msk [vmem:[#allocation3 + $0xb0] sm:$0xff] %vm1410, %v3366
        %v3383 = vld [vmem:[%s3318 + $0x1] sm:$0xff]
        %v3384 = vld [vmem:[%s3318 + $0x11] sm:$0xff]
        %v3385 = vld [vmem:[%s3318 + $0x21] sm:$0xff]
        %v3386 = vld [vmem:[%s3318 + $0x31] sm:$0xff]
        %v3387 = vld [vmem:[%s3318 + $0x41] sm:$0xff]
        %v3388 = vld [vmem:[%s3318 + $0x51] sm:$0xff]
        %v3389 = vld [vmem:[%s3318 + $0x61] sm:$0xff]
        %v3390 = vld [vmem:[%s3318 + $0x71] sm:$0xff]
        %v3391 = vld [vmem:[%s3318 + $0xa1] sm:$0xff]
        %v3392 = vld [vmem:[%s3318 + $0xb1] sm:$0xff]
        %v3393 = vld [vmem:[%s3318 + $0xc1] sm:$0xff]
        %v3394 = vld [vmem:[%s3318 + $0xd1] sm:$0xff]
        %v3395 = vld [vmem:[%s3318 + $0xe1] sm:$0xff]
        %v3396 = vld [vmem:[%s3318 + $0xf1] sm:$0xff]
        %v3397 = vld [vmem:[%s3318 + $0x101] sm:$0xff]
        %v3398 = vld [vmem:[%s3318 + $0x111] sm:$0xff]
        %v3399 = vpack.c.bf16 %v3384, %v3383
        %v3400 = vpack.c.bf16 %v3386, %v3385
        %v3401 = vpack.c.bf16 %v3388, %v3387
        %v3402 = vpack.c.bf16 %v3390, %v3389
        %v3403 = vpack.c.bf16 %v3392, %v3391
        %v3404 = vpack.c.bf16 %v3394, %v3393
        %v3405 = vpack.c.bf16 %v3396, %v3395
        %v3406 = vpack.c.bf16 %v3398, %v3397
        %3415 = vrot.lane.b32.xlu0 %v3399, 96
        %v3416 = vpop.permute.xlu0 %3415
        %3417 = vrot.lane.b32.xlu0 %v3400, 96
        %v3418 = vpop.permute.xlu0 %3417
        %3419 = vrot.lane.b32.xlu0 %v3401, 96
        %v3420 = vpop.permute.xlu0 %3419
        %3421 = vrot.lane.b32.xlu0 %v3402, 96
        %v3422 = vpop.permute.xlu0 %3421
        %3423 = vrot.lane.b32.xlu0 %v3403, 96
        %v3424 = vpop.permute.xlu0 %3423
        %3425 = vrot.lane.b32.xlu0 %v3404, 96
        %v3426 = vpop.permute.xlu0 %3425
        %3427 = vrot.lane.b32.xlu0 %v3405, 96
        %v3428 = vpop.permute.xlu0 %3427
        %3429 = vrot.lane.b32.xlu0 %v3406, 96
        %v3430 = vpop.permute.xlu0 %3429
        %3439 = vst.msk [vmem:[#allocation3 + $0x8] sm:$0xff] %vm1475, %v3416
        %3440 = vst.msk [vmem:[#allocation3 + $0x20] sm:$0xff] %vm1475, %v3418
        %3441 = vst.msk [vmem:[#allocation3 + $0x38] sm:$0xff] %vm1475, %v3420
        %3442 = vst.msk [vmem:[#allocation3 + $0x50] sm:$0xff] %vm1475, %v3422
        %3443 = vst.msk [vmem:[#allocation3 + $0x68] sm:$0xff] %vm1475, %v3424
        %3444 = vst.msk [vmem:[#allocation3 + $0x80] sm:$0xff] %vm1475, %v3426
        %3445 = vst.msk [vmem:[#allocation3 + $0x98] sm:$0xff] %vm1475, %v3428
        %3446 = vst.msk [vmem:[#allocation3 + $0xb0] sm:$0xff] %vm1475, %v3430
        %v3447 = vld [vmem:[%s3318 + $0x2] sm:$0xff]
        %v3448 = vld [vmem:[%s3318 + $0x12] sm:$0xff]
        %v3449 = vld [vmem:[%s3318 + $0x22] sm:$0xff]
        %v3450 = vld [vmem:[%s3318 + $0x32] sm:$0xff]
        %v3451 = vld [vmem:[%s3318 + $0x42] sm:$0xff]
        %v3452 = vld [vmem:[%s3318 + $0x52] sm:$0xff]
        %v3453 = vld [vmem:[%s3318 + $0x62] sm:$0xff]
        %v3454 = vld [vmem:[%s3318 + $0x72] sm:$0xff]
        %v3455 = vld [vmem:[%s3318 + $0xa2] sm:$0xff]
        %v3456 = vld [vmem:[%s3318 + $0xb2] sm:$0xff]
        %v3457 = vld [vmem:[%s3318 + $0xc2] sm:$0xff]
        %v3458 = vld [vmem:[%s3318 + $0xd2] sm:$0xff]
        %v3459 = vld [vmem:[%s3318 + $0xe2] sm:$0xff]
        %v3460 = vld [vmem:[%s3318 + $0xf2] sm:$0xff]
        %v3461 = vld [vmem:[%s3318 + $0x102] sm:$0xff]
        %v3462 = vld [vmem:[%s3318 + $0x112] sm:$0xff]
        %v3463 = vpack.c.bf16 %v3448, %v3447
        %v3464 = vpack.c.bf16 %v3450, %v3449
        %v3465 = vpack.c.bf16 %v3452, %v3451
        %v3466 = vpack.c.bf16 %v3454, %v3453
        %v3467 = vpack.c.bf16 %v3456, %v3455
        %v3468 = vpack.c.bf16 %v3458, %v3457
        %v3469 = vpack.c.bf16 %v3460, %v3459
        %v3470 = vpack.c.bf16 %v3462, %v3461
        %3471 = vst.msk [vmem:[#allocation3 + $0x10] sm:$0xff] %vm1128, %v3463
        %3472 = vst.msk [vmem:[#allocation3 + $0x28] sm:$0xff] %vm1128, %v3464
        %3473 = vst.msk [vmem:[#allocation3 + $0x40] sm:$0xff] %vm1128, %v3465
        %3474 = vst.msk [vmem:[#allocation3 + $0x58] sm:$0xff] %vm1128, %v3466
        %3475 = vst.msk [vmem:[#allocation3 + $0x70] sm:$0xff] %vm1128, %v3467
        %3476 = vst.msk [vmem:[#allocation3 + $0x88] sm:$0xff] %vm1128, %v3468
        %3477 = vst.msk [vmem:[#allocation3 + $0xa0] sm:$0xff] %vm1128, %v3469
        %3478 = vst.msk [vmem:[#allocation3 + $0xb8] sm:$0xff] %vm1128, %v3470
        %v3479 = vld [vmem:[#allocation3] sm:$0xff]
        %v3480 = vld [vmem:[#allocation3 + $0x8] sm:$0xff]
        %v3481 = vld [vmem:[#allocation3 + $0x10] sm:$0xff]
        %v3482 = vld [vmem:[#allocation3 + $0x18] sm:$0xff]
        %v3483 = vld [vmem:[#allocation3 + $0x20] sm:$0xff]
        %v3484 = vld [vmem:[#allocation3 + $0x28] sm:$0xff]
        %v3485 = vld [vmem:[#allocation3 + $0x30] sm:$0xff]
        %v3486 = vld [vmem:[#allocation3 + $0x38] sm:$0xff]
        %v3487 = vld [vmem:[#allocation3 + $0x40] sm:$0xff]
        %v3488 = vld [vmem:[#allocation3 + $0x48] sm:$0xff]
        %v3489 = vld [vmem:[#allocation3 + $0x50] sm:$0xff]
        %v3490 = vld [vmem:[#allocation3 + $0x58] sm:$0xff]
        %v3491 = vld [vmem:[#allocation3 + $0x60] sm:$0xff]
        %v3492 = vld [vmem:[#allocation3 + $0x68] sm:$0xff]
        %v3493 = vld [vmem:[#allocation3 + $0x70] sm:$0xff]
        %v3494 = vld [vmem:[#allocation3 + $0x78] sm:$0xff]
        %v3495 = vld [vmem:[#allocation3 + $0x80] sm:$0xff]
        %v3496 = vld [vmem:[#allocation3 + $0x88] sm:$0xff]
        %v3497 = vld [vmem:[#allocation3 + $0x90] sm:$0xff]
        %v3498 = vld [vmem:[#allocation3 + $0x98] sm:$0xff]
        %v3499 = vld [vmem:[#allocation3 + $0xa0] sm:$0xff]
        %v3500 = vld [vmem:[#allocation3 + $0xa8] sm:$0xff]
        %v3501 = vld [vmem:[#allocation3 + $0xb0] sm:$0xff]
        %v3502 = vld [vmem:[#allocation3 + $0xb8] sm:$0xff]
        %s3503 = scalar_lea.vmem %s7, 288
        %v3504 = vld [vmem:[%s3503] sm:$0xf]
        %v3505 = vld [vmem:[%s3503 + $0x4] sm:$0xf]
        %v3506 = vld [vmem:[%s3503 + $0x8] sm:$0xf]
        %v3507 = vld [vmem:[%s3503 + $0xc] sm:$0xf]
        %v3508 = vld [vmem:[%s3503 + $0x10] sm:$0xf]
        %v3509 = vld [vmem:[%s3503 + $0x14] sm:$0xf]
        %v3510 = vld [vmem:[%s3503 + $0x18] sm:$0xf]
        %v3511 = vld [vmem:[%s3503 + $0x1c] sm:$0xf]
        %v3512 = vld [vmem:[%s3503 + $0x20] sm:$0xf]
        %v3513 = vld [vmem:[%s3503 + $0x24] sm:$0xf]
        %v3514 = vld [vmem:[%s3503 + $0x28] sm:$0xf]
        %v3515 = vld [vmem:[%s3503 + $0x2c] sm:$0xf]
        %v3516 = vld [vmem:[%s3503 + $0x30] sm:$0xf]
        %v3517 = vld [vmem:[%s3503 + $0x34] sm:$0xf]
        %v3518 = vld [vmem:[%s3503 + $0x38] sm:$0xf]
        %v3519 = vld [vmem:[%s3503 + $0x3c] sm:$0xf]
        %v3520 = vld [vmem:[%s3503 + $0x40] sm:$0xf]
        %v3521 = vld [vmem:[%s3503 + $0x44] sm:$0xf]
        %v3522 = vld [vmem:[%s3503 + $0x48] sm:$0xf]
        %v3523 = vld [vmem:[%s3503 + $0x4c] sm:$0xf]
        %v3524 = vld [vmem:[%s3503 + $0x50] sm:$0xf]
        %v3525 = vld [vmem:[%s3503 + $0x54] sm:$0xf]
        %v3526 = vld [vmem:[%s3503 + $0x58] sm:$0xf]
        %v3527 = vld [vmem:[%s3503 + $0x5c] sm:$0xf]
        %v3528 = vld [vmem:[%s3503 + $0x60] sm:$0xf]
        %v3529 = vld [vmem:[%s3503 + $0x64] sm:$0xf]
        %v3530 = vld [vmem:[%s3503 + $0x68] sm:$0xf]
        %v3531 = vld [vmem:[%s3503 + $0x6c] sm:$0xf]
        %v3532 = vld [vmem:[%s3503 + $0x70] sm:$0xf]
        %v3533 = vld [vmem:[%s3503 + $0x74] sm:$0xf]
        %v3534 = vld [vmem:[%s3503 + $0x78] sm:$0xf]
        %v3535 = vld [vmem:[%s3503 + $0x7c] sm:$0xf]
        %v3536 = vld [vmem:[%s3503 + $0x80] sm:$0xf]
        %v3537 = vld [vmem:[%s3503 + $0x84] sm:$0xf]
        %v3538 = vld [vmem:[%s3503 + $0x88] sm:$0xf]
        %v3539 = vld [vmem:[%s3503 + $0x8c] sm:$0xf]
        %v3576 = vunpack.c.l.b16 %v3504
        %v3577 = vunpack.c.l.b16 %v3505
        %v3578 = vunpack.c.l.b16 %v3506
        %v3579 = vunpack.c.l.b16 %v3507
        %v3580 = vunpack.c.l.b16 %v3508
        %v3581 = vunpack.c.l.b16 %v3509
        %v3582 = vunpack.c.l.b16 %v3510
        %v3583 = vunpack.c.l.b16 %v3511
        %v3584 = vunpack.c.l.b16 %v3512
        %v3585 = vunpack.c.l.b16 %v3513
        %v3586 = vunpack.c.l.b16 %v3514
        %v3587 = vunpack.c.l.b16 %v3515
        %v3588 = vunpack.c.l.b16 %v3516
        %v3589 = vunpack.c.l.b16 %v3517
        %v3590 = vunpack.c.l.b16 %v3518
        %v3591 = vunpack.c.l.b16 %v3519
        %v3592 = vunpack.c.l.b16 %v3520
        %v3593 = vunpack.c.l.b16 %v3521
        %v3594 = vunpack.c.l.b16 %v3522
        %v3595 = vunpack.c.l.b16 %v3523
        %v3596 = vunpack.c.l.b16 %v3524
        %v3597 = vunpack.c.l.b16 %v3525
        %v3598 = vunpack.c.l.b16 %v3526
        %v3599 = vunpack.c.l.b16 %v3527
        %v3600 = vunpack.c.l.b16 %v3528
        %v3601 = vunpack.c.l.b16 %v3529
        %v3602 = vunpack.c.l.b16 %v3530
        %v3603 = vunpack.c.l.b16 %v3531
        %v3604 = vunpack.c.l.b16 %v3532
        %v3605 = vunpack.c.l.b16 %v3533
        %v3606 = vunpack.c.l.b16 %v3534
        %v3607 = vunpack.c.l.b16 %v3535
        %v3608 = vunpack.c.l.b16 %v3536
        %v3609 = vunpack.c.l.b16 %v3537
        %v3610 = vunpack.c.l.b16 %v3538
        %v3611 = vunpack.c.l.b16 %v3539
        %v3612 = vpack.c.b16 %v3577, %v3576
        %v3613 = vpack.c.b16 %v3579, %v3578
        %v3614 = vpack.c.b16 %v3581, %v3580
        %v3615 = vpack.c.b16 %v3583, %v3582
        %v3616 = vpack.c.b16 %v3585, %v3584
        %v3617 = vpack.c.b16 %v3587, %v3586
        %v3618 = vpack.c.b16 %v3589, %v3588
        %v3619 = vpack.c.b16 %v3591, %v3590
        %v3620 = vpack.c.b16 %v3593, %v3592
        %v3621 = vpack.c.b16 %v3595, %v3594
        %v3622 = vpack.c.b16 %v3597, %v3596
        %v3623 = vpack.c.b16 %v3599, %v3598
        %v3624 = vpack.c.b16 %v3601, %v3600
        %v3625 = vpack.c.b16 %v3603, %v3602
        %v3626 = vpack.c.b16 %v3605, %v3604
        %v3627 = vpack.c.b16 %v3607, %v3606
        %v3628 = vpack.c.b16 %v3609, %v3608
        %v3629 = vpack.c.b16 %v3611, %v3610
        %v3649 = vsel %vm1128, %v3481, 0
        %v3652 = vsel %vm1128, %v3484, 0
        %v3655 = vsel %vm1128, %v3487, 0
        %v3658 = vsel %vm1128, %v3490, 0
        %v3661 = vsel %vm1128, %v3493, 0
        %v3664 = vsel %vm1128, %v3496, 0
        %v3667 = vsel %vm1128, %v3499, 0
        %v3670 = vsel %vm1128, %v3502, 0
        %3672 = vmatprep.subr.bf16.mxu0 0
        %3673 = vmatpush1.bf16.msra.mxu0 %v3612
        %3674 = vmatprep.subr.bf16.mxu0 0
        %3675 = vmatpush1.bf16.msra.mxu0 %v3613
        %3676 = vmatprep.subr.bf16.mxu0 0
        %3677 = vmatpush1.bf16.msra.mxu0 %v3614
        %3678 = vmatprep.subr.bf16.mxu0 0
        %3679 = vmatpush1.bf16.msra.mxu0 %v3615
        %3680 = vmatprep.subr.bf16.mxu0 0
        %3681 = vmatpush1.bf16.msra.mxu0 %v3616
        %3682 = vmatprep.subr.bf16.mxu0 0
        %3683 = vmatpush1.bf16.msra.mxu0 %v3617
        %3684 = vmatprep.subr.bf16.mxu0 0
        %3685 = vmatpush1.bf16.msra.mxu0 %v3618
        %3686 = vmatprep.subr.bf16.mxu0 0
        %3687 = vmatpush1.bf16.msra.mxu0 %v3619
        %3688 = vmatprep.subr.bf16.mxu0 0
        %3689 = vmatpush1.bf16.msra.mxu0 %v3620
        %3690 = vmatprep.subr.bf16.mxu0 0
        %3691 = vmatpush1.bf16.msra.mxu0 %v3621
        %3692 = vmatprep.subr.bf16.mxu0 0
        %3693 = vmatpush1.bf16.msra.mxu0 %v3622
        %3694 = vmatprep.subr.bf16.mxu0 0
        %3695 = vmatpush1.bf16.msra.mxu0 %v3623
        %3696 = vmatprep.subr.bf16.mxu0 0
        %3697 = vmatpush1.bf16.msra.mxu0 %v3624
        %3698 = vmatprep.subr.bf16.mxu0 0
        %3699 = vmatpush1.bf16.msra.mxu0 %v3625
        %3700 = vmatprep.subr.bf16.mxu0 0
        %3701 = vmatpush1.bf16.msra.mxu0 %v3626
        %3702 = vmatprep.subr.bf16.mxu0 0
        %3703 = vmatpush1.bf16.msra.mxu0 %v3627
        %3704 = vmatprep.mubr.bf16.mxu0 %v3480
        %3705 = vmatmul.mubr.bf16.gmra.mrb[0].mxu0 %v3479
        %v3706 = vpop.f32.mrb[0].mxu0
        %v3707 = vadd.f32 0.0, %v3706
        %v3708 = vpop.f32.mrb[0].mxu0
        %v3709 = vpop.f32.mrb[0].mxu0
        %v3710 = vadd.f32 0.0, %v3709
        %v3711 = vpop.f32.mrb[0].mxu0
        %3712 = vmatprep.mubr.bf16.mxu0 %v3483
        %3713 = vmatmul.mubr.bf16.gmra.mrb[0].mxu0 %v3482
        %v3714 = vpop.f32.mrb[0].mxu0
        %v3715 = vadd.f32 0.0, %v3714
        %v3716 = vpop.f32.mrb[0].mxu0
        %v3717 = vpop.f32.mrb[0].mxu0
        %v3718 = vadd.f32 0.0, %v3717
        %v3719 = vpop.f32.mrb[0].mxu0
        %3720 = vmatprep.mubr.bf16.mxu0 %v3486
        %3721 = vmatmul.mubr.bf16.gmra.mrb[0].mxu0 %v3485
        %v3722 = vpop.f32.mrb[0].mxu0
        %v3723 = vadd.f32 0.0, %v3722
        %v3724 = vpop.f32.mrb[0].mxu0
        %v3725 = vpop.f32.mrb[0].mxu0
        %v3726 = vadd.f32 0.0, %v3725
        %v3727 = vpop.f32.mrb[0].mxu0
        %3728 = vmatprep.mubr.bf16.mxu0 %v3489
        %3729 = vmatmul.mubr.bf16.gmra.mrb[0].mxu0 %v3488
        %v3730 = vpop.f32.mrb[0].mxu0
        %v3731 = vadd.f32 0.0, %v3730
        %v3732 = vpop.f32.mrb[0].mxu0
        %v3733 = vpop.f32.mrb[0].mxu0
        %v3734 = vadd.f32 0.0, %v3733
        %v3735 = vpop.f32.mrb[0].mxu0
        %3736 = vmatprep.mubr.bf16.mxu0 %v3492
        %3737 = vmatmul.mubr.bf16.gmra.mrb[0].mxu0 %v3491
        %v3738 = vpop.f32.mrb[0].mxu0
        %v3739 = vadd.f32 0.0, %v3738
        %v3740 = vpop.f32.mrb[0].mxu0
        %v3741 = vpop.f32.mrb[0].mxu0
        %v3742 = vadd.f32 0.0, %v3741
        %v3743 = vpop.f32.mrb[0].mxu0
        %3744 = vmatprep.mubr.bf16.mxu0 %v3495
        %3745 = vmatmul.mubr.bf16.gmra.mrb[0].mxu0 %v3494
        %v3746 = vpop.f32.mrb[0].mxu0
        %v3747 = vadd.f32 0.0, %v3746
        %v3748 = vpop.f32.mrb[0].mxu0
        %v3749 = vpop.f32.mrb[0].mxu0
        %v3750 = vadd.f32 0.0, %v3749
        %v3751 = vpop.f32.mrb[0].mxu0
        %3752 = vmatprep.mubr.bf16.mxu0 %v3498
        %3753 = vmatmul.mubr.bf16.gmra.mrb[0].mxu0 %v3497
        %v3754 = vpop.f32.mrb[0].mxu0
        %v3755 = vadd.f32 0.0, %v3754
        %v3756 = vpop.f32.mrb[0].mxu0
        %v3757 = vpop.f32.mrb[0].mxu0
        %v3758 = vadd.f32 0.0, %v3757
        %v3759 = vpop.f32.mrb[0].mxu0
        %3760 = vmatprep.mubr.bf16.mxu0 %v3501
        %3761 = vmatmul.mubr.bf16.gmra.mrb[0].mxu0 %v3500
        %v3762 = vpop.f32.mrb[0].mxu0
        %v3763 = vadd.f32 0.0, %v3762
        %v3764 = vpop.f32.mrb[0].mxu0
        %v3765 = vpop.f32.mrb[0].mxu0
        %v3766 = vadd.f32 0.0, %v3765
        %v3767 = vpop.f32.mrb[0].mxu0
        %3768 = vdwg.mxu0
        %3769 = vmatprep.subr.bf16.mxu0 0
        %3770 = vmatpush1.bf16.msra.mxu0 %v3628
        %3771 = vmatprep.subr.bf16.mxu0 0
        %3772 = vmatpush1.bf16.msra.mxu0 %v3629
        %3773 = vmatprep.subr.bf16.mxu0 0
        %3774 = vmatpush1.bf16.msra.mxu0 0
        %3775 = vmatprep.subr.bf16.mxu0 0
        %3776 = vmatpush1.bf16.msra.mxu0 0
        %3777 = vmatprep.subr.bf16.mxu0 0
        %3778 = vmatpush1.bf16.msra.mxu0 0
        %3779 = vmatprep.subr.bf16.mxu0 0
        %3780 = vmatpush1.bf16.msra.mxu0 0
        %3781 = vmatprep.subr.bf16.mxu0 0
        %3782 = vmatpush1.bf16.msra.mxu0 0
        %3783 = vmatprep.subr.bf16.mxu0 0
        %3784 = vmatpush1.bf16.msra.mxu0 0
        %3785 = vmatprep.subr.bf16.mxu0 0
        %3786 = vmatpush1.bf16.msra.mxu0 0
        %3787 = vmatprep.subr.bf16.mxu0 0
        %3788 = vmatpush1.bf16.msra.mxu0 0
        %3789 = vmatprep.subr.bf16.mxu0 0
        %3790 = vmatpush1.bf16.msra.mxu0 0
        %3791 = vmatprep.subr.bf16.mxu0 0
        %3792 = vmatpush1.bf16.msra.mxu0 0
        %3793 = vmatprep.subr.bf16.mxu0 0
        %3794 = vmatpush1.bf16.msra.mxu0 0
        %3795 = vmatprep.subr.bf16.mxu0 0
        %3796 = vmatpush1.bf16.msra.mxu0 0
        %3797 = vmatprep.subr.bf16.mxu0 0
        %3798 = vmatpush1.bf16.msra.mxu0 0
        %3799 = vmatprep.subr.bf16.mxu0 0
        %3800 = vmatpush1.bf16.msra.mxu0 0
        %3801 = vmatprep.mubr.bf16.mxu0 0
        %3802 = vmatmul.mubr.bf16.gmra.mrb[0].mxu0 %v3649
        %v3803 = vpop.f32.mrb[0].mxu0
        %v3804 = vadd.f32 %v3707, %v3803
        %v3805 = vpop.f32.mrb[0].mxu0
        %v3806 = vpop.f32.mrb[0].mxu0
        %v3807 = vadd.f32 %v3710, %v3806
        %v3808 = vpop.f32.mrb[0].mxu0
        %3809 = vmatprep.mubr.bf16.mxu0 0
        %3810 = vmatmul.mubr.bf16.gmra.mrb[0].mxu0 %v3652
        %v3811 = vpop.f32.mrb[0].mxu0
        %v3812 = vadd.f32 %v3715, %v3811
        %v3813 = vpop.f32.mrb[0].mxu0
        %v3814 = vpop.f32.mrb[0].mxu0
        %v3815 = vadd.f32 %v3718, %v3814
        %v3816 = vpop.f32.mrb[0].mxu0
        %3817 = vmatprep.mubr.bf16.mxu0 0
        %3818 = vmatmul.mubr.bf16.gmra.mrb[0].mxu0 %v3655
        %v3819 = vpop.f32.mrb[0].mxu0
        %v3820 = vadd.f32 %v3723, %v3819
        %v3821 = vpop.f32.mrb[0].mxu0
        %v3822 = vpop.f32.mrb[0].mxu0
        %v3823 = vadd.f32 %v3726, %v3822
        %v3824 = vpop.f32.mrb[0].mxu0
        %3825 = vmatprep.mubr.bf16.mxu0 0
        %3826 = vmatmul.mubr.bf16.gmra.mrb[0].mxu0 %v3658
        %v3827 = vpop.f32.mrb[0].mxu0
        %v3828 = vadd.f32 %v3731, %v3827
        %v3829 = vpop.f32.mrb[0].mxu0
        %v3830 = vpop.f32.mrb[0].mxu0
        %v3831 = vadd.f32 %v3734, %v3830
        %v3832 = vpop.f32.mrb[0].mxu0
        %3833 = vmatprep.mubr.bf16.mxu0 0
        %3834 = vmatmul.mubr.bf16.gmra.mrb[0].mxu0 %v3661
        %v3835 = vpop.f32.mrb[0].mxu0
        %v3836 = vadd.f32 %v3739, %v3835
        %v3837 = vpop.f32.mrb[0].mxu0
        %v3838 = vpop.f32.mrb[0].mxu0
        %v3839 = vadd.f32 %v3742, %v3838
        %v3840 = vpop.f32.mrb[0].mxu0
        %3841 = vmatprep.mubr.bf16.mxu0 0
        %3842 = vmatmul.mubr.bf16.gmra.mrb[0].mxu0 %v3664
        %v3843 = vpop.f32.mrb[0].mxu0
        %v3844 = vadd.f32 %v3747, %v3843
        %v3845 = vpop.f32.mrb[0].mxu0
        %v3846 = vpop.f32.mrb[0].mxu0
        %v3847 = vadd.f32 %v3750, %v3846
        %v3848 = vpop.f32.mrb[0].mxu0
        %3849 = vmatprep.mubr.bf16.mxu0 0
        %3850 = vmatmul.mubr.bf16.gmra.mrb[0].mxu0 %v3667
        %v3851 = vpop.f32.mrb[0].mxu0
        %v3852 = vadd.f32 %v3755, %v3851
        %v3853 = vpop.f32.mrb[0].mxu0
        %v3854 = vpop.f32.mrb[0].mxu0
        %v3855 = vadd.f32 %v3758, %v3854
        %v3856 = vpop.f32.mrb[0].mxu0
        %3857 = vmatprep.mubr.bf16.mxu0 0
        %3858 = vmatmul.mubr.bf16.gmra.mrb[0].mxu0 %v3670
        %v3859 = vpop.f32.mrb[0].mxu0
        %v3860 = vadd.f32 %v3763, %v3859
        %v3861 = vpop.f32.mrb[0].mxu0
        %v3862 = vpop.f32.mrb[0].mxu0
        %v3863 = vadd.f32 %v3766, %v3862
        %v3864 = vpop.f32.mrb[0].mxu0
        %3865 = vdwg.mxu0
        %v3866 = vadd.f32 %v2934, %v3804
        %v3867 = vadd.f32 %v2937, %v3807
        %v3868 = vadd.f32 %v2942, %v3812
        %v3869 = vadd.f32 %v2945, %v3815
        %v3870 = vadd.f32 %v2950, %v3820
        %v3871 = vadd.f32 %v2953, %v3823
        %v3872 = vadd.f32 %v2958, %v3828
        %v3873 = vadd.f32 %v2961, %v3831
        %v3874 = vadd.f32 %v2966, %v3836
        %v3875 = vadd.f32 %v2969, %v3839
        %v3876 = vadd.f32 %v2974, %v3844
        %v3877 = vadd.f32 %v2977, %v3847
        %v3878 = vadd.f32 %v2982, %v3852
        %v3879 = vadd.f32 %v2985, %v3855
        %v3880 = vadd.f32 %v2990, %v3860
        %v3881 = vadd.f32 %v2993, %v3863
        %v3882 = vld [vmem:[%s8] sm:$0x1]
        %v3884 = vlaneseq
        %v3885 = vshrl.u32 %v3884, 7
        %v3886 = vsub.s32 0, %v3885
        %v3887 = vrot.slane %v3882, %v3886
        %v3889 = vadd.f32 %v3866, %v3887
        %v3890 = vadd.f32 %v3867, %v3887
        %v3891 = vadd.f32 %v3868, %v3887
        %v3892 = vadd.f32 %v3869, %v3887
        %v3893 = vadd.f32 %v3870, %v3887
        %v3894 = vadd.f32 %v3871, %v3887
        %v3895 = vadd.f32 %v3872, %v3887
        %v3896 = vadd.f32 %v3873, %v3887
        %v3897 = vadd.f32 %v3874, %v3887
        %v3898 = vadd.f32 %v3875, %v3887
        %v3899 = vadd.f32 %v3876, %v3887
        %v3900 = vadd.f32 %v3877, %v3887
        %v3901 = vadd.f32 %v3878, %v3887
        %v3902 = vadd.f32 %v3879, %v3887
        %v3903 = vadd.f32 %v3880, %v3887
        %v3904 = vadd.f32 %v3881, %v3887
        %3905 = vst.msk [vmem:[%s499] sm:$0xff] %vm1128, %v3889
        %3906 = vst.msk [vmem:[%s499 + $0x8] sm:$0xff] %vm1128, %v3890
        %3907 = vst.msk [vmem:[%s499 + $0x10] sm:$0xff] %vm1128, %v3891
        %3908 = vst.msk [vmem:[%s499 + $0x18] sm:$0xff] %vm1128, %v3892
        %3909 = vst.msk [vmem:[%s499 + $0x20] sm:$0xff] %vm1128, %v3893
        %3910 = vst.msk [vmem:[%s499 + $0x28] sm:$0xff] %vm1128, %v3894
        %3911 = vst.msk [vmem:[%s499 + $0x30] sm:$0xff] %vm1128, %v3895
        %3912 = vst.msk [vmem:[%s499 + $0x38] sm:$0xff] %vm1128, %v3896
        %3913 = vst.msk [vmem:[%s499 + $0x40] sm:$0xff] %vm1128, %v3897
        %3914 = vst.msk [vmem:[%s499 + $0x48] sm:$0xff] %vm1128, %v3898
        %3915 = vst.msk [vmem:[%s499 + $0x50] sm:$0xff] %vm1128, %v3899
        %3916 = vst.msk [vmem:[%s499 + $0x58] sm:$0xff] %vm1128, %v3900
        %3917 = vst.msk [vmem:[%s499 + $0x60] sm:$0xff] %vm1128, %v3901
        %3918 = vst.msk [vmem:[%s499 + $0x68] sm:$0xff] %vm1128, %v3902
        %3919 = vst.msk [vmem:[%s499 + $0x70] sm:$0xff] %vm1128, %v3903
        %3920 = vst.msk [vmem:[%s499 + $0x78] sm:$0xff] %vm1128, %v3904
        // Predicated region
        $region65: #{tpu_custom_call.1} parent=55 // pred_check
          %p3921 = pneg %p547
        $region66: #{tpu_custom_call.1} parent=55 // pred_check_branch
          %3923 = sbr.rel (%p3921) target = $region68
        $region67: #{tpu_custom_call.1} parent=55 // pred_region
          %vm3924 = vcmask 254976
          %3925 = vst.msk [vmem:[%s506] sm:$0x3] %vm3924, 0.0
        $region68: #{tpu_custom_call.1} parent=55 // pred_fallthru
          _
        %v3926 = vld [vmem:[%s506] sm:$0x1]
        %v3927 = vsel %vm1128, %v3889, 0.0
        %v3928 = vsel %vm1128, %v3890, 0.0
        %v3929 = vadd.f32 %v3927, %v3928
        %v3930 = vsel %vm1128, %v3891, 0.0
        %v3931 = vadd.f32 %v3929, %v3930
        %v3932 = vsel %vm1128, %v3892, 0.0
        %v3933 = vadd.f32 %v3931, %v3932
        %v3934 = vsel %vm1128, %v3893, 0.0
        %v3935 = vadd.f32 %v3933, %v3934
        %v3936 = vsel %vm1128, %v3894, 0.0
        %v3937 = vadd.f32 %v3935, %v3936
        %v3938 = vsel %vm1128, %v3895, 0.0
        %v3939 = vadd.f32 %v3937, %v3938
        %v3940 = vsel %vm1128, %v3896, 0.0
        %v3941 = vadd.f32 %v3939, %v3940
        %v3942 = vsel %vm1128, %v3897, 0.0
        %v3943 = vadd.f32 %v3941, %v3942
        %v3944 = vsel %vm1128, %v3898, 0.0
        %v3945 = vadd.f32 %v3943, %v3944
        %v3946 = vsel %vm1128, %v3899, 0.0
        %v3947 = vadd.f32 %v3945, %v3946
        %v3948 = vsel %vm1128, %v3900, 0.0
        %v3949 = vadd.f32 %v3947, %v3948
        %v3950 = vsel %vm1128, %v3901, 0.0
        %v3951 = vadd.f32 %v3949, %v3950
        %v3952 = vsel %vm1128, %v3902, 0.0
        %v3953 = vadd.f32 %v3951, %v3952
        %v3954 = vsel %vm1128, %v3903, 0.0
        %v3955 = vadd.f32 %v3953, %v3954
        %v3956 = vsel %vm1128, %v3904, 0.0
        %v3957 = vadd.f32 %v3955, %v3956
        %v3958 = vrot.slane %v3957, 4
        %v3959 = vadd.f32 %v3957, %v3958
        %v3960 = vrot.slane %v3959, 2
        %v3961 = vadd.f32 %v3959, %v3960
        %v3962 = vrot.slane %v3961, 1
        %v3963 = vadd.f32 %v3961, %v3962
        %v3964 = vadd.f32 %v3926, %v3963
        %vm3965 = vcmask 253952
        %3966 = vst.msk [vmem:[%s506] sm:$0x1] %vm3965, %v3964
        %v3967 = vld [vmem:[%s506 + $0x1] sm:$0x1]
        %v3968 = vmul.f32 %v3889, %v3889
        %v3969 = vmul.f32 %v3890, %v3890
        %v3970 = vmul.f32 %v3891, %v3891
        %v3971 = vmul.f32 %v3892, %v3892
        %v3972 = vmul.f32 %v3893, %v3893
        %v3973 = vmul.f32 %v3894, %v3894
        %v3974 = vmul.f32 %v3895, %v3895
        %v3975 = vmul.f32 %v3896, %v3896
        %v3976 = vmul.f32 %v3897, %v3897
        %v3977 = vmul.f32 %v3898, %v3898
        %v3978 = vmul.f32 %v3899, %v3899
        %v3979 = vmul.f32 %v3900, %v3900
        %v3980 = vmul.f32 %v3901, %v3901
        %v3981 = vmul.f32 %v3902, %v3902
        %v3982 = vmul.f32 %v3903, %v3903
        %v3983 = vmul.f32 %v3904, %v3904
        %v3984 = vsel %vm1128, %v3968, 0.0
        %v3985 = vsel %vm1128, %v3969, 0.0
        %v3986 = vadd.f32 %v3984, %v3985
        %v3987 = vsel %vm1128, %v3970, 0.0
        %v3988 = vadd.f32 %v3986, %v3987
        %v3989 = vsel %vm1128, %v3971, 0.0
        %v3990 = vadd.f32 %v3988, %v3989
        %v3991 = vsel %vm1128, %v3972, 0.0
        %v3992 = vadd.f32 %v3990, %v3991
        %v3993 = vsel %vm1128, %v3973, 0.0
        %v3994 = vadd.f32 %v3992, %v3993
        %v3995 = vsel %vm1128, %v3974, 0.0
        %v3996 = vadd.f32 %v3994, %v3995
        %v3997 = vsel %vm1128, %v3975, 0.0
        %v3998 = vadd.f32 %v3996, %v3997
        %v3999 = vsel %vm1128, %v3976, 0.0
        %v4000 = vadd.f32 %v3998, %v3999
        %v4001 = vsel %vm1128, %v3977, 0.0
        %v4002 = vadd.f32 %v4000, %v4001
        %v4003 = vsel %vm1128, %v3978, 0.0
        %v4004 = vadd.f32 %v4002, %v4003
        %v4005 = vsel %vm1128, %v3979, 0.0
        %v4006 = vadd.f32 %v4004, %v4005
        %v4007 = vsel %vm1128, %v3980, 0.0
        %v4008 = vadd.f32 %v4006, %v4007
        %v4009 = vsel %vm1128, %v3981, 0.0
        %v4010 = vadd.f32 %v4008, %v4009
        %v4011 = vsel %vm1128, %v3982, 0.0
        %v4012 = vadd.f32 %v4010, %v4011
        %v4013 = vsel %vm1128, %v3983, 0.0
        %v4014 = vadd.f32 %v4012, %v4013
        %v4015 = vrot.slane %v4014, 4
        %v4016 = vadd.f32 %v4014, %v4015
        %v4017 = vrot.slane %v4016, 2
        %v4018 = vadd.f32 %v4016, %v4017
        %v4019 = vrot.slane %v4018, 1
        %v4020 = vadd.f32 %v4018, %v4019
        %v4021 = vadd.f32 %v3967, %v4020
        %4022 = vst.msk [vmem:[%s506 + $0x1] sm:$0x1] %vm3965, %v4021
        %s4023 = sand.u32 %s284, 1
        %s4024 = scalar_lea.sflag [#allocation8], %s4023
        %s4025 = sand.u32 %s284, 1
        %s4026 = smul.addr %s4025, 128
        %s4027 = scalar_lea.vmem [#allocation9], %s4026
        %s4028 = sand.u32 %s310, 1
        %s4029 = scalar_lea.sflag [#allocation11], %s4028
        %s4030 = sand.u32 %s310, 1
        %s4031 = smul.addr %s4030, 2
        %s4032 = scalar_lea.vmem [#allocation10], %s4031
        // Predicated region
        $region69: #{tpu_custom_call.1} parent=55 // pred_check
          %p4033 = pneg %p294
        $region70: #{tpu_custom_call.1} parent=55 // pred_check_branch
          %4035 = sbr.rel (%p4033) target = $region72
        $region71: #{tpu_custom_call.1} parent=55 // pred_region
          %s4036 = smul.u32 2, %s36
          %s4038 = ssub.s32 2048, 2048
          %4039 = vsyncadd %s4024, %s4038
          %s4040 = smul.addr %s4036, 8
          %s4041 = smul.addr %s35, 32
          %s4042 = sadd.s32 %s4040, %s4041
          %s4043 = smul.addr %s4042, 128
          %s4044 = scalar_lea.hbm %s9, %s4043
          %s4045 = sshll.u32 %s4027, 4
          %s4046 = int_to_ptr.vmem [resolvable:$true] %s4045
          %4051 = dma.vmem_to_hbm [thread:$0]  %s4046, 2048, %s4044, %s4024, 128, 128, 8
        $region72: #{tpu_custom_call.1} parent=55 // pred_fallthru
          _
        // Predicated region
        $region73: #{tpu_custom_call.1} parent=55 // pred_check
          %p4052 = pneg %p320
        $region74: #{tpu_custom_call.1} parent=55 // pred_check_branch
          %4054 = sbr.rel (%p4052) target = $region76
        $region75: #{tpu_custom_call.1} parent=55 // pred_region
          %s4056 = ssub.s32 32, 32
          %4057 = vsyncadd %s4029, %s4056
          %s4058 = smul.addr %s35, 32
          %s4059 = scalar_lea.hbm %s10, %s4058
          %s4061 = sshll.u32 %s4032, 4
          %s4062 = int_to_ptr.vmem [resolvable:$true] %s4061
          %4064 = dma.vmem_to_hbm [thread:$0]  %s4062, 32, %s4059, %s4029
        $region76: #{tpu_custom_call.1} parent=55 // pred_fallthru
          _
      $region56: #{tpu_custom_call.1} parent=5 // pred_fallthru
        _
      %p4065 = scmp.le.s32.totalorder 2, %s26
      // Predicated region
      $region77: #{tpu_custom_call.1} parent=5 // pred_check
        %p4066 = pneg %p4065
      $region78: #{tpu_custom_call.1} parent=5 // pred_check_branch
        %4068 = sbr.rel (%p4066) target = $region80
      $region79: #{tpu_custom_call.1} parent=5 // pred_region
        %s4069 = ssub.s32 %s26, 2
        // Predicated region
        $region81: #{tpu_custom_call.1} parent=79 // pred_check
          %p4070 = pneg %p300
        $region82: #{tpu_custom_call.1} parent=79 // pred_check_branch
          %4072 = sbr.rel (%p4070) target = $region84
        $region83: #{tpu_custom_call.1} parent=79 // pred_region
          %s4073 = sand.u32 %s285, 1
          %s4074 = scalar_lea.sflag [#allocation8], %s4073
          %s4075 = sand.u32 %s285, 1
          %s4076 = smul.addr %s4075, 128
          %s4077 = scalar_lea.vmem [#allocation9], %s4076
          %4078 = dma.done %s4074, 2048
        $region84: #{tpu_custom_call.1} parent=79 // pred_fallthru
          _
        // Predicated region
        $region85: #{tpu_custom_call.1} parent=79 // pred_check
          %p4079 = pneg %p326
        $region86: #{tpu_custom_call.1} parent=79 // pred_check_branch
          %4081 = sbr.rel (%p4079) target = $region88
        $region87: #{tpu_custom_call.1} parent=79 // pred_region
          %s4082 = sand.u32 %s311, 1
          %s4083 = scalar_lea.sflag [#allocation11], %s4082
          %s4084 = sand.u32 %s311, 1
          %s4085 = smul.addr %s4084, 2
          %s4086 = scalar_lea.vmem [#allocation10], %s4085
          %4087 = dma.done %s4083, 32
        $region88: #{tpu_custom_call.1} parent=79 // pred_fallthru
          _
      $region80: #{tpu_custom_call.1} parent=5 // pred_fallthru
        _
    $region6: #{tpu_custom_call.1} parent=1 // loop_footer
      %s30 = sadd.s32 1, %s26
    $region7: #{tpu_custom_call.1} parent=1 // loop_footer_branch
      %25 = sbr.rel target = $region3
    $region8: #{tpu_custom_call.1} parent=1 // loop_exit
      _
    %4088 = vsyncpa [#allocation7], 1
    %s4089 = scalar_lea.sflag [#allocation7], 1
    %4090 = vsyncpa %s4089, 1
    %4091 = vsyncpa [#allocation8], 1
    %s4092 = scalar_lea.sflag [#allocation8], 1
    %4093 = vsyncpa %s4092, 1
    %4094 = vsyncpa [#allocation11], 1
    %s4095 = scalar_lea.sflag [#allocation11], 1
    %4096 = vsyncpa %s4095, 1

// kernel: tpu_custom_call.1
$region0: #{tpu_custom_call.1}
  #allocation0 [shape = 'u32[]', space=smem, size = 0x4, offset = 0x4, fixed_abs, tag = 'smem constant byte address 0x4 - core index']
  #allocation1 [shape = 'u32[144,128]{1,0:T(1,128)}', space=vmem, size = 0x12000, scoped, tag = 'internal scratch']
  #allocation2 [shape = 'f32[4,10,10,32]{3,2,1,0:T(8,128)}', space=vmem, size = 0x50000, scoped, tag = 'scratch operand']
  #allocation3 [shape = 'bf16[128,288]{1,0:T(16,128)(2,1)}', space=vmem, size = 0x18000, scoped, tag = 'scratch operand']
  #allocation4 [shape = 'bf16[64,72]{1,0:T(16,128)(2,1)}', space=vmem, size = 0x4000, scoped, tag = 'scratch operand']
  #allocation5 [shape = 'f32[64,32]{1,0:T(8,128)}', space=vmem, size = 0x8000, scoped, tag = 'scratch operand']
  %s0 = inlined_call_operand.vmem [shape: f32[2,4,8,8,32], index: 0, kind: input, shape index: {}]
  %s1 = inlined_call_operand.vmem [shape: f32[2,4,8,8,32], index: 1, kind: input, shape index: {}]
  %s2 = inlined_call_operand.hbm [shape: f32[2,4,8,8,32], index: 2, kind: input, shape index: {}]
  %s3 = inlined_call_operand.vmem [shape: f32[2,10,10,8], index: 3, kind: input, shape index: {}]
  %s4 = inlined_call_operand.vmem [shape: bf16[72,32], index: 4, kind: input, shape index: {}]
  %s5 = inlined_call_operand.vmem [shape: f32[1,32], index: 5, kind: input, shape index: {}]
  %s6 = inlined_call_operand.vmem [shape: f32[4,1,1,32], index: 6, kind: input, shape index: {}]
  %s7 = inlined_call_operand.vmem [shape: bf16[3,288,32], index: 7, kind: input, shape index: {}]
  %s8 = inlined_call_operand.vmem [shape: f32[1,32], index: 8, kind: input, shape index: {}]
  %s9 = inlined_call_operand.hbm [shape: f32[2,4,8,8,32], index: 9, kind: output, shape index: {0}]
  %s10 = inlined_call_operand.hbm [shape: f32[2,2,32], index: 10, kind: output, shape index: {1}]
  %11 = xla_tuple %s9, %s10
  %s12 = sld [smem:[#allocation0]]
  $region89: #{tpu_custom_call.1} parent=0
    _
  %s14 = ssub.s32 1, %s12
  %s15 = scalar_select 0, %s14, %s12
  $region1: #{tpu_custom_call.1} parent=0
    #allocation6 [shape = 'u8[65536]{0}', space=vmem, size = 0x10000, scoped, tag = 'input window, operand 2']
    #allocation7 [shape = 's32[2]{0}', space=sflag, size = 0x8, scoped, tag = 'scoped memory for tpu_custom_call.1']
    #allocation8 [shape = 's32[2]{0}', space=sflag, size = 0x8, scoped, tag = 'scoped memory for tpu_custom_call.1']
    #allocation9 [shape = 'u8[131072]{0}', space=vmem, size = 0x20000, scoped, tag = 'output window, operand 0']
    #allocation10 [shape = 'u8[2048]{0}', space=vmem, size = 0x800, scoped, tag = 'output window, operand 1']
    #allocation11 [shape = 's32[2]{0}', space=sflag, size = 0x8, scoped, tag = 'scoped memory for tpu_custom_call.1']
    %16 = vsyncpa [#allocation7], 0
    %s17 = scalar_lea.sflag [#allocation7], 1
    %18 = vsyncpa %s17, 0
    %19 = vsyncpa [#allocation8], 0
    %s20 = scalar_lea.sflag [#allocation8], 1
    %21 = vsyncpa %s20, 0
    %22 = vsyncpa [#allocation11], 0
    %s23 = scalar_lea.sflag [#allocation11], 1
    %24 = vsyncpa %s23, 0
    loop: start=0, step=1, limit=6
    $region2: #{tpu_custom_call.1} parent=1 // loop_pre_header
      _
    $region3: #{tpu_custom_call.1} parent=1 // loop_header
      %s26 = sphi 0, %s30
      %p27 = scmp.ge.s32.totalorder %s26, 6
      %s33 = sphi 0, %s45
      %s34 = sphi 0, %s41
      %s35 = sphi 0, %s33
      %s36 = sphi 0, %s34
      %s37 = sphi 0, %s35
      %s38 = sphi 0, %s36
      %s50 = sphi 0, %s52
      %s53 = sphi 0, %s50
      %s54 = sphi 0, %s53
      %s70 = sphi 0, %s54
      %s86 = sphi 0, %s88
      %s89 = sphi 0, %s86
      %s90 = sphi 0, %s89
      %s106 = sphi 0, %s90
      %s122 = sphi 0, %s124
      %s125 = sphi 0, %s122
      %s126 = sphi 0, %s125
      %s142 = sphi 0, %s126
      %s148 = sphi 0, %s150
      %s151 = sphi 0, %s148
      %s152 = sphi 0, %s151
      %s168 = sphi 0, %s152
      %s172 = sphi 0, %s172
      %s174 = sphi 0, %s172
      %s175 = sphi 0, %s174
      %s189 = sphi 0, %s175
      %s193 = sphi 0, %s193
      %s195 = sphi 0, %s193
      %s196 = sphi 0, %s195
      %s210 = sphi 0, %s196
      %s214 = sphi 0, %s214
      %s216 = sphi 0, %s214
      %s217 = sphi 0, %s216
      %s231 = sphi 0, %s217
      %s235 = sphi 0, %s235
      %s237 = sphi 0, %s235
      %s238 = sphi 0, %s237
      %s252 = sphi 0, %s238
      %s256 = sphi 0, %s256
      %s258 = sphi 0, %s256
      %s259 = sphi 0, %s258
      %s273 = sphi 0, %s259
      %s281 = sphi 0, %s283
      %s284 = sphi 0, %s281
      %s285 = sphi 0, %s284
      %s301 = sphi 0, %s285
      %s307 = sphi 0, %s309
      %s310 = sphi 0, %s307
      %s311 = sphi 0, %s310
      %s327 = sphi 0, %s311
    $region4: #{tpu_custom_call.1} parent=1 // loop_header_branch
      %29 = sbr.rel (%p27) target = $region8
    $region5: #{tpu_custom_call.1} parent=1 // loop_body
      %s31 = ssub.s32 %s26, 1
      %s32 = ssub.s32 %s26, 2
      %s39 = sadd.s32 1, %s34
      %p40 = scmp.ge.s32.totalorder %s39, 2
      %s41 = scalar_select %p40, 0, %s39
      %s42 = sadd.s32 1, %s33
      %s43 = scalar_select %p40, %s42, %s33
      %p44 = scmp.ge.s32.totalorder %s43, 2
      %s45 = scalar_select %p44, 0, %s43
      %s46 = ssub.s32 %s33, %s45
      %s47 = ssub.s32 %s34, %s41
      %s48 = sor.u32 %s46, %s47
      %p49 = scmp.eq.s32.totalorder %s48, 0
      %s51 = sadd.s32 %s50, 1
      %s52 = scalar_select %p49, %s50, %s51
      %p55 = pneg %p49
      %p56 = scmp.eq.s32.totalorder %s26, 3
      %p57 = por %p55, %p56
      %p58 = scmp.ne.s32.totalorder %s50, %s53
      %p59 = scmp.eq.s32.totalorder %s26, 0
      %p60 = por %p58, %p59
      %p61 = scmp.ne.s32.totalorder %s50, %s53
      %p62 = scmp.eq.s32.totalorder %s31, 3
      %p63 = por %p61, %p62
      %p64 = scmp.ne.s32.totalorder %s53, %s54
      %p65 = scmp.eq.s32.totalorder %s31, 0
      %p66 = por %p64, %p65
      %p67 = scmp.ne.s32.totalorder %s53, %s54
      %p68 = scmp.eq.s32.totalorder %s32, 3
      %p69 = por %p67, %p68
      %p71 = scmp.ne.s32.totalorder %s54, %s70
      %p72 = scmp.eq.s32.totalorder %s32, 0
      %p73 = por %p71, %p72
      %s74 = smul.u32 %s34, 2
      %s75 = ssub.s32 %s74, 1
      %p76 = scmp.gt.s32.totalorder %s75, 0
      %s77 = scalar_select %p76, %s75, 0
      %s78 = smul.u32 %s41, 2
      %s79 = ssub.s32 %s78, 1
      %p80 = scmp.gt.s32.totalorder %s79, 0
      %s81 = scalar_select %p80, %s79, 0
      %s82 = ssub.s32 %s33, %s45
      %s83 = ssub.s32 %s77, %s81
      %s84 = sor.u32 %s82, %s83
      %p85 = scmp.eq.s32.totalorder %s84, 0
      %s87 = sadd.s32 %s86, 1
      %s88 = scalar_select %p85, %s86, %s87
      %p91 = pneg %p85
      %p92 = scmp.eq.s32.totalorder %s26, 3
      %p93 = por %p91, %p92
      %p94 = scmp.ne.s32.totalorder %s86, %s89
      %p95 = scmp.eq.s32.totalorder %s26, 0
      %p96 = por %p94, %p95
      %p97 = scmp.ne.s32.totalorder %s86, %s89
      %p98 = scmp.eq.s32.totalorder %s31, 3
      %p99 = por %p97, %p98
      %p100 = scmp.ne.s32.totalorder %s89, %s90
      %p101 = scmp.eq.s32.totalorder %s31, 0
      %p102 = por %p100, %p101
      %p103 = scmp.ne.s32.totalorder %s89, %s90
      %p104 = scmp.eq.s32.totalorder %s32, 3
      %p105 = por %p103, %p104
      %p107 = scmp.ne.s32.totalorder %s90, %s106
      %p108 = scmp.eq.s32.totalorder %s32, 0
      %p109 = por %p107, %p108
      %s110 = smul.u32 %s34, 2
      %s111 = sadd.s32 %s110, 2
      %p112 = scmp.lt.s32.totalorder %s111, 3
      %s113 = scalar_select %p112, %s111, 3
      %s114 = smul.u32 %s41, 2
      %s115 = sadd.s32 %s114, 2
      %p116 = scmp.lt.s32.totalorder %s115, 3
      %s117 = scalar_select %p116, %s115, 3
      %s118 = ssub.s32 %s33, %s45
      %s119 = ssub.s32 %s113, %s117
      %s120 = sor.u32 %s118, %s119
      %p121 = scmp.eq.s32.totalorder %s120, 0
      %s123 = sadd.s32 %s122, 1
      %s124 = scalar_select %p121, %s122, %s123
      %p127 = pneg %p121
      %p128 = scmp.eq.s32.totalorder %s26, 3
      %p129 = por %p127, %p128
      %p130 = scmp.ne.s32.totalorder %s122, %s125
      %p131 = scmp.eq.s32.totalorder %s26, 0
      %p132 = por %p130, %p131
      %p133 = scmp.ne.s32.totalorder %s122, %s125
      %p134 = scmp.eq.s32.totalorder %s31, 3
      %p135 = por %p133, %p134
      %p136 = scmp.ne.s32.totalorder %s125, %s126
      %p137 = scmp.eq.s32.totalorder %s31, 0
      %p138 = por %p136, %p137
      %p139 = scmp.ne.s32.totalorder %s125, %s126
      %p140 = scmp.eq.s32.totalorder %s32, 3
      %p141 = por %p139, %p140
      %p143 = scmp.ne.s32.totalorder %s126, %s142
      %p144 = scmp.eq.s32.totalorder %s32, 0
      %p145 = por %p143, %p144
      %s146 = ssub.s32 %s33, %s45
      %p147 = scmp.eq.s32.totalorder %s146, 0
      %s149 = sadd.s32 %s148, 1
      %s150 = scalar_select %p147, %s148, %s149
      %p153 = pneg %p147
      %p154 = scmp.eq.s32.totalorder %s26, 3
      %p155 = por %p153, %p154
      %p156 = scmp.ne.s32.totalorder %s148, %s151
      %p157 = scmp.eq.s32.totalorder %s26, 0
      %p158 = por %p156, %p157
      %p159 = scmp.ne.s32.totalorder %s148, %s151
      %p160 = scmp.eq.s32.totalorder %s31, 3
      %p161 = por %p159, %p160
      %p162 = scmp.ne.s32.totalorder %s151, %s152
      %p163 = scmp.eq.s32.totalorder %s31, 0
      %p164 = por %p162, %p163
      %p165 = scmp.ne.s32.totalorder %s151, %s152
      %p166 = scmp.eq.s32.totalorder %s32, 3
      %p167 = por %p165, %p166
      %p169 = scmp.ne.s32.totalorder %s152, %s168
      %p170 = scmp.eq.s32.totalorder %s32, 0
      %p171 = por %p169, %p170
      %s173 = sadd.s32 %s172, 1
      %p176 = scmp.eq.s32.totalorder %s26, 3
      %p177 = scmp.ne.s32.totalorder %s172, %s174
      %p178 = scmp.eq.s32.totalorder %s26, 0
      %p179 = por %p177, %p178
      %p180 = scmp.ne.s32.totalorder %s172, %s174
      %p181 = scmp.eq.s32.totalorder %s31, 3
      %p182 = por %p180, %p181
      %p183 = scmp.ne.s32.totalorder %s174, %s175
      %p184 = scmp.eq.s32.totalorder %s31, 0
      %p185 = por %p183, %p184
      %p186 = scmp.ne.s32.totalorder %s174, %s175
      %p187 = scmp.eq.s32.totalorder %s32, 3
      %p188 = por %p186, %p187
      %p190 = scmp.ne.s32.totalorder %s175, %s189
      %p191 = scmp.eq.s32.totalorder %s32, 0
      %p192 = por %p190, %p191
      %s194 = sadd.s32 %s193, 1
      %p197 = scmp.eq.s32.totalorder %s26, 3
      %p198 = scmp.ne.s32.totalorder %s193, %s195
      %p199 = scmp.eq.s32.totalorder %s26, 0
      %p200 = por %p198, %p199
      %p201 = scmp.ne.s32.totalorder %s193, %s195
      %p202 = scmp.eq.s32.totalorder %s31, 3
      %p203 = por %p201, %p202
      %p204 = scmp.ne.s32.totalorder %s195, %s196
      %p205 = scmp.eq.s32.totalorder %s31, 0
      %p206 = por %p204, %p205
      %p207 = scmp.ne.s32.totalorder %s195, %s196
      %p208 = scmp.eq.s32.totalorder %s32, 3
      %p209 = por %p207, %p208
      %p211 = scmp.ne.s32.totalorder %s196, %s210
      %p212 = scmp.eq.s32.totalorder %s32, 0
      %p213 = por %p211, %p212
      %s215 = sadd.s32 %s214, 1
      %p218 = scmp.eq.s32.totalorder %s26, 3
      %p219 = scmp.ne.s32.totalorder %s214, %s216
      %p220 = scmp.eq.s32.totalorder %s26, 0
      %p221 = por %p219, %p220
      %p222 = scmp.ne.s32.totalorder %s214, %s216
      %p223 = scmp.eq.s32.totalorder %s31, 3
      %p224 = por %p222, %p223
      %p225 = scmp.ne.s32.totalorder %s216, %s217
      %p226 = scmp.eq.s32.totalorder %s31, 0
      %p227 = por %p225, %p226
      %p228 = scmp.ne.s32.totalorder %s216, %s217
      %p229 = scmp.eq.s32.totalorder %s32, 3
      %p230 = por %p228, %p229
      %p232 = scmp.ne.s32.totalorder %s217, %s231
      %p233 = scmp.eq.s32.totalorder %s32, 0
      %p234 = por %p232, %p233
      %s236 = sadd.s32 %s235, 1
      %p239 = scmp.eq.s32.totalorder %s26, 3
      %p240 = scmp.ne.s32.totalorder %s235, %s237
      %p241 = scmp.eq.s32.totalorder %s26, 0
      %p242 = por %p240, %p241
      %p243 = scmp.ne.s32.totalorder %s235, %s237
      %p244 = scmp.eq.s32.totalorder %s31, 3
      %p245 = por %p243, %p244
      %p246 = scmp.ne.s32.totalorder %s237, %s238
      %p247 = scmp.eq.s32.totalorder %s31, 0
      %p248 = por %p246, %p247
      %p249 = scmp.ne.s32.totalorder %s237, %s238
      %p250 = scmp.eq.s32.totalorder %s32, 3
      %p251 = por %p249, %p250
      %p253 = scmp.ne.s32.totalorder %s238, %s252
      %p254 = scmp.eq.s32.totalorder %s32, 0
      %p255 = por %p253, %p254
      %s257 = sadd.s32 %s256, 1
      %p260 = scmp.eq.s32.totalorder %s26, 3
      %p261 = scmp.ne.s32.totalorder %s256, %s258
      %p262 = scmp.eq.s32.totalorder %s26, 0
      %p263 = por %p261, %p262
      %p264 = scmp.ne.s32.totalorder %s256, %s258
      %p265 = scmp.eq.s32.totalorder %s31, 3
      %p266 = por %p264, %p265
      %p267 = scmp.ne.s32.totalorder %s258, %s259
      %p268 = scmp.eq.s32.totalorder %s31, 0
      %p269 = por %p267, %p268
      %p270 = scmp.ne.s32.totalorder %s258, %s259
      %p271 = scmp.eq.s32.totalorder %s32, 3
      %p272 = por %p270, %p271
      %p274 = scmp.ne.s32.totalorder %s259, %s273
      %p275 = scmp.eq.s32.totalorder %s32, 0
      %p276 = por %p274, %p275
      %s277 = ssub.s32 %s33, %s45
      %s278 = ssub.s32 %s34, %s41
      %s279 = sor.u32 %s277, %s278
      %p280 = scmp.eq.s32.totalorder %s279, 0
      %s282 = sadd.s32 %s281, 1
      %s283 = scalar_select %p280, %s281, %s282
      %p286 = pneg %p280
      %p287 = scmp.eq.s32.totalorder %s26, 3
      %p288 = por %p286, %p287
      %p289 = scmp.ne.s32.totalorder %s281, %s284
      %p290 = scmp.eq.s32.totalorder %s26, 0
      %p291 = por %p289, %p290
      %p292 = scmp.ne.s32.totalorder %s281, %s284
      %p293 = scmp.eq.s32.totalorder %s31, 3
      %p294 = por %p292, %p293
      %p295 = scmp.ne.s32.totalorder %s284, %s285
      %p296 = scmp.eq.s32.totalorder %s31, 0
      %p297 = por %p295, %p296
      %p298 = scmp.ne.s32.totalorder %s284, %s285
      %p299 = scmp.eq.s32.totalorder %s32, 3
      %p300 = por %p298, %p299
      %p302 = scmp.ne.s32.totalorder %s285, %s301
      %p303 = scmp.eq.s32.totalorder %s32, 0
      %p304 = por %p302, %p303
      %s305 = ssub.s32 %s33, %s45
      %p306 = scmp.eq.s32.totalorder %s305, 0
      %s308 = sadd.s32 %s307, 1
      %s309 = scalar_select %p306, %s307, %s308
      %p312 = pneg %p306
      %p313 = scmp.eq.s32.totalorder %s26, 3
      %p314 = por %p312, %p313
      %p315 = scmp.ne.s32.totalorder %s307, %s310
      %p316 = scmp.eq.s32.totalorder %s26, 0
      %p317 = por %p315, %p316
      %p318 = scmp.ne.s32.totalorder %s307, %s310
      %p319 = scmp.eq.s32.totalorder %s31, 3
      %p320 = por %p318, %p319
      %p321 = scmp.ne.s32.totalorder %s310, %s311
      %p322 = scmp.eq.s32.totalorder %s31, 0
      %p323 = por %p321, %p322
      %p324 = scmp.ne.s32.totalorder %s310, %s311
      %p325 = scmp.eq.s32.totalorder %s32, 3
      %p326 = por %p324, %p325
      %p328 = scmp.ne.s32.totalorder %s311, %s327
      %p329 = scmp.eq.s32.totalorder %s32, 0
      %p330 = por %p328, %p329
      %p331 = scmp.le.s32.totalorder 1, %s26
      %p332 = scmp.lt.s32.totalorder %s26, 5
      %p333 = pnand %p331, %p332
      %p334 = pneg %p333
      // Predicated region
      $region9: #{tpu_custom_call.1} parent=5 // pred_check
        _
      $region10: #{tpu_custom_call.1} parent=5 // pred_check_branch
        %336 = sbr.rel (%p333) target = $region12
      $region11: #{tpu_custom_call.1} parent=5 // pred_region
        %s337 = ssub.s32 %s26, 1
        // Predicated region
        $region13: #{tpu_custom_call.1} parent=11 // pred_check
          %p338 = pneg %p185
        $region14: #{tpu_custom_call.1} parent=11 // pred_check_branch
          %340 = sbr.rel (%p338) target = $region16
        $region15: #{tpu_custom_call.1} parent=11 // pred_region
          _
        $region16: #{tpu_custom_call.1} parent=11 // pred_fallthru
          _
        // Predicated region
        $region17: #{tpu_custom_call.1} parent=11 // pred_check
          %p341 = pneg %p206
        $region18: #{tpu_custom_call.1} parent=11 // pred_check_branch
          %343 = sbr.rel (%p341) target = $region20
        $region19: #{tpu_custom_call.1} parent=11 // pred_region
          _
        $region20: #{tpu_custom_call.1} parent=11 // pred_fallthru
          _
        // Predicated region
        $region21: #{tpu_custom_call.1} parent=11 // pred_check
          %p344 = pneg %p227
        $region22: #{tpu_custom_call.1} parent=11 // pred_check_branch
          %346 = sbr.rel (%p344) target = $region24
        $region23: #{tpu_custom_call.1} parent=11 // pred_region
          _
        $region24: #{tpu_custom_call.1} parent=11 // pred_fallthru
          _
        // Predicated region
        $region25: #{tpu_custom_call.1} parent=11 // pred_check
          %p347 = pneg %p248
        $region26: #{tpu_custom_call.1} parent=11 // pred_check_branch
          %349 = sbr.rel (%p347) target = $region28
        $region27: #{tpu_custom_call.1} parent=11 // pred_region
          _
        $region28: #{tpu_custom_call.1} parent=11 // pred_fallthru
          _
        // Predicated region
        $region29: #{tpu_custom_call.1} parent=11 // pred_check
          %p350 = pneg %p269
        $region30: #{tpu_custom_call.1} parent=11 // pred_check_branch
          %352 = sbr.rel (%p350) target = $region32
        $region31: #{tpu_custom_call.1} parent=11 // pred_region
          _
        $region32: #{tpu_custom_call.1} parent=11 // pred_fallthru
          _
      $region12: #{tpu_custom_call.1} parent=5 // pred_fallthru
        _
      %p353 = scmp.lt.s32.totalorder %s26, 4
      // Predicated region
      $region33: #{tpu_custom_call.1} parent=5 // pred_check
        %p354 = pneg %p353
      $region34: #{tpu_custom_call.1} parent=5 // pred_check_branch
        %356 = sbr.rel (%p354) target = $region36
      $region35: #{tpu_custom_call.1} parent=5 // pred_region
        // Predicated region
        $region37: #{tpu_custom_call.1} parent=35 // pred_check
          %p357 = pneg %p60
        $region38: #{tpu_custom_call.1} parent=35 // pred_check_branch
          %359 = sbr.rel (%p357) target = $region40
        $region39: #{tpu_custom_call.1} parent=35 // pred_region
          %s360 = smul.u32 2, %s34
          %p361 = scmp.lt.s32.totalorder %s33, 1
          %s362 = scalar_select %p361, %s33, 1
          %p363 = scmp.lt.s32.totalorder %s360, 3
          %s364 = scalar_select %p363, %s360, 3
          %s365 = smul.addr %s364, 8
          %s366 = smul.addr %s362, 32
          %s367 = sadd.s32 %s365, %s366
          %s368 = smul.addr %s367, 8
          %s369 = scalar_lea.vmem %s0, %s368
          %s370 = smul.u32 2, %s34
        $region40: #{tpu_custom_call.1} parent=35 // pred_fallthru
          _
        // Predicated region
        $region41: #{tpu_custom_call.1} parent=35 // pred_check
          %p371 = pneg %p96
        $region42: #{tpu_custom_call.1} parent=35 // pred_check_branch
          %373 = sbr.rel (%p371) target = $region44
        $region43: #{tpu_custom_call.1} parent=35 // pred_region
          %s374 = smul.u32 %s34, 2
          %s375 = ssub.s32 %s374, 1
          %p376 = scmp.gt.s32.totalorder %s375, 0
          %s377 = scalar_select %p376, %s375, 0
          %p378 = scmp.lt.s32.totalorder %s33, 1
          %s379 = scalar_select %p378, %s33, 1
          %p380 = scmp.lt.s32.totalorder %s377, 3
          %s381 = scalar_select %p380, %s377, 3
          %s382 = smul.addr %s381, 8
          %s383 = smul.addr %s379, 32
          %s384 = sadd.s32 %s382, %s383
          %s385 = smul.addr %s384, 8
          %s386 = scalar_lea.vmem %s1, %s385
          %s387 = smul.u32 %s34, 2
          %s388 = ssub.s32 %s387, 1
          %p389 = scmp.gt.s32.totalorder %s388, 0
          %s390 = scalar_select %p389, %s388, 0
        $region44: #{tpu_custom_call.1} parent=35 // pred_fallthru
          _
        // Predicated region
        $region45: #{tpu_custom_call.1} parent=35 // pred_check
          %p391 = pneg %p132
        $region46: #{tpu_custom_call.1} parent=35 // pred_check_branch
          %393 = sbr.rel (%p391) target = $region48
        $region47: #{tpu_custom_call.1} parent=35 // pred_region
          %s394 = sand.u32 %s122, 1
          %s395 = scalar_lea.sflag [#allocation7], %s394
          %s396 = sand.u32 %s122, 1
          %s397 = smul.addr %s396, 64
          %s398 = scalar_lea.vmem [#allocation6], %s397
          %s399 = smul.u32 %s34, 2
          %s400 = sadd.s32 %s399, 2
          %p401 = scmp.lt.s32.totalorder %s400, 3
          %s402 = scalar_select %p401, %s400, 3
          %s404 = ssub.s32 1024, 1024
          %405 = vsyncadd %s395, %s404
          %s406 = smul.addr %s402, 8
          %s407 = smul.addr %s33, 32
          %s408 = sadd.s32 %s406, %s407
          %s409 = smul.addr %s408, 128
          %s410 = scalar_lea.hbm %s2, %s409
          %s411 = sshll.u32 %s398, 4
          %s412 = int_to_ptr.vmem [resolvable:$true] %s411
          %417 = dma.hbm_to_vmem [thread:$0]  %s410, 1024, %s412, %s395, 128, 128, 8
        $region48: #{tpu_custom_call.1} parent=35 // pred_fallthru
          _
        // Predicated region
        $region49: #{tpu_custom_call.1} parent=35 // pred_check
          %p418 = pneg %p158
        $region50: #{tpu_custom_call.1} parent=35 // pred_check_branch
          %420 = sbr.rel (%p418) target = $region52
        $region51: #{tpu_custom_call.1} parent=35 // pred_region
          %p421 = scmp.lt.s32.totalorder %s33, 1
          %s422 = scalar_select %p421, %s33, 1
          %s423 = smul.addr %s422, 20
          %s424 = smul.addr %s423, 8
          %s425 = scalar_lea.vmem %s3, %s424
        $region52: #{tpu_custom_call.1} parent=35 // pred_fallthru
          _
      $region36: #{tpu_custom_call.1} parent=5 // pred_fallthru
        _
      %p426 = scmp.le.s32.totalorder 1, %s26
      %p427 = scmp.lt.s32.totalorder %s26, 5
      %p428 = pnand %p426, %p427
      %p429 = pneg %p428
      // Predicated region
      $region53: #{tpu_custom_call.1} parent=5 // pred_check
        _
      $region54: #{tpu_custom_call.1} parent=5 // pred_check_branch
        %431 = sbr.rel (%p428) target = $region56
      $region55: #{tpu_custom_call.1} parent=5 // pred_region
        %s432 = ssub.s32 %s26, 1
        %s433 = sand.u32 %s125, 1
        %s434 = scalar_lea.sflag [#allocation7], %s433
        %s435 = sand.u32 %s125, 1
        %s436 = smul.addr %s435, 64
        %s437 = scalar_lea.vmem [#allocation6], %s436
        // Predicated region
        $region57: #{tpu_custom_call.1} parent=55 // pred_check
          %p438 = pneg %p138
        $region58: #{tpu_custom_call.1} parent=55 // pred_check_branch
          %440 = sbr.rel (%p438) target = $region60
        $region59: #{tpu_custom_call.1} parent=55 // pred_region
          %441 = dma.done %s434, 1024
        $region60: #{tpu_custom_call.1} parent=55 // pred_fallthru
          _
        %s442 = smul.u32 2, %s36
        %p443 = scmp.lt.s32.totalorder %s35, 1
        %s444 = scalar_select %p443, %s35, 1
        %p445 = scmp.lt.s32.totalorder %s442, 3
        %s446 = scalar_select %p445, %s442, 3
        %s447 = smul.addr %s446, 8
        %s448 = smul.addr %s444, 32
        %s449 = sadd.s32 %s447, %s448
        %s450 = smul.addr %s449, 8
        %s451 = scalar_lea.vmem %s0, %s450
        %p452 = pneg %p66
        %p453 = pneg %p63
        %s454 = smul.u32 %s36, 2
        %s455 = ssub.s32 %s454, 1
        %p456 = scmp.gt.s32.totalorder %s455, 0
        %s457 = scalar_select %p456, %s455, 0
        %p458 = scmp.lt.s32.totalorder %s35, 1
        %s459 = scalar_select %p458, %s35, 1
        %p460 = scmp.lt.s32.totalorder %s457, 3
        %s461 = scalar_select %p460, %s457, 3
        %s462 = smul.addr %s461, 8
        %s463 = smul.addr %s459, 32
        %s464 = sadd.s32 %s462, %s463
        %s465 = smul.addr %s464, 8
        %s466 = scalar_lea.vmem %s1, %s465
        %p467 = pneg %p102
        %p468 = pneg %p99
        %s469 = sand.u32 %s125, 1
        %s470 = scalar_lea.sflag [#allocation7], %s469
        %s471 = sand.u32 %s125, 1
        %s472 = smul.addr %s471, 64
        %s473 = scalar_lea.vmem [#allocation6], %s472
        %p474 = pneg %p138
        %p475 = pneg %p135
        %p476 = scmp.lt.s32.totalorder %s35, 1
        %s477 = scalar_select %p476, %s35, 1
        %s478 = smul.addr %s477, 20
        %s479 = smul.addr %s478, 8
        %s480 = scalar_lea.vmem %s3, %s479
        %p481 = pneg %p164
        %p482 = pneg %p161
        %p483 = pneg %p185
        %p484 = pneg %p182
        %p485 = pneg %p206
        %p486 = pneg %p203
        %p487 = pneg %p227
        %p488 = pneg %p224
        %p489 = pneg %p248
        %p490 = pneg %p245
        %p491 = pneg %p269
        %p492 = pneg %p266
        %p493 = pneg %p297
        %p494 = pneg %p294
        %s495 = sand.u32 %s284, 1
        %s496 = scalar_lea.sflag [#allocation8], %s495
        %s497 = sand.u32 %s284, 1
        %s498 = smul.addr %s497, 128
        %s499 = scalar_lea.vmem [#allocation9], %s498
        %p500 = pneg %p323
        %p501 = pneg %p320
        %s502 = sand.u32 %s310, 1
        %s503 = scalar_lea.sflag [#allocation11], %s502
        %s504 = sand.u32 %s310, 1
        %s505 = smul.addr %s504, 2
        %s506 = scalar_lea.vmem [#allocation10], %s505
        %s507 = smul.u32 2, %s36
        %p508 = scmp.lt.s32.totalorder %s35, 1
        %s509 = scalar_select %p508, %s35, 1
        %p510 = scmp.lt.s32.totalorder %s507, 3
        %s511 = scalar_select %p510, %s507, 3
        %s512 = smul.addr %s511, 8
        %s513 = smul.addr %s509, 32
        %s514 = sadd.s32 %s512, %s513
        %s515 = smul.addr %s514, 8
        %s516 = scalar_lea.vmem %s0, %s515
        %s517 = smul.u32 2, %s36
        %s518 = smul.u32 %s36, 2
        %s519 = ssub.s32 %s518, 1
        %p520 = scmp.gt.s32.totalorder %s519, 0
        %s521 = scalar_select %p520, %s519, 0
        %p522 = scmp.lt.s32.totalorder %s35, 1
        %s523 = scalar_select %p522, %s35, 1
        %p524 = scmp.lt.s32.totalorder %s521, 3
        %s525 = scalar_select %p524, %s521, 3
        %s526 = smul.addr %s525, 8
        %s527 = smul.addr %s523, 32
        %s528 = sadd.s32 %s526, %s527
        %s529 = smul.addr %s528, 8
        %s530 = scalar_lea.vmem %s1, %s529
        %s531 = smul.u32 %s36, 2
        %s532 = ssub.s32 %s531, 1
        %p533 = scmp.gt.s32.totalorder %s532, 0
        %s534 = scalar_select %p533, %s532, 0
        %s535 = smul.u32 %s36, 2
        %s536 = sadd.s32 %s535, 2
        %p537 = scmp.lt.s32.totalorder %s536, 3
        %s538 = scalar_select %p537, %s536, 3
        %p539 = scmp.lt.s32.totalorder %s35, 1
        %s540 = scalar_select %p539, %s35, 1
        %s541 = smul.addr %s540, 20
        %s542 = smul.addr %s541, 8
        %s543 = scalar_lea.vmem %s3, %s542
        %s544 = smul.u32 2, %s36
        %s546 = smul.u32 %s36, 2
        %p547 = scmp.eq.s32.totalorder %s36, 0
        // Predicated region
        $region61: #{tpu_custom_call.1} parent=55 // pred_check
          %p548 = pneg %p547
        $region62: #{tpu_custom_call.1} parent=55 // pred_check_branch
          %550 = sbr.rel (%p548) target = $region64
        $region63: #{tpu_custom_call.1} parent=55 // pred_region
          %vm551 = vcmask 261120
          %552 = vst.msk [vmem:[#allocation2] sm:$0xff] %vm551, 0.0
          %vm553 = vcmask 254976
          %554 = vst.msk [vmem:[#allocation2 + $0x8] sm:$0x3] %vm553, 0.0
          %555 = vst.msk [vmem:[#allocation2 + $0xa0] sm:$0xff] %vm551, 0.0
          %556 = vst.msk [vmem:[#allocation2 + $0xa8] sm:$0x3] %vm553, 0.0
          %557 = vst.msk [vmem:[#allocation2 + $0x140] sm:$0xff] %vm551, 0.0
          %558 = vst.msk [vmem:[#allocation2 + $0x148] sm:$0x3] %vm553, 0.0
          %559 = vst.msk [vmem:[#allocation2 + $0x1e0] sm:$0xff] %vm551, 0.0
          %560 = vst.msk [vmem:[#allocation2 + $0x1e8] sm:$0x3] %vm553, 0.0
          %s561 = scalar_lea.vmem [#allocation2], 144
          %562 = vst.msk [vmem:[%s561] sm:$0xff] %vm551, 0.0
          %563 = vst.msk [vmem:[%s561 + $0x8] sm:$0x3] %vm553, 0.0
          %564 = vst.msk [vmem:[%s561 + $0xa0] sm:$0xff] %vm551, 0.0
          %565 = vst.msk [vmem:[%s561 + $0xa8] sm:$0x3] %vm553, 0.0
          %566 = vst.msk [vmem:[%s561 + $0x140] sm:$0xff] %vm551, 0.0
          %567 = vst.msk [vmem:[%s561 + $0x148] sm:$0x3] %vm553, 0.0
          %568 = vst.msk [vmem:[%s561 + $0x1e0] sm:$0xff] %vm551, 0.0
          %569 = vst.msk [vmem:[%s561 + $0x1e8] sm:$0x3] %vm553, 0.0
          %s570 = scalar_lea.vmem [#allocation2], 16
          %vm571 = vcmask 253952
          %572 = vst.msk [vmem:[%s570] sm:$0x1] %vm571, 0.0
          %573 = vst.msk [vmem:[%s570 + $0x10] sm:$0x1] %vm571, 0.0
          %574 = vst.msk [vmem:[%s570 + $0x20] sm:$0x1] %vm571, 0.0
          %575 = vst.msk [vmem:[%s570 + $0x30] sm:$0x1] %vm571, 0.0
          %576 = vst.msk [vmem:[%s570 + $0x40] sm:$0x1] %vm571, 0.0
          %577 = vst.msk [vmem:[%s570 + $0x50] sm:$0x1] %vm571, 0.0
          %578 = vst.msk [vmem:[%s570 + $0x60] sm:$0x1] %vm571, 0.0
          %579 = vst.msk [vmem:[%s570 + $0x70] sm:$0x1] %vm571, 0.0
          %580 = vst.msk [vmem:[%s570 + $0xa0] sm:$0x1] %vm571, 0.0
          %581 = vst.msk [vmem:[%s570 + $0xb0] sm:$0x1] %vm571, 0.0
          %582 = vst.msk [vmem:[%s570 + $0xc0] sm:$0x1] %vm571, 0.0
          %583 = vst.msk [vmem:[%s570 + $0xd0] sm:$0x1] %vm571, 0.0
          %584 = vst.msk [vmem:[%s570 + $0xe0] sm:$0x1] %vm571, 0.0
          %585 = vst.msk [vmem:[%s570 + $0xf0] sm:$0x1] %vm571, 0.0
          %586 = vst.msk [vmem:[%s570 + $0x100] sm:$0x1] %vm571, 0.0
          %587 = vst.msk [vmem:[%s570 + $0x110] sm:$0x1] %vm571, 0.0
          %588 = vst.msk [vmem:[%s570 + $0x140] sm:$0x1] %vm571, 0.0
          %589 = vst.msk [vmem:[%s570 + $0x150] sm:$0x1] %vm571, 0.0
          %590 = vst.msk [vmem:[%s570 + $0x160] sm:$0x1] %vm571, 0.0
          %591 = vst.msk [vmem:[%s570 + $0x170] sm:$0x1] %vm571, 0.0
          %592 = vst.msk [vmem:[%s570 + $0x180] sm:$0x1] %vm571, 0.0
          %593 = vst.msk [vmem:[%s570 + $0x190] sm:$0x1] %vm571, 0.0
          %594 = vst.msk [vmem:[%s570 + $0x1a0] sm:$0x1] %vm571, 0.0
          %595 = vst.msk [vmem:[%s570 + $0x1b0] sm:$0x1] %vm571, 0.0
          %596 = vst.msk [vmem:[%s570 + $0x1e0] sm:$0x1] %vm571, 0.0
          %597 = vst.msk [vmem:[%s570 + $0x1f0] sm:$0x1] %vm571, 0.0
          %598 = vst.msk [vmem:[%s570 + $0x200] sm:$0x1] %vm571, 0.0
          %599 = vst.msk [vmem:[%s570 + $0x210] sm:$0x1] %vm571, 0.0
          %600 = vst.msk [vmem:[%s570 + $0x220] sm:$0x1] %vm571, 0.0
          %601 = vst.msk [vmem:[%s570 + $0x230] sm:$0x1] %vm571, 0.0
          %602 = vst.msk [vmem:[%s570 + $0x240] sm:$0x1] %vm571, 0.0
          %603 = vst.msk [vmem:[%s570 + $0x250] sm:$0x1] %vm571, 0.0
          %604 = vst.msk [vmem:[%s570 + $0x9] sm:$0x1] %vm571, 0.0
          %605 = vst.msk [vmem:[%s570 + $0x19] sm:$0x1] %vm571, 0.0
          %606 = vst.msk [vmem:[%s570 + $0x29] sm:$0x1] %vm571, 0.0
          %607 = vst.msk [vmem:[%s570 + $0x39] sm:$0x1] %vm571, 0.0
          %608 = vst.msk [vmem:[%s570 + $0x49] sm:$0x1] %vm571, 0.0
          %609 = vst.msk [vmem:[%s570 + $0x59] sm:$0x1] %vm571, 0.0
          %610 = vst.msk [vmem:[%s570 + $0x69] sm:$0x1] %vm571, 0.0
          %611 = vst.msk [vmem:[%s570 + $0x79] sm:$0x1] %vm571, 0.0
          %612 = vst.msk [vmem:[%s570 + $0xa9] sm:$0x1] %vm571, 0.0
          %613 = vst.msk [vmem:[%s570 + $0xb9] sm:$0x1] %vm571, 0.0
          %614 = vst.msk [vmem:[%s570 + $0xc9] sm:$0x1] %vm571, 0.0
          %615 = vst.msk [vmem:[%s570 + $0xd9] sm:$0x1] %vm571, 0.0
          %616 = vst.msk [vmem:[%s570 + $0xe9] sm:$0x1] %vm571, 0.0
          %617 = vst.msk [vmem:[%s570 + $0xf9] sm:$0x1] %vm571, 0.0
          %618 = vst.msk [vmem:[%s570 + $0x109] sm:$0x1] %vm571, 0.0
          %619 = vst.msk [vmem:[%s570 + $0x119] sm:$0x1] %vm571, 0.0
          %620 = vst.msk [vmem:[%s570 + $0x149] sm:$0x1] %vm571, 0.0
          %621 = vst.msk [vmem:[%s570 + $0x159] sm:$0x1] %vm571, 0.0
          %622 = vst.msk [vmem:[%s570 + $0x169] sm:$0x1] %vm571, 0.0
          %623 = vst.msk [vmem:[%s570 + $0x179] sm:$0x1] %vm571, 0.0
          %624 = vst.msk [vmem:[%s570 + $0x189] sm:$0x1] %vm571, 0.0
          %625 = vst.msk [vmem:[%s570 + $0x199] sm:$0x1] %vm571, 0.0
          %626 = vst.msk [vmem:[%s570 + $0x1a9] sm:$0x1] %vm571, 0.0
          %627 = vst.msk [vmem:[%s570 + $0x1b9] sm:$0x1] %vm571, 0.0
          %628 = vst.msk [vmem:[%s570 + $0x1e9] sm:$0x1] %vm571, 0.0
          %629 = vst.msk [vmem:[%s570 + $0x1f9] sm:$0x1] %vm571, 0.0
          %630 = vst.msk [vmem:[%s570 + $0x209] sm:$0x1] %vm571, 0.0
          %631 = vst.msk [vmem:[%s570 + $0x219] sm:$0x1] %vm571, 0.0
          %632 = vst.msk [vmem:[%s570 + $0x229] sm:$0x1] %vm571, 0.0
          %633 = vst.msk [vmem:[%s570 + $0x239] sm:$0x1] %vm571, 0.0
          %634 = vst.msk [vmem:[%s570 + $0x249] sm:$0x1] %vm571, 0.0
          %635 = vst.msk [vmem:[%s570 + $0x259] sm:$0x1] %vm571, 0.0
          %v636 = vld [vmem:[%s543] sm:$0xff]
          %v637 = vld [vmem:[%s543 + $0x10] sm:$0xff]
          %v638 = vld [vmem:[%s543 + $0x20] sm:$0xff]
          %v639 = vld [vmem:[%s543 + $0x30] sm:$0xff]
          %v640 = vld [vmem:[%s543 + $0x40] sm:$0xff]
          %v641 = vld [vmem:[%s543 + $0x50] sm:$0xff]
          %v642 = vld [vmem:[%s543 + $0x60] sm:$0xff]
          %v643 = vld [vmem:[%s543 + $0x70] sm:$0xff]
          %v644 = vpack.c.bf16 %v637, %v636
          %v645 = vpack.c.bf16 %v639, %v638
          %v646 = vpack.c.bf16 %v641, %v640
          %v647 = vpack.c.bf16 %v643, %v642
          %vm648 = vcmask 64512
          %649 = vst.msk [vmem:[#allocation4] sm:$0xff] %vm648, %v644
          %650 = vst.msk [vmem:[#allocation4 + $0x8] sm:$0xff] %vm648, %v645
          %651 = vst.msk [vmem:[#allocation4 + $0x10] sm:$0xff] %vm648, %v646
          %652 = vst.msk [vmem:[#allocation4 + $0x18] sm:$0xff] %vm648, %v647
          %v653 = vld [vmem:[%s543 + $0x1] sm:$0xff]
          %v654 = vld [vmem:[%s543 + $0x11] sm:$0xff]
          %v655 = vld [vmem:[%s543 + $0x21] sm:$0xff]
          %v656 = vld [vmem:[%s543 + $0x31] sm:$0xff]
          %v657 = vld [vmem:[%s543 + $0x41] sm:$0xff]
          %v658 = vld [vmem:[%s543 + $0x51] sm:$0xff]
          %v659 = vld [vmem:[%s543 + $0x61] sm:$0xff]
          %v660 = vld [vmem:[%s543 + $0x71] sm:$0xff]
          %v661 = vpack.c.bf16 %v654, %v653
          %v662 = vpack.c.bf16 %v656, %v655
          %v663 = vpack.c.bf16 %v658, %v657
          %v664 = vpack.c.bf16 %v660, %v659
          %669 = vrot.lane.b32.xlu0 %v661, 8
          %v670 = vpop.permute.xlu0 %669
          %671 = vrot.lane.b32.xlu0 %v662, 8
          %v672 = vpop.permute.xlu0 %671
          %673 = vrot.lane.b32.xlu0 %v663, 8
          %v674 = vpop.permute.xlu0 %673
          %675 = vrot.lane.b32.xlu0 %v664, 8
          %v676 = vpop.permute.xlu0 %675
          %vm681 = vcmask 130112
          %682 = vst.msk [vmem:[#allocation4] sm:$0xff] %vm681, %v670
          %683 = vst.msk [vmem:[#allocation4 + $0x8] sm:$0xff] %vm681, %v672
          %684 = vst.msk [vmem:[#allocation4 + $0x10] sm:$0xff] %vm681, %v674
          %685 = vst.msk [vmem:[#allocation4 + $0x18] sm:$0xff] %vm681, %v676
          %v686 = vld [vmem:[%s543 + $0x2] sm:$0xff]
          %v687 = vld [vmem:[%s543 + $0x12] sm:$0xff]
          %v688 = vld [vmem:[%s543 + $0x22] sm:$0xff]
          %v689 = vld [vmem:[%s543 + $0x32] sm:$0xff]
          %v690 = vld [vmem:[%s543 + $0x42] sm:$0xff]
          %v691 = vld [vmem:[%s543 + $0x52] sm:$0xff]
          %v692 = vld [vmem:[%s543 + $0x62] sm:$0xff]
          %v693 = vld [vmem:[%s543 + $0x72] sm:$0xff]
          %v694 = vpack.c.bf16 %v687, %v686
          %v695 = vpack.c.bf16 %v689, %v688
          %v696 = vpack.c.bf16 %v691, %v690
          %v697 = vpack.c.bf16 %v693, %v692
          %702 = vrot.lane.b32.xlu0 %v694, 16
          %v703 = vpop.permute.xlu0 %702
          %704 = vrot.lane.b32.xlu0 %v695, 16
          %v705 = vpop.permute.xlu0 %704
          %706 = vrot.lane.b32.xlu0 %v696, 16
          %v707 = vpop.permute.xlu0 %706
          %708 = vrot.lane.b32.xlu0 %v697, 16
          %v709 = vpop.permute.xlu0 %708
          %vm714 = vcmask 195712
          %715 = vst.msk [vmem:[#allocation4] sm:$0xff] %vm714, %v703
          %716 = vst.msk [vmem:[#allocation4 + $0x8] sm:$0xff] %vm714, %v705
          %717 = vst.msk [vmem:[#allocation4 + $0x10] sm:$0xff] %vm714, %v707
          %718 = vst.msk [vmem:[#allocation4 + $0x18] sm:$0xff] %vm714, %v709
          %s719 = scalar_lea.vmem %s543, 16
          %v720 = vld [vmem:[%s719] sm:$0xff]
          %v721 = vld [vmem:[%s719 + $0x10] sm:$0xff]
          %v722 = vld [vmem:[%s719 + $0x20] sm:$0xff]
          %v723 = vld [vmem:[%s719 + $0x30] sm:$0xff]
          %v724 = vld [vmem:[%s719 + $0x40] sm:$0xff]
          %v725 = vld [vmem:[%s719 + $0x50] sm:$0xff]
          %v726 = vld [vmem:[%s719 + $0x60] sm:$0xff]
          %v727 = vld [vmem:[%s719 + $0x70] sm:$0xff]
          %v728 = vpack.c.bf16 %v721, %v720
          %v729 = vpack.c.bf16 %v723, %v722
          %v730 = vpack.c.bf16 %v725, %v724
          %v731 = vpack.c.bf16 %v727, %v726
          %736 = vrot.lane.b32.xlu0 %v728, 24
          %v737 = vpop.permute.xlu0 %736
          %738 = vrot.lane.b32.xlu0 %v729, 24
          %v739 = vpop.permute.xlu0 %738
          %740 = vrot.lane.b32.xlu0 %v730, 24
          %v741 = vpop.permute.xlu0 %740
          %742 = vrot.lane.b32.xlu0 %v731, 24
          %v743 = vpop.permute.xlu0 %742
          %vm748 = vcmask 261312
          %749 = vst.msk [vmem:[#allocation4] sm:$0xff] %vm748, %v737
          %750 = vst.msk [vmem:[#allocation4 + $0x8] sm:$0xff] %vm748, %v739
          %751 = vst.msk [vmem:[#allocation4 + $0x10] sm:$0xff] %vm748, %v741
          %752 = vst.msk [vmem:[#allocation4 + $0x18] sm:$0xff] %vm748, %v743
          %v753 = vld [vmem:[%s719 + $0x1] sm:$0xff]
          %v754 = vld [vmem:[%s719 + $0x11] sm:$0xff]
          %v755 = vld [vmem:[%s719 + $0x21] sm:$0xff]
          %v756 = vld [vmem:[%s719 + $0x31] sm:$0xff]
          %v757 = vld [vmem:[%s719 + $0x41] sm:$0xff]
          %v758 = vld [vmem:[%s719 + $0x51] sm:$0xff]
          %v759 = vld [vmem:[%s719 + $0x61] sm:$0xff]
          %v760 = vld [vmem:[%s719 + $0x71] sm:$0xff]
          %v761 = vpack.c.bf16 %v754, %v753
          %v762 = vpack.c.bf16 %v756, %v755
          %v763 = vpack.c.bf16 %v758, %v757
          %v764 = vpack.c.bf16 %v760, %v759
          %769 = vrot.lane.b32.xlu0 %v761, 32
          %v770 = vpop.permute.xlu0 %769
          %771 = vrot.lane.b32.xlu0 %v762, 32
          %v772 = vpop.permute.xlu0 %771
          %773 = vrot.lane.b32.xlu0 %v763, 32
          %v774 = vpop.permute.xlu0 %773
          %775 = vrot.lane.b32.xlu0 %v764, 32
          %v776 = vpop.permute.xlu0 %775
          %vm781 = vcmask 326912
          %782 = vst.msk [vmem:[#allocation4] sm:$0xff] %vm781, %v770
          %783 = vst.msk [vmem:[#allocation4 + $0x8] sm:$0xff] %vm781, %v772
          %784 = vst.msk [vmem:[#allocation4 + $0x10] sm:$0xff] %vm781, %v774
          %785 = vst.msk [vmem:[#allocation4 + $0x18] sm:$0xff] %vm781, %v776
          %v786 = vld [vmem:[%s719 + $0x2] sm:$0xff]
          %v787 = vld [vmem:[%s719 + $0x12] sm:$0xff]
          %v788 = vld [vmem:[%s719 + $0x22] sm:$0xff]
          %v789 = vld [vmem:[%s719 + $0x32] sm:$0xff]
          %v790 = vld [vmem:[%s719 + $0x42] sm:$0xff]
          %v791 = vld [vmem:[%s719 + $0x52] sm:$0xff]
          %v792 = vld [vmem:[%s719 + $0x62] sm:$0xff]
          %v793 = vld [vmem:[%s719 + $0x72] sm:$0xff]
          %v794 = vpack.c.bf16 %v787, %v786
          %v795 = vpack.c.bf16 %v789, %v788
          %v796 = vpack.c.bf16 %v791, %v790
          %v797 = vpack.c.bf16 %v793, %v792
          %802 = vrot.lane.b32.xlu0 %v794, 40
          %v803 = vpop.permute.xlu0 %802
          %804 = vrot.lane.b32.xlu0 %v795, 40
          %v805 = vpop.permute.xlu0 %804
          %806 = vrot.lane.b32.xlu0 %v796, 40
          %v807 = vpop.permute.xlu0 %806
          %808 = vrot.lane.b32.xlu0 %v797, 40
          %v809 = vpop.permute.xlu0 %808
          %vm814 = vcmask 392512
          %815 = vst.msk [vmem:[#allocation4] sm:$0xff] %vm814, %v803
          %816 = vst.msk [vmem:[#allocation4 + $0x8] sm:$0xff] %vm814, %v805
          %817 = vst.msk [vmem:[#allocation4 + $0x10] sm:$0xff] %vm814, %v807
          %818 = vst.msk [vmem:[#allocation4 + $0x18] sm:$0xff] %vm814, %v809
          %s819 = scalar_lea.vmem %s543, 32
          %v820 = vld [vmem:[%s819] sm:$0xff]
          %v821 = vld [vmem:[%s819 + $0x10] sm:$0xff]
          %v822 = vld [vmem:[%s819 + $0x20] sm:$0xff]
          %v823 = vld [vmem:[%s819 + $0x30] sm:$0xff]
          %v824 = vld [vmem:[%s819 + $0x40] sm:$0xff]
          %v825 = vld [vmem:[%s819 + $0x50] sm:$0xff]
          %v826 = vld [vmem:[%s819 + $0x60] sm:$0xff]
          %v827 = vld [vmem:[%s819 + $0x70] sm:$0xff]
          %v828 = vpack.c.bf16 %v821, %v820
          %v829 = vpack.c.bf16 %v823, %v822
          %v830 = vpack.c.bf16 %v825, %v824
          %v831 = vpack.c.bf16 %v827, %v826
          %836 = vrot.lane.b32.xlu0 %v828, 48
          %v837 = vpop.permute.xlu0 %836
          %838 = vrot.lane.b32.xlu0 %v829, 48
          %v839 = vpop.permute.xlu0 %838
          %840 = vrot.lane.b32.xlu0 %v830, 48
          %v841 = vpop.permute.xlu0 %840
          %842 = vrot.lane.b32.xlu0 %v831, 48
          %v843 = vpop.permute.xlu0 %842
          %vm848 = vcmask 458112
          %849 = vst.msk [vmem:[#allocation4] sm:$0xff] %vm848, %v837
          %850 = vst.msk [vmem:[#allocation4 + $0x8] sm:$0xff] %vm848, %v839
          %851 = vst.msk [vmem:[#allocation4 + $0x10] sm:$0xff] %vm848, %v841
          %852 = vst.msk [vmem:[#allocation4 + $0x18] sm:$0xff] %vm848, %v843
          %v853 = vld [vmem:[%s819 + $0x1] sm:$0xff]
          %v854 = vld [vmem:[%s819 + $0x11] sm:$0xff]
          %v855 = vld [vmem:[%s819 + $0x21] sm:$0xff]
          %v856 = vld [vmem:[%s819 + $0x31] sm:$0xff]
          %v857 = vld [vmem:[%s819 + $0x41] sm:$0xff]
          %v858 = vld [vmem:[%s819 + $0x51] sm:$0xff]
          %v859 = vld [vmem:[%s819 + $0x61] sm:$0xff]
          %v860 = vld [vmem:[%s819 + $0x71] sm:$0xff]
          %v861 = vpack.c.bf16 %v854, %v853
          %v862 = vpack.c.bf16 %v856, %v855
          %v863 = vpack.c.bf16 %v858, %v857
          %v864 = vpack.c.bf16 %v860, %v859
          %869 = vrot.lane.b32.xlu0 %v861, 56
          %v870 = vpop.permute.xlu0 %869
          %871 = vrot.lane.b32.xlu0 %v862, 56
          %v872 = vpop.permute.xlu0 %871
          %873 = vrot.lane.b32.xlu0 %v863, 56
          %v874 = vpop.permute.xlu0 %873
          %875 = vrot.lane.b32.xlu0 %v864, 56
          %v876 = vpop.permute.xlu0 %875
          %vm881 = vcmask 523712
          %882 = vst.msk [vmem:[#allocation4] sm:$0xff] %vm881, %v870
          %883 = vst.msk [vmem:[#allocation4 + $0x8] sm:$0xff] %vm881, %v872
          %884 = vst.msk [vmem:[#allocation4 + $0x10] sm:$0xff] %vm881, %v874
          %885 = vst.msk [vmem:[#allocation4 + $0x18] sm:$0xff] %vm881, %v876
          %v886 = vld [vmem:[%s819 + $0x2] sm:$0xff]
          %v887 = vld [vmem:[%s819 + $0x12] sm:$0xff]
          %v888 = vld [vmem:[%s819 + $0x22] sm:$0xff]
          %v889 = vld [vmem:[%s819 + $0x32] sm:$0xff]
          %v890 = vld [vmem:[%s819 + $0x42] sm:$0xff]
          %v891 = vld [vmem:[%s819 + $0x52] sm:$0xff]
          %v892 = vld [vmem:[%s819 + $0x62] sm:$0xff]
          %v893 = vld [vmem:[%s819 + $0x72] sm:$0xff]
          %v894 = vpack.c.bf16 %v887, %v886
          %v895 = vpack.c.bf16 %v889, %v888
          %v896 = vpack.c.bf16 %v891, %v890
          %v897 = vpack.c.bf16 %v893, %v892
          %902 = vrot.lane.b32.xlu0 %v894, 64
          %v903 = vpop.permute.xlu0 %902
          %904 = vrot.lane.b32.xlu0 %v895, 64
          %v905 = vpop.permute.xlu0 %904
          %906 = vrot.lane.b32.xlu0 %v896, 64
          %v907 = vpop.permute.xlu0 %906
          %908 = vrot.lane.b32.xlu0 %v897, 64
          %v909 = vpop.permute.xlu0 %908
          %vm914 = vcmask 589312
          %915 = vst.msk [vmem:[#allocation4] sm:$0xff] %vm914, %v903
          %916 = vst.msk [vmem:[#allocation4 + $0x8] sm:$0xff] %vm914, %v905
          %917 = vst.msk [vmem:[#allocation4 + $0x10] sm:$0xff] %vm914, %v907
          %918 = vst.msk [vmem:[#allocation4 + $0x18] sm:$0xff] %vm914, %v909
          %v919 = vld [vmem:[#allocation4] sm:$0xff]
          %v920 = vld [vmem:[#allocation4 + $0x8] sm:$0xff]
          %v921 = vld [vmem:[#allocation4 + $0x10] sm:$0xff]
          %v922 = vld [vmem:[#allocation4 + $0x18] sm:$0xff]
          %v923 = vld [vmem:[%s4] sm:$0xf]
          %v924 = vld [vmem:[%s4 + $0x4] sm:$0xf]
          %v925 = vld [vmem:[%s4 + $0x8] sm:$0xf]
          %v926 = vld [vmem:[%s4 + $0xc] sm:$0xf]
          %v927 = vld [vmem:[%s4 + $0x10] sm:$0xf]
          %v928 = vld [vmem:[%s4 + $0x14] sm:$0xf]
          %v929 = vld [vmem:[%s4 + $0x18] sm:$0xf]
          %v930 = vld [vmem:[%s4 + $0x1c] sm:$0xf]
          %v931 = vld [vmem:[%s4 + $0x20] sm:$0xf]
          %v932 = vld [vmem:[%s5] sm:$0x1]
          %v934 = vlaneseq
          %v935 = vshrl.u32 %v934, 7
          %v936 = vsub.s32 0, %v935
          %v937 = vrot.slane %v932, %v936
          %v948 = vunpack.c.l.b16 %v923
          %v949 = vunpack.c.l.b16 %v924
          %v950 = vunpack.c.l.b16 %v925
          %v951 = vunpack.c.l.b16 %v926
          %v952 = vunpack.c.l.b16 %v927
          %v953 = vunpack.c.l.b16 %v928
          %v954 = vunpack.c.l.b16 %v929
          %v955 = vunpack.c.l.b16 %v930
          %v956 = vunpack.c.l.b16 %v931
          %v957 = vpack.c.b16 %v949, %v948
          %v958 = vpack.c.b16 %v951, %v950
          %v959 = vpack.c.b16 %v953, %v952
          %v960 = vpack.c.b16 %v955, %v954
          %v961 = vpack.c.b16 %v956, %v956
          %vm966 = vcmask 588800
          %v968 = vsel %vm966, %v919, 0
          %v971 = vsel %vm966, %v920, 0
          %v974 = vsel %vm966, %v921, 0
          %v977 = vsel %vm966, %v922, 0
          %vm979 = vcmask 1043456
          %v981 = vsel %vm979, %v961, 0
          %983 = vmatprep.subr.bf16.mxu0 0
          %984 = vmatpush1.bf16.msra.mxu0 %v957
          %985 = vmatprep.subr.bf16.mxu0 0
          %986 = vmatpush1.bf16.msra.mxu0 %v958
          %987 = vmatprep.subr.bf16.mxu0 0
          %988 = vmatpush1.bf16.msra.mxu0 %v959
          %989 = vmatprep.subr.bf16.mxu0 0
          %990 = vmatpush1.bf16.msra.mxu0 %v960
          %991 = vmatprep.subr.bf16.mxu0 0
          %992 = vmatpush1.bf16.msra.mxu0 %v981
          %993 = vmatprep.subr.bf16.mxu0 0
          %994 = vmatpush1.bf16.msra.mxu0 0
          %995 = vmatprep.subr.bf16.mxu0 0
          %996 = vmatpush1.bf16.msra.mxu0 0
          %997 = vmatprep.subr.bf16.mxu0 0
          %998 = vmatpush1.bf16.msra.mxu0 0
          %999 = vmatprep.subr.bf16.mxu0 0
          %1000 = vmatpush1.bf16.msra.mxu0 0
          %1001 = vmatprep.subr.bf16.mxu0 0
          %1002 = vmatpush1.bf16.msra.mxu0 0
          %1003 = vmatprep.subr.bf16.mxu0 0
          %1004 = vmatpush1.bf16.msra.mxu0 0
          %1005 = vmatprep.subr.bf16.mxu0 0
          %1006 = vmatpush1.bf16.msra.mxu0 0
          %1007 = vmatprep.subr.bf16.mxu0 0
          %1008 = vmatpush1.bf16.msra.mxu0 0
          %1009 = vmatprep.subr.bf16.mxu0 0
          %1010 = vmatpush1.bf16.msra.mxu0 0
          %1011 = vmatprep.subr.bf16.mxu0 0
          %1012 = vmatpush1.bf16.msra.mxu0 0
          %1013 = vmatprep.subr.bf16.mxu0 0
          %1014 = vmatpush1.bf16.msra.mxu0 0
          %1015 = vmatprep.mubr.bf16.mxu0 0
          %1016 = vmatmul.mubr.bf16.gmra.mrb[0].mxu0 %v968
          %v1017 = vpop.f32.mrb[0].mxu0
          %v1018 = vadd.f32 %v937, %v1017
          %v1019 = vpop.f32.mrb[0].mxu0
          %v1020 = vpop.f32.mrb[0].mxu0
          %v1021 = vadd.f32 %v937, %v1020
          %v1022 = vpop.f32.mrb[0].mxu0
          %1023 = vmatprep.mubr.bf16.mxu0 0
          %1024 = vmatmul.mubr.bf16.gmra.mrb[0].mxu0 %v971
          %v1025 = vpop.f32.mrb[0].mxu0
          %v1026 = vadd.f32 %v937, %v1025
          %v1027 = vpop.f32.mrb[0].mxu0
          %v1028 = vpop.f32.mrb[0].mxu0
          %v1029 = vadd.f32 %v937, %v1028
          %v1030 = vpop.f32.mrb[0].mxu0
          %1031 = vmatprep.mubr.bf16.mxu0 0
          %1032 = vmatmul.mubr.bf16.gmra.mrb[0].mxu0 %v974
          %v1033 = vpop.f32.mrb[0].mxu0
          %v1034 = vadd.f32 %v937, %v1033
          %v1035 = vpop.f32.mrb[0].mxu0
          %v1036 = vpop.f32.mrb[0].mxu0
          %v1037 = vadd.f32 %v937, %v1036
          %v1038 = vpop.f32.mrb[0].mxu0
          %1039 = vmatprep.mubr.bf16.mxu0 0
          %1040 = vmatmul.mubr.bf16.gmra.mrb[0].mxu0 %v977
          %v1041 = vpop.f32.mrb[0].mxu0
          %v1042 = vadd.f32 %v937, %v1041
          %v1043 = vpop.f32.mrb[0].mxu0
          %v1044 = vpop.f32.mrb[0].mxu0
          %v1045 = vadd.f32 %v937, %v1044
          %v1046 = vpop.f32.mrb[0].mxu0
          %1047 = vdwg.mxu0
          %1048 = vst.msk [vmem:[#allocation5] sm:$0xff] %vm551, %v1018
          %1049 = vst.msk [vmem:[#allocation5 + $0x8] sm:$0xff] %vm551, %v1021
          %1050 = vst.msk [vmem:[#allocation5 + $0x10] sm:$0xff] %vm551, %v1026
          %1051 = vst.msk [vmem:[#allocation5 + $0x18] sm:$0xff] %vm551, %v1029
          %1052 = vst.msk [vmem:[#allocation5 + $0x20] sm:$0xff] %vm551, %v1034
          %1053 = vst.msk [vmem:[#allocation5 + $0x28] sm:$0xff] %vm551, %v1037
          %1054 = vst.msk [vmem:[#allocation5 + $0x30] sm:$0xff] %vm551, %v1042
          %1055 = vst.msk [vmem:[#allocation5 + $0x38] sm:$0xff] %vm551, %v1045
        $region64: #{tpu_custom_call.1} parent=55 // pred_fallthru
          _
        %v1056 = vld [vmem:[#allocation5] sm:$0xff]
        %v1057 = vld [vmem:[#allocation5 + $0x8] sm:$0xff]
        %v1058 = vld [vmem:[#allocation5 + $0x10] sm:$0xff]
        %v1059 = vld [vmem:[#allocation5 + $0x18] sm:$0xff]
        %v1060 = vld [vmem:[#allocation5 + $0x20] sm:$0xff]
        %v1061 = vld [vmem:[#allocation5 + $0x28] sm:$0xff]
        %v1062 = vld [vmem:[#allocation5 + $0x30] sm:$0xff]
        %v1063 = vld [vmem:[#allocation5 + $0x38] sm:$0xff]
        %s1064 = scalar_lea.vmem %s6, %s546
        %v1065 = vld [vmem:[%s1064] sm:$0x1]
        %v1066 = vld [vmem:[%s1064 + $0x1] sm:$0x1]
        %v1067 = vld [vmem:[%s516] sm:$0xff]
        %v1068 = vld [vmem:[%s516 + $0x8] sm:$0xff]
        %v1069 = vld [vmem:[%s516 + $0x10] sm:$0xff]
        %v1070 = vld [vmem:[%s516 + $0x18] sm:$0xff]
        %v1071 = vld [vmem:[%s516 + $0x20] sm:$0xff]
        %v1072 = vld [vmem:[%s516 + $0x28] sm:$0xff]
        %v1073 = vld [vmem:[%s516 + $0x30] sm:$0xff]
        %v1074 = vld [vmem:[%s516 + $0x38] sm:$0xff]
        %v1075 = vld [vmem:[%s516 + $0x40] sm:$0xff]
        %v1076 = vld [vmem:[%s516 + $0x48] sm:$0xff]
        %v1077 = vld [vmem:[%s516 + $0x50] sm:$0xff]
        %v1078 = vld [vmem:[%s516 + $0x58] sm:$0xff]
        %v1079 = vld [vmem:[%s516 + $0x60] sm:$0xff]
        %v1080 = vld [vmem:[%s516 + $0x68] sm:$0xff]
        %v1081 = vld [vmem:[%s516 + $0x70] sm:$0xff]
        %v1082 = vld [vmem:[%s516 + $0x78] sm:$0xff]
        %v1083 = vadd.f32 %v1067, %v1056
        %v1084 = vadd.f32 %v1068, %v1057
        %v1085 = vadd.f32 %v1069, %v1058
        %v1086 = vadd.f32 %v1070, %v1059
        %v1087 = vadd.f32 %v1071, %v1060
        %v1088 = vadd.f32 %v1072, %v1061
        %v1089 = vadd.f32 %v1073, %v1062
        %v1090 = vadd.f32 %v1074, %v1063
        %v1091 = vadd.f32 %v1075, %v1056
        %v1092 = vadd.f32 %v1076, %v1057
        %v1093 = vadd.f32 %v1077, %v1058
        %v1094 = vadd.f32 %v1078, %v1059
        %v1095 = vadd.f32 %v1079, %v1060
        %v1096 = vadd.f32 %v1080, %v1061
        %v1097 = vadd.f32 %v1081, %v1062
        %v1098 = vadd.f32 %v1082, %v1063
        %v1101 = vlaneseq
        %v1102 = vshrl.u32 %v1101, 7
        %v1103 = vsub.s32 0, %v1102
        %v1104 = vrot.slane %v1065, %v1103
        %v1105 = vlaneseq
        %v1106 = vshrl.u32 %v1105, 7
        %v1107 = vsub.s32 0, %v1106
        %v1108 = vrot.slane %v1066, %v1107
        %v1111 = vadd.f32 %v1083, %v1104
        %v1112 = vadd.f32 %v1084, %v1104
        %v1113 = vadd.f32 %v1085, %v1104
        %v1114 = vadd.f32 %v1086, %v1104
        %v1115 = vadd.f32 %v1087, %v1104
        %v1116 = vadd.f32 %v1088, %v1104
        %v1117 = vadd.f32 %v1089, %v1104
        %v1118 = vadd.f32 %v1090, %v1104
        %v1119 = vadd.f32 %v1091, %v1108
        %v1120 = vadd.f32 %v1092, %v1108
        %v1121 = vadd.f32 %v1093, %v1108
        %v1122 = vadd.f32 %v1094, %v1108
        %v1123 = vadd.f32 %v1095, %v1108
        %v1124 = vadd.f32 %v1096, %v1108
        %v1125 = vadd.f32 %v1097, %v1108
        %v1126 = vadd.f32 %v1098, %v1108
        %s1127 = scalar_lea.vmem [#allocation2], 176
        %vm1128 = vcmask 261120
        %1129 = vst.msk [vmem:[%s1127 + $0x1] sm:$0xff] %vm1128, %v1111
        %1130 = vst.msk [vmem:[%s1127 + $0x11] sm:$0xff] %vm1128, %v1112
        %1131 = vst.msk [vmem:[%s1127 + $0x21] sm:$0xff] %vm1128, %v1113
        %1132 = vst.msk [vmem:[%s1127 + $0x31] sm:$0xff] %vm1128, %v1114
        %1133 = vst.msk [vmem:[%s1127 + $0x41] sm:$0xff] %vm1128, %v1115
        %1134 = vst.msk [vmem:[%s1127 + $0x51] sm:$0xff] %vm1128, %v1116
        %1135 = vst.msk [vmem:[%s1127 + $0x61] sm:$0xff] %vm1128, %v1117
        %1136 = vst.msk [vmem:[%s1127 + $0x71] sm:$0xff] %vm1128, %v1118
        %1137 = vst.msk [vmem:[%s1127 + $0xa1] sm:$0xff] %vm1128, %v1119
        %1138 = vst.msk [vmem:[%s1127 + $0xb1] sm:$0xff] %vm1128, %v1120
        %1139 = vst.msk [vmem:[%s1127 + $0xc1] sm:$0xff] %vm1128, %v1121
        %1140 = vst.msk [vmem:[%s1127 + $0xd1] sm:$0xff] %vm1128, %v1122
        %1141 = vst.msk [vmem:[%s1127 + $0xe1] sm:$0xff] %vm1128, %v1123
        %1142 = vst.msk [vmem:[%s1127 + $0xf1] sm:$0xff] %vm1128, %v1124
        %1143 = vst.msk [vmem:[%s1127 + $0x101] sm:$0xff] %vm1128, %v1125
        %1144 = vst.msk [vmem:[%s1127 + $0x111] sm:$0xff] %vm1128, %v1126
        %s1145 = ssub.s32 %s546, 1
        %p1146 = scmp.gt.s32.totalorder %s1145, 0
        %s1147 = scalar_select %p1146, %s1145, 0
        %v1148 = vld [vmem:[%s530] sm:$0xff]
        %v1149 = vld [vmem:[%s530 + $0x8] sm:$0xff]
        %v1150 = vld [vmem:[%s530 + $0x10] sm:$0xff]
        %v1151 = vld [vmem:[%s530 + $0x18] sm:$0xff]
        %v1152 = vld [vmem:[%s530 + $0x20] sm:$0xff]
        %v1153 = vld [vmem:[%s530 + $0x28] sm:$0xff]
        %v1154 = vld [vmem:[%s530 + $0x30] sm:$0xff]
        %v1155 = vld [vmem:[%s530 + $0x38] sm:$0xff]
        %v1156 = vadd.f32 %v1148, %v1056
        %v1157 = vadd.f32 %v1149, %v1057
        %v1158 = vadd.f32 %v1150, %v1058
        %v1159 = vadd.f32 %v1151, %v1059
        %v1160 = vadd.f32 %v1152, %v1060
        %v1161 = vadd.f32 %v1153, %v1061
        %v1162 = vadd.f32 %v1154, %v1062
        %v1163 = vadd.f32 %v1155, %v1063
        %s1164 = scalar_lea.vmem %s6, %s1147
        %v1165 = vld [vmem:[%s1164] sm:$0x1]
        %v1167 = vlaneseq
        %v1168 = vshrl.u32 %v1167, 7
        %v1169 = vsub.s32 0, %v1168
        %v1170 = vrot.slane %v1165, %v1169
        %v1172 = vadd.f32 %v1156, %v1170
        %v1173 = vadd.f32 %v1157, %v1170
        %v1174 = vadd.f32 %v1158, %v1170
        %v1175 = vadd.f32 %v1159, %v1170
        %v1176 = vadd.f32 %v1160, %v1170
        %v1177 = vadd.f32 %v1161, %v1170
        %v1178 = vadd.f32 %v1162, %v1170
        %v1179 = vadd.f32 %v1163, %v1170
        %p1180 = scmp.gt.s32.totalorder %s36, 0
        %s1181 = scalar_select %p1180, 1, 0
        %v1182 = vstv %s1181
        %vm1183 = vcmp.eq.s32.totalorder %v1182, 1
        %v1184 = vsel %vm1183, %v1172, 0.0
        %v1185 = vsel %vm1183, %v1173, 0.0
        %v1186 = vsel %vm1183, %v1174, 0.0
        %v1187 = vsel %vm1183, %v1175, 0.0
        %v1188 = vsel %vm1183, %v1176, 0.0
        %v1189 = vsel %vm1183, %v1177, 0.0
        %v1190 = vsel %vm1183, %v1178, 0.0
        %v1191 = vsel %vm1183, %v1179, 0.0
        %s1192 = scalar_lea.vmem [#allocation2], 16
        %1193 = vst.msk [vmem:[%s1192 + $0x1] sm:$0xff] %vm1128, %v1184
        %1194 = vst.msk [vmem:[%s1192 + $0x11] sm:$0xff] %vm1128, %v1185
        %1195 = vst.msk [vmem:[%s1192 + $0x21] sm:$0xff] %vm1128, %v1186
        %1196 = vst.msk [vmem:[%s1192 + $0x31] sm:$0xff] %vm1128, %v1187
        %1197 = vst.msk [vmem:[%s1192 + $0x41] sm:$0xff] %vm1128, %v1188
        %1198 = vst.msk [vmem:[%s1192 + $0x51] sm:$0xff] %vm1128, %v1189
        %1199 = vst.msk [vmem:[%s1192 + $0x61] sm:$0xff] %vm1128, %v1190
        %1200 = vst.msk [vmem:[%s1192 + $0x71] sm:$0xff] %vm1128, %v1191
        %s1201 = sadd.s32 %s546, 2
        %p1202 = scmp.lt.s32.totalorder %s1201, 3
        %s1203 = scalar_select %p1202, %s1201, 3
        %v1204 = vld [vmem:[%s437] sm:$0xff]
        %v1205 = vld [vmem:[%s437 + $0x8] sm:$0xff]
        %v1206 = vld [vmem:[%s437 + $0x10] sm:$0xff]
        %v1207 = vld [vmem:[%s437 + $0x18] sm:$0xff]
        %v1208 = vld [vmem:[%s437 + $0x20] sm:$0xff]
        %v1209 = vld [vmem:[%s437 + $0x28] sm:$0xff]
        %v1210 = vld [vmem:[%s437 + $0x30] sm:$0xff]
        %v1211 = vld [vmem:[%s437 + $0x38] sm:$0xff]
        %v1212 = vadd.f32 %v1204, %v1056
        %v1213 = vadd.f32 %v1205, %v1057
        %v1214 = vadd.f32 %v1206, %v1058
        %v1215 = vadd.f32 %v1207, %v1059
        %v1216 = vadd.f32 %v1208, %v1060
        %v1217 = vadd.f32 %v1209, %v1061
        %v1218 = vadd.f32 %v1210, %v1062
        %v1219 = vadd.f32 %v1211, %v1063
        %s1220 = scalar_lea.vmem %s6, %s1203
        %v1221 = vld [vmem:[%s1220] sm:$0x1]
        %v1223 = vlaneseq
        %v1224 = vshrl.u32 %v1223, 7
        %v1225 = vsub.s32 0, %v1224
        %v1226 = vrot.slane %v1221, %v1225
        %v1228 = vadd.f32 %v1212, %v1226
        %v1229 = vadd.f32 %v1213, %v1226
        %v1230 = vadd.f32 %v1214, %v1226
        %v1231 = vadd.f32 %v1215, %v1226
        %v1232 = vadd.f32 %v1216, %v1226
        %v1233 = vadd.f32 %v1217, %v1226
        %v1234 = vadd.f32 %v1218, %v1226
        %v1235 = vadd.f32 %v1219, %v1226
        %p1236 = scmp.lt.s32.totalorder %s36, 1
        %s1237 = scalar_select %p1236, 1, 0
        %v1238 = vstv %s1237
        %vm1239 = vcmp.eq.s32.totalorder %v1238, 1
        %v1240 = vsel %vm1239, %v1228, 0.0
        %v1241 = vsel %vm1239, %v1229, 0.0
        %v1242 = vsel %vm1239, %v1230, 0.0
        %v1243 = vsel %vm1239, %v1231, 0.0
        %v1244 = vsel %vm1239, %v1232, 0.0
        %v1245 = vsel %vm1239, %v1233, 0.0
        %v1246 = vsel %vm1239, %v1234, 0.0
        %v1247 = vsel %vm1239, %v1235, 0.0
        %s1248 = scalar_lea.vmem [#allocation2], 496
        %1249 = vst.msk [vmem:[%s1248 + $0x1] sm:$0xff] %vm1128, %v1240
        %1250 = vst.msk [vmem:[%s1248 + $0x11] sm:$0xff] %vm1128, %v1241
        %1251 = vst.msk [vmem:[%s1248 + $0x21] sm:$0xff] %vm1128, %v1242
        %1252 = vst.msk [vmem:[%s1248 + $0x31] sm:$0xff] %vm1128, %v1243
        %1253 = vst.msk [vmem:[%s1248 + $0x41] sm:$0xff] %vm1128, %v1244
        %1254 = vst.msk [vmem:[%s1248 + $0x51] sm:$0xff] %vm1128, %v1245
        %1255 = vst.msk [vmem:[%s1248 + $0x61] sm:$0xff] %vm1128, %v1246
        %1256 = vst.msk [vmem:[%s1248 + $0x71] sm:$0xff] %vm1128, %v1247
        %v1257 = vld [vmem:[#allocation2] sm:$0xff]
        %v1258 = vld [vmem:[#allocation2 + $0x10] sm:$0xff]
        %v1259 = vld [vmem:[#allocation2 + $0x20] sm:$0xff]
        %v1260 = vld [vmem:[#allocation2 + $0x30] sm:$0xff]
        %v1261 = vld [vmem:[#allocation2 + $0x40] sm:$0xff]
        %v1262 = vld [vmem:[#allocation2 + $0x50] sm:$0xff]
        %v1263 = vld [vmem:[#allocation2 + $0x60] sm:$0xff]
        %v1264 = vld [vmem:[#allocation2 + $0x70] sm:$0xff]
        %v1265 = vld [vmem:[#allocation2 + $0xa0] sm:$0xff]
        %v1266 = vld [vmem:[#allocation2 + $0xb0] sm:$0xff]
        %v1267 = vld [vmem:[#allocation2 + $0xc0] sm:$0xff]
        %v1268 = vld [vmem:[#allocation2 + $0xd0] sm:$0xff]
        %v1269 = vld [vmem:[#allocation2 + $0xe0] sm:$0xff]
        %v1270 = vld [vmem:[#allocation2 + $0xf0] sm:$0xff]
        %v1271 = vld [vmem:[#allocation2 + $0x100] sm:$0xff]
        %v1272 = vld [vmem:[#allocation2 + $0x110] sm:$0xff]
        %v1273 = vpack.c.bf16 %v1258, %v1257
        %v1274 = vpack.c.bf16 %v1260, %v1259
        %v1275 = vpack.c.bf16 %v1262, %v1261
        %v1276 = vpack.c.bf16 %v1264, %v1263
        %v1277 = vpack.c.bf16 %v1266, %v1265
        %v1278 = vpack.c.bf16 %v1268, %v1267
        %v1279 = vpack.c.bf16 %v1270, %v1269
        %v1280 = vpack.c.bf16 %v1272, %v1271
        %1281 = vst.msk [vmem:[#allocation3] sm:$0xff] %vm1128, %v1273
        %1282 = vst.msk [vmem:[#allocation3 + $0x18] sm:$0xff] %vm1128, %v1274
        %1283 = vst.msk [vmem:[#allocation3 + $0x30] sm:$0xff] %vm1128, %v1275
        %1284 = vst.msk [vmem:[#allocation3 + $0x48] sm:$0xff] %vm1128, %v1276
        %1285 = vst.msk [vmem:[#allocation3 + $0x60] sm:$0xff] %vm1128, %v1277
        %1286 = vst.msk [vmem:[#allocation3 + $0x78] sm:$0xff] %vm1128, %v1278
        %1287 = vst.msk [vmem:[#allocation3 + $0x90] sm:$0xff] %vm1128, %v1279
        %1288 = vst.msk [vmem:[#allocation3 + $0xa8] sm:$0xff] %vm1128, %v1280
        %v1289 = vld [vmem:[#allocation2 + $0x1] sm:$0xff]
        %v1290 = vld [vmem:[#allocation2 + $0x11] sm:$0xff]
        %v1291 = vld [vmem:[#allocation2 + $0x21] sm:$0xff]
        %v1292 = vld [vmem:[#allocation2 + $0x31] sm:$0xff]
        %v1293 = vld [vmem:[#allocation2 + $0x41] sm:$0xff]
        %v1294 = vld [vmem:[#allocation2 + $0x51] sm:$0xff]
        %v1295 = vld [vmem:[#allocation2 + $0x61] sm:$0xff]
        %v1296 = vld [vmem:[#allocation2 + $0x71] sm:$0xff]
        %v1297 = vld [vmem:[#allocation2 + $0xa1] sm:$0xff]
        %v1298 = vld [vmem:[#allocation2 + $0xb1] sm:$0xff]
        %v1299 = vld [vmem:[#allocation2 + $0xc1] sm:$0xff]
        %v1300 = vld [vmem:[#allocation2 + $0xd1] sm:$0xff]
        %v1301 = vld [vmem:[#allocation2 + $0xe1] sm:$0xff]
        %v1302 = vld [vmem:[#allocation2 + $0xf1] sm:$0xff]
        %v1303 = vld [vmem:[#allocation2 + $0x101] sm:$0xff]
        %v1304 = vld [vmem:[#allocation2 + $0x111] sm:$0xff]
        %v1305 = vpack.c.bf16 %v1290, %v1289
        %v1306 = vpack.c.bf16 %v1292, %v1291
        %v1307 = vpack.c.bf16 %v1294, %v1293
        %v1308 = vpack.c.bf16 %v1296, %v1295
        %v1309 = vpack.c.bf16 %v1298, %v1297
        %v1310 = vpack.c.bf16 %v1300, %v1299
        %v1311 = vpack.c.bf16 %v1302, %v1301
        %v1312 = vpack.c.bf16 %v1304, %v1303
        %1321 = vrot.lane.b32.xlu0 %v1305, 32
        %v1322 = vpop.permute.xlu0 %1321
        %1323 = vrot.lane.b32.xlu0 %v1306, 32
        %v1324 = vpop.permute.xlu0 %1323
        %1325 = vrot.lane.b32.xlu0 %v1307, 32
        %v1326 = vpop.permute.xlu0 %1325
        %1327 = vrot.lane.b32.xlu0 %v1308, 32
        %v1328 = vpop.permute.xlu0 %1327
        %1329 = vrot.lane.b32.xlu0 %v1309, 32
        %v1330 = vpop.permute.xlu0 %1329
        %1331 = vrot.lane.b32.xlu0 %v1310, 32
        %v1332 = vpop.permute.xlu0 %1331
        %1333 = vrot.lane.b32.xlu0 %v1311, 32
        %v1334 = vpop.permute.xlu0 %1333
        %1335 = vrot.lane.b32.xlu0 %v1312, 32
        %v1336 = vpop.permute.xlu0 %1335
        %vm1345 = vcmask 523520
        %1346 = vst.msk [vmem:[#allocation3] sm:$0xff] %vm1345, %v1322
        %1347 = vst.msk [vmem:[#allocation3 + $0x18] sm:$0xff] %vm1345, %v1324
        %1348 = vst.msk [vmem:[#allocation3 + $0x30] sm:$0xff] %vm1345, %v1326
        %1349 = vst.msk [vmem:[#allocation3 + $0x48] sm:$0xff] %vm1345, %v1328
        %1350 = vst.msk [vmem:[#allocation3 + $0x60] sm:$0xff] %vm1345, %v1330
        %1351 = vst.msk [vmem:[#allocation3 + $0x78] sm:$0xff] %vm1345, %v1332
        %1352 = vst.msk [vmem:[#allocation3 + $0x90] sm:$0xff] %vm1345, %v1334
        %1353 = vst.msk [vmem:[#allocation3 + $0xa8] sm:$0xff] %vm1345, %v1336
        %v1354 = vld [vmem:[#allocation2 + $0x2] sm:$0xff]
        %v1355 = vld [vmem:[#allocation2 + $0x12] sm:$0xff]
        %v1356 = vld [vmem:[#allocation2 + $0x22] sm:$0xff]
        %v1357 = vld [vmem:[#allocation2 + $0x32] sm:$0xff]
        %v1358 = vld [vmem:[#allocation2 + $0x42] sm:$0xff]
        %v1359 = vld [vmem:[#allocation2 + $0x52] sm:$0xff]
        %v1360 = vld [vmem:[#allocation2 + $0x62] sm:$0xff]
        %v1361 = vld [vmem:[#allocation2 + $0x72] sm:$0xff]
        %v1362 = vld [vmem:[#allocation2 + $0xa2] sm:$0xff]
        %v1363 = vld [vmem:[#allocation2 + $0xb2] sm:$0xff]
        %v1364 = vld [vmem:[#allocation2 + $0xc2] sm:$0xff]
        %v1365 = vld [vmem:[#allocation2 + $0xd2] sm:$0xff]
        %v1366 = vld [vmem:[#allocation2 + $0xe2] sm:$0xff]
        %v1367 = vld [vmem:[#allocation2 + $0xf2] sm:$0xff]
        %v1368 = vld [vmem:[#allocation2 + $0x102] sm:$0xff]
        %v1369 = vld [vmem:[#allocation2 + $0x112] sm:$0xff]
        %v1370 = vpack.c.bf16 %v1355, %v1354
        %v1371 = vpack.c.bf16 %v1357, %v1356
        %v1372 = vpack.c.bf16 %v1359, %v1358
        %v1373 = vpack.c.bf16 %v1361, %v1360
        %v1374 = vpack.c.bf16 %v1363, %v1362
        %v1375 = vpack.c.bf16 %v1365, %v1364
        %v1376 = vpack.c.bf16 %v1367, %v1366
        %v1377 = vpack.c.bf16 %v1369, %v1368
        %1386 = vrot.lane.b32.xlu0 %v1370, 64
        %v1387 = vpop.permute.xlu0 %1386
        %1388 = vrot.lane.b32.xlu0 %v1371, 64
        %v1389 = vpop.permute.xlu0 %1388
        %1390 = vrot.lane.b32.xlu0 %v1372, 64
        %v1391 = vpop.permute.xlu0 %1390
        %1392 = vrot.lane.b32.xlu0 %v1373, 64
        %v1393 = vpop.permute.xlu0 %1392
        %1394 = vrot.lane.b32.xlu0 %v1374, 64
        %v1395 = vpop.permute.xlu0 %1394
        %1396 = vrot.lane.b32.xlu0 %v1375, 64
        %v1397 = vpop.permute.xlu0 %1396
        %1398 = vrot.lane.b32.xlu0 %v1376, 64
        %v1399 = vpop.permute.xlu0 %1398
        %1400 = vrot.lane.b32.xlu0 %v1377, 64
        %v1401 = vpop.permute.xlu0 %1400
        %vm1410 = vcmask 785920
        %1411 = vst.msk [vmem:[#allocation3] sm:$0xff] %vm1410, %v1387
        %1412 = vst.msk [vmem:[#allocation3 + $0x18] sm:$0xff] %vm1410, %v1389
        %1413 = vst.msk [vmem:[#allocation3 + $0x30] sm:$0xff] %vm1410, %v1391
        %1414 = vst.msk [vmem:[#allocation3 + $0x48] sm:$0xff] %vm1410, %v1393
        %1415 = vst.msk [vmem:[#allocation3 + $0x60] sm:$0xff] %vm1410, %v1395
        %1416 = vst.msk [vmem:[#allocation3 + $0x78] sm:$0xff] %vm1410, %v1397
        %1417 = vst.msk [vmem:[#allocation3 + $0x90] sm:$0xff] %vm1410, %v1399
        %1418 = vst.msk [vmem:[#allocation3 + $0xa8] sm:$0xff] %vm1410, %v1401
        %v1419 = vld [vmem:[%s1192] sm:$0xff]
        %v1420 = vld [vmem:[%s1192 + $0x10] sm:$0xff]
        %v1421 = vld [vmem:[%s1192 + $0x20] sm:$0xff]
        %v1422 = vld [vmem:[%s1192 + $0x30] sm:$0xff]
        %v1423 = vld [vmem:[%s1192 + $0x40] sm:$0xff]
        %v1424 = vld [vmem:[%s1192 + $0x50] sm:$0xff]
        %v1425 = vld [vmem:[%s1192 + $0x60] sm:$0xff]
        %v1426 = vld [vmem:[%s1192 + $0x70] sm:$0xff]
        %v1427 = vld [vmem:[%s1192 + $0xa0] sm:$0xff]
        %v1428 = vld [vmem:[%s1192 + $0xb0] sm:$0xff]
        %v1429 = vld [vmem:[%s1192 + $0xc0] sm:$0xff]
        %v1430 = vld [vmem:[%s1192 + $0xd0] sm:$0xff]
        %v1431 = vld [vmem:[%s1192 + $0xe0] sm:$0xff]
        %v1432 = vld [vmem:[%s1192 + $0xf0] sm:$0xff]
        %v1433 = vld [vmem:[%s1192 + $0x100] sm:$0xff]
        %v1434 = vld [vmem:[%s1192 + $0x110] sm:$0xff]
        %v1435 = vpack.c.bf16 %v1420, %v1419
        %v1436 = vpack.c.bf16 %v1422, %v1421
        %v1437 = vpack.c.bf16 %v1424, %v1423
        %v1438 = vpack.c.bf16 %v1426, %v1425
        %v1439 = vpack.c.bf16 %v1428, %v1427
        %v1440 = vpack.c.bf16 %v1430, %v1429
        %v1441 = vpack.c.bf16 %v1432, %v1431
        %v1442 = vpack.c.bf16 %v1434, %v1433
        %1451 = vrot.lane.b32.xlu0 %v1435, 96
        %v1452 = vpop.permute.xlu0 %1451
        %1453 = vrot.lane.b32.xlu0 %v1436, 96
        %v1454 = vpop.permute.xlu0 %1453
        %1455 = vrot.lane.b32.xlu0 %v1437, 96
        %v1456 = vpop.permute.xlu0 %1455
        %1457 = vrot.lane.b32.xlu0 %v1438, 96
        %v1458 = vpop.permute.xlu0 %1457
        %1459 = vrot.lane.b32.xlu0 %v1439, 96
        %v1460 = vpop.permute.xlu0 %1459
        %1461 = vrot.lane.b32.xlu0 %v1440, 96
        %v1462 = vpop.permute.xlu0 %1461
        %1463 = vrot.lane.b32.xlu0 %v1441, 96
        %v1464 = vpop.permute.xlu0 %1463
        %1465 = vrot.lane.b32.xlu0 %v1442, 96
        %v1466 = vpop.permute.xlu0 %1465
        %vm1475 = vcmask 1048320
        %1476 = vst.msk [vmem:[#allocation3] sm:$0xff] %vm1475, %v1452
        %1477 = vst.msk [vmem:[#allocation3 + $0x18] sm:$0xff] %vm1475, %v1454
        %1478 = vst.msk [vmem:[#allocation3 + $0x30] sm:$0xff] %vm1475, %v1456
        %1479 = vst.msk [vmem:[#allocation3 + $0x48] sm:$0xff] %vm1475, %v1458
        %1480 = vst.msk [vmem:[#allocation3 + $0x60] sm:$0xff] %vm1475, %v1460
        %1481 = vst.msk [vmem:[#allocation3 + $0x78] sm:$0xff] %vm1475, %v1462
        %1482 = vst.msk [vmem:[#allocation3 + $0x90] sm:$0xff] %vm1475, %v1464
        %1483 = vst.msk [vmem:[#allocation3 + $0xa8] sm:$0xff] %vm1475, %v1466
        %v1484 = vld [vmem:[%s1192 + $0x1] sm:$0xff]
        %v1485 = vld [vmem:[%s1192 + $0x11] sm:$0xff]
        %v1486 = vld [vmem:[%s1192 + $0x21] sm:$0xff]
        %v1487 = vld [vmem:[%s1192 + $0x31] sm:$0xff]
        %v1488 = vld [vmem:[%s1192 + $0x41] sm:$0xff]
        %v1489 = vld [vmem:[%s1192 + $0x51] sm:$0xff]
        %v1490 = vld [vmem:[%s1192 + $0x61] sm:$0xff]
        %v1491 = vld [vmem:[%s1192 + $0x71] sm:$0xff]
        %v1492 = vld [vmem:[%s1192 + $0xa1] sm:$0xff]
        %v1493 = vld [vmem:[%s1192 + $0xb1] sm:$0xff]
        %v1494 = vld [vmem:[%s1192 + $0xc1] sm:$0xff]
        %v1495 = vld [vmem:[%s1192 + $0xd1] sm:$0xff]
        %v1496 = vld [vmem:[%s1192 + $0xe1] sm:$0xff]
        %v1497 = vld [vmem:[%s1192 + $0xf1] sm:$0xff]
        %v1498 = vld [vmem:[%s1192 + $0x101] sm:$0xff]
        %v1499 = vld [vmem:[%s1192 + $0x111] sm:$0xff]
        %v1500 = vpack.c.bf16 %v1485, %v1484
        %v1501 = vpack.c.bf16 %v1487, %v1486
        %v1502 = vpack.c.bf16 %v1489, %v1488
        %v1503 = vpack.c.bf16 %v1491, %v1490
        %v1504 = vpack.c.bf16 %v1493, %v1492
        %v1505 = vpack.c.bf16 %v1495, %v1494
        %v1506 = vpack.c.bf16 %v1497, %v1496
        %v1507 = vpack.c.bf16 %v1499, %v1498
        %1508 = vst.msk [vmem:[#allocation3 + $0x8] sm:$0xff] %vm1128, %v1500
        %1509 = vst.msk [vmem:[#allocation3 + $0x20] sm:$0xff] %vm1128, %v1501
        %1510 = vst.msk [vmem:[#allocation3 + $0x38] sm:$0xff] %vm1128, %v1502
        %1511 = vst.msk [vmem:[#allocation3 + $0x50] sm:$0xff] %vm1128, %v1503
        %1512 = vst.msk [vmem:[#allocation3 + $0x68] sm:$0xff] %vm1128, %v1504
        %1513 = vst.msk [vmem:[#allocation3 + $0x80] sm:$0xff] %vm1128, %v1505
        %1514 = vst.msk [vmem:[#allocation3 + $0x98] sm:$0xff] %vm1128, %v1506
        %1515 = vst.msk [vmem:[#allocation3 + $0xb0] sm:$0xff] %vm1128, %v1507
        %v1516 = vld [vmem:[%s1192 + $0x2] sm:$0xff]
        %v1517 = vld [vmem:[%s1192 + $0x12] sm:$0xff]
        %v1518 = vld [vmem:[%s1192 + $0x22] sm:$0xff]
        %v1519 = vld [vmem:[%s1192 + $0x32] sm:$0xff]
        %v1520 = vld [vmem:[%s1192 + $0x42] sm:$0xff]
        %v1521 = vld [vmem:[%s1192 + $0x52] sm:$0xff]
        %v1522 = vld [vmem:[%s1192 + $0x62] sm:$0xff]
        %v1523 = vld [vmem:[%s1192 + $0x72] sm:$0xff]
        %v1524 = vld [vmem:[%s1192 + $0xa2] sm:$0xff]
        %v1525 = vld [vmem:[%s1192 + $0xb2] sm:$0xff]
        %v1526 = vld [vmem:[%s1192 + $0xc2] sm:$0xff]
        %v1527 = vld [vmem:[%s1192 + $0xd2] sm:$0xff]
        %v1528 = vld [vmem:[%s1192 + $0xe2] sm:$0xff]
        %v1529 = vld [vmem:[%s1192 + $0xf2] sm:$0xff]
        %v1530 = vld [vmem:[%s1192 + $0x102] sm:$0xff]
        %v1531 = vld [vmem:[%s1192 + $0x112] sm:$0xff]
        %v1532 = vpack.c.bf16 %v1517, %v1516
        %v1533 = vpack.c.bf16 %v1519, %v1518
        %v1534 = vpack.c.bf16 %v1521, %v1520
        %v1535 = vpack.c.bf16 %v1523, %v1522
        %v1536 = vpack.c.bf16 %v1525, %v1524
        %v1537 = vpack.c.bf16 %v1527, %v1526
        %v1538 = vpack.c.bf16 %v1529, %v1528
        %v1539 = vpack.c.bf16 %v1531, %v1530
        %1548 = vrot.lane.b32.xlu0 %v1532, 32
        %v1549 = vpop.permute.xlu0 %1548
        %1550 = vrot.lane.b32.xlu0 %v1533, 32
        %v1551 = vpop.permute.xlu0 %1550
        %1552 = vrot.lane.b32.xlu0 %v1534, 32
        %v1553 = vpop.permute.xlu0 %1552
        %1554 = vrot.lane.b32.xlu0 %v1535, 32
        %v1555 = vpop.permute.xlu0 %1554
        %1556 = vrot.lane.b32.xlu0 %v1536, 32
        %v1557 = vpop.permute.xlu0 %1556
        %1558 = vrot.lane.b32.xlu0 %v1537, 32
        %v1559 = vpop.permute.xlu0 %1558
        %1560 = vrot.lane.b32.xlu0 %v1538, 32
        %v1561 = vpop.permute.xlu0 %1560
        %1562 = vrot.lane.b32.xlu0 %v1539, 32
        %v1563 = vpop.permute.xlu0 %1562
        %1572 = vst.msk [vmem:[#allocation3 + $0x8] sm:$0xff] %vm1345, %v1549
        %1573 = vst.msk [vmem:[#allocation3 + $0x20] sm:$0xff] %vm1345, %v1551
        %1574 = vst.msk [vmem:[#allocation3 + $0x38] sm:$0xff] %vm1345, %v1553
        %1575 = vst.msk [vmem:[#allocation3 + $0x50] sm:$0xff] %vm1345, %v1555
        %1576 = vst.msk [vmem:[#allocation3 + $0x68] sm:$0xff] %vm1345, %v1557
        %1577 = vst.msk [vmem:[#allocation3 + $0x80] sm:$0xff] %vm1345, %v1559
        %1578 = vst.msk [vmem:[#allocation3 + $0x98] sm:$0xff] %vm1345, %v1561
        %1579 = vst.msk [vmem:[#allocation3 + $0xb0] sm:$0xff] %vm1345, %v1563
        %s1580 = scalar_lea.vmem [#allocation2], 32
        %v1581 = vld [vmem:[%s1580] sm:$0xff]
        %v1582 = vld [vmem:[%s1580 + $0x10] sm:$0xff]
        %v1583 = vld [vmem:[%s1580 + $0x20] sm:$0xff]
        %v1584 = vld [vmem:[%s1580 + $0x30] sm:$0xff]
        %v1585 = vld [vmem:[%s1580 + $0x40] sm:$0xff]
        %v1586 = vld [vmem:[%s1580 + $0x50] sm:$0xff]
        %v1587 = vld [vmem:[%s1580 + $0x60] sm:$0xff]
        %v1588 = vld [vmem:[%s1580 + $0x70] sm:$0xff]
        %v1589 = vld [vmem:[%s1580 + $0xa0] sm:$0xff]
        %v1590 = vld [vmem:[%s1580 + $0xb0] sm:$0xff]
        %v1591 = vld [vmem:[%s1580 + $0xc0] sm:$0xff]
        %v1592 = vld [vmem:[%s1580 + $0xd0] sm:$0xff]
        %v1593 = vld [vmem:[%s1580 + $0xe0] sm:$0xff]
        %v1594 = vld [vmem:[%s1580 + $0xf0] sm:$0xff]
        %v1595 = vld [vmem:[%s1580 + $0x100] sm:$0xff]
        %v1596 = vld [vmem:[%s1580 + $0x110] sm:$0xff]
        %v1597 = vpack.c.bf16 %v1582, %v1581
        %v1598 = vpack.c.bf16 %v1584, %v1583
        %v1599 = vpack.c.bf16 %v1586, %v1585
        %v1600 = vpack.c.bf16 %v1588, %v1587
        %v1601 = vpack.c.bf16 %v1590, %v1589
        %v1602 = vpack.c.bf16 %v1592, %v1591
        %v1603 = vpack.c.bf16 %v1594, %v1593
        %v1604 = vpack.c.bf16 %v1596, %v1595
        %1613 = vrot.lane.b32.xlu0 %v1597, 64
        %v1614 = vpop.permute.xlu0 %1613
        %1615 = vrot.lane.b32.xlu0 %v1598, 64
        %v1616 = vpop.permute.xlu0 %1615
        %1617 = vrot.lane.b32.xlu0 %v1599, 64
        %v1618 = vpop.permute.xlu0 %1617
        %1619 = vrot.lane.b32.xlu0 %v1600, 64
        %v1620 = vpop.permute.xlu0 %1619
        %1621 = vrot.lane.b32.xlu0 %v1601, 64
        %v1622 = vpop.permute.xlu0 %1621
        %1623 = vrot.lane.b32.xlu0 %v1602, 64
        %v1624 = vpop.permute.xlu0 %1623
        %1625 = vrot.lane.b32.xlu0 %v1603, 64
        %v1626 = vpop.permute.xlu0 %1625
        %1627 = vrot.lane.b32.xlu0 %v1604, 64
        %v1628 = vpop.permute.xlu0 %1627
        %1637 = vst.msk [vmem:[#allocation3 + $0x8] sm:$0xff] %vm1410, %v1614
        %1638 = vst.msk [vmem:[#allocation3 + $0x20] sm:$0xff] %vm1410, %v1616
        %1639 = vst.msk [vmem:[#allocation3 + $0x38] sm:$0xff] %vm1410, %v1618
        %1640 = vst.msk [vmem:[#allocation3 + $0x50] sm:$0xff] %vm1410, %v1620
        %1641 = vst.msk [vmem:[#allocation3 + $0x68] sm:$0xff] %vm1410, %v1622
        %1642 = vst.msk [vmem:[#allocation3 + $0x80] sm:$0xff] %vm1410, %v1624
        %1643 = vst.msk [vmem:[#allocation3 + $0x98] sm:$0xff] %vm1410, %v1626
        %1644 = vst.msk [vmem:[#allocation3 + $0xb0] sm:$0xff] %vm1410, %v1628
        %v1645 = vld [vmem:[%s1580 + $0x1] sm:$0xff]
        %v1646 = vld [vmem:[%s1580 + $0x11] sm:$0xff]
        %v1647 = vld [vmem:[%s1580 + $0x21] sm:$0xff]
        %v1648 = vld [vmem:[%s1580 + $0x31] sm:$0xff]
        %v1649 = vld [vmem:[%s1580 + $0x41] sm:$0xff]
        %v1650 = vld [vmem:[%s1580 + $0x51] sm:$0xff]
        %v1651 = vld [vmem:[%s1580 + $0x61] sm:$0xff]
        %v1652 = vld [vmem:[%s1580 + $0x71] sm:$0xff]
        %v1653 = vld [vmem:[%s1580 + $0xa1] sm:$0xff]
        %v1654 = vld [vmem:[%s1580 + $0xb1] sm:$0xff]
        %v1655 = vld [vmem:[%s1580 + $0xc1] sm:$0xff]
        %v1656 = vld [vmem:[%s1580 + $0xd1] sm:$0xff]
        %v1657 = vld [vmem:[%s1580 + $0xe1] sm:$0xff]
        %v1658 = vld [vmem:[%s1580 + $0xf1] sm:$0xff]
        %v1659 = vld [vmem:[%s1580 + $0x101] sm:$0xff]
        %v1660 = vld [vmem:[%s1580 + $0x111] sm:$0xff]
        %v1661 = vpack.c.bf16 %v1646, %v1645
        %v1662 = vpack.c.bf16 %v1648, %v1647
        %v1663 = vpack.c.bf16 %v1650, %v1649
        %v1664 = vpack.c.bf16 %v1652, %v1651
        %v1665 = vpack.c.bf16 %v1654, %v1653
        %v1666 = vpack.c.bf16 %v1656, %v1655
        %v1667 = vpack.c.bf16 %v1658, %v1657
        %v1668 = vpack.c.bf16 %v1660, %v1659
        %1677 = vrot.lane.b32.xlu0 %v1661, 96
        %v1678 = vpop.permute.xlu0 %1677
        %1679 = vrot.lane.b32.xlu0 %v1662, 96
        %v1680 = vpop.permute.xlu0 %1679
        %1681 = vrot.lane.b32.xlu0 %v1663, 96
        %v1682 = vpop.permute.xlu0 %1681
        %1683 = vrot.lane.b32.xlu0 %v1664, 96
        %v1684 = vpop.permute.xlu0 %1683
        %1685 = vrot.lane.b32.xlu0 %v1665, 96
        %v1686 = vpop.permute.xlu0 %1685
        %1687 = vrot.lane.b32.xlu0 %v1666, 96
        %v1688 = vpop.permute.xlu0 %1687
        %1689 = vrot.lane.b32.xlu0 %v1667, 96
        %v1690 = vpop.permute.xlu0 %1689
        %1691 = vrot.lane.b32.xlu0 %v1668, 96
        %v1692 = vpop.permute.xlu0 %1691
        %1701 = vst.msk [vmem:[#allocation3 + $0x8] sm:$0xff] %vm1475, %v1678
        %1702 = vst.msk [vmem:[#allocation3 + $0x20] sm:$0xff] %vm1475, %v1680
        %1703 = vst.msk [vmem:[#allocation3 + $0x38] sm:$0xff] %vm1475, %v1682
        %1704 = vst.msk [vmem:[#allocation3 + $0x50] sm:$0xff] %vm1475, %v1684
        %1705 = vst.msk [vmem:[#allocation3 + $0x68] sm:$0xff] %vm1475, %v1686
        %1706 = vst.msk [vmem:[#allocation3 + $0x80] sm:$0xff] %vm1475, %v1688
        %1707 = vst.msk [vmem:[#allocation3 + $0x98] sm:$0xff] %vm1475, %v1690
        %1708 = vst.msk [vmem:[#allocation3 + $0xb0] sm:$0xff] %vm1475, %v1692
        %v1709 = vld [vmem:[%s1580 + $0x2] sm:$0xff]
        %v1710 = vld [vmem:[%s1580 + $0x12] sm:$0xff]
        %v1711 = vld [vmem:[%s1580 + $0x22] sm:$0xff]
        %v1712 = vld [vmem:[%s1580 + $0x32] sm:$0xff]
        %v1713 = vld [vmem:[%s1580 + $0x42] sm:$0xff]
        %v1714 = vld [vmem:[%s1580 + $0x52] sm:$0xff]
        %v1715 = vld [vmem:[%s1580 + $0x62] sm:$0xff]
        %v1716 = vld [vmem:[%s1580 + $0x72] sm:$0xff]
        %v1717 = vld [vmem:[%s1580 + $0xa2] sm:$0xff]
        %v1718 = vld [vmem:[%s1580 + $0xb2] sm:$0xff]
        %v1719 = vld [vmem:[%s1580 + $0xc2] sm:$0xff]
        %v1720 = vld [vmem:[%s1580 + $0xd2] sm:$0xff]
        %v1721 = vld [vmem:[%s1580 + $0xe2] sm:$0xff]
        %v1722 = vld [vmem:[%s1580 + $0xf2] sm:$0xff]
        %v1723 = vld [vmem:[%s1580 + $0x102] sm:$0xff]
        %v1724 = vld [vmem:[%s1580 + $0x112] sm:$0xff]
        %v1725 = vpack.c.bf16 %v1710, %v1709
        %v1726 = vpack.c.bf16 %v1712, %v1711
        %v1727 = vpack.c.bf16 %v1714, %v1713
        %v1728 = vpack.c.bf16 %v1716, %v1715
        %v1729 = vpack.c.bf16 %v1718, %v1717
        %v1730 = vpack.c.bf16 %v1720, %v1719
        %v1731 = vpack.c.bf16 %v1722, %v1721
        %v1732 = vpack.c.bf16 %v1724, %v1723
        %1733 = vst.msk [vmem:[#allocation3 + $0x10] sm:$0xff] %vm1128, %v1725
        %1734 = vst.msk [vmem:[#allocation3 + $0x28] sm:$0xff] %vm1128, %v1726
        %1735 = vst.msk [vmem:[#allocation3 + $0x40] sm:$0xff] %vm1128, %v1727
        %1736 = vst.msk [vmem:[#allocation3 + $0x58] sm:$0xff] %vm1128, %v1728
        %1737 = vst.msk [vmem:[#allocation3 + $0x70] sm:$0xff] %vm1128, %v1729
        %1738 = vst.msk [vmem:[#allocation3 + $0x88] sm:$0xff] %vm1128, %v1730
        %1739 = vst.msk [vmem:[#allocation3 + $0xa0] sm:$0xff] %vm1128, %v1731
        %1740 = vst.msk [vmem:[#allocation3 + $0xb8] sm:$0xff] %vm1128, %v1732
        %v1741 = vld [vmem:[#allocation3] sm:$0xff]
        %v1742 = vld [vmem:[#allocation3 + $0x8] sm:$0xff]
        %v1743 = vld [vmem:[#allocation3 + $0x10] sm:$0xff]
        %v1744 = vld [vmem:[#allocation3 + $0x18] sm:$0xff]
        %v1745 = vld [vmem:[#allocation3 + $0x20] sm:$0xff]
        %v1746 = vld [vmem:[#allocation3 + $0x28] sm:$0xff]
        %v1747 = vld [vmem:[#allocation3 + $0x30] sm:$0xff]
        %v1748 = vld [vmem:[#allocation3 + $0x38] sm:$0xff]
        %v1749 = vld [vmem:[#allocation3 + $0x40] sm:$0xff]
        %v1750 = vld [vmem:[#allocation3 + $0x48] sm:$0xff]
        %v1751 = vld [vmem:[#allocation3 + $0x50] sm:$0xff]
        %v1752 = vld [vmem:[#allocation3 + $0x58] sm:$0xff]
        %v1753 = vld [vmem:[#allocation3 + $0x60] sm:$0xff]
        %v1754 = vld [vmem:[#allocation3 + $0x68] sm:$0xff]
        %v1755 = vld [vmem:[#allocation3 + $0x70] sm:$0xff]
        %v1756 = vld [vmem:[#allocation3 + $0x78] sm:$0xff]
        %v1757 = vld [vmem:[#allocation3 + $0x80] sm:$0xff]
        %v1758 = vld [vmem:[#allocation3 + $0x88] sm:$0xff]
        %v1759 = vld [vmem:[#allocation3 + $0x90] sm:$0xff]
        %v1760 = vld [vmem:[#allocation3 + $0x98] sm:$0xff]
        %v1761 = vld [vmem:[#allocation3 + $0xa0] sm:$0xff]
        %v1762 = vld [vmem:[#allocation3 + $0xa8] sm:$0xff]
        %v1763 = vld [vmem:[#allocation3 + $0xb0] sm:$0xff]
        %v1764 = vld [vmem:[#allocation3 + $0xb8] sm:$0xff]
        %v1765 = vld [vmem:[%s7] sm:$0xf]
        %v1766 = vld [vmem:[%s7 + $0x4] sm:$0xf]
        %v1767 = vld [vmem:[%s7 + $0x8] sm:$0xf]
        %v1768 = vld [vmem:[%s7 + $0xc] sm:$0xf]
        %v1769 = vld [vmem:[%s7 + $0x10] sm:$0xf]
        %v1770 = vld [vmem:[%s7 + $0x14] sm:$0xf]
        %v1771 = vld [vmem:[%s7 + $0x18] sm:$0xf]
        %v1772 = vld [vmem:[%s7 + $0x1c] sm:$0xf]
        %v1773 = vld [vmem:[%s7 + $0x20] sm:$0xf]
        %v1774 = vld [vmem:[%s7 + $0x24] sm:$0xf]
        %v1775 = vld [vmem:[%s7 + $0x28] sm:$0xf]
        %v1776 = vld [vmem:[%s7 + $0x2c] sm:$0xf]
        %v1777 = vld [vmem:[%s7 + $0x30] sm:$0xf]
        %v1778 = vld [vmem:[%s7 + $0x34] sm:$0xf]
        %v1779 = vld [vmem:[%s7 + $0x38] sm:$0xf]
        %v1780 = vld [vmem:[%s7 + $0x3c] sm:$0xf]
        %v1781 = vld [vmem:[%s7 + $0x40] sm:$0xf]
        %v1782 = vld [vmem:[%s7 + $0x44] sm:$0xf]
        %v1783 = vld [vmem:[%s7 + $0x48] sm:$0xf]
        %v1784 = vld [vmem:[%s7 + $0x4c] sm:$0xf]
        %v1785 = vld [vmem:[%s7 + $0x50] sm:$0xf]
        %v1786 = vld [vmem:[%s7 + $0x54] sm:$0xf]
        %v1787 = vld [vmem:[%s7 + $0x58] sm:$0xf]
        %v1788 = vld [vmem:[%s7 + $0x5c] sm:$0xf]
        %v1789 = vld [vmem:[%s7 + $0x60] sm:$0xf]
        %v1790 = vld [vmem:[%s7 + $0x64] sm:$0xf]
        %v1791 = vld [vmem:[%s7 + $0x68] sm:$0xf]
        %v1792 = vld [vmem:[%s7 + $0x6c] sm:$0xf]
        %v1793 = vld [vmem:[%s7 + $0x70] sm:$0xf]
        %v1794 = vld [vmem:[%s7 + $0x74] sm:$0xf]
        %v1795 = vld [vmem:[%s7 + $0x78] sm:$0xf]
        %v1796 = vld [vmem:[%s7 + $0x7c] sm:$0xf]
        %v1797 = vld [vmem:[%s7 + $0x80] sm:$0xf]
        %v1798 = vld [vmem:[%s7 + $0x84] sm:$0xf]
        %v1799 = vld [vmem:[%s7 + $0x88] sm:$0xf]
        %v1800 = vld [vmem:[%s7 + $0x8c] sm:$0xf]
        %s1801 = scalar_lea.vmem [#allocation2], 160
        %v1802 = vld [vmem:[%s1801] sm:$0xff]
        %v1803 = vld [vmem:[%s1801 + $0x10] sm:$0xff]
        %v1804 = vld [vmem:[%s1801 + $0x20] sm:$0xff]
        %v1805 = vld [vmem:[%s1801 + $0x30] sm:$0xff]
        %v1806 = vld [vmem:[%s1801 + $0x40] sm:$0xff]
        %v1807 = vld [vmem:[%s1801 + $0x50] sm:$0xff]
        %v1808 = vld [vmem:[%s1801 + $0x60] sm:$0xff]
        %v1809 = vld [vmem:[%s1801 + $0x70] sm:$0xff]
        %v1810 = vld [vmem:[%s1801 + $0xa0] sm:$0xff]
        %v1811 = vld [vmem:[%s1801 + $0xb0] sm:$0xff]
        %v1812 = vld [vmem:[%s1801 + $0xc0] sm:$0xff]
        %v1813 = vld [vmem:[%s1801 + $0xd0] sm:$0xff]
        %v1814 = vld [vmem:[%s1801 + $0xe0] sm:$0xff]
        %v1815 = vld [vmem:[%s1801 + $0xf0] sm:$0xff]
        %v1816 = vld [vmem:[%s1801 + $0x100] sm:$0xff]
        %v1817 = vld [vmem:[%s1801 + $0x110] sm:$0xff]
        %v1818 = vpack.c.bf16 %v1803, %v1802
        %v1819 = vpack.c.bf16 %v1805, %v1804
        %v1820 = vpack.c.bf16 %v1807, %v1806
        %v1821 = vpack.c.bf16 %v1809, %v1808
        %v1822 = vpack.c.bf16 %v1811, %v1810
        %v1823 = vpack.c.bf16 %v1813, %v1812
        %v1824 = vpack.c.bf16 %v1815, %v1814
        %v1825 = vpack.c.bf16 %v1817, %v1816
        %1826 = vst.msk [vmem:[#allocation3] sm:$0xff] %vm1128, %v1818
        %1827 = vst.msk [vmem:[#allocation3 + $0x18] sm:$0xff] %vm1128, %v1819
        %1828 = vst.msk [vmem:[#allocation3 + $0x30] sm:$0xff] %vm1128, %v1820
        %1829 = vst.msk [vmem:[#allocation3 + $0x48] sm:$0xff] %vm1128, %v1821
        %1830 = vst.msk [vmem:[#allocation3 + $0x60] sm:$0xff] %vm1128, %v1822
        %1831 = vst.msk [vmem:[#allocation3 + $0x78] sm:$0xff] %vm1128, %v1823
        %1832 = vst.msk [vmem:[#allocation3 + $0x90] sm:$0xff] %vm1128, %v1824
        %1833 = vst.msk [vmem:[#allocation3 + $0xa8] sm:$0xff] %vm1128, %v1825
        %v1834 = vld [vmem:[%s1801 + $0x1] sm:$0xff]
        %v1835 = vld [vmem:[%s1801 + $0x11] sm:$0xff]
        %v1836 = vld [vmem:[%s1801 + $0x21] sm:$0xff]
        %v1837 = vld [vmem:[%s1801 + $0x31] sm:$0xff]
        %v1838 = vld [vmem:[%s1801 + $0x41] sm:$0xff]
        %v1839 = vld [vmem:[%s1801 + $0x51] sm:$0xff]
        %v1840 = vld [vmem:[%s1801 + $0x61] sm:$0xff]
        %v1841 = vld [vmem:[%s1801 + $0x71] sm:$0xff]
        %v1842 = vld [vmem:[%s1801 + $0xa1] sm:$0xff]
        %v1843 = vld [vmem:[%s1801 + $0xb1] sm:$0xff]
        %v1844 = vld [vmem:[%s1801 + $0xc1] sm:$0xff]
        %v1845 = vld [vmem:[%s1801 + $0xd1] sm:$0xff]
        %v1846 = vld [vmem:[%s1801 + $0xe1] sm:$0xff]
        %v1847 = vld [vmem:[%s1801 + $0xf1] sm:$0xff]
        %v1848 = vld [vmem:[%s1801 + $0x101] sm:$0xff]
        %v1849 = vld [vmem:[%s1801 + $0x111] sm:$0xff]
        %v1850 = vpack.c.bf16 %v1835, %v1834
        %v1851 = vpack.c.bf16 %v1837, %v1836
        %v1852 = vpack.c.bf16 %v1839, %v1838
        %v1853 = vpack.c.bf16 %v1841, %v1840
        %v1854 = vpack.c.bf16 %v1843, %v1842
        %v1855 = vpack.c.bf16 %v1845, %v1844
        %v1856 = vpack.c.bf16 %v1847, %v1846
        %v1857 = vpack.c.bf16 %v1849, %v1848
        %1866 = vrot.lane.b32.xlu0 %v1850, 32
        %v1867 = vpop.permute.xlu0 %1866
        %1868 = vrot.lane.b32.xlu0 %v1851, 32
        %v1869 = vpop.permute.xlu0 %1868
        %1870 = vrot.lane.b32.xlu0 %v1852, 32
        %v1871 = vpop.permute.xlu0 %1870
        %1872 = vrot.lane.b32.xlu0 %v1853, 32
        %v1873 = vpop.permute.xlu0 %1872
        %1874 = vrot.lane.b32.xlu0 %v1854, 32
        %v1875 = vpop.permute.xlu0 %1874
        %1876 = vrot.lane.b32.xlu0 %v1855, 32
        %v1877 = vpop.permute.xlu0 %1876
        %1878 = vrot.lane.b32.xlu0 %v1856, 32
        %v1879 = vpop.permute.xlu0 %1878
        %1880 = vrot.lane.b32.xlu0 %v1857, 32
        %v1881 = vpop.permute.xlu0 %1880
        %1890 = vst.msk [vmem:[#allocation3] sm:$0xff] %vm1345, %v1867
        %1891 = vst.msk [vmem:[#allocation3 + $0x18] sm:$0xff] %vm1345, %v1869
        %1892 = vst.msk [vmem:[#allocation3 + $0x30] sm:$0xff] %vm1345, %v1871
        %1893 = vst.msk [vmem:[#allocation3 + $0x48] sm:$0xff] %vm1345, %v1873
        %1894 = vst.msk [vmem:[#allocation3 + $0x60] sm:$0xff] %vm1345, %v1875
        %1895 = vst.msk [vmem:[#allocation3 + $0x78] sm:$0xff] %vm1345, %v1877
        %1896 = vst.msk [vmem:[#allocation3 + $0x90] sm:$0xff] %vm1345, %v1879
        %1897 = vst.msk [vmem:[#allocation3 + $0xa8] sm:$0xff] %vm1345, %v1881
        %v1898 = vld [vmem:[%s1801 + $0x2] sm:$0xff]
        %v1899 = vld [vmem:[%s1801 + $0x12] sm:$0xff]
        %v1900 = vld [vmem:[%s1801 + $0x22] sm:$0xff]
        %v1901 = vld [vmem:[%s1801 + $0x32] sm:$0xff]
        %v1902 = vld [vmem:[%s1801 + $0x42] sm:$0xff]
        %v1903 = vld [vmem:[%s1801 + $0x52] sm:$0xff]
        %v1904 = vld [vmem:[%s1801 + $0x62] sm:$0xff]
        %v1905 = vld [vmem:[%s1801 + $0x72] sm:$0xff]
        %v1906 = vld [vmem:[%s1801 + $0xa2] sm:$0xff]
        %v1907 = vld [vmem:[%s1801 + $0xb2] sm:$0xff]
        %v1908 = vld [vmem:[%s1801 + $0xc2] sm:$0xff]
        %v1909 = vld [vmem:[%s1801 + $0xd2] sm:$0xff]
        %v1910 = vld [vmem:[%s1801 + $0xe2] sm:$0xff]
        %v1911 = vld [vmem:[%s1801 + $0xf2] sm:$0xff]
        %v1912 = vld [vmem:[%s1801 + $0x102] sm:$0xff]
        %v1913 = vld [vmem:[%s1801 + $0x112] sm:$0xff]
        %v1914 = vpack.c.bf16 %v1899, %v1898
        %v1915 = vpack.c.bf16 %v1901, %v1900
        %v1916 = vpack.c.bf16 %v1903, %v1902
        %v1917 = vpack.c.bf16 %v1905, %v1904
        %v1918 = vpack.c.bf16 %v1907, %v1906
        %v1919 = vpack.c.bf16 %v1909, %v1908
        %v1920 = vpack.c.bf16 %v1911, %v1910
        %v1921 = vpack.c.bf16 %v1913, %v1912
        %1930 = vrot.lane.b32.xlu0 %v1914, 64
        %v1931 = vpop.permute.xlu0 %1930
        %1932 = vrot.lane.b32.xlu0 %v1915, 64
        %v1933 = vpop.permute.xlu0 %1932
        %1934 = vrot.lane.b32.xlu0 %v1916, 64
        %v1935 = vpop.permute.xlu0 %1934
        %1936 = vrot.lane.b32.xlu0 %v1917, 64
        %v1937 = vpop.permute.xlu0 %1936
        %1938 = vrot.lane.b32.xlu0 %v1918, 64
        %v1939 = vpop.permute.xlu0 %1938
        %1940 = vrot.lane.b32.xlu0 %v1919, 64
        %v1941 = vpop.permute.xlu0 %1940
        %1942 = vrot.lane.b32.xlu0 %v1920, 64
        %v1943 = vpop.permute.xlu0 %1942
        %1944 = vrot.lane.b32.xlu0 %v1921, 64
        %v1945 = vpop.permute.xlu0 %1944
        %1954 = vst.msk [vmem:[#allocation3] sm:$0xff] %vm1410, %v1931
        %1955 = vst.msk [vmem:[#allocation3 + $0x18] sm:$0xff] %vm1410, %v1933
        %1956 = vst.msk [vmem:[#allocation3 + $0x30] sm:$0xff] %vm1410, %v1935
        %1957 = vst.msk [vmem:[#allocation3 + $0x48] sm:$0xff] %vm1410, %v1937
        %1958 = vst.msk [vmem:[#allocation3 + $0x60] sm:$0xff] %vm1410, %v1939
        %1959 = vst.msk [vmem:[#allocation3 + $0x78] sm:$0xff] %vm1410, %v1941
        %1960 = vst.msk [vmem:[#allocation3 + $0x90] sm:$0xff] %vm1410, %v1943
        %1961 = vst.msk [vmem:[#allocation3 + $0xa8] sm:$0xff] %vm1410, %v1945
        %v1962 = vld [vmem:[%s1127] sm:$0xff]
        %v1963 = vld [vmem:[%s1127 + $0x10] sm:$0xff]
        %v1964 = vld [vmem:[%s1127 + $0x20] sm:$0xff]
        %v1965 = vld [vmem:[%s1127 + $0x30] sm:$0xff]
        %v1966 = vld [vmem:[%s1127 + $0x40] sm:$0xff]
        %v1967 = vld [vmem:[%s1127 + $0x50] sm:$0xff]
        %v1968 = vld [vmem:[%s1127 + $0x60] sm:$0xff]
        %v1969 = vld [vmem:[%s1127 + $0x70] sm:$0xff]
        %v1970 = vld [vmem:[%s1127 + $0xa0] sm:$0xff]
        %v1971 = vld [vmem:[%s1127 + $0xb0] sm:$0xff]
        %v1972 = vld [vmem:[%s1127 + $0xc0] sm:$0xff]
        %v1973 = vld [vmem:[%s1127 + $0xd0] sm:$0xff]
        %v1974 = vld [vmem:[%s1127 + $0xe0] sm:$0xff]
        %v1975 = vld [vmem:[%s1127 + $0xf0] sm:$0xff]
        %v1976 = vld [vmem:[%s1127 + $0x100] sm:$0xff]
        %v1977 = vld [vmem:[%s1127 + $0x110] sm:$0xff]
        %v1978 = vpack.c.bf16 %v1963, %v1962
        %v1979 = vpack.c.bf16 %v1965, %v1964
        %v1980 = vpack.c.bf16 %v1967, %v1966
        %v1981 = vpack.c.bf16 %v1969, %v1968
        %v1982 = vpack.c.bf16 %v1971, %v1970
        %v1983 = vpack.c.bf16 %v1973, %v1972
        %v1984 = vpack.c.bf16 %v1975, %v1974
        %v1985 = vpack.c.bf16 %v1977, %v1976
        %1994 = vrot.lane.b32.xlu0 %v1978, 96
        %v1995 = vpop.permute.xlu0 %1994
        %1996 = vrot.lane.b32.xlu0 %v1979, 96
        %v1997 = vpop.permute.xlu0 %1996
        %1998 = vrot.lane.b32.xlu0 %v1980, 96
        %v1999 = vpop.permute.xlu0 %1998
        %2000 = vrot.lane.b32.xlu0 %v1981, 96
        %v2001 = vpop.permute.xlu0 %2000
        %2002 = vrot.lane.b32.xlu0 %v1982, 96
        %v2003 = vpop.permute.xlu0 %2002
        %2004 = vrot.lane.b32.xlu0 %v1983, 96
        %v2005 = vpop.permute.xlu0 %2004
        %2006 = vrot.lane.b32.xlu0 %v1984, 96
        %v2007 = vpop.permute.xlu0 %2006
        %2008 = vrot.lane.b32.xlu0 %v1985, 96
        %v2009 = vpop.permute.xlu0 %2008
        %2018 = vst.msk [vmem:[#allocation3] sm:$0xff] %vm1475, %v1995
        %2019 = vst.msk [vmem:[#allocation3 + $0x18] sm:$0xff] %vm1475, %v1997
        %2020 = vst.msk [vmem:[#allocation3 + $0x30] sm:$0xff] %vm1475, %v1999
        %2021 = vst.msk [vmem:[#allocation3 + $0x48] sm:$0xff] %vm1475, %v2001
        %2022 = vst.msk [vmem:[#allocation3 + $0x60] sm:$0xff] %vm1475, %v2003
        %2023 = vst.msk [vmem:[#allocation3 + $0x78] sm:$0xff] %vm1475, %v2005
        %2024 = vst.msk [vmem:[#allocation3 + $0x90] sm:$0xff] %vm1475, %v2007
        %2025 = vst.msk [vmem:[#allocation3 + $0xa8] sm:$0xff] %vm1475, %v2009
        %v2026 = vld [vmem:[%s1127 + $0x1] sm:$0xff]
        %v2027 = vld [vmem:[%s1127 + $0x11] sm:$0xff]
        %v2028 = vld [vmem:[%s1127 + $0x21] sm:$0xff]
        %v2029 = vld [vmem:[%s1127 + $0x31] sm:$0xff]
        %v2030 = vld [vmem:[%s1127 + $0x41] sm:$0xff]
        %v2031 = vld [vmem:[%s1127 + $0x51] sm:$0xff]
        %v2032 = vld [vmem:[%s1127 + $0x61] sm:$0xff]
        %v2033 = vld [vmem:[%s1127 + $0x71] sm:$0xff]
        %v2034 = vld [vmem:[%s1127 + $0xa1] sm:$0xff]
        %v2035 = vld [vmem:[%s1127 + $0xb1] sm:$0xff]
        %v2036 = vld [vmem:[%s1127 + $0xc1] sm:$0xff]
        %v2037 = vld [vmem:[%s1127 + $0xd1] sm:$0xff]
        %v2038 = vld [vmem:[%s1127 + $0xe1] sm:$0xff]
        %v2039 = vld [vmem:[%s1127 + $0xf1] sm:$0xff]
        %v2040 = vld [vmem:[%s1127 + $0x101] sm:$0xff]
        %v2041 = vld [vmem:[%s1127 + $0x111] sm:$0xff]
        %v2042 = vpack.c.bf16 %v2027, %v2026
        %v2043 = vpack.c.bf16 %v2029, %v2028
        %v2044 = vpack.c.bf16 %v2031, %v2030
        %v2045 = vpack.c.bf16 %v2033, %v2032
        %v2046 = vpack.c.bf16 %v2035, %v2034
        %v2047 = vpack.c.bf16 %v2037, %v2036
        %v2048 = vpack.c.bf16 %v2039, %v2038
        %v2049 = vpack.c.bf16 %v2041, %v2040
        %2050 = vst.msk [vmem:[#allocation3 + $0x8] sm:$0xff] %vm1128, %v2042
        %2051 = vst.msk [vmem:[#allocation3 + $0x20] sm:$0xff] %vm1128, %v2043
        %2052 = vst.msk [vmem:[#allocation3 + $0x38] sm:$0xff] %vm1128, %v2044
        %2053 = vst.msk [vmem:[#allocation3 + $0x50] sm:$0xff] %vm1128, %v2045
        %2054 = vst.msk [vmem:[#allocation3 + $0x68] sm:$0xff] %vm1128, %v2046
        %2055 = vst.msk [vmem:[#allocation3 + $0x80] sm:$0xff] %vm1128, %v2047
        %2056 = vst.msk [vmem:[#allocation3 + $0x98] sm:$0xff] %vm1128, %v2048
        %2057 = vst.msk [vmem:[#allocation3 + $0xb0] sm:$0xff] %vm1128, %v2049
        %v2058 = vld [vmem:[%s1127 + $0x2] sm:$0xff]
        %v2059 = vld [vmem:[%s1127 + $0x12] sm:$0xff]
        %v2060 = vld [vmem:[%s1127 + $0x22] sm:$0xff]
        %v2061 = vld [vmem:[%s1127 + $0x32] sm:$0xff]
        %v2062 = vld [vmem:[%s1127 + $0x42] sm:$0xff]
        %v2063 = vld [vmem:[%s1127 + $0x52] sm:$0xff]
        %v2064 = vld [vmem:[%s1127 + $0x62] sm:$0xff]
        %v2065 = vld [vmem:[%s1127 + $0x72] sm:$0xff]
        %v2066 = vld [vmem:[%s1127 + $0xa2] sm:$0xff]
        %v2067 = vld [vmem:[%s1127 + $0xb2] sm:$0xff]
        %v2068 = vld [vmem:[%s1127 + $0xc2] sm:$0xff]
        %v2069 = vld [vmem:[%s1127 + $0xd2] sm:$0xff]
        %v2070 = vld [vmem:[%s1127 + $0xe2] sm:$0xff]
        %v2071 = vld [vmem:[%s1127 + $0xf2] sm:$0xff]
        %v2072 = vld [vmem:[%s1127 + $0x102] sm:$0xff]
        %v2073 = vld [vmem:[%s1127 + $0x112] sm:$0xff]
        %v2074 = vpack.c.bf16 %v2059, %v2058
        %v2075 = vpack.c.bf16 %v2061, %v2060
        %v2076 = vpack.c.bf16 %v2063, %v2062
        %v2077 = vpack.c.bf16 %v2065, %v2064
        %v2078 = vpack.c.bf16 %v2067, %v2066
        %v2079 = vpack.c.bf16 %v2069, %v2068
        %v2080 = vpack.c.bf16 %v2071, %v2070
        %v2081 = vpack.c.bf16 %v2073, %v2072
        %2090 = vrot.lane.b32.xlu0 %v2074, 32
        %v2091 = vpop.permute.xlu0 %2090
        %2092 = vrot.lane.b32.xlu0 %v2075, 32
        %v2093 = vpop.permute.xlu0 %2092
        %2094 = vrot.lane.b32.xlu0 %v2076, 32
        %v2095 = vpop.permute.xlu0 %2094
        %2096 = vrot.lane.b32.xlu0 %v2077, 32
        %v2097 = vpop.permute.xlu0 %2096
        %2098 = vrot.lane.b32.xlu0 %v2078, 32
        %v2099 = vpop.permute.xlu0 %2098
        %2100 = vrot.lane.b32.xlu0 %v2079, 32
        %v2101 = vpop.permute.xlu0 %2100
        %2102 = vrot.lane.b32.xlu0 %v2080, 32
        %v2103 = vpop.permute.xlu0 %2102
        %2104 = vrot.lane.b32.xlu0 %v2081, 32
        %v2105 = vpop.permute.xlu0 %2104
        %2114 = vst.msk [vmem:[#allocation3 + $0x8] sm:$0xff] %vm1345, %v2091
        %2115 = vst.msk [vmem:[#allocation3 + $0x20] sm:$0xff] %vm1345, %v2093
        %2116 = vst.msk [vmem:[#allocation3 + $0x38] sm:$0xff] %vm1345, %v2095
        %2117 = vst.msk [vmem:[#allocation3 + $0x50] sm:$0xff] %vm1345, %v2097
        %2118 = vst.msk [vmem:[#allocation3 + $0x68] sm:$0xff] %vm1345, %v2099
        %2119 = vst.msk [vmem:[#allocation3 + $0x80] sm:$0xff] %vm1345, %v2101
        %2120 = vst.msk [vmem:[#allocation3 + $0x98] sm:$0xff] %vm1345, %v2103
        %2121 = vst.msk [vmem:[#allocation3 + $0xb0] sm:$0xff] %vm1345, %v2105
        %s2122 = scalar_lea.vmem [#allocation2], 192
        %v2123 = vld [vmem:[%s2122] sm:$0xff]
        %v2124 = vld [vmem:[%s2122 + $0x10] sm:$0xff]
        %v2125 = vld [vmem:[%s2122 + $0x20] sm:$0xff]
        %v2126 = vld [vmem:[%s2122 + $0x30] sm:$0xff]
        %v2127 = vld [vmem:[%s2122 + $0x40] sm:$0xff]
        %v2128 = vld [vmem:[%s2122 + $0x50] sm:$0xff]
        %v2129 = vld [vmem:[%s2122 + $0x60] sm:$0xff]
        %v2130 = vld [vmem:[%s2122 + $0x70] sm:$0xff]
        %v2131 = vld [vmem:[%s2122 + $0xa0] sm:$0xff]
        %v2132 = vld [vmem:[%s2122 + $0xb0] sm:$0xff]
        %v2133 = vld [vmem:[%s2122 + $0xc0] sm:$0xff]
        %v2134 = vld [vmem:[%s2122 + $0xd0] sm:$0xff]
        %v2135 = vld [vmem:[%s2122 + $0xe0] sm:$0xff]
        %v2136 = vld [vmem:[%s2122 + $0xf0] sm:$0xff]
        %v2137 = vld [vmem:[%s2122 + $0x100] sm:$0xff]
        %v2138 = vld [vmem:[%s2122 + $0x110] sm:$0xff]
        %v2139 = vpack.c.bf16 %v2124, %v2123
        %v2140 = vpack.c.bf16 %v2126, %v2125
        %v2141 = vpack.c.bf16 %v2128, %v2127
        %v2142 = vpack.c.bf16 %v2130, %v2129
        %v2143 = vpack.c.bf16 %v2132, %v2131
        %v2144 = vpack.c.bf16 %v2134, %v2133
        %v2145 = vpack.c.bf16 %v2136, %v2135
        %v2146 = vpack.c.bf16 %v2138, %v2137
        %2155 = vrot.lane.b32.xlu0 %v2139, 64
        %v2156 = vpop.permute.xlu0 %2155
        %2157 = vrot.lane.b32.xlu0 %v2140, 64
        %v2158 = vpop.permute.xlu0 %2157
        %2159 = vrot.lane.b32.xlu0 %v2141, 64
        %v2160 = vpop.permute.xlu0 %2159
        %2161 = vrot.lane.b32.xlu0 %v2142, 64
        %v2162 = vpop.permute.xlu0 %2161
        %2163 = vrot.lane.b32.xlu0 %v2143, 64
        %v2164 = vpop.permute.xlu0 %2163
        %2165 = vrot.lane.b32.xlu0 %v2144, 64
        %v2166 = vpop.permute.xlu0 %2165
        %2167 = vrot.lane.b32.xlu0 %v2145, 64
        %v2168 = vpop.permute.xlu0 %2167
        %2169 = vrot.lane.b32.xlu0 %v2146, 64
        %v2170 = vpop.permute.xlu0 %2169
        %2179 = vst.msk [vmem:[#allocation3 + $0x8] sm:$0xff] %vm1410, %v2156
        %2180 = vst.msk [vmem:[#allocation3 + $0x20] sm:$0xff] %vm1410, %v2158
        %2181 = vst.msk [vmem:[#allocation3 + $0x38] sm:$0xff] %vm1410, %v2160
        %2182 = vst.msk [vmem:[#allocation3 + $0x50] sm:$0xff] %vm1410, %v2162
        %2183 = vst.msk [vmem:[#allocation3 + $0x68] sm:$0xff] %vm1410, %v2164
        %2184 = vst.msk [vmem:[#allocation3 + $0x80] sm:$0xff] %vm1410, %v2166
        %2185 = vst.msk [vmem:[#allocation3 + $0x98] sm:$0xff] %vm1410, %v2168
        %2186 = vst.msk [vmem:[#allocation3 + $0xb0] sm:$0xff] %vm1410, %v2170
        %v2187 = vld [vmem:[%s2122 + $0x1] sm:$0xff]
        %v2188 = vld [vmem:[%s2122 + $0x11] sm:$0xff]
        %v2189 = vld [vmem:[%s2122 + $0x21] sm:$0xff]
        %v2190 = vld [vmem:[%s2122 + $0x31] sm:$0xff]
        %v2191 = vld [vmem:[%s2122 + $0x41] sm:$0xff]
        %v2192 = vld [vmem:[%s2122 + $0x51] sm:$0xff]
        %v2193 = vld [vmem:[%s2122 + $0x61] sm:$0xff]
        %v2194 = vld [vmem:[%s2122 + $0x71] sm:$0xff]
        %v2195 = vld [vmem:[%s2122 + $0xa1] sm:$0xff]
        %v2196 = vld [vmem:[%s2122 + $0xb1] sm:$0xff]
        %v2197 = vld [vmem:[%s2122 + $0xc1] sm:$0xff]
        %v2198 = vld [vmem:[%s2122 + $0xd1] sm:$0xff]
        %v2199 = vld [vmem:[%s2122 + $0xe1] sm:$0xff]
        %v2200 = vld [vmem:[%s2122 + $0xf1] sm:$0xff]
        %v2201 = vld [vmem:[%s2122 + $0x101] sm:$0xff]
        %v2202 = vld [vmem:[%s2122 + $0x111] sm:$0xff]
        %v2203 = vpack.c.bf16 %v2188, %v2187
        %v2204 = vpack.c.bf16 %v2190, %v2189
        %v2205 = vpack.c.bf16 %v2192, %v2191
        %v2206 = vpack.c.bf16 %v2194, %v2193
        %v2207 = vpack.c.bf16 %v2196, %v2195
        %v2208 = vpack.c.bf16 %v2198, %v2197
        %v2209 = vpack.c.bf16 %v2200, %v2199
        %v2210 = vpack.c.bf16 %v2202, %v2201
        %2219 = vrot.lane.b32.xlu0 %v2203, 96
        %v2220 = vpop.permute.xlu0 %2219
        %2221 = vrot.lane.b32.xlu0 %v2204, 96
        %v2222 = vpop.permute.xlu0 %2221
        %2223 = vrot.lane.b32.xlu0 %v2205, 96
        %v2224 = vpop.permute.xlu0 %2223
        %2225 = vrot.lane.b32.xlu0 %v2206, 96
        %v2226 = vpop.permute.xlu0 %2225
        %2227 = vrot.lane.b32.xlu0 %v2207, 96
        %v2228 = vpop.permute.xlu0 %2227
        %2229 = vrot.lane.b32.xlu0 %v2208, 96
        %v2230 = vpop.permute.xlu0 %2229
        %2231 = vrot.lane.b32.xlu0 %v2209, 96
        %v2232 = vpop.permute.xlu0 %2231
        %2233 = vrot.lane.b32.xlu0 %v2210, 96
        %v2234 = vpop.permute.xlu0 %2233
        %2243 = vst.msk [vmem:[#allocation3 + $0x8] sm:$0xff] %vm1475, %v2220
        %2244 = vst.msk [vmem:[#allocation3 + $0x20] sm:$0xff] %vm1475, %v2222
        %2245 = vst.msk [vmem:[#allocation3 + $0x38] sm:$0xff] %vm1475, %v2224
        %2246 = vst.msk [vmem:[#allocation3 + $0x50] sm:$0xff] %vm1475, %v2226
        %2247 = vst.msk [vmem:[#allocation3 + $0x68] sm:$0xff] %vm1475, %v2228
        %2248 = vst.msk [vmem:[#allocation3 + $0x80] sm:$0xff] %vm1475, %v2230
        %2249 = vst.msk [vmem:[#allocation3 + $0x98] sm:$0xff] %vm1475, %v2232
        %2250 = vst.msk [vmem:[#allocation3 + $0xb0] sm:$0xff] %vm1475, %v2234
        %v2251 = vld [vmem:[%s2122 + $0x2] sm:$0xff]
        %v2252 = vld [vmem:[%s2122 + $0x12] sm:$0xff]
        %v2253 = vld [vmem:[%s2122 + $0x22] sm:$0xff]
        %v2254 = vld [vmem:[%s2122 + $0x32] sm:$0xff]
        %v2255 = vld [vmem:[%s2122 + $0x42] sm:$0xff]
        %v2256 = vld [vmem:[%s2122 + $0x52] sm:$0xff]
        %v2257 = vld [vmem:[%s2122 + $0x62] sm:$0xff]
        %v2258 = vld [vmem:[%s2122 + $0x72] sm:$0xff]
        %v2259 = vld [vmem:[%s2122 + $0xa2] sm:$0xff]
        %v2260 = vld [vmem:[%s2122 + $0xb2] sm:$0xff]
        %v2261 = vld [vmem:[%s2122 + $0xc2] sm:$0xff]
        %v2262 = vld [vmem:[%s2122 + $0xd2] sm:$0xff]
        %v2263 = vld [vmem:[%s2122 + $0xe2] sm:$0xff]
        %v2264 = vld [vmem:[%s2122 + $0xf2] sm:$0xff]
        %v2265 = vld [vmem:[%s2122 + $0x102] sm:$0xff]
        %v2266 = vld [vmem:[%s2122 + $0x112] sm:$0xff]
        %v2267 = vpack.c.bf16 %v2252, %v2251
        %v2268 = vpack.c.bf16 %v2254, %v2253
        %v2269 = vpack.c.bf16 %v2256, %v2255
        %v2270 = vpack.c.bf16 %v2258, %v2257
        %v2271 = vpack.c.bf16 %v2260, %v2259
        %v2272 = vpack.c.bf16 %v2262, %v2261
        %v2273 = vpack.c.bf16 %v2264, %v2263
        %v2274 = vpack.c.bf16 %v2266, %v2265
        %2275 = vst.msk [vmem:[#allocation3 + $0x10] sm:$0xff] %vm1128, %v2267
        %2276 = vst.msk [vmem:[#allocation3 + $0x28] sm:$0xff] %vm1128, %v2268
        %2277 = vst.msk [vmem:[#allocation3 + $0x40] sm:$0xff] %vm1128, %v2269
        %2278 = vst.msk [vmem:[#allocation3 + $0x58] sm:$0xff] %vm1128, %v2270
        %2279 = vst.msk [vmem:[#allocation3 + $0x70] sm:$0xff] %vm1128, %v2271
        %2280 = vst.msk [vmem:[#allocation3 + $0x88] sm:$0xff] %vm1128, %v2272
        %2281 = vst.msk [vmem:[#allocation3 + $0xa0] sm:$0xff] %vm1128, %v2273
        %2282 = vst.msk [vmem:[#allocation3 + $0xb8] sm:$0xff] %vm1128, %v2274
        %v2283 = vld [vmem:[#allocation3] sm:$0xff]
        %v2284 = vld [vmem:[#allocation3 + $0x8] sm:$0xff]
        %v2285 = vld [vmem:[#allocation3 + $0x10] sm:$0xff]
        %v2286 = vld [vmem:[#allocation3 + $0x18] sm:$0xff]
        %v2287 = vld [vmem:[#allocation3 + $0x20] sm:$0xff]
        %v2288 = vld [vmem:[#allocation3 + $0x28] sm:$0xff]
        %v2289 = vld [vmem:[#allocation3 + $0x30] sm:$0xff]
        %v2290 = vld [vmem:[#allocation3 + $0x38] sm:$0xff]
        %v2291 = vld [vmem:[#allocation3 + $0x40] sm:$0xff]
        %v2292 = vld [vmem:[#allocation3 + $0x48] sm:$0xff]
        %v2293 = vld [vmem:[#allocation3 + $0x50] sm:$0xff]
        %v2294 = vld [vmem:[#allocation3 + $0x58] sm:$0xff]
        %v2295 = vld [vmem:[#allocation3 + $0x60] sm:$0xff]
        %v2296 = vld [vmem:[#allocation3 + $0x68] sm:$0xff]
        %v2297 = vld [vmem:[#allocation3 + $0x70] sm:$0xff]
        %v2298 = vld [vmem:[#allocation3 + $0x78] sm:$0xff]
        %v2299 = vld [vmem:[#allocation3 + $0x80] sm:$0xff]
        %v2300 = vld [vmem:[#allocation3 + $0x88] sm:$0xff]
        %v2301 = vld [vmem:[#allocation3 + $0x90] sm:$0xff]
        %v2302 = vld [vmem:[#allocation3 + $0x98] sm:$0xff]
        %v2303 = vld [vmem:[#allocation3 + $0xa0] sm:$0xff]
        %v2304 = vld [vmem:[#allocation3 + $0xa8] sm:$0xff]
        %v2305 = vld [vmem:[#allocation3 + $0xb0] sm:$0xff]
        %v2306 = vld [vmem:[#allocation3 + $0xb8] sm:$0xff]
        %s2307 = scalar_lea.vmem %s7, 144
        %v2308 = vld [vmem:[%s2307] sm:$0xf]
        %v2309 = vld [vmem:[%s2307 + $0x4] sm:$0xf]
        %v2310 = vld [vmem:[%s2307 + $0x8] sm:$0xf]
        %v2311 = vld [vmem:[%s2307 + $0xc] sm:$0xf]
        %v2312 = vld [vmem:[%s2307 + $0x10] sm:$0xf]
        %v2313 = vld [vmem:[%s2307 + $0x14] sm:$0xf]
        %v2314 = vld [vmem:[%s2307 + $0x18] sm:$0xf]
        %v2315 = vld [vmem:[%s2307 + $0x1c] sm:$0xf]
        %v2316 = vld [vmem:[%s2307 + $0x20] sm:$0xf]
        %v2317 = vld [vmem:[%s2307 + $0x24] sm:$0xf]
        %v2318 = vld [vmem:[%s2307 + $0x28] sm:$0xf]
        %v2319 = vld [vmem:[%s2307 + $0x2c] sm:$0xf]
        %v2320 = vld [vmem:[%s2307 + $0x30] sm:$0xf]
        %v2321 = vld [vmem:[%s2307 + $0x34] sm:$0xf]
        %v2322 = vld [vmem:[%s2307 + $0x38] sm:$0xf]
        %v2323 = vld [vmem:[%s2307 + $0x3c] sm:$0xf]
        %v2324 = vld [vmem:[%s2307 + $0x40] sm:$0xf]
        %v2325 = vld [vmem:[%s2307 + $0x44] sm:$0xf]
        %v2326 = vld [vmem:[%s2307 + $0x48] sm:$0xf]
        %v2327 = vld [vmem:[%s2307 + $0x4c] sm:$0xf]
        %v2328 = vld [vmem:[%s2307 + $0x50] sm:$0xf]
        %v2329 = vld [vmem:[%s2307 + $0x54] sm:$0xf]
        %v2330 = vld [vmem:[%s2307 + $0x58] sm:$0xf]
        %v2331 = vld [vmem:[%s2307 + $0x5c] sm:$0xf]
        %v2332 = vld [vmem:[%s2307 + $0x60] sm:$0xf]
        %v2333 = vld [vmem:[%s2307 + $0x64] sm:$0xf]
        %v2334 = vld [vmem:[%s2307 + $0x68] sm:$0xf]
        %v2335 = vld [vmem:[%s2307 + $0x6c] sm:$0xf]
        %v2336 = vld [vmem:[%s2307 + $0x70] sm:$0xf]
        %v2337 = vld [vmem:[%s2307 + $0x74] sm:$0xf]
        %v2338 = vld [vmem:[%s2307 + $0x78] sm:$0xf]
        %v2339 = vld [vmem:[%s2307 + $0x7c] sm:$0xf]
        %v2340 = vld [vmem:[%s2307 + $0x80] sm:$0xf]
        %v2341 = vld [vmem:[%s2307 + $0x84] sm:$0xf]
        %v2342 = vld [vmem:[%s2307 + $0x88] sm:$0xf]
        %v2343 = vld [vmem:[%s2307 + $0x8c] sm:$0xf]
        %v2380 = vunpack.c.l.b16 %v2308
        %v2381 = vunpack.c.l.b16 %v2309
        %v2382 = vunpack.c.l.b16 %v2310
        %v2383 = vunpack.c.l.b16 %v2311
        %v2384 = vunpack.c.l.b16 %v2312
        %v2385 = vunpack.c.l.b16 %v2313
        %v2386 = vunpack.c.l.b16 %v2314
        %v2387 = vunpack.c.l.b16 %v2315
        %v2388 = vunpack.c.l.b16 %v2316
        %v2389 = vunpack.c.l.b16 %v2317
        %v2390 = vunpack.c.l.b16 %v2318
        %v2391 = vunpack.c.l.b16 %v2319
        %v2392 = vunpack.c.l.b16 %v2320
        %v2393 = vunpack.c.l.b16 %v2321
        %v2394 = vunpack.c.l.b16 %v2322
        %v2395 = vunpack.c.l.b16 %v2323
        %v2396 = vunpack.c.l.b16 %v2324
        %v2397 = vunpack.c.l.b16 %v2325
        %v2398 = vunpack.c.l.b16 %v2326
        %v2399 = vunpack.c.l.b16 %v2327
        %v2400 = vunpack.c.l.b16 %v2328
        %v2401 = vunpack.c.l.b16 %v2329
        %v2402 = vunpack.c.l.b16 %v2330
        %v2403 = vunpack.c.l.b16 %v2331
        %v2404 = vunpack.c.l.b16 %v2332
        %v2405 = vunpack.c.l.b16 %v2333
        %v2406 = vunpack.c.l.b16 %v2334
        %v2407 = vunpack.c.l.b16 %v2335
        %v2408 = vunpack.c.l.b16 %v2336
        %v2409 = vunpack.c.l.b16 %v2337
        %v2410 = vunpack.c.l.b16 %v2338
        %v2411 = vunpack.c.l.b16 %v2339
        %v2412 = vunpack.c.l.b16 %v2340
        %v2413 = vunpack.c.l.b16 %v2341
        %v2414 = vunpack.c.l.b16 %v2342
        %v2415 = vunpack.c.l.b16 %v2343
        %v2416 = vpack.c.b16 %v2381, %v2380
        %v2417 = vpack.c.b16 %v2383, %v2382
        %v2418 = vpack.c.b16 %v2385, %v2384
        %v2419 = vpack.c.b16 %v2387, %v2386
        %v2420 = vpack.c.b16 %v2389, %v2388
        %v2421 = vpack.c.b16 %v2391, %v2390
        %v2422 = vpack.c.b16 %v2393, %v2392
        %v2423 = vpack.c.b16 %v2395, %v2394
        %v2424 = vpack.c.b16 %v2397, %v2396
        %v2425 = vpack.c.b16 %v2399, %v2398
        %v2426 = vpack.c.b16 %v2401, %v2400
        %v2427 = vpack.c.b16 %v2403, %v2402
        %v2428 = vpack.c.b16 %v2405, %v2404
        %v2429 = vpack.c.b16 %v2407, %v2406
        %v2430 = vpack.c.b16 %v2409, %v2408
        %v2431 = vpack.c.b16 %v2411, %v2410
        %v2432 = vpack.c.b16 %v2413, %v2412
        %v2433 = vpack.c.b16 %v2415, %v2414
        %v2453 = vsel %vm1128, %v2285, 0
        %v2456 = vsel %vm1128, %v2288, 0
        %v2459 = vsel %vm1128, %v2291, 0
        %v2462 = vsel %vm1128, %v2294, 0
        %v2465 = vsel %vm1128, %v2297, 0
        %v2468 = vsel %vm1128, %v2300, 0
        %v2471 = vsel %vm1128, %v2303, 0
        %v2474 = vsel %vm1128, %v2306, 0
        %2476 = vmatprep.subr.bf16.mxu0 0
        %2477 = vmatpush1.bf16.msra.mxu0 %v2416
        %2478 = vmatprep.subr.bf16.mxu0 0
        %2479 = vmatpush1.bf16.msra.mxu0 %v2417
        %2480 = vmatprep.subr.bf16.mxu0 0
        %2481 = vmatpush1.bf16.msra.mxu0 %v2418
        %2482 = vmatprep.subr.bf16.mxu0 0
        %2483 = vmatpush1.bf16.msra.mxu0 %v2419
        %2484 = vmatprep.subr.bf16.mxu0 0
        %2485 = vmatpush1.bf16.msra.mxu0 %v2420
        %2486 = vmatprep.subr.bf16.mxu0 0
        %2487 = vmatpush1.bf16.msra.mxu0 %v2421
        %2488 = vmatprep.subr.bf16.mxu0 0
        %2489 = vmatpush1.bf16.msra.mxu0 %v2422
        %2490 = vmatprep.subr.bf16.mxu0 0
        %2491 = vmatpush1.bf16.msra.mxu0 %v2423
        %2492 = vmatprep.subr.bf16.mxu0 0
        %2493 = vmatpush1.bf16.msra.mxu0 %v2424
        %2494 = vmatprep.subr.bf16.mxu0 0
        %2495 = vmatpush1.bf16.msra.mxu0 %v2425
        %2496 = vmatprep.subr.bf16.mxu0 0
        %2497 = vmatpush1.bf16.msra.mxu0 %v2426
        %2498 = vmatprep.subr.bf16.mxu0 0
        %2499 = vmatpush1.bf16.msra.mxu0 %v2427
        %2500 = vmatprep.subr.bf16.mxu0 0
        %2501 = vmatpush1.bf16.msra.mxu0 %v2428
        %2502 = vmatprep.subr.bf16.mxu0 0
        %2503 = vmatpush1.bf16.msra.mxu0 %v2429
        %2504 = vmatprep.subr.bf16.mxu0 0
        %2505 = vmatpush1.bf16.msra.mxu0 %v2430
        %2506 = vmatprep.subr.bf16.mxu0 0
        %2507 = vmatpush1.bf16.msra.mxu0 %v2431
        %2508 = vmatprep.mubr.bf16.mxu0 %v2284
        %2509 = vmatmul.mubr.bf16.gmra.mrb[0].mxu0 %v2283
        %v2510 = vpop.f32.mrb[0].mxu0
        %v2511 = vadd.f32 0.0, %v2510
        %v2512 = vpop.f32.mrb[0].mxu0
        %v2513 = vpop.f32.mrb[0].mxu0
        %v2514 = vadd.f32 0.0, %v2513
        %v2515 = vpop.f32.mrb[0].mxu0
        %2516 = vmatprep.mubr.bf16.mxu0 %v2287
        %2517 = vmatmul.mubr.bf16.gmra.mrb[0].mxu0 %v2286
        %v2518 = vpop.f32.mrb[0].mxu0
        %v2519 = vadd.f32 0.0, %v2518
        %v2520 = vpop.f32.mrb[0].mxu0
        %v2521 = vpop.f32.mrb[0].mxu0
        %v2522 = vadd.f32 0.0, %v2521
        %v2523 = vpop.f32.mrb[0].mxu0
        %2524 = vmatprep.mubr.bf16.mxu0 %v2290
        %2525 = vmatmul.mubr.bf16.gmra.mrb[0].mxu0 %v2289
        %v2526 = vpop.f32.mrb[0].mxu0
        %v2527 = vadd.f32 0.0, %v2526
        %v2528 = vpop.f32.mrb[0].mxu0
        %v2529 = vpop.f32.mrb[0].mxu0
        %v2530 = vadd.f32 0.0, %v2529
        %v2531 = vpop.f32.mrb[0].mxu0
        %2532 = vmatprep.mubr.bf16.mxu0 %v2293
        %2533 = vmatmul.mubr.bf16.gmra.mrb[0].mxu0 %v2292
        %v2534 = vpop.f32.mrb[0].mxu0
        %v2535 = vadd.f32 0.0, %v2534
        %v2536 = vpop.f32.mrb[0].mxu0
        %v2537 = vpop.f32.mrb[0].mxu0
        %v2538 = vadd.f32 0.0, %v2537
        %v2539 = vpop.f32.mrb[0].mxu0
        %2540 = vmatprep.mubr.bf16.mxu0 %v2296
        %2541 = vmatmul.mubr.bf16.gmra.mrb[0].mxu0 %v2295
        %v2542 = vpop.f32.mrb[0].mxu0
        %v2543 = vadd.f32 0.0, %v2542
        %v2544 = vpop.f32.mrb[0].mxu0
        %v2545 = vpop.f32.mrb[0].mxu0
        %v2546 = vadd.f32 0.0, %v2545
        %v2547 = vpop.f32.mrb[0].mxu0
        %2548 = vmatprep.mubr.bf16.mxu0 %v2299
        %2549 = vmatmul.mubr.bf16.gmra.mrb[0].mxu0 %v2298
        %v2550 = vpop.f32.mrb[0].mxu0
        %v2551 = vadd.f32 0.0, %v2550
        %v2552 = vpop.f32.mrb[0].mxu0
        %v2553 = vpop.f32.mrb[0].mxu0
        %v2554 = vadd.f32 0.0, %v2553
        %v2555 = vpop.f32.mrb[0].mxu0
        %2556 = vmatprep.mubr.bf16.mxu0 %v2302
        %2557 = vmatmul.mubr.bf16.gmra.mrb[0].mxu0 %v2301
        %v2558 = vpop.f32.mrb[0].mxu0
        %v2559 = vadd.f32 0.0, %v2558
        %v2560 = vpop.f32.mrb[0].mxu0
        %v2561 = vpop.f32.mrb[0].mxu0
        %v2562 = vadd.f32 0.0, %v2561
        %v2563 = vpop.f32.mrb[0].mxu0
        %2564 = vmatprep.mubr.bf16.mxu0 %v2305
        %2565 = vmatmul.mubr.bf16.gmra.mrb[0].mxu0 %v2304
        %v2566 = vpop.f32.mrb[0].mxu0
        %v2567 = vadd.f32 0.0, %v2566
        %v2568 = vpop.f32.mrb[0].mxu0
        %v2569 = vpop.f32.mrb[0].mxu0
        %v2570 = vadd.f32 0.0, %v2569
        %v2571 = vpop.f32.mrb[0].mxu0
        %2572 = vdwg.mxu0
        %2573 = vmatprep.subr.bf16.mxu0 0
        %2574 = vmatpush1.bf16.msra.mxu0 %v2432
        %2575 = vmatprep.subr.bf16.mxu0 0
        %2576 = vmatpush1.bf16.msra.mxu0 %v2433
        %2577 = vmatprep.subr.bf16.mxu0 0
        %2578 = vmatpush1.bf16.msra.mxu0 0
        %2579 = vmatprep.subr.bf16.mxu0 0
        %2580 = vmatpush1.bf16.msra.mxu0 0
        %2581 = vmatprep.subr.bf16.mxu0 0
        %2582 = vmatpush1.bf16.msra.mxu0 0
        %2583 = vmatprep.subr.bf16.mxu0 0
        %2584 = vmatpush1.bf16.msra.mxu0 0
        %2585 = vmatprep.subr.bf16.mxu0 0
        %2586 = vmatpush1.bf16.msra.mxu0 0
        %2587 = vmatprep.subr.bf16.mxu0 0
        %2588 = vmatpush1.bf16.msra.mxu0 0
        %2589 = vmatprep.subr.bf16.mxu0 0
        %2590 = vmatpush1.bf16.msra.mxu0 0
        %2591 = vmatprep.subr.bf16.mxu0 0
        %2592 = vmatpush1.bf16.msra.mxu0 0
        %2593 = vmatprep.subr.bf16.mxu0 0
        %2594 = vmatpush1.bf16.msra.mxu0 0
        %2595 = vmatprep.subr.bf16.mxu0 0
        %2596 = vmatpush1.bf16.msra.mxu0 0
        %2597 = vmatprep.subr.bf16.mxu0 0
        %2598 = vmatpush1.bf16.msra.mxu0 0
        %2599 = vmatprep.subr.bf16.mxu0 0
        %2600 = vmatpush1.bf16.msra.mxu0 0
        %2601 = vmatprep.subr.bf16.mxu0 0
        %2602 = vmatpush1.bf16.msra.mxu0 0
        %2603 = vmatprep.subr.bf16.mxu0 0
        %2604 = vmatpush1.bf16.msra.mxu0 0
        %2605 = vmatprep.mubr.bf16.mxu0 0
        %2606 = vmatmul.mubr.bf16.gmra.mrb[0].mxu0 %v2453
        %v2607 = vpop.f32.mrb[0].mxu0
        %v2608 = vadd.f32 %v2511, %v2607
        %v2609 = vpop.f32.mrb[0].mxu0
        %v2610 = vpop.f32.mrb[0].mxu0
        %v2611 = vadd.f32 %v2514, %v2610
        %v2612 = vpop.f32.mrb[0].mxu0
        %2613 = vmatprep.mubr.bf16.mxu0 0
        %2614 = vmatmul.mubr.bf16.gmra.mrb[0].mxu0 %v2456
        %v2615 = vpop.f32.mrb[0].mxu0
        %v2616 = vadd.f32 %v2519, %v2615
        %v2617 = vpop.f32.mrb[0].mxu0
        %v2618 = vpop.f32.mrb[0].mxu0
        %v2619 = vadd.f32 %v2522, %v2618
        %v2620 = vpop.f32.mrb[0].mxu0
        %2621 = vmatprep.mubr.bf16.mxu0 0
        %2622 = vmatmul.mubr.bf16.gmra.mrb[0].mxu0 %v2459
        %v2623 = vpop.f32.mrb[0].mxu0
        %v2624 = vadd.f32 %v2527, %v2623
        %v2625 = vpop.f32.mrb[0].mxu0
        %v2626 = vpop.f32.mrb[0].mxu0
        %v2627 = vadd.f32 %v2530, %v2626
        %v2628 = vpop.f32.mrb[0].mxu0
        %2629 = vmatprep.mubr.bf16.mxu0 0
        %2630 = vmatmul.mubr.bf16.gmra.mrb[0].mxu0 %v2462
        %v2631 = vpop.f32.mrb[0].mxu0
        %v2632 = vadd.f32 %v2535, %v2631
        %v2633 = vpop.f32.mrb[0].mxu0
        %v2634 = vpop.f32.mrb[0].mxu0
        %v2635 = vadd.f32 %v2538, %v2634
        %v2636 = vpop.f32.mrb[0].mxu0
        %2637 = vmatprep.mubr.bf16.mxu0 0
        %2638 = vmatmul.mubr.bf16.gmra.mrb[0].mxu0 %v2465
        %v2639 = vpop.f32.mrb[0].mxu0
        %v2640 = vadd.f32 %v2543, %v2639
        %v2641 = vpop.f32.mrb[0].mxu0
        %v2642 = vpop.f32.mrb[0].mxu0
        %v2643 = vadd.f32 %v2546, %v2642
        %v2644 = vpop.f32.mrb[0].mxu0
        %2645 = vmatprep.mubr.bf16.mxu0 0
        %2646 = vmatmul.mubr.bf16.gmra.mrb[0].mxu0 %v2468
        %v2647 = vpop.f32.mrb[0].mxu0
        %v2648 = vadd.f32 %v2551, %v2647
        %v2649 = vpop.f32.mrb[0].mxu0
        %v2650 = vpop.f32.mrb[0].mxu0
        %v2651 = vadd.f32 %v2554, %v2650
        %v2652 = vpop.f32.mrb[0].mxu0
        %2653 = vmatprep.mubr.bf16.mxu0 0
        %2654 = vmatmul.mubr.bf16.gmra.mrb[0].mxu0 %v2471
        %v2655 = vpop.f32.mrb[0].mxu0
        %v2656 = vadd.f32 %v2559, %v2655
        %v2657 = vpop.f32.mrb[0].mxu0
        %v2658 = vpop.f32.mrb[0].mxu0
        %v2659 = vadd.f32 %v2562, %v2658
        %v2660 = vpop.f32.mrb[0].mxu0
        %2661 = vmatprep.mubr.bf16.mxu0 0
        %2662 = vmatmul.mubr.bf16.gmra.mrb[0].mxu0 %v2474
        %v2663 = vpop.f32.mrb[0].mxu0
        %v2664 = vadd.f32 %v2567, %v2663
        %v2665 = vpop.f32.mrb[0].mxu0
        %v2666 = vpop.f32.mrb[0].mxu0
        %v2667 = vadd.f32 %v2570, %v2666
        %v2668 = vpop.f32.mrb[0].mxu0
        %2669 = vdwg.mxu0
        %v2706 = vunpack.c.l.b16 %v1765
        %v2707 = vunpack.c.l.b16 %v1766
        %v2708 = vunpack.c.l.b16 %v1767
        %v2709 = vunpack.c.l.b16 %v1768
        %v2710 = vunpack.c.l.b16 %v1769
        %v2711 = vunpack.c.l.b16 %v1770
        %v2712 = vunpack.c.l.b16 %v1771
        %v2713 = vunpack.c.l.b16 %v1772
        %v2714 = vunpack.c.l.b16 %v1773
        %v2715 = vunpack.c.l.b16 %v1774
        %v2716 = vunpack.c.l.b16 %v1775
        %v2717 = vunpack.c.l.b16 %v1776
        %v2718 = vunpack.c.l.b16 %v1777
        %v2719 = vunpack.c.l.b16 %v1778
        %v2720 = vunpack.c.l.b16 %v1779
        %v2721 = vunpack.c.l.b16 %v1780
        %v2722 = vunpack.c.l.b16 %v1781
        %v2723 = vunpack.c.l.b16 %v1782
        %v2724 = vunpack.c.l.b16 %v1783
        %v2725 = vunpack.c.l.b16 %v1784
        %v2726 = vunpack.c.l.b16 %v1785
        %v2727 = vunpack.c.l.b16 %v1786
        %v2728 = vunpack.c.l.b16 %v1787
        %v2729 = vunpack.c.l.b16 %v1788
        %v2730 = vunpack.c.l.b16 %v1789
        %v2731 = vunpack.c.l.b16 %v1790
        %v2732 = vunpack.c.l.b16 %v1791
        %v2733 = vunpack.c.l.b16 %v1792
        %v2734 = vunpack.c.l.b16 %v1793
        %v2735 = vunpack.c.l.b16 %v1794
        %v2736 = vunpack.c.l.b16 %v1795
        %v2737 = vunpack.c.l.b16 %v1796
        %v2738 = vunpack.c.l.b16 %v1797
        %v2739 = vunpack.c.l.b16 %v1798
        %v2740 = vunpack.c.l.b16 %v1799
        %v2741 = vunpack.c.l.b16 %v1800
        %v2742 = vpack.c.b16 %v2707, %v2706
        %v2743 = vpack.c.b16 %v2709, %v2708
        %v2744 = vpack.c.b16 %v2711, %v2710
        %v2745 = vpack.c.b16 %v2713, %v2712
        %v2746 = vpack.c.b16 %v2715, %v2714
        %v2747 = vpack.c.b16 %v2717, %v2716
        %v2748 = vpack.c.b16 %v2719, %v2718
        %v2749 = vpack.c.b16 %v2721, %v2720
        %v2750 = vpack.c.b16 %v2723, %v2722
        %v2751 = vpack.c.b16 %v2725, %v2724
        %v2752 = vpack.c.b16 %v2727, %v2726
        %v2753 = vpack.c.b16 %v2729, %v2728
        %v2754 = vpack.c.b16 %v2731, %v2730
        %v2755 = vpack.c.b16 %v2733, %v2732
        %v2756 = vpack.c.b16 %v2735, %v2734
        %v2757 = vpack.c.b16 %v2737, %v2736
        %v2758 = vpack.c.b16 %v2739, %v2738
        %v2759 = vpack.c.b16 %v2741, %v2740
        %v2779 = vsel %vm1128, %v1743, 0
        %v2782 = vsel %vm1128, %v1746, 0
        %v2785 = vsel %vm1128, %v1749, 0
        %v2788 = vsel %vm1128, %v1752, 0
        %v2791 = vsel %vm1128, %v1755, 0
        %v2794 = vsel %vm1128, %v1758, 0
        %v2797 = vsel %vm1128, %v1761, 0
        %v2800 = vsel %vm1128, %v1764, 0
        %2802 = vmatprep.subr.bf16.mxu0 0
        %2803 = vmatpush1.bf16.msra.mxu0 %v2742
        %2804 = vmatprep.subr.bf16.mxu0 0
        %2805 = vmatpush1.bf16.msra.mxu0 %v2743
        %2806 = vmatprep.subr.bf16.mxu0 0
        %2807 = vmatpush1.bf16.msra.mxu0 %v2744
        %2808 = vmatprep.subr.bf16.mxu0 0
        %2809 = vmatpush1.bf16.msra.mxu0 %v2745
        %2810 = vmatprep.subr.bf16.mxu0 0
        %2811 = vmatpush1.bf16.msra.mxu0 %v2746
        %2812 = vmatprep.subr.bf16.mxu0 0
        %2813 = vmatpush1.bf16.msra.mxu0 %v2747
        %2814 = vmatprep.subr.bf16.mxu0 0
        %2815 = vmatpush1.bf16.msra.mxu0 %v2748
        %2816 = vmatprep.subr.bf16.mxu0 0
        %2817 = vmatpush1.bf16.msra.mxu0 %v2749
        %2818 = vmatprep.subr.bf16.mxu0 0
        %2819 = vmatpush1.bf16.msra.mxu0 %v2750
        %2820 = vmatprep.subr.bf16.mxu0 0
        %2821 = vmatpush1.bf16.msra.mxu0 %v2751
        %2822 = vmatprep.subr.bf16.mxu0 0
        %2823 = vmatpush1.bf16.msra.mxu0 %v2752
        %2824 = vmatprep.subr.bf16.mxu0 0
        %2825 = vmatpush1.bf16.msra.mxu0 %v2753
        %2826 = vmatprep.subr.bf16.mxu0 0
        %2827 = vmatpush1.bf16.msra.mxu0 %v2754
        %2828 = vmatprep.subr.bf16.mxu0 0
        %2829 = vmatpush1.bf16.msra.mxu0 %v2755
        %2830 = vmatprep.subr.bf16.mxu0 0
        %2831 = vmatpush1.bf16.msra.mxu0 %v2756
        %2832 = vmatprep.subr.bf16.mxu0 0
        %2833 = vmatpush1.bf16.msra.mxu0 %v2757
        %2834 = vmatprep.mubr.bf16.mxu0 %v1742
        %2835 = vmatmul.mubr.bf16.gmra.mrb[0].mxu0 %v1741
        %v2836 = vpop.f32.mrb[0].mxu0
        %v2837 = vadd.f32 %v2608, %v2836
        %v2838 = vpop.f32.mrb[0].mxu0
        %v2839 = vpop.f32.mrb[0].mxu0
        %v2840 = vadd.f32 %v2611, %v2839
        %v2841 = vpop.f32.mrb[0].mxu0
        %2842 = vmatprep.mubr.bf16.mxu0 %v1745
        %2843 = vmatmul.mubr.bf16.gmra.mrb[0].mxu0 %v1744
        %v2844 = vpop.f32.mrb[0].mxu0
        %v2845 = vadd.f32 %v2616, %v2844
        %v2846 = vpop.f32.mrb[0].mxu0
        %v2847 = vpop.f32.mrb[0].mxu0
        %v2848 = vadd.f32 %v2619, %v2847
        %v2849 = vpop.f32.mrb[0].mxu0
        %2850 = vmatprep.mubr.bf16.mxu0 %v1748
        %2851 = vmatmul.mubr.bf16.gmra.mrb[0].mxu0 %v1747
        %v2852 = vpop.f32.mrb[0].mxu0
        %v2853 = vadd.f32 %v2624, %v2852
        %v2854 = vpop.f32.mrb[0].mxu0
        %v2855 = vpop.f32.mrb[0].mxu0
        %v2856 = vadd.f32 %v2627, %v2855
        %v2857 = vpop.f32.mrb[0].mxu0
        %2858 = vmatprep.mubr.bf16.mxu0 %v1751
        %2859 = vmatmul.mubr.bf16.gmra.mrb[0].mxu0 %v1750
        %v2860 = vpop.f32.mrb[0].mxu0
        %v2861 = vadd.f32 %v2632, %v2860
        %v2862 = vpop.f32.mrb[0].mxu0
        %v2863 = vpop.f32.mrb[0].mxu0
        %v2864 = vadd.f32 %v2635, %v2863
        %v2865 = vpop.f32.mrb[0].mxu0
        %2866 = vmatprep.mubr.bf16.mxu0 %v1754
        %2867 = vmatmul.mubr.bf16.gmra.mrb[0].mxu0 %v1753
        %v2868 = vpop.f32.mrb[0].mxu0
        %v2869 = vadd.f32 %v2640, %v2868
        %v2870 = vpop.f32.mrb[0].mxu0
        %v2871 = vpop.f32.mrb[0].mxu0
        %v2872 = vadd.f32 %v2643, %v2871
        %v2873 = vpop.f32.mrb[0].mxu0
        %2874 = vmatprep.mubr.bf16.mxu0 %v1757
        %2875 = vmatmul.mubr.bf16.gmra.mrb[0].mxu0 %v1756
        %v2876 = vpop.f32.mrb[0].mxu0
        %v2877 = vadd.f32 %v2648, %v2876
        %v2878 = vpop.f32.mrb[0].mxu0
        %v2879 = vpop.f32.mrb[0].mxu0
        %v2880 = vadd.f32 %v2651, %v2879
        %v2881 = vpop.f32.mrb[0].mxu0
        %2882 = vmatprep.mubr.bf16.mxu0 %v1760
        %2883 = vmatmul.mubr.bf16.gmra.mrb[0].mxu0 %v1759
        %v2884 = vpop.f32.mrb[0].mxu0
        %v2885 = vadd.f32 %v2656, %v2884
        %v2886 = vpop.f32.mrb[0].mxu0
        %v2887 = vpop.f32.mrb[0].mxu0
        %v2888 = vadd.f32 %v2659, %v2887
        %v2889 = vpop.f32.mrb[0].mxu0
        %2890 = vmatprep.mubr.bf16.mxu0 %v1763
        %2891 = vmatmul.mubr.bf16.gmra.mrb[0].mxu0 %v1762
        %v2892 = vpop.f32.mrb[0].mxu0
        %v2893 = vadd.f32 %v2664, %v2892
        %v2894 = vpop.f32.mrb[0].mxu0
        %v2895 = vpop.f32.mrb[0].mxu0
        %v2896 = vadd.f32 %v2667, %v2895
        %v2897 = vpop.f32.mrb[0].mxu0
        %2898 = vdwg.mxu0
        %2899 = vmatprep.subr.bf16.mxu0 0
        %2900 = vmatpush1.bf16.msra.mxu0 %v2758
        %2901 = vmatprep.subr.bf16.mxu0 0
        %2902 = vmatpush1.bf16.msra.mxu0 %v2759
        %2903 = vmatprep.subr.bf16.mxu0 0
        %2904 = vmatpush1.bf16.msra.mxu0 0
        %2905 = vmatprep.subr.bf16.mxu0 0
        %2906 = vmatpush1.bf16.msra.mxu0 0
        %2907 = vmatprep.subr.bf16.mxu0 0
        %2908 = vmatpush1.bf16.msra.mxu0 0
        %2909 = vmatprep.subr.bf16.mxu0 0
        %2910 = vmatpush1.bf16.msra.mxu0 0
        %2911 = vmatprep.subr.bf16.mxu0 0
        %2912 = vmatpush1.bf16.msra.mxu0 0
        %2913 = vmatprep.subr.bf16.mxu0 0
        %2914 = vmatpush1.bf16.msra.mxu0 0
        %2915 = vmatprep.subr.bf16.mxu0 0
        %2916 = vmatpush1.bf16.msra.mxu0 0
        %2917 = vmatprep.subr.bf16.mxu0 0
        %2918 = vmatpush1.bf16.msra.mxu0 0
        %2919 = vmatprep.subr.bf16.mxu0 0
        %2920 = vmatpush1.bf16.msra.mxu0 0
        %2921 = vmatprep.subr.bf16.mxu0 0
        %2922 = vmatpush1.bf16.msra.mxu0 0
        %2923 = vmatprep.subr.bf16.mxu0 0
        %2924 = vmatpush1.bf16.msra.mxu0 0
        %2925 = vmatprep.subr.bf16.mxu0 0
        %2926 = vmatpush1.bf16.msra.mxu0 0
        %2927 = vmatprep.subr.bf16.mxu0 0
        %2928 = vmatpush1.bf16.msra.mxu0 0
        %2929 = vmatprep.subr.bf16.mxu0 0
        %2930 = vmatpush1.bf16.msra.mxu0 0
        %2931 = vmatprep.mubr.bf16.mxu0 0
        %2932 = vmatmul.mubr.bf16.gmra.mrb[0].mxu0 %v2779
        %v2933 = vpop.f32.mrb[0].mxu0
        %v2934 = vadd.f32 %v2837, %v2933
        %v2935 = vpop.f32.mrb[0].mxu0
        %v2936 = vpop.f32.mrb[0].mxu0
        %v2937 = vadd.f32 %v2840, %v2936
        %v2938 = vpop.f32.mrb[0].mxu0
        %2939 = vmatprep.mubr.bf16.mxu0 0
        %2940 = vmatmul.mubr.bf16.gmra.mrb[0].mxu0 %v2782
        %v2941 = vpop.f32.mrb[0].mxu0
        %v2942 = vadd.f32 %v2845, %v2941
        %v2943 = vpop.f32.mrb[0].mxu0
        %v2944 = vpop.f32.mrb[0].mxu0
        %v2945 = vadd.f32 %v2848, %v2944
        %v2946 = vpop.f32.mrb[0].mxu0
        %2947 = vmatprep.mubr.bf16.mxu0 0
        %2948 = vmatmul.mubr.bf16.gmra.mrb[0].mxu0 %v2785
        %v2949 = vpop.f32.mrb[0].mxu0
        %v2950 = vadd.f32 %v2853, %v2949
        %v2951 = vpop.f32.mrb[0].mxu0
        %v2952 = vpop.f32.mrb[0].mxu0
        %v2953 = vadd.f32 %v2856, %v2952
        %v2954 = vpop.f32.mrb[0].mxu0
        %2955 = vmatprep.mubr.bf16.mxu0 0
        %2956 = vmatmul.mubr.bf16.gmra.mrb[0].mxu0 %v2788
        %v2957 = vpop.f32.mrb[0].mxu0
        %v2958 = vadd.f32 %v2861, %v2957
        %v2959 = vpop.f32.mrb[0].mxu0
        %v2960 = vpop.f32.mrb[0].mxu0
        %v2961 = vadd.f32 %v2864, %v2960
        %v2962 = vpop.f32.mrb[0].mxu0
        %2963 = vmatprep.mubr.bf16.mxu0 0
        %2964 = vmatmul.mubr.bf16.gmra.mrb[0].mxu0 %v2791
        %v2965 = vpop.f32.mrb[0].mxu0
        %v2966 = vadd.f32 %v2869, %v2965
        %v2967 = vpop.f32.mrb[0].mxu0
        %v2968 = vpop.f32.mrb[0].mxu0
        %v2969 = vadd.f32 %v2872, %v2968
        %v2970 = vpop.f32.mrb[0].mxu0
        %2971 = vmatprep.mubr.bf16.mxu0 0
        %2972 = vmatmul.mubr.bf16.gmra.mrb[0].mxu0 %v2794
        %v2973 = vpop.f32.mrb[0].mxu0
        %v2974 = vadd.f32 %v2877, %v2973
        %v2975 = vpop.f32.mrb[0].mxu0
        %v2976 = vpop.f32.mrb[0].mxu0
        %v2977 = vadd.f32 %v2880, %v2976
        %v2978 = vpop.f32.mrb[0].mxu0
        %2979 = vmatprep.mubr.bf16.mxu0 0
        %2980 = vmatmul.mubr.bf16.gmra.mrb[0].mxu0 %v2797
        %v2981 = vpop.f32.mrb[0].mxu0
        %v2982 = vadd.f32 %v2885, %v2981
        %v2983 = vpop.f32.mrb[0].mxu0
        %v2984 = vpop.f32.mrb[0].mxu0
        %v2985 = vadd.f32 %v2888, %v2984
        %v2986 = vpop.f32.mrb[0].mxu0
        %2987 = vmatprep.mubr.bf16.mxu0 0
        %2988 = vmatmul.mubr.bf16.gmra.mrb[0].mxu0 %v2800
        %v2989 = vpop.f32.mrb[0].mxu0
        %v2990 = vadd.f32 %v2893, %v2989
        %v2991 = vpop.f32.mrb[0].mxu0
        %v2992 = vpop.f32.mrb[0].mxu0
        %v2993 = vadd.f32 %v2896, %v2992
        %v2994 = vpop.f32.mrb[0].mxu0
        %2995 = vdwg.mxu0
        %s2996 = scalar_lea.vmem [#allocation2], 320
        %v2997 = vld [vmem:[%s2996] sm:$0xff]
        %v2998 = vld [vmem:[%s2996 + $0x10] sm:$0xff]
        %v2999 = vld [vmem:[%s2996 + $0x20] sm:$0xff]
        %v3000 = vld [vmem:[%s2996 + $0x30] sm:$0xff]
        %v3001 = vld [vmem:[%s2996 + $0x40] sm:$0xff]
        %v3002 = vld [vmem:[%s2996 + $0x50] sm:$0xff]
        %v3003 = vld [vmem:[%s2996 + $0x60] sm:$0xff]
        %v3004 = vld [vmem:[%s2996 + $0x70] sm:$0xff]
        %v3005 = vld [vmem:[%s2996 + $0xa0] sm:$0xff]
        %v3006 = vld [vmem:[%s2996 + $0xb0] sm:$0xff]
        %v3007 = vld [vmem:[%s2996 + $0xc0] sm:$0xff]
        %v3008 = vld [vmem:[%s2996 + $0xd0] sm:$0xff]
        %v3009 = vld [vmem:[%s2996 + $0xe0] sm:$0xff]
        %v3010 = vld [vmem:[%s2996 + $0xf0] sm:$0xff]
        %v3011 = vld [vmem:[%s2996 + $0x100] sm:$0xff]
        %v3012 = vld [vmem:[%s2996 + $0x110] sm:$0xff]
        %v3013 = vpack.c.bf16 %v2998, %v2997
        %v3014 = vpack.c.bf16 %v3000, %v2999
        %v3015 = vpack.c.bf16 %v3002, %v3001
        %v3016 = vpack.c.bf16 %v3004, %v3003
        %v3017 = vpack.c.bf16 %v3006, %v3005
        %v3018 = vpack.c.bf16 %v3008, %v3007
        %v3019 = vpack.c.bf16 %v3010, %v3009
        %v3020 = vpack.c.bf16 %v3012, %v3011
        %3021 = vst.msk [vmem:[#allocation3] sm:$0xff] %vm1128, %v3013
        %3022 = vst.msk [vmem:[#allocation3 + $0x18] sm:$0xff] %vm1128, %v3014
        %3023 = vst.msk [vmem:[#allocation3 + $0x30] sm:$0xff] %vm1128, %v3015
        %3024 = vst.msk [vmem:[#allocation3 + $0x48] sm:$0xff] %vm1128, %v3016
        %3025 = vst.msk [vmem:[#allocation3 + $0x60] sm:$0xff] %vm1128, %v3017
        %3026 = vst.msk [vmem:[#allocation3 + $0x78] sm:$0xff] %vm1128, %v3018
        %3027 = vst.msk [vmem:[#allocation3 + $0x90] sm:$0xff] %vm1128, %v3019
        %3028 = vst.msk [vmem:[#allocation3 + $0xa8] sm:$0xff] %vm1128, %v3020
        %v3029 = vld [vmem:[%s2996 + $0x1] sm:$0xff]
        %v3030 = vld [vmem:[%s2996 + $0x11] sm:$0xff]
        %v3031 = vld [vmem:[%s2996 + $0x21] sm:$0xff]
        %v3032 = vld [vmem:[%s2996 + $0x31] sm:$0xff]
        %v3033 = vld [vmem:[%s2996 + $0x41] sm:$0xff]
        %v3034 = vld [vmem:[%s2996 + $0x51] sm:$0xff]
        %v3035 = vld [vmem:[%s2996 + $0x61] sm:$0xff]
        %v3036 = vld [vmem:[%s2996 + $0x71] sm:$0xff]
        %v3037 = vld [vmem:[%s2996 + $0xa1] sm:$0xff]
        %v3038 = vld [vmem:[%s2996 + $0xb1] sm:$0xff]
        %v3039 = vld [vmem:[%s2996 + $0xc1] sm:$0xff]
        %v3040 = vld [vmem:[%s2996 + $0xd1] sm:$0xff]
        %v3041 = vld [vmem:[%s2996 + $0xe1] sm:$0xff]
        %v3042 = vld [vmem:[%s2996 + $0xf1] sm:$0xff]
        %v3043 = vld [vmem:[%s2996 + $0x101] sm:$0xff]
        %v3044 = vld [vmem:[%s2996 + $0x111] sm:$0xff]
        %v3045 = vpack.c.bf16 %v3030, %v3029
        %v3046 = vpack.c.bf16 %v3032, %v3031
        %v3047 = vpack.c.bf16 %v3034, %v3033
        %v3048 = vpack.c.bf16 %v3036, %v3035
        %v3049 = vpack.c.bf16 %v3038, %v3037
        %v3050 = vpack.c.bf16 %v3040, %v3039
        %v3051 = vpack.c.bf16 %v3042, %v3041
        %v3052 = vpack.c.bf16 %v3044, %v3043
        %3061 = vrot.lane.b32.xlu0 %v3045, 32
        %v3062 = vpop.permute.xlu0 %3061
        %3063 = vrot.lane.b32.xlu0 %v3046, 32
        %v3064 = vpop.permute.xlu0 %3063
        %3065 = vrot.lane.b32.xlu0 %v3047, 32
        %v3066 = vpop.permute.xlu0 %3065
        %3067 = vrot.lane.b32.xlu0 %v3048, 32
        %v3068 = vpop.permute.xlu0 %3067
        %3069 = vrot.lane.b32.xlu0 %v3049, 32
        %v3070 = vpop.permute.xlu0 %3069
        %3071 = vrot.lane.b32.xlu0 %v3050, 32
        %v3072 = vpop.permute.xlu0 %3071
        %3073 = vrot.lane.b32.xlu0 %v3051, 32
        %v3074 = vpop.permute.xlu0 %3073
        %3075 = vrot.lane.b32.xlu0 %v3052, 32
        %v3076 = vpop.permute.xlu0 %3075
        %3085 = vst.msk [vmem:[#allocation3] sm:$0xff] %vm1345, %v3062
        %3086 = vst.msk [vmem:[#allocation3 + $0x18] sm:$0xff] %vm1345, %v3064
        %3087 = vst.msk [vmem:[#allocation3 + $0x30] sm:$0xff] %vm1345, %v3066
        %3088 = vst.msk [vmem:[#allocation3 + $0x48] sm:$0xff] %vm1345, %v3068
        %3089 = vst.msk [vmem:[#allocation3 + $0x60] sm:$0xff] %vm1345, %v3070
        %3090 = vst.msk [vmem:[#allocation3 + $0x78] sm:$0xff] %vm1345, %v3072
        %3091 = vst.msk [vmem:[#allocation3 + $0x90] sm:$0xff] %vm1345, %v3074
        %3092 = vst.msk [vmem:[#allocation3 + $0xa8] sm:$0xff] %vm1345, %v3076
        %v3093 = vld [vmem:[%s2996 + $0x2] sm:$0xff]
        %v3094 = vld [vmem:[%s2996 + $0x12] sm:$0xff]
        %v3095 = vld [vmem:[%s2996 + $0x22] sm:$0xff]
        %v3096 = vld [vmem:[%s2996 + $0x32] sm:$0xff]
        %v3097 = vld [vmem:[%s2996 + $0x42] sm:$0xff]
        %v3098 = vld [vmem:[%s2996 + $0x52] sm:$0xff]
        %v3099 = vld [vmem:[%s2996 + $0x62] sm:$0xff]
        %v3100 = vld [vmem:[%s2996 + $0x72] sm:$0xff]
        %v3101 = vld [vmem:[%s2996 + $0xa2] sm:$0xff]
        %v3102 = vld [vmem:[%s2996 + $0xb2] sm:$0xff]
        %v3103 = vld [vmem:[%s2996 + $0xc2] sm:$0xff]
        %v3104 = vld [vmem:[%s2996 + $0xd2] sm:$0xff]
        %v3105 = vld [vmem:[%s2996 + $0xe2] sm:$0xff]
        %v3106 = vld [vmem:[%s2996 + $0xf2] sm:$0xff]
        %v3107 = vld [vmem:[%s2996 + $0x102] sm:$0xff]
        %v3108 = vld [vmem:[%s2996 + $0x112] sm:$0xff]
        %v3109 = vpack.c.bf16 %v3094, %v3093
        %v3110 = vpack.c.bf16 %v3096, %v3095
        %v3111 = vpack.c.bf16 %v3098, %v3097
        %v3112 = vpack.c.bf16 %v3100, %v3099
        %v3113 = vpack.c.bf16 %v3102, %v3101
        %v3114 = vpack.c.bf16 %v3104, %v3103
        %v3115 = vpack.c.bf16 %v3106, %v3105
        %v3116 = vpack.c.bf16 %v3108, %v3107
        %3125 = vrot.lane.b32.xlu0 %v3109, 64
        %v3126 = vpop.permute.xlu0 %3125
        %3127 = vrot.lane.b32.xlu0 %v3110, 64
        %v3128 = vpop.permute.xlu0 %3127
        %3129 = vrot.lane.b32.xlu0 %v3111, 64
        %v3130 = vpop.permute.xlu0 %3129
        %3131 = vrot.lane.b32.xlu0 %v3112, 64
        %v3132 = vpop.permute.xlu0 %3131
        %3133 = vrot.lane.b32.xlu0 %v3113, 64
        %v3134 = vpop.permute.xlu0 %3133
        %3135 = vrot.lane.b32.xlu0 %v3114, 64
        %v3136 = vpop.permute.xlu0 %3135
        %3137 = vrot.lane.b32.xlu0 %v3115, 64
        %v3138 = vpop.permute.xlu0 %3137
        %3139 = vrot.lane.b32.xlu0 %v3116, 64
        %v3140 = vpop.permute.xlu0 %3139
        %3149 = vst.msk [vmem:[#allocation3] sm:$0xff] %vm1410, %v3126
        %3150 = vst.msk [vmem:[#allocation3 + $0x18] sm:$0xff] %vm1410, %v3128
        %3151 = vst.msk [vmem:[#allocation3 + $0x30] sm:$0xff] %vm1410, %v3130
        %3152 = vst.msk [vmem:[#allocation3 + $0x48] sm:$0xff] %vm1410, %v3132
        %3153 = vst.msk [vmem:[#allocation3 + $0x60] sm:$0xff] %vm1410, %v3134
        %3154 = vst.msk [vmem:[#allocation3 + $0x78] sm:$0xff] %vm1410, %v3136
        %3155 = vst.msk [vmem:[#allocation3 + $0x90] sm:$0xff] %vm1410, %v3138
        %3156 = vst.msk [vmem:[#allocation3 + $0xa8] sm:$0xff] %vm1410, %v3140
        %s3157 = scalar_lea.vmem [#allocation2], 336
        %v3158 = vld [vmem:[%s3157] sm:$0xff]
        %v3159 = vld [vmem:[%s3157 + $0x10] sm:$0xff]
        %v3160 = vld [vmem:[%s3157 + $0x20] sm:$0xff]
        %v3161 = vld [vmem:[%s3157 + $0x30] sm:$0xff]
        %v3162 = vld [vmem:[%s3157 + $0x40] sm:$0xff]
        %v3163 = vld [vmem:[%s3157 + $0x50] sm:$0xff]
        %v3164 = vld [vmem:[%s3157 + $0x60] sm:$0xff]
        %v3165 = vld [vmem:[%s3157 + $0x70] sm:$0xff]
        %v3166 = vld [vmem:[%s3157 + $0xa0] sm:$0xff]
        %v3167 = vld [vmem:[%s3157 + $0xb0] sm:$0xff]
        %v3168 = vld [vmem:[%s3157 + $0xc0] sm:$0xff]
        %v3169 = vld [vmem:[%s3157 + $0xd0] sm:$0xff]
        %v3170 = vld [vmem:[%s3157 + $0xe0] sm:$0xff]
        %v3171 = vld [vmem:[%s3157 + $0xf0] sm:$0xff]
        %v3172 = vld [vmem:[%s3157 + $0x100] sm:$0xff]
        %v3173 = vld [vmem:[%s3157 + $0x110] sm:$0xff]
        %v3174 = vpack.c.bf16 %v3159, %v3158
        %v3175 = vpack.c.bf16 %v3161, %v3160
        %v3176 = vpack.c.bf16 %v3163, %v3162
        %v3177 = vpack.c.bf16 %v3165, %v3164
        %v3178 = vpack.c.bf16 %v3167, %v3166
        %v3179 = vpack.c.bf16 %v3169, %v3168
        %v3180 = vpack.c.bf16 %v3171, %v3170
        %v3181 = vpack.c.bf16 %v3173, %v3172
        %3190 = vrot.lane.b32.xlu0 %v3174, 96
        %v3191 = vpop.permute.xlu0 %3190
        %3192 = vrot.lane.b32.xlu0 %v3175, 96
        %v3193 = vpop.permute.xlu0 %3192
        %3194 = vrot.lane.b32.xlu0 %v3176, 96
        %v3195 = vpop.permute.xlu0 %3194
        %3196 = vrot.lane.b32.xlu0 %v3177, 96
        %v3197 = vpop.permute.xlu0 %3196
        %3198 = vrot.lane.b32.xlu0 %v3178, 96
        %v3199 = vpop.permute.xlu0 %3198
        %3200 = vrot.lane.b32.xlu0 %v3179, 96
        %v3201 = vpop.permute.xlu0 %3200
        %3202 = vrot.lane.b32.xlu0 %v3180, 96
        %v3203 = vpop.permute.xlu0 %3202
        %3204 = vrot.lane.b32.xlu0 %v3181, 96
        %v3205 = vpop.permute.xlu0 %3204
        %3214 = vst.msk [vmem:[#allocation3] sm:$0xff] %vm1475, %v3191
        %3215 = vst.msk [vmem:[#allocation3 + $0x18] sm:$0xff] %vm1475, %v3193
        %3216 = vst.msk [vmem:[#allocation3 + $0x30] sm:$0xff] %vm1475, %v3195
        %3217 = vst.msk [vmem:[#allocation3 + $0x48] sm:$0xff] %vm1475, %v3197
        %3218 = vst.msk [vmem:[#allocation3 + $0x60] sm:$0xff] %vm1475, %v3199
        %3219 = vst.msk [vmem:[#allocation3 + $0x78] sm:$0xff] %vm1475, %v3201
        %3220 = vst.msk [vmem:[#allocation3 + $0x90] sm:$0xff] %vm1475, %v3203
        %3221 = vst.msk [vmem:[#allocation3 + $0xa8] sm:$0xff] %vm1475, %v3205
        %v3222 = vld [vmem:[%s3157 + $0x1] sm:$0xff]
        %v3223 = vld [vmem:[%s3157 + $0x11] sm:$0xff]
        %v3224 = vld [vmem:[%s3157 + $0x21] sm:$0xff]
        %v3225 = vld [vmem:[%s3157 + $0x31] sm:$0xff]
        %v3226 = vld [vmem:[%s3157 + $0x41] sm:$0xff]
        %v3227 = vld [vmem:[%s3157 + $0x51] sm:$0xff]
        %v3228 = vld [vmem:[%s3157 + $0x61] sm:$0xff]
        %v3229 = vld [vmem:[%s3157 + $0x71] sm:$0xff]
        %v3230 = vld [vmem:[%s3157 + $0xa1] sm:$0xff]
        %v3231 = vld [vmem:[%s3157 + $0xb1] sm:$0xff]
        %v3232 = vld [vmem:[%s3157 + $0xc1] sm:$0xff]
        %v3233 = vld [vmem:[%s3157 + $0xd1] sm:$0xff]
        %v3234 = vld [vmem:[%s3157 + $0xe1] sm:$0xff]
        %v3235 = vld [vmem:[%s3157 + $0xf1] sm:$0xff]
        %v3236 = vld [vmem:[%s3157 + $0x101] sm:$0xff]
        %v3237 = vld [vmem:[%s3157 + $0x111] sm:$0xff]
        %v3238 = vpack.c.bf16 %v3223, %v3222
        %v3239 = vpack.c.bf16 %v3225, %v3224
        %v3240 = vpack.c.bf16 %v3227, %v3226
        %v3241 = vpack.c.bf16 %v3229, %v3228
        %v3242 = vpack.c.bf16 %v3231, %v3230
        %v3243 = vpack.c.bf16 %v3233, %v3232
        %v3244 = vpack.c.bf16 %v3235, %v3234
        %v3245 = vpack.c.bf16 %v3237, %v3236
        %3246 = vst.msk [vmem:[#allocation3 + $0x8] sm:$0xff] %vm1128, %v3238
        %3247 = vst.msk [vmem:[#allocation3 + $0x20] sm:$0xff] %vm1128, %v3239
        %3248 = vst.msk [vmem:[#allocation3 + $0x38] sm:$0xff] %vm1128, %v3240
        %3249 = vst.msk [vmem:[#allocation3 + $0x50] sm:$0xff] %vm1128, %v3241
        %3250 = vst.msk [vmem:[#allocation3 + $0x68] sm:$0xff] %vm1128, %v3242
        %3251 = vst.msk [vmem:[#allocation3 + $0x80] sm:$0xff] %vm1128, %v3243
        %3252 = vst.msk [vmem:[#allocation3 + $0x98] sm:$0xff] %vm1128, %v3244
        %3253 = vst.msk [vmem:[#allocation3 + $0xb0] sm:$0xff] %vm1128, %v3245
        %v3254 = vld [vmem:[%s3157 + $0x2] sm:$0xff]
        %v3255 = vld [vmem:[%s3157 + $0x12] sm:$0xff]
        %v3256 = vld [vmem:[%s3157 + $0x22] sm:$0xff]
        %v3257 = vld [vmem:[%s3157 + $0x32] sm:$0xff]
        %v3258 = vld [vmem:[%s3157 + $0x42] sm:$0xff]
        %v3259 = vld [vmem:[%s3157 + $0x52] sm:$0xff]
        %v3260 = vld [vmem:[%s3157 + $0x62] sm:$0xff]
        %v3261 = vld [vmem:[%s3157 + $0x72] sm:$0xff]
        %v3262 = vld [vmem:[%s3157 + $0xa2] sm:$0xff]
        %v3263 = vld [vmem:[%s3157 + $0xb2] sm:$0xff]
        %v3264 = vld [vmem:[%s3157 + $0xc2] sm:$0xff]
        %v3265 = vld [vmem:[%s3157 + $0xd2] sm:$0xff]
        %v3266 = vld [vmem:[%s3157 + $0xe2] sm:$0xff]
        %v3267 = vld [vmem:[%s3157 + $0xf2] sm:$0xff]
        %v3268 = vld [vmem:[%s3157 + $0x102] sm:$0xff]
        %v3269 = vld [vmem:[%s3157 + $0x112] sm:$0xff]
        %v3270 = vpack.c.bf16 %v3255, %v3254
        %v3271 = vpack.c.bf16 %v3257, %v3256
        %v3272 = vpack.c.bf16 %v3259, %v3258
        %v3273 = vpack.c.bf16 %v3261, %v3260
        %v3274 = vpack.c.bf16 %v3263, %v3262
        %v3275 = vpack.c.bf16 %v3265, %v3264
        %v3276 = vpack.c.bf16 %v3267, %v3266
        %v3277 = vpack.c.bf16 %v3269, %v3268
        %3286 = vrot.lane.b32.xlu0 %v3270, 32
        %v3287 = vpop.permute.xlu0 %3286
        %3288 = vrot.lane.b32.xlu0 %v3271, 32
        %v3289 = vpop.permute.xlu0 %3288
        %3290 = vrot.lane.b32.xlu0 %v3272, 32
        %v3291 = vpop.permute.xlu0 %3290
        %3292 = vrot.lane.b32.xlu0 %v3273, 32
        %v3293 = vpop.permute.xlu0 %3292
        %3294 = vrot.lane.b32.xlu0 %v3274, 32
        %v3295 = vpop.permute.xlu0 %3294
        %3296 = vrot.lane.b32.xlu0 %v3275, 32
        %v3297 = vpop.permute.xlu0 %3296
        %3298 = vrot.lane.b32.xlu0 %v3276, 32
        %v3299 = vpop.permute.xlu0 %3298
        %3300 = vrot.lane.b32.xlu0 %v3277, 32
        %v3301 = vpop.permute.xlu0 %3300
        %3310 = vst.msk [vmem:[#allocation3 + $0x8] sm:$0xff] %vm1345, %v3287
        %3311 = vst.msk [vmem:[#allocation3 + $0x20] sm:$0xff] %vm1345, %v3289
        %3312 = vst.msk [vmem:[#allocation3 + $0x38] sm:$0xff] %vm1345, %v3291
        %3313 = vst.msk [vmem:[#allocation3 + $0x50] sm:$0xff] %vm1345, %v3293
        %3314 = vst.msk [vmem:[#allocation3 + $0x68] sm:$0xff] %vm1345, %v3295
        %3315 = vst.msk [vmem:[#allocation3 + $0x80] sm:$0xff] %vm1345, %v3297
        %3316 = vst.msk [vmem:[#allocation3 + $0x98] sm:$0xff] %vm1345, %v3299
        %3317 = vst.msk [vmem:[#allocation3 + $0xb0] sm:$0xff] %vm1345, %v3301
        %s3318 = scalar_lea.vmem [#allocation2], 352
        %v3319 = vld [vmem:[%s3318] sm:$0xff]
        %v3320 = vld [vmem:[%s3318 + $0x10] sm:$0xff]
        %v3321 = vld [vmem:[%s3318 + $0x20] sm:$0xff]
        %v3322 = vld [vmem:[%s3318 + $0x30] sm:$0xff]
        %v3323 = vld [vmem:[%s3318 + $0x40] sm:$0xff]
        %v3324 = vld [vmem:[%s3318 + $0x50] sm:$0xff]
        %v3325 = vld [vmem:[%s3318 + $0x60] sm:$0xff]
        %v3326 = vld [vmem:[%s3318 + $0x70] sm:$0xff]
        %v3327 = vld [vmem:[%s3318 + $0xa0] sm:$0xff]
        %v3328 = vld [vmem:[%s3318 + $0xb0] sm:$0xff]
        %v3329 = vld [vmem:[%s3318 + $0xc0] sm:$0xff]
        %v3330 = vld [vmem:[%s3318 + $0xd0] sm:$0xff]
        %v3331 = vld [vmem:[%s3318 + $0xe0] sm:$0xff]
        %v3332 = vld [vmem:[%s3318 + $0xf0] sm:$0xff]
        %v3333 = vld [vmem:[%s3318 + $0x100] sm:$0xff]
        %v3334 = vld [vmem:[%s3318 + $0x110] sm:$0xff]
        %v3335 = vpack.c.bf16 %v3320, %v3319
        %v3336 = vpack.c.bf16 %v3322, %v3321
        %v3337 = vpack.c.bf16 %v3324, %v3323
        %v3338 = vpack.c.bf16 %v3326, %v3325
        %v3339 = vpack.c.bf16 %v3328, %v3327
        %v3340 = vpack.c.bf16 %v3330, %v3329
        %v3341 = vpack.c.bf16 %v3332, %v3331
        %v3342 = vpack.c.bf16 %v3334, %v3333
        %3351 = vrot.lane.b32.xlu0 %v3335, 64
        %v3352 = vpop.permute.xlu0 %3351
        %3353 = vrot.lane.b32.xlu0 %v3336, 64
        %v3354 = vpop.permute.xlu0 %3353
        %3355 = vrot.lane.b32.xlu0 %v3337, 64
        %v3356 = vpop.permute.xlu0 %3355
        %3357 = vrot.lane.b32.xlu0 %v3338, 64
        %v3358 = vpop.permute.xlu0 %3357
        %3359 = vrot.lane.b32.xlu0 %v3339, 64
        %v3360 = vpop.permute.xlu0 %3359
        %3361 = vrot.lane.b32.xlu0 %v3340, 64
        %v3362 = vpop.permute.xlu0 %3361
        %3363 = vrot.lane.b32.xlu0 %v3341, 64
        %v3364 = vpop.permute.xlu0 %3363
        %3365 = vrot.lane.b32.xlu0 %v3342, 64
        %v3366 = vpop.permute.xlu0 %3365
        %3375 = vst.msk [vmem:[#allocation3 + $0x8] sm:$0xff] %vm1410, %v3352
        %3376 = vst.msk [vmem:[#allocation3 + $0x20] sm:$0xff] %vm1410, %v3354
        %3377 = vst.msk [vmem:[#allocation3 + $0x38] sm:$0xff] %vm1410, %v3356
        %3378 = vst.msk [vmem:[#allocation3 + $0x50] sm:$0xff] %vm1410, %v3358
        %3379 = vst.msk [vmem:[#allocation3 + $0x68] sm:$0xff] %vm1410, %v3360
        %3380 = vst.msk [vmem:[#allocation3 + $0x80] sm:$0xff] %vm1410, %v3362
        %3381 = vst.msk [vmem:[#allocation3 + $0x98] sm:$0xff] %vm1410, %v3364
        %3382 = vst.msk [vmem:[#allocation3 + $0xb0] sm:$0xff] %vm1410, %v3366
        %v3383 = vld [vmem:[%s3318 + $0x1] sm:$0xff]
        %v3384 = vld [vmem:[%s3318 + $0x11] sm:$0xff]
        %v3385 = vld [vmem:[%s3318 + $0x21] sm:$0xff]
        %v3386 = vld [vmem:[%s3318 + $0x31] sm:$0xff]
        %v3387 = vld [vmem:[%s3318 + $0x41] sm:$0xff]
        %v3388 = vld [vmem:[%s3318 + $0x51] sm:$0xff]
        %v3389 = vld [vmem:[%s3318 + $0x61] sm:$0xff]
        %v3390 = vld [vmem:[%s3318 + $0x71] sm:$0xff]
        %v3391 = vld [vmem:[%s3318 + $0xa1] sm:$0xff]
        %v3392 = vld [vmem:[%s3318 + $0xb1] sm:$0xff]
        %v3393 = vld [vmem:[%s3318 + $0xc1] sm:$0xff]
        %v3394 = vld [vmem:[%s3318 + $0xd1] sm:$0xff]
        %v3395 = vld [vmem:[%s3318 + $0xe1] sm:$0xff]
        %v3396 = vld [vmem:[%s3318 + $0xf1] sm:$0xff]
        %v3397 = vld [vmem:[%s3318 + $0x101] sm:$0xff]
        %v3398 = vld [vmem:[%s3318 + $0x111] sm:$0xff]
        %v3399 = vpack.c.bf16 %v3384, %v3383
        %v3400 = vpack.c.bf16 %v3386, %v3385
        %v3401 = vpack.c.bf16 %v3388, %v3387
        %v3402 = vpack.c.bf16 %v3390, %v3389
        %v3403 = vpack.c.bf16 %v3392, %v3391
        %v3404 = vpack.c.bf16 %v3394, %v3393
        %v3405 = vpack.c.bf16 %v3396, %v3395
        %v3406 = vpack.c.bf16 %v3398, %v3397
        %3415 = vrot.lane.b32.xlu0 %v3399, 96
        %v3416 = vpop.permute.xlu0 %3415
        %3417 = vrot.lane.b32.xlu0 %v3400, 96
        %v3418 = vpop.permute.xlu0 %3417
        %3419 = vrot.lane.b32.xlu0 %v3401, 96
        %v3420 = vpop.permute.xlu0 %3419
        %3421 = vrot.lane.b32.xlu0 %v3402, 96
        %v3422 = vpop.permute.xlu0 %3421
        %3423 = vrot.lane.b32.xlu0 %v3403, 96
        %v3424 = vpop.permute.xlu0 %3423
        %3425 = vrot.lane.b32.xlu0 %v3404, 96
        %v3426 = vpop.permute.xlu0 %3425
        %3427 = vrot.lane.b32.xlu0 %v3405, 96
        %v3428 = vpop.permute.xlu0 %3427
        %3429 = vrot.lane.b32.xlu0 %v3406, 96
        %v3430 = vpop.permute.xlu0 %3429
        %3439 = vst.msk [vmem:[#allocation3 + $0x8] sm:$0xff] %vm1475, %v3416
        %3440 = vst.msk [vmem:[#allocation3 + $0x20] sm:$0xff] %vm1475, %v3418
        %3441 = vst.msk [vmem:[#allocation3 + $0x38] sm:$0xff] %vm1475, %v3420
        %3442 = vst.msk [vmem:[#allocation3 + $0x50] sm:$0xff] %vm1475, %v3422
        %3443 = vst.msk [vmem:[#allocation3 + $0x68] sm:$0xff] %vm1475, %v3424
        %3444 = vst.msk [vmem:[#allocation3 + $0x80] sm:$0xff] %vm1475, %v3426
        %3445 = vst.msk [vmem:[#allocation3 + $0x98] sm:$0xff] %vm1475, %v3428
        %3446 = vst.msk [vmem:[#allocation3 + $0xb0] sm:$0xff] %vm1475, %v3430
        %v3447 = vld [vmem:[%s3318 + $0x2] sm:$0xff]
        %v3448 = vld [vmem:[%s3318 + $0x12] sm:$0xff]
        %v3449 = vld [vmem:[%s3318 + $0x22] sm:$0xff]
        %v3450 = vld [vmem:[%s3318 + $0x32] sm:$0xff]
        %v3451 = vld [vmem:[%s3318 + $0x42] sm:$0xff]
        %v3452 = vld [vmem:[%s3318 + $0x52] sm:$0xff]
        %v3453 = vld [vmem:[%s3318 + $0x62] sm:$0xff]
        %v3454 = vld [vmem:[%s3318 + $0x72] sm:$0xff]
        %v3455 = vld [vmem:[%s3318 + $0xa2] sm:$0xff]
        %v3456 = vld [vmem:[%s3318 + $0xb2] sm:$0xff]
        %v3457 = vld [vmem:[%s3318 + $0xc2] sm:$0xff]
        %v3458 = vld [vmem:[%s3318 + $0xd2] sm:$0xff]
        %v3459 = vld [vmem:[%s3318 + $0xe2] sm:$0xff]
        %v3460 = vld [vmem:[%s3318 + $0xf2] sm:$0xff]
        %v3461 = vld [vmem:[%s3318 + $0x102] sm:$0xff]
        %v3462 = vld [vmem:[%s3318 + $0x112] sm:$0xff]
        %v3463 = vpack.c.bf16 %v3448, %v3447
        %v3464 = vpack.c.bf16 %v3450, %v3449
        %v3465 = vpack.c.bf16 %v3452, %v3451
        %v3466 = vpack.c.bf16 %v3454, %v3453
        %v3467 = vpack.c.bf16 %v3456, %v3455
        %v3468 = vpack.c.bf16 %v3458, %v3457
        %v3469 = vpack.c.bf16 %v3460, %v3459
        %v3470 = vpack.c.bf16 %v3462, %v3461
        %3471 = vst.msk [vmem:[#allocation3 + $0x10] sm:$0xff] %vm1128, %v3463
        %3472 = vst.msk [vmem:[#allocation3 + $0x28] sm:$0xff] %vm1128, %v3464
        %3473 = vst.msk [vmem:[#allocation3 + $0x40] sm:$0xff] %vm1128, %v3465
        %3474 = vst.msk [vmem:[#allocation3 + $0x58] sm:$0xff] %vm1128, %v3466
        %3475 = vst.msk [vmem:[#allocation3 + $0x70] sm:$0xff] %vm1128, %v3467
        %3476 = vst.msk [vmem:[#allocation3 + $0x88] sm:$0xff] %vm1128, %v3468
        %3477 = vst.msk [vmem:[#allocation3 + $0xa0] sm:$0xff] %vm1128, %v3469
        %3478 = vst.msk [vmem:[#allocation3 + $0xb8] sm:$0xff] %vm1128, %v3470
        %v3479 = vld [vmem:[#allocation3] sm:$0xff]
        %v3480 = vld [vmem:[#allocation3 + $0x8] sm:$0xff]
        %v3481 = vld [vmem:[#allocation3 + $0x10] sm:$0xff]
        %v3482 = vld [vmem:[#allocation3 + $0x18] sm:$0xff]
        %v3483 = vld [vmem:[#allocation3 + $0x20] sm:$0xff]
        %v3484 = vld [vmem:[#allocation3 + $0x28] sm:$0xff]
        %v3485 = vld [vmem:[#allocation3 + $0x30] sm:$0xff]
        %v3486 = vld [vmem:[#allocation3 + $0x38] sm:$0xff]
        %v3487 = vld [vmem:[#allocation3 + $0x40] sm:$0xff]
        %v3488 = vld [vmem:[#allocation3 + $0x48] sm:$0xff]
        %v3489 = vld [vmem:[#allocation3 + $0x50] sm:$0xff]
        %v3490 = vld [vmem:[#allocation3 + $0x58] sm:$0xff]
        %v3491 = vld [vmem:[#allocation3 + $0x60] sm:$0xff]
        %v3492 = vld [vmem:[#allocation3 + $0x68] sm:$0xff]
        %v3493 = vld [vmem:[#allocation3 + $0x70] sm:$0xff]
        %v3494 = vld [vmem:[#allocation3 + $0x78] sm:$0xff]
        %v3495 = vld [vmem:[#allocation3 + $0x80] sm:$0xff]
        %v3496 = vld [vmem:[#allocation3 + $0x88] sm:$0xff]
        %v3497 = vld [vmem:[#allocation3 + $0x90] sm:$0xff]
        %v3498 = vld [vmem:[#allocation3 + $0x98] sm:$0xff]
        %v3499 = vld [vmem:[#allocation3 + $0xa0] sm:$0xff]
        %v3500 = vld [vmem:[#allocation3 + $0xa8] sm:$0xff]
        %v3501 = vld [vmem:[#allocation3 + $0xb0] sm:$0xff]
        %v3502 = vld [vmem:[#allocation3 + $0xb8] sm:$0xff]
        %s3503 = scalar_lea.vmem %s7, 288
        %v3504 = vld [vmem:[%s3503] sm:$0xf]
        %v3505 = vld [vmem:[%s3503 + $0x4] sm:$0xf]
        %v3506 = vld [vmem:[%s3503 + $0x8] sm:$0xf]
        %v3507 = vld [vmem:[%s3503 + $0xc] sm:$0xf]
        %v3508 = vld [vmem:[%s3503 + $0x10] sm:$0xf]
        %v3509 = vld [vmem:[%s3503 + $0x14] sm:$0xf]
        %v3510 = vld [vmem:[%s3503 + $0x18] sm:$0xf]
        %v3511 = vld [vmem:[%s3503 + $0x1c] sm:$0xf]
        %v3512 = vld [vmem:[%s3503 + $0x20] sm:$0xf]
        %v3513 = vld [vmem:[%s3503 + $0x24] sm:$0xf]
        %v3514 = vld [vmem:[%s3503 + $0x28] sm:$0xf]
        %v3515 = vld [vmem:[%s3503 + $0x2c] sm:$0xf]
        %v3516 = vld [vmem:[%s3503 + $0x30] sm:$0xf]
        %v3517 = vld [vmem:[%s3503 + $0x34] sm:$0xf]
        %v3518 = vld [vmem:[%s3503 + $0x38] sm:$0xf]
        %v3519 = vld [vmem:[%s3503 + $0x3c] sm:$0xf]
        %v3520 = vld [vmem:[%s3503 + $0x40] sm:$0xf]
        %v3521 = vld [vmem:[%s3503 + $0x44] sm:$0xf]
        %v3522 = vld [vmem:[%s3503 + $0x48] sm:$0xf]
        %v3523 = vld [vmem:[%s3503 + $0x4c] sm:$0xf]
        %v3524 = vld [vmem:[%s3503 + $0x50] sm:$0xf]
        %v3525 = vld [vmem:[%s3503 + $0x54] sm:$0xf]
        %v3526 = vld [vmem:[%s3503 + $0x58] sm:$0xf]
        %v3527 = vld [vmem:[%s3503 + $0x5c] sm:$0xf]
        %v3528 = vld [vmem:[%s3503 + $0x60] sm:$0xf]
        %v3529 = vld [vmem:[%s3503 + $0x64] sm:$0xf]
        %v3530 = vld [vmem:[%s3503 + $0x68] sm:$0xf]
        %v3531 = vld [vmem:[%s3503 + $0x6c] sm:$0xf]
        %v3532 = vld [vmem:[%s3503 + $0x70] sm:$0xf]
        %v3533 = vld [vmem:[%s3503 + $0x74] sm:$0xf]
        %v3534 = vld [vmem:[%s3503 + $0x78] sm:$0xf]
        %v3535 = vld [vmem:[%s3503 + $0x7c] sm:$0xf]
        %v3536 = vld [vmem:[%s3503 + $0x80] sm:$0xf]
        %v3537 = vld [vmem:[%s3503 + $0x84] sm:$0xf]
        %v3538 = vld [vmem:[%s3503 + $0x88] sm:$0xf]
        %v3539 = vld [vmem:[%s3503 + $0x8c] sm:$0xf]
        %v3576 = vunpack.c.l.b16 %v3504
        %v3577 = vunpack.c.l.b16 %v3505
        %v3578 = vunpack.c.l.b16 %v3506
        %v3579 = vunpack.c.l.b16 %v3507
        %v3580 = vunpack.c.l.b16 %v3508
        %v3581 = vunpack.c.l.b16 %v3509
        %v3582 = vunpack.c.l.b16 %v3510
        %v3583 = vunpack.c.l.b16 %v3511
        %v3584 = vunpack.c.l.b16 %v3512
        %v3585 = vunpack.c.l.b16 %v3513
        %v3586 = vunpack.c.l.b16 %v3514
        %v3587 = vunpack.c.l.b16 %v3515
        %v3588 = vunpack.c.l.b16 %v3516
        %v3589 = vunpack.c.l.b16 %v3517
        %v3590 = vunpack.c.l.b16 %v3518
        %v3591 = vunpack.c.l.b16 %v3519
        %v3592 = vunpack.c.l.b16 %v3520
        %v3593 = vunpack.c.l.b16 %v3521
        %v3594 = vunpack.c.l.b16 %v3522
        %v3595 = vunpack.c.l.b16 %v3523
        %v3596 = vunpack.c.l.b16 %v3524
        %v3597 = vunpack.c.l.b16 %v3525
        %v3598 = vunpack.c.l.b16 %v3526
        %v3599 = vunpack.c.l.b16 %v3527
        %v3600 = vunpack.c.l.b16 %v3528
        %v3601 = vunpack.c.l.b16 %v3529
        %v3602 = vunpack.c.l.b16 %v3530
        %v3603 = vunpack.c.l.b16 %v3531
        %v3604 = vunpack.c.l.b16 %v3532
        %v3605 = vunpack.c.l.b16 %v3533
        %v3606 = vunpack.c.l.b16 %v3534
        %v3607 = vunpack.c.l.b16 %v3535
        %v3608 = vunpack.c.l.b16 %v3536
        %v3609 = vunpack.c.l.b16 %v3537
        %v3610 = vunpack.c.l.b16 %v3538
        %v3611 = vunpack.c.l.b16 %v3539
        %v3612 = vpack.c.b16 %v3577, %v3576
        %v3613 = vpack.c.b16 %v3579, %v3578
        %v3614 = vpack.c.b16 %v3581, %v3580
        %v3615 = vpack.c.b16 %v3583, %v3582
        %v3616 = vpack.c.b16 %v3585, %v3584
        %v3617 = vpack.c.b16 %v3587, %v3586
        %v3618 = vpack.c.b16 %v3589, %v3588
        %v3619 = vpack.c.b16 %v3591, %v3590
        %v3620 = vpack.c.b16 %v3593, %v3592
        %v3621 = vpack.c.b16 %v3595, %v3594
        %v3622 = vpack.c.b16 %v3597, %v3596
        %v3623 = vpack.c.b16 %v3599, %v3598
        %v3624 = vpack.c.b16 %v3601, %v3600
        %v3625 = vpack.c.b16 %v3603, %v3602
        %v3626 = vpack.c.b16 %v3605, %v3604
        %v3627 = vpack.c.b16 %v3607, %v3606
        %v3628 = vpack.c.b16 %v3609, %v3608
        %v3629 = vpack.c.b16 %v3611, %v3610
        %v3649 = vsel %vm1128, %v3481, 0
        %v3652 = vsel %vm1128, %v3484, 0
        %v3655 = vsel %vm1128, %v3487, 0
        %v3658 = vsel %vm1128, %v3490, 0
        %v3661 = vsel %vm1128, %v3493, 0
        %v3664 = vsel %vm1128, %v3496, 0
        %v3667 = vsel %vm1128, %v3499, 0
        %v3670 = vsel %vm1128, %v3502, 0
        %3672 = vmatprep.subr.bf16.mxu0 0
        %3673 = vmatpush1.bf16.msra.mxu0 %v3612
        %3674 = vmatprep.subr.bf16.mxu0 0
        %3675 = vmatpush1.bf16.msra.mxu0 %v3613
        %3676 = vmatprep.subr.bf16.mxu0 0
        %3677 = vmatpush1.bf16.msra.mxu0 %v3614
        %3678 = vmatprep.subr.bf16.mxu0 0
        %3679 = vmatpush1.bf16.msra.mxu0 %v3615
        %3680 = vmatprep.subr.bf16.mxu0 0
        %3681 = vmatpush1.bf16.msra.mxu0 %v3616
        %3682 = vmatprep.subr.bf16.mxu0 0
        %3683 = vmatpush1.bf16.msra.mxu0 %v3617
        %3684 = vmatprep.subr.bf16.mxu0 0
        %3685 = vmatpush1.bf16.msra.mxu0 %v3618
        %3686 = vmatprep.subr.bf16.mxu0 0
        %3687 = vmatpush1.bf16.msra.mxu0 %v3619
        %3688 = vmatprep.subr.bf16.mxu0 0
        %3689 = vmatpush1.bf16.msra.mxu0 %v3620
        %3690 = vmatprep.subr.bf16.mxu0 0
        %3691 = vmatpush1.bf16.msra.mxu0 %v3621
        %3692 = vmatprep.subr.bf16.mxu0 0
        %3693 = vmatpush1.bf16.msra.mxu0 %v3622
        %3694 = vmatprep.subr.bf16.mxu0 0
        %3695 = vmatpush1.bf16.msra.mxu0 %v3623
        %3696 = vmatprep.subr.bf16.mxu0 0
        %3697 = vmatpush1.bf16.msra.mxu0 %v3624
        %3698 = vmatprep.subr.bf16.mxu0 0
        %3699 = vmatpush1.bf16.msra.mxu0 %v3625
        %3700 = vmatprep.subr.bf16.mxu0 0
        %3701 = vmatpush1.bf16.msra.mxu0 %v3626
        %3702 = vmatprep.subr.bf16.mxu0 0
        %3703 = vmatpush1.bf16.msra.mxu0 %v3627
        %3704 = vmatprep.mubr.bf16.mxu0 %v3480
        %3705 = vmatmul.mubr.bf16.gmra.mrb[0].mxu0 %v3479
        %v3706 = vpop.f32.mrb[0].mxu0
        %v3707 = vadd.f32 0.0, %v3706
        %v3708 = vpop.f32.mrb[0].mxu0
        %v3709 = vpop.f32.mrb[0].mxu0
        %v3710 = vadd.f32 0.0, %v3709
        %v3711 = vpop.f32.mrb[0].mxu0
        %3712 = vmatprep.mubr.bf16.mxu0 %v3483
        %3713 = vmatmul.mubr.bf16.gmra.mrb[0].mxu0 %v3482
        %v3714 = vpop.f32.mrb[0].mxu0
        %v3715 = vadd.f32 0.0, %v3714
        %v3716 = vpop.f32.mrb[0].mxu0
        %v3717 = vpop.f32.mrb[0].mxu0
        %v3718 = vadd.f32 0.0, %v3717
        %v3719 = vpop.f32.mrb[0].mxu0
        %3720 = vmatprep.mubr.bf16.mxu0 %v3486
        %3721 = vmatmul.mubr.bf16.gmra.mrb[0].mxu0 %v3485
        %v3722 = vpop.f32.mrb[0].mxu0
        %v3723 = vadd.f32 0.0, %v3722
        %v3724 = vpop.f32.mrb[0].mxu0
        %v3725 = vpop.f32.mrb[0].mxu0
        %v3726 = vadd.f32 0.0, %v3725
        %v3727 = vpop.f32.mrb[0].mxu0
        %3728 = vmatprep.mubr.bf16.mxu0 %v3489
        %3729 = vmatmul.mubr.bf16.gmra.mrb[0].mxu0 %v3488
        %v3730 = vpop.f32.mrb[0].mxu0
        %v3731 = vadd.f32 0.0, %v3730
        %v3732 = vpop.f32.mrb[0].mxu0
        %v3733 = vpop.f32.mrb[0].mxu0
        %v3734 = vadd.f32 0.0, %v3733
        %v3735 = vpop.f32.mrb[0].mxu0
        %3736 = vmatprep.mubr.bf16.mxu0 %v3492
        %3737 = vmatmul.mubr.bf16.gmra.mrb[0].mxu0 %v3491
        %v3738 = vpop.f32.mrb[0].mxu0
        %v3739 = vadd.f32 0.0, %v3738
        %v3740 = vpop.f32.mrb[0].mxu0
        %v3741 = vpop.f32.mrb[0].mxu0
        %v3742 = vadd.f32 0.0, %v3741
        %v3743 = vpop.f32.mrb[0].mxu0
        %3744 = vmatprep.mubr.bf16.mxu0 %v3495
        %3745 = vmatmul.mubr.bf16.gmra.mrb[0].mxu0 %v3494
        %v3746 = vpop.f32.mrb[0].mxu0
        %v3747 = vadd.f32 0.0, %v3746
        %v3748 = vpop.f32.mrb[0].mxu0
        %v3749 = vpop.f32.mrb[0].mxu0
        %v3750 = vadd.f32 0.0, %v3749
        %v3751 = vpop.f32.mrb[0].mxu0
        %3752 = vmatprep.mubr.bf16.mxu0 %v3498
        %3753 = vmatmul.mubr.bf16.gmra.mrb[0].mxu0 %v3497
        %v3754 = vpop.f32.mrb[0].mxu0
        %v3755 = vadd.f32 0.0, %v3754
        %v3756 = vpop.f32.mrb[0].mxu0
        %v3757 = vpop.f32.mrb[0].mxu0
        %v3758 = vadd.f32 0.0, %v3757
        %v3759 = vpop.f32.mrb[0].mxu0
        %3760 = vmatprep.mubr.bf16.mxu0 %v3501
        %3761 = vmatmul.mubr.bf16.gmra.mrb[0].mxu0 %v3500
        %v3762 = vpop.f32.mrb[0].mxu0
        %v3763 = vadd.f32 0.0, %v3762
        %v3764 = vpop.f32.mrb[0].mxu0
        %v3765 = vpop.f32.mrb[0].mxu0
        %v3766 = vadd.f32 0.0, %v3765
        %v3767 = vpop.f32.mrb[0].mxu0
        %3768 = vdwg.mxu0
        %3769 = vmatprep.subr.bf16.mxu0 0
        %3770 = vmatpush1.bf16.msra.mxu0 %v3628
        %3771 = vmatprep.subr.bf16.mxu0 0
        %3772 = vmatpush1.bf16.msra.mxu0 %v3629
        %3773 = vmatprep.subr.bf16.mxu0 0
        %3774 = vmatpush1.bf16.msra.mxu0 0
        %3775 = vmatprep.subr.bf16.mxu0 0
        %3776 = vmatpush1.bf16.msra.mxu0 0
        %3777 = vmatprep.subr.bf16.mxu0 0
        %3778 = vmatpush1.bf16.msra.mxu0 0
        %3779 = vmatprep.subr.bf16.mxu0 0
        %3780 = vmatpush1.bf16.msra.mxu0 0
        %3781 = vmatprep.subr.bf16.mxu0 0
        %3782 = vmatpush1.bf16.msra.mxu0 0
        %3783 = vmatprep.subr.bf16.mxu0 0
        %3784 = vmatpush1.bf16.msra.mxu0 0
        %3785 = vmatprep.subr.bf16.mxu0 0
        %3786 = vmatpush1.bf16.msra.mxu0 0
        %3787 = vmatprep.subr.bf16.mxu0 0
        %3788 = vmatpush1.bf16.msra.mxu0 0
        %3789 = vmatprep.subr.bf16.mxu0 0
        %3790 = vmatpush1.bf16.msra.mxu0 0
        %3791 = vmatprep.subr.bf16.mxu0 0
        %3792 = vmatpush1.bf16.msra.mxu0 0
        %3793 = vmatprep.subr.bf16.mxu0 0
        %3794 = vmatpush1.bf16.msra.mxu0 0
        %3795 = vmatprep.subr.bf16.mxu0 0
        %3796 = vmatpush1.bf16.msra.mxu0 0
        %3797 = vmatprep.subr.bf16.mxu0 0
        %3798 = vmatpush1.bf16.msra.mxu0 0
        %3799 = vmatprep.subr.bf16.mxu0 0
        %3800 = vmatpush1.bf16.msra.mxu0 0
        %3801 = vmatprep.mubr.bf16.mxu0 0
        %3802 = vmatmul.mubr.bf16.gmra.mrb[0].mxu0 %v3649
        %v3803 = vpop.f32.mrb[0].mxu0
        %v3804 = vadd.f32 %v3707, %v3803
        %v3805 = vpop.f32.mrb[0].mxu0
        %v3806 = vpop.f32.mrb[0].mxu0
        %v3807 = vadd.f32 %v3710, %v3806
        %v3808 = vpop.f32.mrb[0].mxu0
        %3809 = vmatprep.mubr.bf16.mxu0 0
        %3810 = vmatmul.mubr.bf16.gmra.mrb[0].mxu0 %v3652
        %v3811 = vpop.f32.mrb[0].mxu0
        %v3812 = vadd.f32 %v3715, %v3811
        %v3813 = vpop.f32.mrb[0].mxu0
        %v3814 = vpop.f32.mrb[0].mxu0
        %v3815 = vadd.f32 %v3718, %v3814
        %v3816 = vpop.f32.mrb[0].mxu0
        %3817 = vmatprep.mubr.bf16.mxu0 0
        %3818 = vmatmul.mubr.bf16.gmra.mrb[0].mxu0 %v3655
        %v3819 = vpop.f32.mrb[0].mxu0
        %v3820 = vadd.f32 %v3723, %v3819
        %v3821 = vpop.f32.mrb[0].mxu0
        %v3822 = vpop.f32.mrb[0].mxu0
        %v3823 = vadd.f32 %v3726, %v3822
        %v3824 = vpop.f32.mrb[0].mxu0
        %3825 = vmatprep.mubr.bf16.mxu0 0
        %3826 = vmatmul.mubr.bf16.gmra.mrb[0].mxu0 %v3658
        %v3827 = vpop.f32.mrb[0].mxu0
        %v3828 = vadd.f32 %v3731, %v3827
        %v3829 = vpop.f32.mrb[0].mxu0
        %v3830 = vpop.f32.mrb[0].mxu0
        %v3831 = vadd.f32 %v3734, %v3830
        %v3832 = vpop.f32.mrb[0].mxu0
        %3833 = vmatprep.mubr.bf16.mxu0 0
        %3834 = vmatmul.mubr.bf16.gmra.mrb[0].mxu0 %v3661
        %v3835 = vpop.f32.mrb[0].mxu0
        %v3836 = vadd.f32 %v3739, %v3835
        %v3837 = vpop.f32.mrb[0].mxu0
        %v3838 = vpop.f32.mrb[0].mxu0
        %v3839 = vadd.f32 %v3742, %v3838
        %v3840 = vpop.f32.mrb[0].mxu0
        %3841 = vmatprep.mubr.bf16.mxu0 0
        %3842 = vmatmul.mubr.bf16.gmra.mrb[0].mxu0 %v3664
        %v3843 = vpop.f32.mrb[0].mxu0
        %v3844 = vadd.f32 %v3747, %v3843
        %v3845 = vpop.f32.mrb[0].mxu0
        %v3846 = vpop.f32.mrb[0].mxu0
        %v3847 = vadd.f32 %v3750, %v3846
        %v3848 = vpop.f32.mrb[0].mxu0
        %3849 = vmatprep.mubr.bf16.mxu0 0
        %3850 = vmatmul.mubr.bf16.gmra.mrb[0].mxu0 %v3667
        %v3851 = vpop.f32.mrb[0].mxu0
        %v3852 = vadd.f32 %v3755, %v3851
        %v3853 = vpop.f32.mrb[0].mxu0
        %v3854 = vpop.f32.mrb[0].mxu0
        %v3855 = vadd.f32 %v3758, %v3854
        %v3856 = vpop.f32.mrb[0].mxu0
        %3857 = vmatprep.mubr.bf16.mxu0 0
        %3858 = vmatmul.mubr.bf16.gmra.mrb[0].mxu0 %v3670
        %v3859 = vpop.f32.mrb[0].mxu0
        %v3860 = vadd.f32 %v3763, %v3859
        %v3861 = vpop.f32.mrb[0].mxu0
        %v3862 = vpop.f32.mrb[0].mxu0
        %v3863 = vadd.f32 %v3766, %v3862
        %v3864 = vpop.f32.mrb[0].mxu0
        %3865 = vdwg.mxu0
        %v3866 = vadd.f32 %v2934, %v3804
        %v3867 = vadd.f32 %v2937, %v3807
        %v3868 = vadd.f32 %v2942, %v3812
        %v3869 = vadd.f32 %v2945, %v3815
        %v3870 = vadd.f32 %v2950, %v3820
        %v3871 = vadd.f32 %v2953, %v3823
        %v3872 = vadd.f32 %v2958, %v3828
        %v3873 = vadd.f32 %v2961, %v3831
        %v3874 = vadd.f32 %v2966, %v3836
        %v3875 = vadd.f32 %v2969, %v3839
        %v3876 = vadd.f32 %v2974, %v3844
        %v3877 = vadd.f32 %v2977, %v3847
        %v3878 = vadd.f32 %v2982, %v3852
        %v3879 = vadd.f32 %v2985, %v3855
        %v3880 = vadd.f32 %v2990, %v3860
        %v3881 = vadd.f32 %v2993, %v3863
        %v3882 = vld [vmem:[%s8] sm:$0x1]
        %v3884 = vlaneseq
        %v3885 = vshrl.u32 %v3884, 7
        %v3886 = vsub.s32 0, %v3885
        %v3887 = vrot.slane %v3882, %v3886
        %v3889 = vadd.f32 %v3866, %v3887
        %v3890 = vadd.f32 %v3867, %v3887
        %v3891 = vadd.f32 %v3868, %v3887
        %v3892 = vadd.f32 %v3869, %v3887
        %v3893 = vadd.f32 %v3870, %v3887
        %v3894 = vadd.f32 %v3871, %v3887
        %v3895 = vadd.f32 %v3872, %v3887
        %v3896 = vadd.f32 %v3873, %v3887
        %v3897 = vadd.f32 %v3874, %v3887
        %v3898 = vadd.f32 %v3875, %v3887
        %v3899 = vadd.f32 %v3876, %v3887
        %v3900 = vadd.f32 %v3877, %v3887
        %v3901 = vadd.f32 %v3878, %v3887
        %v3902 = vadd.f32 %v3879, %v3887
        %v3903 = vadd.f32 %v3880, %v3887
        %v3904 = vadd.f32 %v3881, %v3887
        %3905 = vst.msk [vmem:[%s499] sm:$0xff] %vm1128, %v3889
        %3906 = vst.msk [vmem:[%s499 + $0x8] sm:$0xff] %vm1128, %v3890
        %3907 = vst.msk [vmem:[%s499 + $0x10] sm:$0xff] %vm1128, %v3891
        %3908 = vst.msk [vmem:[%s499 + $0x18] sm:$0xff] %vm1128, %v3892
        %3909 = vst.msk [vmem:[%s499 + $0x20] sm:$0xff] %vm1128, %v3893
        %3910 = vst.msk [vmem:[%s499 + $0x28] sm:$0xff] %vm1128, %v3894
        %3911 = vst.msk [vmem:[%s499 + $0x30] sm:$0xff] %vm1128, %v3895
        %3912 = vst.msk [vmem:[%s499 + $0x38] sm:$0xff] %vm1128, %v3896
        %3913 = vst.msk [vmem:[%s499 + $0x40] sm:$0xff] %vm1128, %v3897
        %3914 = vst.msk [vmem:[%s499 + $0x48] sm:$0xff] %vm1128, %v3898
        %3915 = vst.msk [vmem:[%s499 + $0x50] sm:$0xff] %vm1128, %v3899
        %3916 = vst.msk [vmem:[%s499 + $0x58] sm:$0xff] %vm1128, %v3900
        %3917 = vst.msk [vmem:[%s499 + $0x60] sm:$0xff] %vm1128, %v3901
        %3918 = vst.msk [vmem:[%s499 + $0x68] sm:$0xff] %vm1128, %v3902
        %3919 = vst.msk [vmem:[%s499 + $0x70] sm:$0xff] %vm1128, %v3903
        %3920 = vst.msk [vmem:[%s499 + $0x78] sm:$0xff] %vm1128, %v3904
        // Predicated region
        $region65: #{tpu_custom_call.1} parent=55 // pred_check
          %p3921 = pneg %p547
        $region66: #{tpu_custom_call.1} parent=55 // pred_check_branch
          %3923 = sbr.rel (%p3921) target = $region68
        $region67: #{tpu_custom_call.1} parent=55 // pred_region
          %vm3924 = vcmask 254976
          %3925 = vst.msk [vmem:[%s506] sm:$0x3] %vm3924, 0.0
        $region68: #{tpu_custom_call.1} parent=55 // pred_fallthru
          _
        %v3926 = vld [vmem:[%s506] sm:$0x1]
        %v3927 = vsel %vm1128, %v3889, 0.0
        %v3928 = vsel %vm1128, %v3890, 0.0
        %v3929 = vadd.f32 %v3927, %v3928
        %v3930 = vsel %vm1128, %v3891, 0.0
        %v3931 = vadd.f32 %v3929, %v3930
        %v3932 = vsel %vm1128, %v3892, 0.0
        %v3933 = vadd.f32 %v3931, %v3932
        %v3934 = vsel %vm1128, %v3893, 0.0
        %v3935 = vadd.f32 %v3933, %v3934
        %v3936 = vsel %vm1128, %v3894, 0.0
        %v3937 = vadd.f32 %v3935, %v3936
        %v3938 = vsel %vm1128, %v3895, 0.0
        %v3939 = vadd.f32 %v3937, %v3938
        %v3940 = vsel %vm1128, %v3896, 0.0
        %v3941 = vadd.f32 %v3939, %v3940
        %v3942 = vsel %vm1128, %v3897, 0.0
        %v3943 = vadd.f32 %v3941, %v3942
        %v3944 = vsel %vm1128, %v3898, 0.0
        %v3945 = vadd.f32 %v3943, %v3944
        %v3946 = vsel %vm1128, %v3899, 0.0
        %v3947 = vadd.f32 %v3945, %v3946
        %v3948 = vsel %vm1128, %v3900, 0.0
        %v3949 = vadd.f32 %v3947, %v3948
        %v3950 = vsel %vm1128, %v3901, 0.0
        %v3951 = vadd.f32 %v3949, %v3950
        %v3952 = vsel %vm1128, %v3902, 0.0
        %v3953 = vadd.f32 %v3951, %v3952
        %v3954 = vsel %vm1128, %v3903, 0.0
        %v3955 = vadd.f32 %v3953, %v3954
        %v3956 = vsel %vm1128, %v3904, 0.0
        %v3957 = vadd.f32 %v3955, %v3956
        %v3958 = vrot.slane %v3957, 4
        %v3959 = vadd.f32 %v3957, %v3958
        %v3960 = vrot.slane %v3959, 2
        %v3961 = vadd.f32 %v3959, %v3960
        %v3962 = vrot.slane %v3961, 1
        %v3963 = vadd.f32 %v3961, %v3962
        %v3964 = vadd.f32 %v3926, %v3963
        %vm3965 = vcmask 253952
        %3966 = vst.msk [vmem:[%s506] sm:$0x1] %vm3965, %v3964
        %v3967 = vld [vmem:[%s506 + $0x1] sm:$0x1]
        %v3968 = vmul.f32 %v3889, %v3889
        %v3969 = vmul.f32 %v3890, %v3890
        %v3970 = vmul.f32 %v3891, %v3891
        %v3971 = vmul.f32 %v3892, %v3892
        %v3972 = vmul.f32 %v3893, %v3893
        %v3973 = vmul.f32 %v3894, %v3894
        %v3974 = vmul.f32 %v3895, %v3895
        %v3975 = vmul.f32 %v3896, %v3896
        %v3976 = vmul.f32 %v3897, %v3897
        %v3977 = vmul.f32 %v3898, %v3898
        %v3978 = vmul.f32 %v3899, %v3899
        %v3979 = vmul.f32 %v3900, %v3900
        %v3980 = vmul.f32 %v3901, %v3901
        %v3981 = vmul.f32 %v3902, %v3902
        %v3982 = vmul.f32 %v3903, %v3903
        %v3983 = vmul.f32 %v3904, %v3904
        %v3984 = vsel %vm1128, %v3968, 0.0
        %v3985 = vsel %vm1128, %v3969, 0.0
        %v3986 = vadd.f32 %v3984, %v3985
        %v3987 = vsel %vm1128, %v3970, 0.0
        %v3988 = vadd.f32 %v3986, %v3987
        %v3989 = vsel %vm1128, %v3971, 0.0
        %v3990 = vadd.f32 %v3988, %v3989
        %v3991 = vsel %vm1128, %v3972, 0.0
        %v3992 = vadd.f32 %v3990, %v3991
        %v3993 = vsel %vm1128, %v3973, 0.0
        %v3994 = vadd.f32 %v3992, %v3993
        %v3995 = vsel %vm1128, %v3974, 0.0
        %v3996 = vadd.f32 %v3994, %v3995
        %v3997 = vsel %vm1128, %v3975, 0.0
        %v3998 = vadd.f32 %v3996, %v3997
        %v3999 = vsel %vm1128, %v3976, 0.0
        %v4000 = vadd.f32 %v3998, %v3999
        %v4001 = vsel %vm1128, %v3977, 0.0
        %v4002 = vadd.f32 %v4000, %v4001
        %v4003 = vsel %vm1128, %v3978, 0.0
        %v4004 = vadd.f32 %v4002, %v4003
        %v4005 = vsel %vm1128, %v3979, 0.0
        %v4006 = vadd.f32 %v4004, %v4005
        %v4007 = vsel %vm1128, %v3980, 0.0
        %v4008 = vadd.f32 %v4006, %v4007
        %v4009 = vsel %vm1128, %v3981, 0.0
        %v4010 = vadd.f32 %v4008, %v4009
        %v4011 = vsel %vm1128, %v3982, 0.0
        %v4012 = vadd.f32 %v4010, %v4011
        %v4013 = vsel %vm1128, %v3983, 0.0
        %v4014 = vadd.f32 %v4012, %v4013
        %v4015 = vrot.slane %v4014, 4
        %v4016 = vadd.f32 %v4014, %v4015
        %v4017 = vrot.slane %v4016, 2
        %v4018 = vadd.f32 %v4016, %v4017
        %v4019 = vrot.slane %v4018, 1
        %v4020 = vadd.f32 %v4018, %v4019
        %v4021 = vadd.f32 %v3967, %v4020
        %4022 = vst.msk [vmem:[%s506 + $0x1] sm:$0x1] %vm3965, %v4021
        %s4023 = sand.u32 %s284, 1
        %s4024 = scalar_lea.sflag [#allocation8], %s4023
        %s4025 = sand.u32 %s284, 1
        %s4026 = smul.addr %s4025, 128
        %s4027 = scalar_lea.vmem [#allocation9], %s4026
        %s4028 = sand.u32 %s310, 1
        %s4029 = scalar_lea.sflag [#allocation11], %s4028
        %s4030 = sand.u32 %s310, 1
        %s4031 = smul.addr %s4030, 2
        %s4032 = scalar_lea.vmem [#allocation10], %s4031
        // Predicated region
        $region69: #{tpu_custom_call.1} parent=55 // pred_check
          %p4033 = pneg %p294
        $region70: #{tpu_custom_call.1} parent=55 // pred_check_branch
          %4035 = sbr.rel (%p4033) target = $region72
        $region71: #{tpu_custom_call.1} parent=55 // pred_region
          %s4036 = smul.u32 2, %s36
          %s4038 = ssub.s32 2048, 2048
          %4039 = vsyncadd %s4024, %s4038
          %s4040 = smul.addr %s4036, 8
          %s4041 = smul.addr %s35, 32
          %s4042 = sadd.s32 %s4040, %s4041
          %s4043 = smul.addr %s4042, 128
          %s4044 = scalar_lea.hbm %s9, %s4043
          %s4045 = sshll.u32 %s4027, 4
          %s4046 = int_to_ptr.vmem [resolvable:$true] %s4045
          %4051 = dma.vmem_to_hbm [thread:$0]  %s4046, 2048, %s4044, %s4024, 128, 128, 8
        $region72: #{tpu_custom_call.1} parent=55 // pred_fallthru
          _
        // Predicated region
        $region73: #{tpu_custom_call.1} parent=55 // pred_check
          %p4052 = pneg %p320
        $region74: #{tpu_custom_call.1} parent=55 // pred_check_branch
          %4054 = sbr.rel (%p4052) target = $region76
        $region75: #{tpu_custom_call.1} parent=55 // pred_region
          %s4056 = ssub.s32 32, 32
          %4057 = vsyncadd %s4029, %s4056
          %s4058 = smul.addr %s35, 32
          %s4059 = scalar_lea.hbm %s10, %s4058
          %s4061 = sshll.u32 %s4032, 4
          %s4062 = int_to_ptr.vmem [resolvable:$true] %s4061
          %4064 = dma.vmem_to_hbm [thread:$0]  %s4062, 32, %s4059, %s4029
        $region76: #{tpu_custom_call.1} parent=55 // pred_fallthru
          _
      $region56: #{tpu_custom_call.1} parent=5 // pred_fallthru
        _
      %p4065 = scmp.le.s32.totalorder 2, %s26
      // Predicated region
      $region77: #{tpu_custom_call.1} parent=5 // pred_check
        %p4066 = pneg %p4065
      $region78: #{tpu_custom_call.1} parent=5 // pred_check_branch
        %4068 = sbr.rel (%p4066) target = $region80
      $region79: #{tpu_custom_call.1} parent=5 // pred_region
        %s4069 = ssub.s32 %s26, 2
        // Predicated region
        $region81: #{tpu_custom_call.1} parent=79 // pred_check
          %p4070 = pneg %p300
        $region82: #{tpu_custom_call.1} parent=79 // pred_check_branch
          %4072 = sbr.rel (%p4070) target = $region84
        $region83: #{tpu_custom_call.1} parent=79 // pred_region
          %s4073 = sand.u32 %s285, 1
          %s4074 = scalar_lea.sflag [#allocation8], %s4073
          %s4075 = sand.u32 %s285, 1
          %s4076 = smul.addr %s4075, 128
          %s4077 = scalar_lea.vmem [#allocation9], %s4076
          %4078 = dma.done %s4074, 2048
        $region84: #{tpu_custom_call.1} parent=79 // pred_fallthru
          _
        // Predicated region
        $region85: #{tpu_custom_call.1} parent=79 // pred_check
          %p4079 = pneg %p326
        $region86: #{tpu_custom_call.1} parent=79 // pred_check_branch
          %4081 = sbr.rel (%p4079) target = $region88
        $region87: #{tpu_custom_call.1} parent=79 // pred_region
          %s4082 = sand.u32 %s311, 1
          %s4083 = scalar_lea.sflag [#allocation11], %s4082
          %s4084 = sand.u32 %s311, 1
          %s4085 = smul.addr %s4084, 2
          %s4086 = scalar_lea.vmem [#allocation10], %s4085
          %4087 = dma.done %s4083, 32
        $region88: #{tpu_custom_call.1} parent=79 // pred_fallthru
          _
      $region80: #{tpu_custom_call.1} parent=5 // pred_fallthru
        _
    $region6: #{tpu_custom_call.1} parent=1 // loop_footer
      %s30 = sadd.s32 1, %s26
    $region7: #{tpu_custom_call.1} parent=1 // loop_footer_branch
      %25 = sbr.rel target = $region3
    $region8: #{tpu_custom_call.1} parent=1 // loop_exit
      _
    %4088 = vsyncpa [#allocation7], 1
    %s4089 = scalar_lea.sflag [#allocation7], 1
    %4090 = vsyncpa %s4089, 1
    %4091 = vsyncpa [#allocation8], 1
    %s4092 = scalar_lea.sflag [#allocation8], 1
    %4093 = vsyncpa %s4092, 1
    %4094 = vsyncpa [#allocation11], 1
    %s4095 = scalar_lea.sflag [#allocation11], 1
    %4096 = vsyncpa %s4095, 1

</llo_original>
